<compile_context>
chip_gen: v6e
topology: v6e:2x2x1
jax: 0.10.0
libtpu: 0.0.40
codegen_flags: <defaults>
</compile_context>

<pallas_src>
import functools

import jax
import jax.numpy as jnp
from jax.experimental import pallas as pl
from jax.experimental.pallas import tpu as pltpu

# ----------------------------- configuration --------------------------------
# (scaled-down ViT backbone; classifier-head dims match the PyTorch module exactly)
PATCH = 16            # real ViT-H-14: 14 / 224px; scaled down
IMG = 32              # -> 2x2 = 4 patches (+1 cls token)
IN_CH = 3
WIDTH = 128           # real: 1280 (chosen = lane width for dense vregs)
                      # TODO(synk): if scaled to the real width, use K/N matmul dims
                      # that are multiples of 256 for v6e/v7x MXU tiles.
NUM_HEADS = 4         # real: 16
HEAD_DIM = WIDTH // NUM_HEADS
LOG2_HEAD_DIM = HEAD_DIM.bit_length() - 1
NUM_LAYERS = 2        # real: 32.  TODO(synk): at real depth, stream layer weights via a
                      # layer grid axis + layer-indexed BlockSpecs instead of unrolling.
MLP_DIM = 4 * WIDTH
EMBED_DIM = 1024      # CLIP visual output dim -> fc1 input (matches module)
HIDDEN = 512          # fc1 output (matches module)
CLASS_NUM = 10
PAD_CLASSES = 128     # lane-dense padded logits; sliced to CLASS_NUM outside the kernel
S_PAD = 8             # tokens per image padded to one sublane group (cls + 4 patches real)
LOG2_S_PAD = 3
LN_EPS = 1e-5
NEG_INF = -1e30
DEFAULT_B_TILE = 32   # images per grid step -> 256 token rows per matmul

assert HEAD_DIM & (HEAD_DIM - 1) == 0, "HEAD_DIM must be a power of two"
assert S_PAD == 1 << LOG2_S_PAD


def _const_index(ndim, *_):
    return (0,) * ndim


def _round_up(x, m):
    return (x + m - 1) // m * m


def _ln2d(x, g, b):
    mu = jnp.mean(x, axis=-1, keepdims=True)
    var = jnp.mean((x - mu) ** 2, axis=-1, keepdims=True)
    return (x - mu) * jax.lax.rsqrt(var + LN_EPS) * g + b


# ------------------------------ fused Pallas kernel --------------------------

def _fused_vit_classifier_kernel(
        patches_ref, tok_bias_ref, conv_w_ref, ln_pre_g_ref, ln_pre_b_ref,
        ln1_g_ref, ln1_b_ref, wqkv_ref, bqkv_ref, wo_ref, bo_ref,
        ln2_g_ref, ln2_b_ref, wfc_ref, bfc_ref, wpr_ref, bpr_ref,
        ln_post_g_ref, ln_post_b_ref, proj_ref,
        fc1_w_ref, fc1_b_ref, fc2_w_ref, fc2_b_ref,
        logits_ref, *, num_layers, num_heads, b_tile, s_real):
    f32, bf16 = jnp.float32, jnp.bfloat16
    n = b_tile * S_PAD                 # token rows in this batch tile
    w = conv_w_ref.shape[-1]           # transformer width (128, lane-dense)

    # --- patch embedding (Conv2d as matmul) + cls token + positional embedding ---
    # patches carries an all-zero row at every cls / pad position, so adding
    # tok_bias (cls+pos on those rows, pos elsewhere) reproduces
    # concat([cls, patch_tokens]) + pos with no in-kernel concatenation.
    x = jnp.dot(patches_ref[...], conv_w_ref[...],
                preferred_element_type=f32) + tok_bias_ref[...]            # (n, w)
    x = _ln2d(x, ln_pre_g_ref[...], ln_pre_b_ref[...])

    # --- loop-invariant attention masks, generated in-kernel (no O(B^2) DMAs) ---
    # attn_bias[i, j] = 0 if key j is a REAL token of the same image as query i,
    # else -inf.  S_PAD = 8, so all index math is shifts / bitwise-ands (VPU only).
    ri = jax.lax.broadcasted_iota(jnp.int32, (n, n), 0)
    ci = jax.lax.broadcasted_iota(jnp.int32, (n, n), 1)
    same_image = jnp.right_shift(ri, LOG2_S_PAD) == jnp.right_shift(ci, LOG2_S_PAD)
    real_key = jnp.bitwise_and(ci, S_PAD - 1) < s_real
    attn_bias = jnp.where(jnp.logical_and(same_image, real_key),
                          0.0, NEG_INF).astype(f32)                        # (n, n)
    # lane -> head ownership (head h owns lanes [h*HEAD_DIM, (h+1)*HEAD_DIM))
    lane_head = jnp.right_shift(
        jax.lax.broadcasted_iota(jnp.int32, (n, w), 1), LOG2_HEAD_DIM)     # (n, w)

    for l in range(num_layers):
        # ---------------- multi-head self-attention ----------------
        h = _ln2d(x, ln1_g_ref[l], ln1_b_ref[l])
        qkv = jnp.dot(h.astype(bf16), wqkv_ref[l],
                      preferred_element_type=f32) + bqkv_ref[l]            # (n, 3w)
        q = qkv[:, :w]                 # 1/sqrt(HEAD_DIM) folded into Wq at init
        k = qkv[:, w:2 * w].astype(bf16)
        v = qkv[:, 2 * w:].astype(bf16)

        # Per-head matmuls via lane masks — no one-hot bookkeeping matmuls.
        # Masking q to head h's lanes makes the full-width contraction produce
        # exactly head h's scores; at w == 128 lanes this costs the same MXU
        # passes as an hd-wide contraction (K / output-N granularity is 128).
        # TODO(synk): if WIDTH grows past 128, contract per-head hd-wide slices
        # instead to avoid NUM_HEADS x extra MXU passes.
        attn = None
        for hh in range(num_heads):
            head_lanes = lane_head == hh
            q_h = jnp.where(head_lanes, q, 0.0).astype(bf16)               # (n, w)
            s_h = jax.lax.dot_general(q_h, k, (((1,), (1,)), ((), ())),
                                      preferred_element_type=f32) + attn_bias
            s_h = s_h - jnp.max(s_h, axis=-1, keepdims=True)
            p_h = jnp.exp(s_h)
            p_h = p_h * pl.reciprocal(jnp.sum(p_h, axis=-1, keepdims=True),
                                      approx=True)
            o_h = jnp.where(head_lanes,
                            jnp.dot(p_h.astype(bf16), v,
                                    preferred_element_type=f32), 0.0)      # (n, w)
            attn = o_h if attn is None else attn + o_h
        x = x + jnp.dot(attn.astype(bf16), wo_ref[l],
                        preferred_element_type=f32) + bo_ref[l]

        # ---------------------------- MLP ---------------------------
        h2 = _ln2d(x, ln2_g_ref[l], ln2_b_ref[l])
        h2 = jnp.dot(h2.astype(bf16), wfc_ref[l],
                     preferred_element_type=f32) + bfc_ref[l]
        # TODO(synk): open_clip's nn.GELU is exact (erf); tanh approximation used here.
        h2 = jax.nn.gelu(h2, approximate=True)
        x = x + jnp.dot(h2.astype(bf16), wpr_ref[l],
                        preferred_element_type=f32) + bpr_ref[l]

    # --- cls pooling (bf16 one-hot built in-kernel) + ln_post + projection ---
    bi = jax.lax.broadcasted_iota(jnp.int32, (b_tile, n), 0)
    ti = jax.lax.broadcasted_iota(jnp.int32, (b_tile, n), 1)
    cls_sel = (ti == bi * S_PAD).astype(bf16)                              # (b_tile, n)
    x_cls = jnp.dot(cls_sel, x.astype(bf16), preferred_element_type=f32)   # (b_tile, w)
    x_cls = _ln2d(x_cls, ln_post_g_ref[...], ln_post_b_ref[...])
    feats = jnp.dot(x_cls.astype(bf16), proj_ref[...],
                    preferred_element_type=f32)                            # (b_tile, 1024)

    # --- classifier head: fc2(relu(fc1(feats))) — exact match of the module ---
    hidden = jnp.dot(feats.astype(bf16), fc1_w_ref[...],
                     preferred_element_type=f32) + fc1_b_ref[...]
    hidden = jnp.maximum(hidden, 0.0)
    logits_ref[...] = jnp.dot(hidden.astype(bf16), fc2_w_ref[...],
                              preferred_element_type=f32) + fc2_b_ref[...]  # (b_tile, 128)


# ------------------------------ parameters ------------------------------------

def init_params(key, class_num=CLASS_NUM):
    assert class_num <= PAD_CLASSES
    patch_dim = IN_CH * PATCH * PATCH
    keys = jax.random.split(key, 8 + 4 * NUM_LAYERS)
    it = iter(keys)

    def nrm(shape, scale=0.02):
        return (scale * jax.random.normal(next(it), shape)).astype(jnp.float32)

    def nrm_bf16(shape, scale=0.02):
        return nrm(shape, scale).astype(jnp.bfloat16)

    wqkv, wo, wfc, wpr = [], [], [], []
    for _ in range(NUM_LAYERS):
        wq = nrm((WIDTH, 3 * WIDTH))
        # Fold the 1/sqrt(head_dim) attention scale into Wq.  NOTE: bqkv is zero;
        # if real pretrained QKV biases are ever loaded, the Q bias must be scaled too.
        wq = wq.at[:, :WIDTH].multiply(HEAD_DIM ** -0.5)
        wqkv.append(wq.astype(jnp.bfloat16))
        wo.append(nrm_bf16((WIDTH, WIDTH)))
        wfc.append(nrm_bf16((WIDTH, MLP_DIM)))
        wpr.append(nrm_bf16((MLP_DIM, WIDTH)))

    fc2_real = nrm((HIDDEN, class_num))
    fc2_w = jnp.zeros((HIDDEN, PAD_CLASSES), jnp.float32).at[:, :class_num].set(fc2_real)

    return {
        'conv_w': nrm_bf16((patch_dim, WIDTH)),                  # conv1 (bias=False), flattened
        'cls': nrm((WIDTH,)),
        'pos': nrm((S_PAD, WIDTH)),
        'ln_pre_g': jnp.ones((1, WIDTH), jnp.float32),
        'ln_pre_b': jnp.zeros((1, WIDTH), jnp.float32),
        'ln1_g': jnp.ones((NUM_LAYERS, 1, WIDTH), jnp.float32),
        'ln1_b': jnp.zeros((NUM_LAYERS, 1, WIDTH), jnp.float32),
        'wqkv': jnp.stack(wqkv),
        'bqkv': jnp.zeros((NUM_LAYERS, 1, 3 * WIDTH), jnp.float32),
        'wo': jnp.stack(wo),
        'bo': jnp.zeros((NUM_LAYERS, 1, WIDTH), jnp.float32),
        'ln2_g': jnp.ones((NUM_LAYERS, 1, WIDTH), jnp.float32),
        'ln2_b': jnp.zeros((NUM_LAYERS, 1, WIDTH), jnp.float32),
        'wfc': jnp.stack(wfc),
        'bfc': jnp.zeros((NUM_LAYERS, 1, MLP_DIM), jnp.float32),
        'wpr': jnp.stack(wpr),
        'bpr': jnp.zeros((NUM_LAYERS, 1, WIDTH), jnp.float32),
        'ln_post_g': jnp.ones((1, WIDTH), jnp.float32),
        'ln_post_b': jnp.zeros((1, WIDTH), jnp.float32),
        'proj': nrm_bf16((WIDTH, EMBED_DIM), scale=WIDTH ** -0.5),
        'fc1_w': nrm_bf16((EMBED_DIM, HIDDEN)),
        'fc1_b': jnp.zeros((1, HIDDEN), jnp.float32),
        'fc2_w': fc2_w.astype(jnp.bfloat16),
        'fc2_b': jnp.zeros((1, PAD_CLASSES), jnp.float32),
    }


# ------------------------------ forward pass ----------------------------------

def _image_to_token_rows(image, b_pad):
    """NCHW image -> (b_pad*S_PAD, C*PATCH*PATCH) bf16 patch rows (channel-major per
    patch, as Conv2d), with all-zero rows at the cls / pad token positions."""
    B, C, H, W = image.shape
    gh, gw = H // PATCH, W // PATCH
    n_patches = gh * gw
    assert n_patches + 1 <= S_PAD, "token count exceeds the padded sequence length"
    patch_dim = C * PATCH * PATCH
    patches = image.reshape(B, C, gh, PATCH, gw, PATCH)
    patches = patches.transpose(0, 2, 4, 1, 3, 5).reshape(B, n_patches, patch_dim)
    rows = jnp.zeros((b_pad, S_PAD, patch_dim), jnp.bfloat16)
    rows = rows.at[:B, 1:1 + n_patches].set(patches.astype(jnp.bfloat16))
    return rows.reshape(b_pad * S_PAD, patch_dim), n_patches + 1   # (rows, real seq len)


def image_classifier_forward(params, image, b_tile=DEFAULT_B_TILE):
    """image: (B, C, H, W) float32 NCHW, like the PyTorch module."""
    B = image.shape[0]
    # batch tile: multiple of 8 sublanes (BlockSpec rule), capped to the padded batch
    b_tile = min(_round_up(b_tile, 8), _round_up(B, 8))
    b_pad = _round_up(B, b_tile)
    num_tiles = b_pad // b_tile
    n_tile = b_tile * S_PAD

    patches, s_real = _image_to_token_rows(image, b_pad)
    patch_dim = patches.shape[-1]

    # cls token + positional embedding folded into one per-row additive bias.
    # Tiled only to ONE batch tile (constant index_map -> VMEM-resident, not B-scaled).
    tok_bias = params['pos'].at[0].add(params['cls'])          # (S_PAD, WIDTH)
    tok_bias = jnp.tile(tok_bias, (b_tile, 1))                 # (n_tile, WIDTH)

    weights = (params['conv_w'], params['ln_pre_g'], params['ln_pre_b'],
               params['ln1_g'], params['ln1_b'], params['wqkv'], params['bqkv'],
               params['wo'], params['bo'], params['ln2_g'], params['ln2_b'],
               params['wfc'], params['bfc'], params['wpr'], params['bpr'],
               params['ln_post_g'], params['ln_post_b'], params['proj'],
               params['fc1_w'], params['fc1_b'], params['fc2_w'], params['fc2_b'])

    in_specs = ([pl.BlockSpec((n_tile, patch_dim), lambda i: (i, 0)),       # streamed
                 pl.BlockSpec(tok_bias.shape, functools.partial(_const_index, 2))]
                + [pl.BlockSpec(wgt.shape, functools.partial(_const_index, wgt.ndim))
                   for wgt in weights])                                     # resident
    out_specs = pl.BlockSpec((b_tile, PAD_CLASSES), lambda i: (i, 0))

    kernel = functools.partial(
        _fused_vit_classifier_kernel, num_layers=NUM_LAYERS, num_heads=NUM_HEADS,
        b_tile=b_tile, s_real=s_real)

    logits_pad = pl.pallas_call(
        kernel,
        out_shape=jax.ShapeDtypeStruct((b_pad, PAD_CLASSES), jnp.float32),
        grid=(num_tiles,),
        in_specs=in_specs,
        out_specs=out_specs,
        compiler_params=pltpu.CompilerParams(
            dimension_semantics=("parallel",),          # batch tiles -> both v7x TCs
            vmem_limit_bytes=32 * 1024 * 1024),
    )(patches, tok_bias, *weights)
    return logits_pad[:B, :CLASS_NUM]      # strip batch + lane padding outside the kernel


# ----------------------------------- main -------------------------------------

if __name__ == "__main__":
    key = jax.random.PRNGKey(0)
    k_param, k_img = jax.random.split(key)
    params = init_params(k_param, class_num=CLASS_NUM)

    batch = 16
    image = jax.random.normal(k_img, (batch, IN_CH, IMG, IMG), dtype=jnp.float32)

    # b_tile=8 -> 2 grid steps of 64 token rows each (exercises the streamed batch axis);
    # production uses the default b_tile=32 (256-row matmuls).
    fwd = jax.jit(functools.partial(image_classifier_forward, b_tile=8))
    logits = fwd(params, image)
    jax.block_until_ready(logits)

    assert logits.shape == (batch, CLASS_NUM) and logits.dtype == jnp.float32
    assert bool(jnp.all(jnp.isfinite(logits)))
    print("KERNEL_OK")
</pallas_src>

<mosaic_0001>
module attributes {stable_mosaic.version = 11 : i64} {
  func.func @_fused_vit_classifier_kernel(%arg0: i32, %arg1: memref<64x768xbf16, #tpu.memory_space<vmem>>, %arg2: memref<64x128xf32, #tpu.memory_space<vmem>>, %arg3: memref<768x128xbf16, #tpu.memory_space<vmem>>, %arg4: memref<1x128xf32, #tpu.memory_space<vmem>>, %arg5: memref<1x128xf32, #tpu.memory_space<vmem>>, %arg6: memref<2x1x128xf32, #tpu.memory_space<vmem>>, %arg7: memref<2x1x128xf32, #tpu.memory_space<vmem>>, %arg8: memref<2x128x384xbf16, #tpu.memory_space<vmem>>, %arg9: memref<2x1x384xf32, #tpu.memory_space<vmem>>, %arg10: memref<2x128x128xbf16, #tpu.memory_space<vmem>>, %arg11: memref<2x1x128xf32, #tpu.memory_space<vmem>>, %arg12: memref<2x1x128xf32, #tpu.memory_space<vmem>>, %arg13: memref<2x1x128xf32, #tpu.memory_space<vmem>>, %arg14: memref<2x128x512xbf16, #tpu.memory_space<vmem>>, %arg15: memref<2x1x512xf32, #tpu.memory_space<vmem>>, %arg16: memref<2x512x128xbf16, #tpu.memory_space<vmem>>, %arg17: memref<2x1x128xf32, #tpu.memory_space<vmem>>, %arg18: memref<1x128xf32, #tpu.memory_space<vmem>>, %arg19: memref<1x128xf32, #tpu.memory_space<vmem>>, %arg20: memref<128x1024xbf16, #tpu.memory_space<vmem>>, %arg21: memref<1024x512xbf16, #tpu.memory_space<vmem>>, %arg22: memref<1x512xf32, #tpu.memory_space<vmem>>, %arg23: memref<512x128xbf16, #tpu.memory_space<vmem>>, %arg24: memref<1x128xf32, #tpu.memory_space<vmem>>, %arg25: memref<8x128xf32, #tpu.memory_space<vmem>>) attributes {dimension_semantics = [#tpu.dimension_semantics<parallel>], iteration_bounds = array<i64: 2>, scalar_prefetch = 0 : i64, scratch_operands = 0 : i64, tpu.core_type = #tpu.core_type<tc>, window_params = [{transform_indices = @transform_0, window_bounds = array<i64: 64, 768>}, {pipeline_mode = #tpu.pipeline_mode<synchronous>, transform_indices = @transform_1, window_bounds = array<i64: 64, 128>}, {pipeline_mode = #tpu.pipeline_mode<synchronous>, transform_indices = @transform_2, window_bounds = array<i64: 768, 128>}, {pipeline_mode = #tpu.pipeline_mode<synchronous>, transform_indices = @transform_3, window_bounds = array<i64: 1, 128>}, {pipeline_mode = #tpu.pipeline_mode<synchronous>, transform_indices = @transform_4, window_bounds = array<i64: 1, 128>}, {pipeline_mode = #tpu.pipeline_mode<synchronous>, transform_indices = @transform_5, window_bounds = array<i64: 2, 1, 128>}, {pipeline_mode = #tpu.pipeline_mode<synchronous>, transform_indices = @transform_6, window_bounds = array<i64: 2, 1, 128>}, {pipeline_mode = #tpu.pipeline_mode<synchronous>, transform_indices = @transform_7, window_bounds = array<i64: 2, 128, 384>}, {pipeline_mode = #tpu.pipeline_mode<synchronous>, transform_indices = @transform_8, window_bounds = array<i64: 2, 1, 384>}, {pipeline_mode = #tpu.pipeline_mode<synchronous>, transform_indices = @transform_9, window_bounds = array<i64: 2, 128, 128>}, {pipeline_mode = #tpu.pipeline_mode<synchronous>, transform_indices = @transform_10, window_bounds = array<i64: 2, 1, 128>}, {pipeline_mode = #tpu.pipeline_mode<synchronous>, transform_indices = @transform_11, window_bounds = array<i64: 2, 1, 128>}, {pipeline_mode = #tpu.pipeline_mode<synchronous>, transform_indices = @transform_12, window_bounds = array<i64: 2, 1, 128>}, {pipeline_mode = #tpu.pipeline_mode<synchronous>, transform_indices = @transform_13, window_bounds = array<i64: 2, 128, 512>}, {pipeline_mode = #tpu.pipeline_mode<synchronous>, transform_indices = @transform_14, window_bounds = array<i64: 2, 1, 512>}, {pipeline_mode = #tpu.pipeline_mode<synchronous>, transform_indices = @transform_15, window_bounds = array<i64: 2, 512, 128>}, {pipeline_mode = #tpu.pipeline_mode<synchronous>, transform_indices = @transform_16, window_bounds = array<i64: 2, 1, 128>}, {pipeline_mode = #tpu.pipeline_mode<synchronous>, transform_indices = @transform_17, window_bounds = array<i64: 1, 128>}, {pipeline_mode = #tpu.pipeline_mode<synchronous>, transform_indices = @transform_18, window_bounds = array<i64: 1, 128>}, {pipeline_mode = #tpu.pipeline_mode<synchronous>, transform_indices = @transform_19, window_bounds = array<i64: 128, 1024>}, {pipeline_mode = #tpu.pipeline_mode<synchronous>, transform_indices = @transform_20, window_bounds = array<i64: 1024, 512>}, {pipeline_mode = #tpu.pipeline_mode<synchronous>, transform_indices = @transform_21, window_bounds = array<i64: 1, 512>}, {pipeline_mode = #tpu.pipeline_mode<synchronous>, transform_indices = @transform_22, window_bounds = array<i64: 512, 128>}, {pipeline_mode = #tpu.pipeline_mode<synchronous>, transform_indices = @transform_23, window_bounds = array<i64: 1, 128>}, {transform_indices = @transform_24, window_bounds = array<i64: 8, 128>}]} {
    %c0 = arith.constant 0 : index
    %c0_0 = arith.constant 0 : index
    %0 = vector.load %arg1[%c0, %c0_0] : memref<64x768xbf16, #tpu.memory_space<vmem>>, vector<64x768xbf16>
    %c0_1 = arith.constant 0 : index
    %c0_2 = arith.constant 0 : index
    %1 = vector.load %arg3[%c0_1, %c0_2] : memref<768x128xbf16, #tpu.memory_space<vmem>>, vector<768x128xbf16>
    %cst = arith.constant dense<0.000000e+00> : vector<64x128xf32>
    %2 = tpu.matmul %0, %1, %cst {dimension_numbers = #tpu.dot_dimension_numbers<[1], [0], [0], [1], [0, 0, 1, 1], [], []>} : vector<64x768xbf16>, vector<768x128xbf16>, vector<64x128xf32> -> vector<64x128xf32>
    %c0_3 = arith.constant 0 : index
    %c0_4 = arith.constant 0 : index
    %3 = vector.load %arg2[%c0_3, %c0_4] : memref<64x128xf32, #tpu.memory_space<vmem>>, vector<64x128xf32>
    %4 = arith.addf %2, %3 : vector<64x128xf32>
    %c0_5 = arith.constant 0 : index
    %c0_6 = arith.constant 0 : index
    %5 = vector.load %arg4[%c0_5, %c0_6] : memref<1x128xf32, #tpu.memory_space<vmem>>, vector<1x128xf32>
    %c0_7 = arith.constant 0 : index
    %c0_8 = arith.constant 0 : index
    %6 = vector.load %arg5[%c0_7, %c0_8] : memref<1x128xf32, #tpu.memory_space<vmem>>, vector<1x128xf32>
    %cst_9 = arith.constant dense<0.000000e+00> : vector<64xf32>
    %7 = vector.multi_reduction <add>, %4, %cst_9 [1] : vector<64x128xf32> to vector<64xf32>
    %8 = vector.shape_cast %7 : vector<64xf32> to vector<64x1xf32>
    %cst_10 = arith.constant 1.280000e+02 : f32
    %9 = vector.broadcast %cst_10 : f32 to vector<64x1xf32>
    %10 = arith.divf %8, %9 : vector<64x1xf32>
    %11 = vector.broadcast %10 : vector<64x1xf32> to vector<64x128xf32>
    %12 = arith.subf %4, %11 : vector<64x128xf32>
    %13 = arith.mulf %12, %12 : vector<64x128xf32>
    %cst_11 = arith.constant dense<0.000000e+00> : vector<64xf32>
    %14 = vector.multi_reduction <add>, %13, %cst_11 [1] : vector<64x128xf32> to vector<64xf32>
    %15 = vector.shape_cast %14 : vector<64xf32> to vector<64x1xf32>
    %cst_12 = arith.constant 1.280000e+02 : f32
    %16 = vector.broadcast %cst_12 : f32 to vector<64x1xf32>
    %17 = arith.divf %15, %16 : vector<64x1xf32>
    %18 = vector.broadcast %10 : vector<64x1xf32> to vector<64x128xf32>
    %19 = arith.subf %4, %18 : vector<64x128xf32>
    %cst_13 = arith.constant 9.99999974E-6 : f32
    %20 = vector.broadcast %cst_13 : f32 to vector<64x1xf32>
    %21 = arith.addf %17, %20 : vector<64x1xf32>
    %22 = math.rsqrt %21 : vector<64x1xf32>
    %23 = vector.broadcast %22 : vector<64x1xf32> to vector<64x128xf32>
    %24 = arith.mulf %19, %23 : vector<64x128xf32>
    %25 = vector.broadcast %5 : vector<1x128xf32> to vector<64x128xf32>
    %26 = arith.mulf %24, %25 : vector<64x128xf32>
    %27 = vector.broadcast %6 : vector<1x128xf32> to vector<64x128xf32>
    %28 = arith.addf %26, %27 : vector<64x128xf32>
    %29 = tpu.iota {dimensions = array<i32: 0>} : vector<64x64xi32>
    %30 = tpu.iota {dimensions = array<i32: 1>} : vector<64x64xi32>
    %c3_i32 = arith.constant 3 : i32
    %31 = vector.broadcast %c3_i32 : i32 to vector<64x64xi32>
    %32 = arith.shrsi %29, %31 : vector<64x64xi32>
    %c3_i32_14 = arith.constant 3 : i32
    %33 = vector.broadcast %c3_i32_14 : i32 to vector<64x64xi32>
    %34 = arith.shrsi %30, %33 : vector<64x64xi32>
    %35 = arith.cmpi eq, %32, %34 : vector<64x64xi32>
    %c7_i32 = arith.constant 7 : i32
    %36 = vector.broadcast %c7_i32 : i32 to vector<64x64xi32>
    %37 = arith.andi %30, %36 : vector<64x64xi32>
    %c5_i32 = arith.constant 5 : i32
    %38 = vector.broadcast %c5_i32 : i32 to vector<64x64xi32>
    %39 = arith.cmpi slt, %37, %38 : vector<64x64xi32>
    %40 = arith.andi %35, %39 : vector<64x64xi1>
    %cst_15 = arith.constant 0.000000e+00 : f32
    %cst_16 = arith.constant -1.000000e+30 : f32
    %41 = vector.broadcast %cst_15 : f32 to vector<64x64xf32>
    %42 = vector.broadcast %cst_16 : f32 to vector<64x64xf32>
    %43 = arith.select %40, %41, %42 : vector<64x64xi1>, vector<64x64xf32>
    %44 = tpu.iota {dimensions = array<i32: 1>} : vector<64x128xi32>
    %c5_i32_17 = arith.constant 5 : i32
    %45 = vector.broadcast %c5_i32_17 : i32 to vector<64x128xi32>
    %46 = arith.shrsi %44, %45 : vector<64x128xi32>
    %c0_18 = arith.constant 0 : index
    %c0_19 = arith.constant 0 : index
    %c0_20 = arith.constant 0 : index
    %47 = vector.load %arg6[%c0_18, %c0_19, %c0_20] : memref<2x1x128xf32, #tpu.memory_space<vmem>>, vector<1x1x128xf32>
    %48 = vector.shape_cast %47 : vector<1x1x128xf32> to vector<1x128xf32>
    %c0_21 = arith.constant 0 : index
    %c0_22 = arith.constant 0 : index
    %c0_23 = arith.constant 0 : index
    %49 = vector.load %arg7[%c0_21, %c0_22, %c0_23] : memref<2x1x128xf32, #tpu.memory_space<vmem>>, vector<1x1x128xf32>
    %50 = vector.shape_cast %49 : vector<1x1x128xf32> to vector<1x128xf32>
    %cst_24 = arith.constant dense<0.000000e+00> : vector<64xf32>
    %51 = vector.multi_reduction <add>, %28, %cst_24 [1] : vector<64x128xf32> to vector<64xf32>
    %52 = vector.shape_cast %51 : vector<64xf32> to vector<64x1xf32>
    %cst_25 = arith.constant 1.280000e+02 : f32
    %53 = vector.broadcast %cst_25 : f32 to vector<64x1xf32>
    %54 = arith.divf %52, %53 : vector<64x1xf32>
    %55 = vector.broadcast %54 : vector<64x1xf32> to vector<64x128xf32>
    %56 = arith.subf %28, %55 : vector<64x128xf32>
    %57 = arith.mulf %56, %56 : vector<64x128xf32>
    %cst_26 = arith.constant dense<0.000000e+00> : vector<64xf32>
    %58 = vector.multi_reduction <add>, %57, %cst_26 [1] : vector<64x128xf32> to vector<64xf32>
    %59 = vector.shape_cast %58 : vector<64xf32> to vector<64x1xf32>
    %cst_27 = arith.constant 1.280000e+02 : f32
    %60 = vector.broadcast %cst_27 : f32 to vector<64x1xf32>
    %61 = arith.divf %59, %60 : vector<64x1xf32>
    %62 = vector.broadcast %54 : vector<64x1xf32> to vector<64x128xf32>
    %63 = arith.subf %28, %62 : vector<64x128xf32>
    %cst_28 = arith.constant 9.99999974E-6 : f32
    %64 = vector.broadcast %cst_28 : f32 to vector<64x1xf32>
    %65 = arith.addf %61, %64 : vector<64x1xf32>
    %66 = math.rsqrt %65 : vector<64x1xf32>
    %67 = vector.broadcast %66 : vector<64x1xf32> to vector<64x128xf32>
    %68 = arith.mulf %63, %67 : vector<64x128xf32>
    %69 = vector.broadcast %48 : vector<1x128xf32> to vector<64x128xf32>
    %70 = arith.mulf %68, %69 : vector<64x128xf32>
    %71 = vector.broadcast %50 : vector<1x128xf32> to vector<64x128xf32>
    %72 = arith.addf %70, %71 : vector<64x128xf32>
    %73 = arith.truncf %72 : vector<64x128xf32> to vector<64x128xbf16>
    %c0_29 = arith.constant 0 : index
    %c0_30 = arith.constant 0 : index
    %c0_31 = arith.constant 0 : index
    %74 = vector.load %arg8[%c0_29, %c0_30, %c0_31] : memref<2x128x384xbf16, #tpu.memory_space<vmem>>, vector<1x128x384xbf16>
    %75 = vector.shape_cast %74 : vector<1x128x384xbf16> to vector<128x384xbf16>
    %cst_32 = arith.constant dense<0.000000e+00> : vector<64x384xf32>
    %76 = tpu.matmul %73, %75, %cst_32 {dimension_numbers = #tpu.dot_dimension_numbers<[1], [0], [0], [1], [0, 0, 1, 1], [], []>} : vector<64x128xbf16>, vector<128x384xbf16>, vector<64x384xf32> -> vector<64x384xf32>
    %c0_33 = arith.constant 0 : index
    %c0_34 = arith.constant 0 : index
    %c0_35 = arith.constant 0 : index
    %77 = vector.load %arg9[%c0_33, %c0_34, %c0_35] : memref<2x1x384xf32, #tpu.memory_space<vmem>>, vector<1x1x384xf32>
    %78 = vector.shape_cast %77 : vector<1x1x384xf32> to vector<1x384xf32>
    %79 = vector.broadcast %78 : vector<1x384xf32> to vector<64x384xf32>
    %80 = arith.addf %76, %79 : vector<64x384xf32>
    %81 = vector.extract_strided_slice %80 {offsets = [0, 0], sizes = [64, 128], strides = [1, 1]} : vector<64x384xf32> to vector<64x128xf32>
    %82 = vector.extract_strided_slice %80 {offsets = [0, 128], sizes = [64, 128], strides = [1, 1]} : vector<64x384xf32> to vector<64x128xf32>
    %83 = arith.truncf %82 : vector<64x128xf32> to vector<64x128xbf16>
    %84 = vector.extract_strided_slice %80 {offsets = [0, 256], sizes = [64, 128], strides = [1, 1]} : vector<64x384xf32> to vector<64x128xf32>
    %85 = arith.truncf %84 : vector<64x128xf32> to vector<64x128xbf16>
    %c0_i32 = arith.constant 0 : i32
    %86 = vector.broadcast %c0_i32 : i32 to vector<64x128xi32>
    %87 = arith.cmpi eq, %46, %86 : vector<64x128xi32>
    %cst_36 = arith.constant 0.000000e+00 : f32
    %88 = vector.broadcast %cst_36 : f32 to vector<64x128xf32>
    %89 = arith.select %87, %81, %88 : vector<64x128xi1>, vector<64x128xf32>
    %90 = arith.truncf %89 : vector<64x128xf32> to vector<64x128xbf16>
    %cst_37 = arith.constant dense<0.000000e+00> : vector<64x64xf32>
    %91 = tpu.matmul %90, %83, %cst_37 {dimension_numbers = #tpu.dot_dimension_numbers<[1], [1], [0], [0], [0, 0, 1, 0], [], []>} : vector<64x128xbf16>, vector<64x128xbf16>, vector<64x64xf32> -> vector<64x64xf32>
    %92 = arith.addf %91, %43 : vector<64x64xf32>
    %cst_38 = arith.constant dense<0xFF800000> : vector<64xf32>
    %93 = vector.multi_reduction <maximumf>, %92, %cst_38 [1] : vector<64x64xf32> to vector<64xf32>
    %94 = vector.shape_cast %93 : vector<64xf32> to vector<64x1xf32>
    %95 = vector.broadcast %94 : vector<64x1xf32> to vector<64x64xf32>
    %96 = arith.subf %92, %95 : vector<64x64xf32>
    %97 = math.exp %96 : vector<64x64xf32>
    %cst_39 = arith.constant dense<0.000000e+00> : vector<64xf32>
    %98 = vector.multi_reduction <add>, %97, %cst_39 [1] : vector<64x64xf32> to vector<64xf32>
    %99 = vector.shape_cast %98 : vector<64xf32> to vector<64x1xf32>
    %100 = tpu.reciprocal %99 {approx = true} : vector<64x1xf32> -> vector<64x1xf32>
    %101 = vector.broadcast %100 : vector<64x1xf32> to vector<64x64xf32>
    %102 = arith.mulf %97, %101 : vector<64x64xf32>
    %103 = arith.truncf %102 : vector<64x64xf32> to vector<64x64xbf16>
    %cst_40 = arith.constant dense<0.000000e+00> : vector<64x128xf32>
    %104 = tpu.matmul %103, %85, %cst_40 {dimension_numbers = #tpu.dot_dimension_numbers<[1], [0], [0], [1], [0, 0, 1, 1], [], []>} : vector<64x64xbf16>, vector<64x128xbf16>, vector<64x128xf32> -> vector<64x128xf32>
    %cst_41 = arith.constant 0.000000e+00 : f32
    %105 = vector.broadcast %cst_41 : f32 to vector<64x128xf32>
    %106 = arith.select %87, %104, %105 : vector<64x128xi1>, vector<64x128xf32>
    %c1_i32 = arith.constant 1 : i32
    %107 = vector.broadcast %c1_i32 : i32 to vector<64x128xi32>
    %108 = arith.cmpi eq, %46, %107 : vector<64x128xi32>
    %cst_42 = arith.constant 0.000000e+00 : f32
    %109 = vector.broadcast %cst_42 : f32 to vector<64x128xf32>
    %110 = arith.select %108, %81, %109 : vector<64x128xi1>, vector<64x128xf32>
    %111 = arith.truncf %110 : vector<64x128xf32> to vector<64x128xbf16>
    %cst_43 = arith.constant dense<0.000000e+00> : vector<64x64xf32>
    %112 = tpu.matmul %111, %83, %cst_43 {dimension_numbers = #tpu.dot_dimension_numbers<[1], [1], [0], [0], [0, 0, 1, 0], [], []>} : vector<64x128xbf16>, vector<64x128xbf16>, vector<64x64xf32> -> vector<64x64xf32>
    %113 = arith.addf %112, %43 : vector<64x64xf32>
    %cst_44 = arith.constant dense<0xFF800000> : vector<64xf32>
    %114 = vector.multi_reduction <maximumf>, %113, %cst_44 [1] : vector<64x64xf32> to vector<64xf32>
    %115 = vector.shape_cast %114 : vector<64xf32> to vector<64x1xf32>
    %116 = vector.broadcast %115 : vector<64x1xf32> to vector<64x64xf32>
    %117 = arith.subf %113, %116 : vector<64x64xf32>
    %118 = math.exp %117 : vector<64x64xf32>
    %cst_45 = arith.constant dense<0.000000e+00> : vector<64xf32>
    %119 = vector.multi_reduction <add>, %118, %cst_45 [1] : vector<64x64xf32> to vector<64xf32>
    %120 = vector.shape_cast %119 : vector<64xf32> to vector<64x1xf32>
    %121 = tpu.reciprocal %120 {approx = true} : vector<64x1xf32> -> vector<64x1xf32>
    %122 = vector.broadcast %121 : vector<64x1xf32> to vector<64x64xf32>
    %123 = arith.mulf %118, %122 : vector<64x64xf32>
    %124 = arith.truncf %123 : vector<64x64xf32> to vector<64x64xbf16>
    %cst_46 = arith.constant dense<0.000000e+00> : vector<64x128xf32>
    %125 = tpu.matmul %124, %85, %cst_46 {dimension_numbers = #tpu.dot_dimension_numbers<[1], [0], [0], [1], [0, 0, 1, 1], [], []>} : vector<64x64xbf16>, vector<64x128xbf16>, vector<64x128xf32> -> vector<64x128xf32>
    %cst_47 = arith.constant 0.000000e+00 : f32
    %126 = vector.broadcast %cst_47 : f32 to vector<64x128xf32>
    %127 = arith.select %108, %125, %126 : vector<64x128xi1>, vector<64x128xf32>
    %128 = arith.addf %106, %127 : vector<64x128xf32>
    %c2_i32 = arith.constant 2 : i32
    %129 = vector.broadcast %c2_i32 : i32 to vector<64x128xi32>
    %130 = arith.cmpi eq, %46, %129 : vector<64x128xi32>
    %cst_48 = arith.constant 0.000000e+00 : f32
    %131 = vector.broadcast %cst_48 : f32 to vector<64x128xf32>
    %132 = arith.select %130, %81, %131 : vector<64x128xi1>, vector<64x128xf32>
    %133 = arith.truncf %132 : vector<64x128xf32> to vector<64x128xbf16>
    %cst_49 = arith.constant dense<0.000000e+00> : vector<64x64xf32>
    %134 = tpu.matmul %133, %83, %cst_49 {dimension_numbers = #tpu.dot_dimension_numbers<[1], [1], [0], [0], [0, 0, 1, 0], [], []>} : vector<64x128xbf16>, vector<64x128xbf16>, vector<64x64xf32> -> vector<64x64xf32>
    %135 = arith.addf %134, %43 : vector<64x64xf32>
    %cst_50 = arith.constant dense<0xFF800000> : vector<64xf32>
    %136 = vector.multi_reduction <maximumf>, %135, %cst_50 [1] : vector<64x64xf32> to vector<64xf32>
    %137 = vector.shape_cast %136 : vector<64xf32> to vector<64x1xf32>
    %138 = vector.broadcast %137 : vector<64x1xf32> to vector<64x64xf32>
    %139 = arith.subf %135, %138 : vector<64x64xf32>
    %140 = math.exp %139 : vector<64x64xf32>
    %cst_51 = arith.constant dense<0.000000e+00> : vector<64xf32>
    %141 = vector.multi_reduction <add>, %140, %cst_51 [1] : vector<64x64xf32> to vector<64xf32>
    %142 = vector.shape_cast %141 : vector<64xf32> to vector<64x1xf32>
    %143 = tpu.reciprocal %142 {approx = true} : vector<64x1xf32> -> vector<64x1xf32>
    %144 = vector.broadcast %143 : vector<64x1xf32> to vector<64x64xf32>
    %145 = arith.mulf %140, %144 : vector<64x64xf32>
    %146 = arith.truncf %145 : vector<64x64xf32> to vector<64x64xbf16>
    %cst_52 = arith.constant dense<0.000000e+00> : vector<64x128xf32>
    %147 = tpu.matmul %146, %85, %cst_52 {dimension_numbers = #tpu.dot_dimension_numbers<[1], [0], [0], [1], [0, 0, 1, 1], [], []>} : vector<64x64xbf16>, vector<64x128xbf16>, vector<64x128xf32> -> vector<64x128xf32>
    %cst_53 = arith.constant 0.000000e+00 : f32
    %148 = vector.broadcast %cst_53 : f32 to vector<64x128xf32>
    %149 = arith.select %130, %147, %148 : vector<64x128xi1>, vector<64x128xf32>
    %150 = arith.addf %128, %149 : vector<64x128xf32>
    %c3_i32_54 = arith.constant 3 : i32
    %151 = vector.broadcast %c3_i32_54 : i32 to vector<64x128xi32>
    %152 = arith.cmpi eq, %46, %151 : vector<64x128xi32>
    %cst_55 = arith.constant 0.000000e+00 : f32
    %153 = vector.broadcast %cst_55 : f32 to vector<64x128xf32>
    %154 = arith.select %152, %81, %153 : vector<64x128xi1>, vector<64x128xf32>
    %155 = arith.truncf %154 : vector<64x128xf32> to vector<64x128xbf16>
    %cst_56 = arith.constant dense<0.000000e+00> : vector<64x64xf32>
    %156 = tpu.matmul %155, %83, %cst_56 {dimension_numbers = #tpu.dot_dimension_numbers<[1], [1], [0], [0], [0, 0, 1, 0], [], []>} : vector<64x128xbf16>, vector<64x128xbf16>, vector<64x64xf32> -> vector<64x64xf32>
    %157 = arith.addf %156, %43 : vector<64x64xf32>
    %cst_57 = arith.constant dense<0xFF800000> : vector<64xf32>
    %158 = vector.multi_reduction <maximumf>, %157, %cst_57 [1] : vector<64x64xf32> to vector<64xf32>
    %159 = vector.shape_cast %158 : vector<64xf32> to vector<64x1xf32>
    %160 = vector.broadcast %159 : vector<64x1xf32> to vector<64x64xf32>
    %161 = arith.subf %157, %160 : vector<64x64xf32>
    %162 = math.exp %161 : vector<64x64xf32>
    %cst_58 = arith.constant dense<0.000000e+00> : vector<64xf32>
    %163 = vector.multi_reduction <add>, %162, %cst_58 [1] : vector<64x64xf32> to vector<64xf32>
    %164 = vector.shape_cast %163 : vector<64xf32> to vector<64x1xf32>
    %165 = tpu.reciprocal %164 {approx = true} : vector<64x1xf32> -> vector<64x1xf32>
    %166 = vector.broadcast %165 : vector<64x1xf32> to vector<64x64xf32>
    %167 = arith.mulf %162, %166 : vector<64x64xf32>
    %168 = arith.truncf %167 : vector<64x64xf32> to vector<64x64xbf16>
    %cst_59 = arith.constant dense<0.000000e+00> : vector<64x128xf32>
    %169 = tpu.matmul %168, %85, %cst_59 {dimension_numbers = #tpu.dot_dimension_numbers<[1], [0], [0], [1], [0, 0, 1, 1], [], []>} : vector<64x64xbf16>, vector<64x128xbf16>, vector<64x128xf32> -> vector<64x128xf32>
    %cst_60 = arith.constant 0.000000e+00 : f32
    %170 = vector.broadcast %cst_60 : f32 to vector<64x128xf32>
    %171 = arith.select %152, %169, %170 : vector<64x128xi1>, vector<64x128xf32>
    %172 = arith.addf %150, %171 : vector<64x128xf32>
    %173 = arith.truncf %172 : vector<64x128xf32> to vector<64x128xbf16>
    %c0_61 = arith.constant 0 : index
    %c0_62 = arith.constant 0 : index
    %c0_63 = arith.constant 0 : index
    %174 = vector.load %arg10[%c0_61, %c0_62, %c0_63] : memref<2x128x128xbf16, #tpu.memory_space<vmem>>, vector<1x128x128xbf16>
    %175 = vector.shape_cast %174 : vector<1x128x128xbf16> to vector<128x128xbf16>
    %cst_64 = arith.constant dense<0.000000e+00> : vector<64x128xf32>
    %176 = tpu.matmul %173, %175, %cst_64 {dimension_numbers = #tpu.dot_dimension_numbers<[1], [0], [0], [1], [0, 0, 1, 1], [], []>} : vector<64x128xbf16>, vector<128x128xbf16>, vector<64x128xf32> -> vector<64x128xf32>
    %177 = arith.addf %28, %176 : vector<64x128xf32>
    %c0_65 = arith.constant 0 : index
    %c0_66 = arith.constant 0 : index
    %c0_67 = arith.constant 0 : index
    %178 = vector.load %arg11[%c0_65, %c0_66, %c0_67] : memref<2x1x128xf32, #tpu.memory_space<vmem>>, vector<1x1x128xf32>
    %179 = vector.shape_cast %178 : vector<1x1x128xf32> to vector<1x128xf32>
    %180 = vector.broadcast %179 : vector<1x128xf32> to vector<64x128xf32>
    %181 = arith.addf %177, %180 : vector<64x128xf32>
    %c0_68 = arith.constant 0 : index
    %c0_69 = arith.constant 0 : index
    %c0_70 = arith.constant 0 : index
    %182 = vector.load %arg12[%c0_68, %c0_69, %c0_70] : memref<2x1x128xf32, #tpu.memory_space<vmem>>, vector<1x1x128xf32>
    %183 = vector.shape_cast %182 : vector<1x1x128xf32> to vector<1x128xf32>
    %c0_71 = arith.constant 0 : index
    %c0_72 = arith.constant 0 : index
    %c0_73 = arith.constant 0 : index
    %184 = vector.load %arg13[%c0_71, %c0_72, %c0_73] : memref<2x1x128xf32, #tpu.memory_space<vmem>>, vector<1x1x128xf32>
    %185 = vector.shape_cast %184 : vector<1x1x128xf32> to vector<1x128xf32>
    %cst_74 = arith.constant dense<0.000000e+00> : vector<64xf32>
    %186 = vector.multi_reduction <add>, %181, %cst_74 [1] : vector<64x128xf32> to vector<64xf32>
    %187 = vector.shape_cast %186 : vector<64xf32> to vector<64x1xf32>
    %cst_75 = arith.constant 1.280000e+02 : f32
    %188 = vector.broadcast %cst_75 : f32 to vector<64x1xf32>
    %189 = arith.divf %187, %188 : vector<64x1xf32>
    %190 = vector.broadcast %189 : vector<64x1xf32> to vector<64x128xf32>
    %191 = arith.subf %181, %190 : vector<64x128xf32>
    %192 = arith.mulf %191, %191 : vector<64x128xf32>
    %cst_76 = arith.constant dense<0.000000e+00> : vector<64xf32>
    %193 = vector.multi_reduction <add>, %192, %cst_76 [1] : vector<64x128xf32> to vector<64xf32>
    %194 = vector.shape_cast %193 : vector<64xf32> to vector<64x1xf32>
    %cst_77 = arith.constant 1.280000e+02 : f32
    %195 = vector.broadcast %cst_77 : f32 to vector<64x1xf32>
    %196 = arith.divf %194, %195 : vector<64x1xf32>
    %197 = vector.broadcast %189 : vector<64x1xf32> to vector<64x128xf32>
    %198 = arith.subf %181, %197 : vector<64x128xf32>
    %cst_78 = arith.constant 9.99999974E-6 : f32
    %199 = vector.broadcast %cst_78 : f32 to vector<64x1xf32>
    %200 = arith.addf %196, %199 : vector<64x1xf32>
    %201 = math.rsqrt %200 : vector<64x1xf32>
    %202 = vector.broadcast %201 : vector<64x1xf32> to vector<64x128xf32>
    %203 = arith.mulf %198, %202 : vector<64x128xf32>
    %204 = vector.broadcast %183 : vector<1x128xf32> to vector<64x128xf32>
    %205 = arith.mulf %203, %204 : vector<64x128xf32>
    %206 = vector.broadcast %185 : vector<1x128xf32> to vector<64x128xf32>
    %207 = arith.addf %205, %206 : vector<64x128xf32>
    %208 = arith.truncf %207 : vector<64x128xf32> to vector<64x128xbf16>
    %c0_79 = arith.constant 0 : index
    %c0_80 = arith.constant 0 : index
    %c0_81 = arith.constant 0 : index
    %209 = vector.load %arg14[%c0_79, %c0_80, %c0_81] : memref<2x128x512xbf16, #tpu.memory_space<vmem>>, vector<1x128x512xbf16>
    %210 = vector.shape_cast %209 : vector<1x128x512xbf16> to vector<128x512xbf16>
    %cst_82 = arith.constant dense<0.000000e+00> : vector<64x512xf32>
    %211 = tpu.matmul %208, %210, %cst_82 {dimension_numbers = #tpu.dot_dimension_numbers<[1], [0], [0], [1], [0, 0, 1, 1], [], []>} : vector<64x128xbf16>, vector<128x512xbf16>, vector<64x512xf32> -> vector<64x512xf32>
    %c0_83 = arith.constant 0 : index
    %c0_84 = arith.constant 0 : index
    %c0_85 = arith.constant 0 : index
    %212 = vector.load %arg15[%c0_83, %c0_84, %c0_85] : memref<2x1x512xf32, #tpu.memory_space<vmem>>, vector<1x1x512xf32>
    %213 = vector.shape_cast %212 : vector<1x1x512xf32> to vector<1x512xf32>
    %214 = vector.broadcast %213 : vector<1x512xf32> to vector<64x512xf32>
    %215 = arith.addf %211, %214 : vector<64x512xf32>
    %216 = arith.mulf %215, %215 : vector<64x512xf32>
    %217 = arith.mulf %215, %216 : vector<64x512xf32>
    %cst_86 = arith.constant 4.471500e-02 : f32
    %218 = vector.broadcast %cst_86 : f32 to vector<64x512xf32>
    %219 = arith.mulf %218, %217 : vector<64x512xf32>
    %220 = arith.addf %215, %219 : vector<64x512xf32>
    %cst_87 = arith.constant 0.797884583 : f32
    %221 = vector.broadcast %cst_87 : f32 to vector<64x512xf32>
    %222 = arith.mulf %221, %220 : vector<64x512xf32>
    %223 = math.tanh %222 : vector<64x512xf32>
    %cst_88 = arith.constant 1.000000e+00 : f32
    %224 = vector.broadcast %cst_88 : f32 to vector<64x512xf32>
    %225 = arith.addf %224, %223 : vector<64x512xf32>
    %cst_89 = arith.constant 5.000000e-01 : f32
    %226 = vector.broadcast %cst_89 : f32 to vector<64x512xf32>
    %227 = arith.mulf %226, %225 : vector<64x512xf32>
    %228 = arith.mulf %215, %227 : vector<64x512xf32>
    %229 = arith.truncf %228 : vector<64x512xf32> to vector<64x512xbf16>
    %c0_90 = arith.constant 0 : index
    %c0_91 = arith.constant 0 : index
    %c0_92 = arith.constant 0 : index
    %230 = vector.load %arg16[%c0_90, %c0_91, %c0_92] : memref<2x512x128xbf16, #tpu.memory_space<vmem>>, vector<1x512x128xbf16>
    %231 = vector.shape_cast %230 : vector<1x512x128xbf16> to vector<512x128xbf16>
    %cst_93 = arith.constant dense<0.000000e+00> : vector<64x128xf32>
    %232 = tpu.matmul %229, %231, %cst_93 {dimension_numbers = #tpu.dot_dimension_numbers<[1], [0], [0], [1], [0, 0, 1, 1], [], []>} : vector<64x512xbf16>, vector<512x128xbf16>, vector<64x128xf32> -> vector<64x128xf32>
    %233 = arith.addf %181, %232 : vector<64x128xf32>
    %c0_94 = arith.constant 0 : index
    %c0_95 = arith.constant 0 : index
    %c0_96 = arith.constant 0 : index
    %234 = vector.load %arg17[%c0_94, %c0_95, %c0_96] : memref<2x1x128xf32, #tpu.memory_space<vmem>>, vector<1x1x128xf32>
    %235 = vector.shape_cast %234 : vector<1x1x128xf32> to vector<1x128xf32>
    %236 = vector.broadcast %235 : vector<1x128xf32> to vector<64x128xf32>
    %237 = arith.addf %233, %236 : vector<64x128xf32>
    %c1 = arith.constant 1 : index
    %c0_97 = arith.constant 0 : index
    %c0_98 = arith.constant 0 : index
    %238 = vector.load %arg6[%c1, %c0_97, %c0_98] : memref<2x1x128xf32, #tpu.memory_space<vmem>>, vector<1x1x128xf32>
    %239 = vector.shape_cast %238 : vector<1x1x128xf32> to vector<1x128xf32>
    %c1_99 = arith.constant 1 : index
    %c0_100 = arith.constant 0 : index
    %c0_101 = arith.constant 0 : index
    %240 = vector.load %arg7[%c1_99, %c0_100, %c0_101] : memref<2x1x128xf32, #tpu.memory_space<vmem>>, vector<1x1x128xf32>
    %241 = vector.shape_cast %240 : vector<1x1x128xf32> to vector<1x128xf32>
    %cst_102 = arith.constant dense<0.000000e+00> : vector<64xf32>
    %242 = vector.multi_reduction <add>, %237, %cst_102 [1] : vector<64x128xf32> to vector<64xf32>
    %243 = vector.shape_cast %242 : vector<64xf32> to vector<64x1xf32>
    %cst_103 = arith.constant 1.280000e+02 : f32
    %244 = vector.broadcast %cst_103 : f32 to vector<64x1xf32>
    %245 = arith.divf %243, %244 : vector<64x1xf32>
    %246 = vector.broadcast %245 : vector<64x1xf32> to vector<64x128xf32>
    %247 = arith.subf %237, %246 : vector<64x128xf32>
    %248 = arith.mulf %247, %247 : vector<64x128xf32>
    %cst_104 = arith.constant dense<0.000000e+00> : vector<64xf32>
    %249 = vector.multi_reduction <add>, %248, %cst_104 [1] : vector<64x128xf32> to vector<64xf32>
    %250 = vector.shape_cast %249 : vector<64xf32> to vector<64x1xf32>
    %cst_105 = arith.constant 1.280000e+02 : f32
    %251 = vector.broadcast %cst_105 : f32 to vector<64x1xf32>
    %252 = arith.divf %250, %251 : vector<64x1xf32>
    %253 = vector.broadcast %245 : vector<64x1xf32> to vector<64x128xf32>
    %254 = arith.subf %237, %253 : vector<64x128xf32>
    %cst_106 = arith.constant 9.99999974E-6 : f32
    %255 = vector.broadcast %cst_106 : f32 to vector<64x1xf32>
    %256 = arith.addf %252, %255 : vector<64x1xf32>
    %257 = math.rsqrt %256 : vector<64x1xf32>
    %258 = vector.broadcast %257 : vector<64x1xf32> to vector<64x128xf32>
    %259 = arith.mulf %254, %258 : vector<64x128xf32>
    %260 = vector.broadcast %239 : vector<1x128xf32> to vector<64x128xf32>
    %261 = arith.mulf %259, %260 : vector<64x128xf32>
    %262 = vector.broadcast %241 : vector<1x128xf32> to vector<64x128xf32>
    %263 = arith.addf %261, %262 : vector<64x128xf32>
    %264 = arith.truncf %263 : vector<64x128xf32> to vector<64x128xbf16>
    %c1_107 = arith.constant 1 : index
    %c0_108 = arith.constant 0 : index
    %c0_109 = arith.constant 0 : index
    %265 = vector.load %arg8[%c1_107, %c0_108, %c0_109] : memref<2x128x384xbf16, #tpu.memory_space<vmem>>, vector<1x128x384xbf16>
    %266 = vector.shape_cast %265 : vector<1x128x384xbf16> to vector<128x384xbf16>
    %cst_110 = arith.constant dense<0.000000e+00> : vector<64x384xf32>
    %267 = tpu.matmul %264, %266, %cst_110 {dimension_numbers = #tpu.dot_dimension_numbers<[1], [0], [0], [1], [0, 0, 1, 1], [], []>} : vector<64x128xbf16>, vector<128x384xbf16>, vector<64x384xf32> -> vector<64x384xf32>
    %c1_111 = arith.constant 1 : index
    %c0_112 = arith.constant 0 : index
    %c0_113 = arith.constant 0 : index
    %268 = vector.load %arg9[%c1_111, %c0_112, %c0_113] : memref<2x1x384xf32, #tpu.memory_space<vmem>>, vector<1x1x384xf32>
    %269 = vector.shape_cast %268 : vector<1x1x384xf32> to vector<1x384xf32>
    %270 = vector.broadcast %269 : vector<1x384xf32> to vector<64x384xf32>
    %271 = arith.addf %267, %270 : vector<64x384xf32>
    %272 = vector.extract_strided_slice %271 {offsets = [0, 0], sizes = [64, 128], strides = [1, 1]} : vector<64x384xf32> to vector<64x128xf32>
    %273 = vector.extract_strided_slice %271 {offsets = [0, 128], sizes = [64, 128], strides = [1, 1]} : vector<64x384xf32> to vector<64x128xf32>
    %274 = arith.truncf %273 : vector<64x128xf32> to vector<64x128xbf16>
    %275 = vector.extract_strided_slice %271 {offsets = [0, 256], sizes = [64, 128], strides = [1, 1]} : vector<64x384xf32> to vector<64x128xf32>
    %276 = arith.truncf %275 : vector<64x128xf32> to vector<64x128xbf16>
    %c0_i32_114 = arith.constant 0 : i32
    %277 = vector.broadcast %c0_i32_114 : i32 to vector<64x128xi32>
    %278 = arith.cmpi eq, %46, %277 : vector<64x128xi32>
    %cst_115 = arith.constant 0.000000e+00 : f32
    %279 = vector.broadcast %cst_115 : f32 to vector<64x128xf32>
    %280 = arith.select %278, %272, %279 : vector<64x128xi1>, vector<64x128xf32>
    %281 = arith.truncf %280 : vector<64x128xf32> to vector<64x128xbf16>
    %cst_116 = arith.constant dense<0.000000e+00> : vector<64x64xf32>
    %282 = tpu.matmul %281, %274, %cst_116 {dimension_numbers = #tpu.dot_dimension_numbers<[1], [1], [0], [0], [0, 0, 1, 0], [], []>} : vector<64x128xbf16>, vector<64x128xbf16>, vector<64x64xf32> -> vector<64x64xf32>
    %283 = arith.addf %282, %43 : vector<64x64xf32>
    %cst_117 = arith.constant dense<0xFF800000> : vector<64xf32>
    %284 = vector.multi_reduction <maximumf>, %283, %cst_117 [1] : vector<64x64xf32> to vector<64xf32>
    %285 = vector.shape_cast %284 : vector<64xf32> to vector<64x1xf32>
    %286 = vector.broadcast %285 : vector<64x1xf32> to vector<64x64xf32>
    %287 = arith.subf %283, %286 : vector<64x64xf32>
    %288 = math.exp %287 : vector<64x64xf32>
    %cst_118 = arith.constant dense<0.000000e+00> : vector<64xf32>
    %289 = vector.multi_reduction <add>, %288, %cst_118 [1] : vector<64x64xf32> to vector<64xf32>
    %290 = vector.shape_cast %289 : vector<64xf32> to vector<64x1xf32>
    %291 = tpu.reciprocal %290 {approx = true} : vector<64x1xf32> -> vector<64x1xf32>
    %292 = vector.broadcast %291 : vector<64x1xf32> to vector<64x64xf32>
    %293 = arith.mulf %288, %292 : vector<64x64xf32>
    %294 = arith.truncf %293 : vector<64x64xf32> to vector<64x64xbf16>
    %cst_119 = arith.constant dense<0.000000e+00> : vector<64x128xf32>
    %295 = tpu.matmul %294, %276, %cst_119 {dimension_numbers = #tpu.dot_dimension_numbers<[1], [0], [0], [1], [0, 0, 1, 1], [], []>} : vector<64x64xbf16>, vector<64x128xbf16>, vector<64x128xf32> -> vector<64x128xf32>
    %cst_120 = arith.constant 0.000000e+00 : f32
    %296 = vector.broadcast %cst_120 : f32 to vector<64x128xf32>
    %297 = arith.select %278, %295, %296 : vector<64x128xi1>, vector<64x128xf32>
    %c1_i32_121 = arith.constant 1 : i32
    %298 = vector.broadcast %c1_i32_121 : i32 to vector<64x128xi32>
    %299 = arith.cmpi eq, %46, %298 : vector<64x128xi32>
    %cst_122 = arith.constant 0.000000e+00 : f32
    %300 = vector.broadcast %cst_122 : f32 to vector<64x128xf32>
    %301 = arith.select %299, %272, %300 : vector<64x128xi1>, vector<64x128xf32>
    %302 = arith.truncf %301 : vector<64x128xf32> to vector<64x128xbf16>
    %cst_123 = arith.constant dense<0.000000e+00> : vector<64x64xf32>
    %303 = tpu.matmul %302, %274, %cst_123 {dimension_numbers = #tpu.dot_dimension_numbers<[1], [1], [0], [0], [0, 0, 1, 0], [], []>} : vector<64x128xbf16>, vector<64x128xbf16>, vector<64x64xf32> -> vector<64x64xf32>
    %304 = arith.addf %303, %43 : vector<64x64xf32>
    %cst_124 = arith.constant dense<0xFF800000> : vector<64xf32>
    %305 = vector.multi_reduction <maximumf>, %304, %cst_124 [1] : vector<64x64xf32> to vector<64xf32>
    %306 = vector.shape_cast %305 : vector<64xf32> to vector<64x1xf32>
    %307 = vector.broadcast %306 : vector<64x1xf32> to vector<64x64xf32>
    %308 = arith.subf %304, %307 : vector<64x64xf32>
    %309 = math.exp %308 : vector<64x64xf32>
    %cst_125 = arith.constant dense<0.000000e+00> : vector<64xf32>
    %310 = vector.multi_reduction <add>, %309, %cst_125 [1] : vector<64x64xf32> to vector<64xf32>
    %311 = vector.shape_cast %310 : vector<64xf32> to vector<64x1xf32>
    %312 = tpu.reciprocal %311 {approx = true} : vector<64x1xf32> -> vector<64x1xf32>
    %313 = vector.broadcast %312 : vector<64x1xf32> to vector<64x64xf32>
    %314 = arith.mulf %309, %313 : vector<64x64xf32>
    %315 = arith.truncf %314 : vector<64x64xf32> to vector<64x64xbf16>
    %cst_126 = arith.constant dense<0.000000e+00> : vector<64x128xf32>
    %316 = tpu.matmul %315, %276, %cst_126 {dimension_numbers = #tpu.dot_dimension_numbers<[1], [0], [0], [1], [0, 0, 1, 1], [], []>} : vector<64x64xbf16>, vector<64x128xbf16>, vector<64x128xf32> -> vector<64x128xf32>
    %cst_127 = arith.constant 0.000000e+00 : f32
    %317 = vector.broadcast %cst_127 : f32 to vector<64x128xf32>
    %318 = arith.select %299, %316, %317 : vector<64x128xi1>, vector<64x128xf32>
    %319 = arith.addf %297, %318 : vector<64x128xf32>
    %c2_i32_128 = arith.constant 2 : i32
    %320 = vector.broadcast %c2_i32_128 : i32 to vector<64x128xi32>
    %321 = arith.cmpi eq, %46, %320 : vector<64x128xi32>
    %cst_129 = arith.constant 0.000000e+00 : f32
    %322 = vector.broadcast %cst_129 : f32 to vector<64x128xf32>
    %323 = arith.select %321, %272, %322 : vector<64x128xi1>, vector<64x128xf32>
    %324 = arith.truncf %323 : vector<64x128xf32> to vector<64x128xbf16>
    %cst_130 = arith.constant dense<0.000000e+00> : vector<64x64xf32>
    %325 = tpu.matmul %324, %274, %cst_130 {dimension_numbers = #tpu.dot_dimension_numbers<[1], [1], [0], [0], [0, 0, 1, 0], [], []>} : vector<64x128xbf16>, vector<64x128xbf16>, vector<64x64xf32> -> vector<64x64xf32>
    %326 = arith.addf %325, %43 : vector<64x64xf32>
    %cst_131 = arith.constant dense<0xFF800000> : vector<64xf32>
    %327 = vector.multi_reduction <maximumf>, %326, %cst_131 [1] : vector<64x64xf32> to vector<64xf32>
    %328 = vector.shape_cast %327 : vector<64xf32> to vector<64x1xf32>
    %329 = vector.broadcast %328 : vector<64x1xf32> to vector<64x64xf32>
    %330 = arith.subf %326, %329 : vector<64x64xf32>
    %331 = math.exp %330 : vector<64x64xf32>
    %cst_132 = arith.constant dense<0.000000e+00> : vector<64xf32>
    %332 = vector.multi_reduction <add>, %331, %cst_132 [1] : vector<64x64xf32> to vector<64xf32>
    %333 = vector.shape_cast %332 : vector<64xf32> to vector<64x1xf32>
    %334 = tpu.reciprocal %333 {approx = true} : vector<64x1xf32> -> vector<64x1xf32>
    %335 = vector.broadcast %334 : vector<64x1xf32> to vector<64x64xf32>
    %336 = arith.mulf %331, %335 : vector<64x64xf32>
    %337 = arith.truncf %336 : vector<64x64xf32> to vector<64x64xbf16>
    %cst_133 = arith.constant dense<0.000000e+00> : vector<64x128xf32>
    %338 = tpu.matmul %337, %276, %cst_133 {dimension_numbers = #tpu.dot_dimension_numbers<[1], [0], [0], [1], [0, 0, 1, 1], [], []>} : vector<64x64xbf16>, vector<64x128xbf16>, vector<64x128xf32> -> vector<64x128xf32>
    %cst_134 = arith.constant 0.000000e+00 : f32
    %339 = vector.broadcast %cst_134 : f32 to vector<64x128xf32>
    %340 = arith.select %321, %338, %339 : vector<64x128xi1>, vector<64x128xf32>
    %341 = arith.addf %319, %340 : vector<64x128xf32>
    %c3_i32_135 = arith.constant 3 : i32
    %342 = vector.broadcast %c3_i32_135 : i32 to vector<64x128xi32>
    %343 = arith.cmpi eq, %46, %342 : vector<64x128xi32>
    %cst_136 = arith.constant 0.000000e+00 : f32
    %344 = vector.broadcast %cst_136 : f32 to vector<64x128xf32>
    %345 = arith.select %343, %272, %344 : vector<64x128xi1>, vector<64x128xf32>
    %346 = arith.truncf %345 : vector<64x128xf32> to vector<64x128xbf16>
    %cst_137 = arith.constant dense<0.000000e+00> : vector<64x64xf32>
    %347 = tpu.matmul %346, %274, %cst_137 {dimension_numbers = #tpu.dot_dimension_numbers<[1], [1], [0], [0], [0, 0, 1, 0], [], []>} : vector<64x128xbf16>, vector<64x128xbf16>, vector<64x64xf32> -> vector<64x64xf32>
    %348 = arith.addf %347, %43 : vector<64x64xf32>
    %cst_138 = arith.constant dense<0xFF800000> : vector<64xf32>
    %349 = vector.multi_reduction <maximumf>, %348, %cst_138 [1] : vector<64x64xf32> to vector<64xf32>
    %350 = vector.shape_cast %349 : vector<64xf32> to vector<64x1xf32>
    %351 = vector.broadcast %350 : vector<64x1xf32> to vector<64x64xf32>
    %352 = arith.subf %348, %351 : vector<64x64xf32>
    %353 = math.exp %352 : vector<64x64xf32>
    %cst_139 = arith.constant dense<0.000000e+00> : vector<64xf32>
    %354 = vector.multi_reduction <add>, %353, %cst_139 [1] : vector<64x64xf32> to vector<64xf32>
    %355 = vector.shape_cast %354 : vector<64xf32> to vector<64x1xf32>
    %356 = tpu.reciprocal %355 {approx = true} : vector<64x1xf32> -> vector<64x1xf32>
    %357 = vector.broadcast %356 : vector<64x1xf32> to vector<64x64xf32>
    %358 = arith.mulf %353, %357 : vector<64x64xf32>
    %359 = arith.truncf %358 : vector<64x64xf32> to vector<64x64xbf16>
    %cst_140 = arith.constant dense<0.000000e+00> : vector<64x128xf32>
    %360 = tpu.matmul %359, %276, %cst_140 {dimension_numbers = #tpu.dot_dimension_numbers<[1], [0], [0], [1], [0, 0, 1, 1], [], []>} : vector<64x64xbf16>, vector<64x128xbf16>, vector<64x128xf32> -> vector<64x128xf32>
    %cst_141 = arith.constant 0.000000e+00 : f32
    %361 = vector.broadcast %cst_141 : f32 to vector<64x128xf32>
    %362 = arith.select %343, %360, %361 : vector<64x128xi1>, vector<64x128xf32>
    %363 = arith.addf %341, %362 : vector<64x128xf32>
    %364 = arith.truncf %363 : vector<64x128xf32> to vector<64x128xbf16>
    %c1_142 = arith.constant 1 : index
    %c0_143 = arith.constant 0 : index
    %c0_144 = arith.constant 0 : index
    %365 = vector.load %arg10[%c1_142, %c0_143, %c0_144] : memref<2x128x128xbf16, #tpu.memory_space<vmem>>, vector<1x128x128xbf16>
    %366 = vector.shape_cast %365 : vector<1x128x128xbf16> to vector<128x128xbf16>
    %cst_145 = arith.constant dense<0.000000e+00> : vector<64x128xf32>
    %367 = tpu.matmul %364, %366, %cst_145 {dimension_numbers = #tpu.dot_dimension_numbers<[1], [0], [0], [1], [0, 0, 1, 1], [], []>} : vector<64x128xbf16>, vector<128x128xbf16>, vector<64x128xf32> -> vector<64x128xf32>
    %368 = arith.addf %237, %367 : vector<64x128xf32>
    %c1_146 = arith.constant 1 : index
    %c0_147 = arith.constant 0 : index
    %c0_148 = arith.constant 0 : index
    %369 = vector.load %arg11[%c1_146, %c0_147, %c0_148] : memref<2x1x128xf32, #tpu.memory_space<vmem>>, vector<1x1x128xf32>
    %370 = vector.shape_cast %369 : vector<1x1x128xf32> to vector<1x128xf32>
    %371 = vector.broadcast %370 : vector<1x128xf32> to vector<64x128xf32>
    %372 = arith.addf %368, %371 : vector<64x128xf32>
    %c1_149 = arith.constant 1 : index
    %c0_150 = arith.constant 0 : index
    %c0_151 = arith.constant 0 : index
    %373 = vector.load %arg12[%c1_149, %c0_150, %c0_151] : memref<2x1x128xf32, #tpu.memory_space<vmem>>, vector<1x1x128xf32>
    %374 = vector.shape_cast %373 : vector<1x1x128xf32> to vector<1x128xf32>
    %c1_152 = arith.constant 1 : index
    %c0_153 = arith.constant 0 : index
    %c0_154 = arith.constant 0 : index
    %375 = vector.load %arg13[%c1_152, %c0_153, %c0_154] : memref<2x1x128xf32, #tpu.memory_space<vmem>>, vector<1x1x128xf32>
    %376 = vector.shape_cast %375 : vector<1x1x128xf32> to vector<1x128xf32>
    %cst_155 = arith.constant dense<0.000000e+00> : vector<64xf32>
    %377 = vector.multi_reduction <add>, %372, %cst_155 [1] : vector<64x128xf32> to vector<64xf32>
    %378 = vector.shape_cast %377 : vector<64xf32> to vector<64x1xf32>
    %cst_156 = arith.constant 1.280000e+02 : f32
    %379 = vector.broadcast %cst_156 : f32 to vector<64x1xf32>
    %380 = arith.divf %378, %379 : vector<64x1xf32>
    %381 = vector.broadcast %380 : vector<64x1xf32> to vector<64x128xf32>
    %382 = arith.subf %372, %381 : vector<64x128xf32>
    %383 = arith.mulf %382, %382 : vector<64x128xf32>
    %cst_157 = arith.constant dense<0.000000e+00> : vector<64xf32>
    %384 = vector.multi_reduction <add>, %383, %cst_157 [1] : vector<64x128xf32> to vector<64xf32>
    %385 = vector.shape_cast %384 : vector<64xf32> to vector<64x1xf32>
    %cst_158 = arith.constant 1.280000e+02 : f32
    %386 = vector.broadcast %cst_158 : f32 to vector<64x1xf32>
    %387 = arith.divf %385, %386 : vector<64x1xf32>
    %388 = vector.broadcast %380 : vector<64x1xf32> to vector<64x128xf32>
    %389 = arith.subf %372, %388 : vector<64x128xf32>
    %cst_159 = arith.constant 9.99999974E-6 : f32
    %390 = vector.broadcast %cst_159 : f32 to vector<64x1xf32>
    %391 = arith.addf %387, %390 : vector<64x1xf32>
    %392 = math.rsqrt %391 : vector<64x1xf32>
    %393 = vector.broadcast %392 : vector<64x1xf32> to vector<64x128xf32>
    %394 = arith.mulf %389, %393 : vector<64x128xf32>
    %395 = vector.broadcast %374 : vector<1x128xf32> to vector<64x128xf32>
    %396 = arith.mulf %394, %395 : vector<64x128xf32>
    %397 = vector.broadcast %376 : vector<1x128xf32> to vector<64x128xf32>
    %398 = arith.addf %396, %397 : vector<64x128xf32>
    %399 = arith.truncf %398 : vector<64x128xf32> to vector<64x128xbf16>
    %c1_160 = arith.constant 1 : index
    %c0_161 = arith.constant 0 : index
    %c0_162 = arith.constant 0 : index
    %400 = vector.load %arg14[%c1_160, %c0_161, %c0_162] : memref<2x128x512xbf16, #tpu.memory_space<vmem>>, vector<1x128x512xbf16>
    %401 = vector.shape_cast %400 : vector<1x128x512xbf16> to vector<128x512xbf16>
    %cst_163 = arith.constant dense<0.000000e+00> : vector<64x512xf32>
    %402 = tpu.matmul %399, %401, %cst_163 {dimension_numbers = #tpu.dot_dimension_numbers<[1], [0], [0], [1], [0, 0, 1, 1], [], []>} : vector<64x128xbf16>, vector<128x512xbf16>, vector<64x512xf32> -> vector<64x512xf32>
    %c1_164 = arith.constant 1 : index
    %c0_165 = arith.constant 0 : index
    %c0_166 = arith.constant 0 : index
    %403 = vector.load %arg15[%c1_164, %c0_165, %c0_166] : memref<2x1x512xf32, #tpu.memory_space<vmem>>, vector<1x1x512xf32>
    %404 = vector.shape_cast %403 : vector<1x1x512xf32> to vector<1x512xf32>
    %405 = vector.broadcast %404 : vector<1x512xf32> to vector<64x512xf32>
    %406 = arith.addf %402, %405 : vector<64x512xf32>
    %407 = arith.mulf %406, %406 : vector<64x512xf32>
    %408 = arith.mulf %406, %407 : vector<64x512xf32>
    %cst_167 = arith.constant 4.471500e-02 : f32
    %409 = vector.broadcast %cst_167 : f32 to vector<64x512xf32>
    %410 = arith.mulf %409, %408 : vector<64x512xf32>
    %411 = arith.addf %406, %410 : vector<64x512xf32>
    %cst_168 = arith.constant 0.797884583 : f32
    %412 = vector.broadcast %cst_168 : f32 to vector<64x512xf32>
    %413 = arith.mulf %412, %411 : vector<64x512xf32>
    %414 = math.tanh %413 : vector<64x512xf32>
    %cst_169 = arith.constant 1.000000e+00 : f32
    %415 = vector.broadcast %cst_169 : f32 to vector<64x512xf32>
    %416 = arith.addf %415, %414 : vector<64x512xf32>
    %cst_170 = arith.constant 5.000000e-01 : f32
    %417 = vector.broadcast %cst_170 : f32 to vector<64x512xf32>
    %418 = arith.mulf %417, %416 : vector<64x512xf32>
    %419 = arith.mulf %406, %418 : vector<64x512xf32>
    %420 = arith.truncf %419 : vector<64x512xf32> to vector<64x512xbf16>
    %c1_171 = arith.constant 1 : index
    %c0_172 = arith.constant 0 : index
    %c0_173 = arith.constant 0 : index
    %421 = vector.load %arg16[%c1_171, %c0_172, %c0_173] : memref<2x512x128xbf16, #tpu.memory_space<vmem>>, vector<1x512x128xbf16>
    %422 = vector.shape_cast %421 : vector<1x512x128xbf16> to vector<512x128xbf16>
    %cst_174 = arith.constant dense<0.000000e+00> : vector<64x128xf32>
    %423 = tpu.matmul %420, %422, %cst_174 {dimension_numbers = #tpu.dot_dimension_numbers<[1], [0], [0], [1], [0, 0, 1, 1], [], []>} : vector<64x512xbf16>, vector<512x128xbf16>, vector<64x128xf32> -> vector<64x128xf32>
    %424 = arith.addf %372, %423 : vector<64x128xf32>
    %c1_175 = arith.constant 1 : index
    %c0_176 = arith.constant 0 : index
    %c0_177 = arith.constant 0 : index
    %425 = vector.load %arg17[%c1_175, %c0_176, %c0_177] : memref<2x1x128xf32, #tpu.memory_space<vmem>>, vector<1x1x128xf32>
    %426 = vector.shape_cast %425 : vector<1x1x128xf32> to vector<1x128xf32>
    %427 = vector.broadcast %426 : vector<1x128xf32> to vector<64x128xf32>
    %428 = arith.addf %424, %427 : vector<64x128xf32>
    %429 = tpu.iota {dimensions = array<i32: 0>} : vector<8x64xi32>
    %430 = tpu.iota {dimensions = array<i32: 1>} : vector<8x64xi32>
    %c8_i32 = arith.constant 8 : i32
    %431 = vector.broadcast %c8_i32 : i32 to vector<8x64xi32>
    %432 = arith.muli %429, %431 : vector<8x64xi32>
    %433 = arith.cmpi eq, %430, %432 : vector<8x64xi32>
    %434 = arith.extui %433 : vector<8x64xi1> to vector<8x64xi32>
    %435 = arith.sitofp %434 : vector<8x64xi32> to vector<8x64xf32>
    %436 = arith.truncf %435 : vector<8x64xf32> to vector<8x64xbf16>
    %437 = arith.truncf %428 : vector<64x128xf32> to vector<64x128xbf16>
    %cst_178 = arith.constant dense<0.000000e+00> : vector<8x128xf32>
    %438 = tpu.matmul %436, %437, %cst_178 {dimension_numbers = #tpu.dot_dimension_numbers<[1], [0], [0], [1], [0, 0, 1, 1], [], []>} : vector<8x64xbf16>, vector<64x128xbf16>, vector<8x128xf32> -> vector<8x128xf32>
    %c0_179 = arith.constant 0 : index
    %c0_180 = arith.constant 0 : index
    %439 = vector.load %arg18[%c0_179, %c0_180] : memref<1x128xf32, #tpu.memory_space<vmem>>, vector<1x128xf32>
    %c0_181 = arith.constant 0 : index
    %c0_182 = arith.constant 0 : index
    %440 = vector.load %arg19[%c0_181, %c0_182] : memref<1x128xf32, #tpu.memory_space<vmem>>, vector<1x128xf32>
    %cst_183 = arith.constant dense<0.000000e+00> : vector<8xf32>
    %441 = vector.multi_reduction <add>, %438, %cst_183 [1] : vector<8x128xf32> to vector<8xf32>
    %442 = vector.shape_cast %441 : vector<8xf32> to vector<8x1xf32>
    %cst_184 = arith.constant 1.280000e+02 : f32
    %443 = vector.broadcast %cst_184 : f32 to vector<8x1xf32>
    %444 = arith.divf %442, %443 : vector<8x1xf32>
    %445 = vector.broadcast %444 : vector<8x1xf32> to vector<8x128xf32>
    %446 = arith.subf %438, %445 : vector<8x128xf32>
    %447 = arith.mulf %446, %446 : vector<8x128xf32>
    %cst_185 = arith.constant dense<0.000000e+00> : vector<8xf32>
    %448 = vector.multi_reduction <add>, %447, %cst_185 [1] : vector<8x128xf32> to vector<8xf32>
    %449 = vector.shape_cast %448 : vector<8xf32> to vector<8x1xf32>
    %cst_186 = arith.constant 1.280000e+02 : f32
    %450 = vector.broadcast %cst_186 : f32 to vector<8x1xf32>
    %451 = arith.divf %449, %450 : vector<8x1xf32>
    %452 = vector.broadcast %444 : vector<8x1xf32> to vector<8x128xf32>
    %453 = arith.subf %438, %452 : vector<8x128xf32>
    %cst_187 = arith.constant 9.99999974E-6 : f32
    %454 = vector.broadcast %cst_187 : f32 to vector<8x1xf32>
    %455 = arith.addf %451, %454 : vector<8x1xf32>
    %456 = math.rsqrt %455 : vector<8x1xf32>
    %457 = vector.broadcast %456 : vector<8x1xf32> to vector<8x128xf32>
    %458 = arith.mulf %453, %457 : vector<8x128xf32>
    %459 = vector.broadcast %439 : vector<1x128xf32> to vector<8x128xf32>
    %460 = arith.mulf %458, %459 : vector<8x128xf32>
    %461 = vector.broadcast %440 : vector<1x128xf32> to vector<8x128xf32>
    %462 = arith.addf %460, %461 : vector<8x128xf32>
    %463 = arith.truncf %462 : vector<8x128xf32> to vector<8x128xbf16>
    %c0_188 = arith.constant 0 : index
    %c0_189 = arith.constant 0 : index
    %464 = vector.load %arg20[%c0_188, %c0_189] : memref<128x1024xbf16, #tpu.memory_space<vmem>>, vector<128x1024xbf16>
    %cst_190 = arith.constant dense<0.000000e+00> : vector<8x1024xf32>
    %465 = tpu.matmul %463, %464, %cst_190 {dimension_numbers = #tpu.dot_dimension_numbers<[1], [0], [0], [1], [0, 0, 1, 1], [], []>} : vector<8x128xbf16>, vector<128x1024xbf16>, vector<8x1024xf32> -> vector<8x1024xf32>
    %466 = arith.truncf %465 : vector<8x1024xf32> to vector<8x1024xbf16>
    %c0_191 = arith.constant 0 : index
    %c0_192 = arith.constant 0 : index
    %467 = vector.load %arg21[%c0_191, %c0_192] : memref<1024x512xbf16, #tpu.memory_space<vmem>>, vector<1024x512xbf16>
    %cst_193 = arith.constant dense<0.000000e+00> : vector<8x512xf32>
    %468 = tpu.matmul %466, %467, %cst_193 {dimension_numbers = #tpu.dot_dimension_numbers<[1], [0], [0], [1], [0, 0, 1, 1], [], []>} : vector<8x1024xbf16>, vector<1024x512xbf16>, vector<8x512xf32> -> vector<8x512xf32>
    %c0_194 = arith.constant 0 : index
    %c0_195 = arith.constant 0 : index
    %469 = vector.load %arg22[%c0_194, %c0_195] : memref<1x512xf32, #tpu.memory_space<vmem>>, vector<1x512xf32>
    %470 = vector.broadcast %469 : vector<1x512xf32> to vector<8x512xf32>
    %471 = arith.addf %468, %470 : vector<8x512xf32>
    %cst_196 = arith.constant 0.000000e+00 : f32
    %472 = vector.broadcast %cst_196 : f32 to vector<8x512xf32>
    %473 = arith.maximumf %471, %472 : vector<8x512xf32>
    %474 = arith.truncf %473 : vector<8x512xf32> to vector<8x512xbf16>
    %c0_197 = arith.constant 0 : index
    %c0_198 = arith.constant 0 : index
    %475 = vector.load %arg23[%c0_197, %c0_198] : memref<512x128xbf16, #tpu.memory_space<vmem>>, vector<512x128xbf16>
    %cst_199 = arith.constant dense<0.000000e+00> : vector<8x128xf32>
    %476 = tpu.matmul %474, %475, %cst_199 {dimension_numbers = #tpu.dot_dimension_numbers<[1], [0], [0], [1], [0, 0, 1, 1], [], []>} : vector<8x512xbf16>, vector<512x128xbf16>, vector<8x128xf32> -> vector<8x128xf32>
    %c0_200 = arith.constant 0 : index
    %c0_201 = arith.constant 0 : index
    %477 = vector.load %arg24[%c0_200, %c0_201] : memref<1x128xf32, #tpu.memory_space<vmem>>, vector<1x128xf32>
    %478 = vector.broadcast %477 : vector<1x128xf32> to vector<8x128xf32>
    %479 = arith.addf %476, %478 : vector<8x128xf32>
    %c0_202 = arith.constant 0 : index
    %c0_203 = arith.constant 0 : index
    %480 = vector.load %arg25[%c0_202, %c0_203] : memref<8x128xf32, #tpu.memory_space<vmem>>, vector<8x128xf32>
    tpu.vector_store %arg25[%c0_202, %c0_203], %479 {strides = array<i32>} : memref<8x128xf32, #tpu.memory_space<vmem>>, vector<8x128xf32>,
    return
  }
  func.func @transform_0(%arg0: i32) -> (i32, i32) {
    %c0_i32 = arith.constant 0 : i32
    %c0_i32_0 = arith.constant 0 : i32
    return %arg0, %c0_i32 : i32, i32
  }
  func.func @transform_1(%arg0: i32) -> (i32, i32) {
    %c0_i32 = arith.constant 0 : i32
    %c0_i32_0 = arith.constant 0 : i32
    %c0_i32_1 = arith.constant 0 : i32
    return %c0_i32, %c0_i32_0 : i32, i32
  }
  func.func @transform_2(%arg0: i32) -> (i32, i32) {
    %c0_i32 = arith.constant 0 : i32
    %c0_i32_0 = arith.constant 0 : i32
    %c0_i32_1 = arith.constant 0 : i32
    return %c0_i32, %c0_i32_0 : i32, i32
  }
  func.func @transform_3(%arg0: i32) -> (i32, i32) {
    %c0_i32 = arith.constant 0 : i32
    %c0_i32_0 = arith.constant 0 : i32
    %c0_i32_1 = arith.constant 0 : i32
    return %c0_i32, %c0_i32_0 : i32, i32
  }
  func.func @transform_4(%arg0: i32) -> (i32, i32) {
    %c0_i32 = arith.constant 0 : i32
    %c0_i32_0 = arith.constant 0 : i32
    %c0_i32_1 = arith.constant 0 : i32
    return %c0_i32, %c0_i32_0 : i32, i32
  }
  func.func @transform_5(%arg0: i32) -> (i32, i32, i32) {
    %c0_i32 = arith.constant 0 : i32
    %c0_i32_0 = arith.constant 0 : i32
    %c0_i32_1 = arith.constant 0 : i32
    %c0_i32_2 = arith.constant 0 : i32
    return %c0_i32, %c0_i32_0, %c0_i32_1 : i32, i32, i32
  }
  func.func @transform_6(%arg0: i32) -> (i32, i32, i32) {
    %c0_i32 = arith.constant 0 : i32
    %c0_i32_0 = arith.constant 0 : i32
    %c0_i32_1 = arith.constant 0 : i32
    %c0_i32_2 = arith.constant 0 : i32
    return %c0_i32, %c0_i32_0, %c0_i32_1 : i32, i32, i32
  }
  func.func @transform_7(%arg0: i32) -> (i32, i32, i32) {
    %c0_i32 = arith.constant 0 : i32
    %c0_i32_0 = arith.constant 0 : i32
    %c0_i32_1 = arith.constant 0 : i32
    %c0_i32_2 = arith.constant 0 : i32
    return %c0_i32, %c0_i32_0, %c0_i32_1 : i32, i32, i32
  }
  func.func @transform_8(%arg0: i32) -> (i32, i32, i32) {
    %c0_i32 = arith.constant 0 : i32
    %c0_i32_0 = arith.constant 0 : i32
    %c0_i32_1 = arith.constant 0 : i32
    %c0_i32_2 = arith.constant 0 : i32
    return %c0_i32, %c0_i32_0, %c0_i32_1 : i32, i32, i32
  }
  func.func @transform_9(%arg0: i32) -> (i32, i32, i32) {
    %c0_i32 = arith.constant 0 : i32
    %c0_i32_0 = arith.constant 0 : i32
    %c0_i32_1 = arith.constant 0 : i32
    %c0_i32_2 = arith.constant 0 : i32
    return %c0_i32, %c0_i32_0, %c0_i32_1 : i32, i32, i32
  }
  func.func @transform_10(%arg0: i32) -> (i32, i32, i32) {
    %c0_i32 = arith.constant 0 : i32
    %c0_i32_0 = arith.constant 0 : i32
    %c0_i32_1 = arith.constant 0 : i32
    %c0_i32_2 = arith.constant 0 : i32
    return %c0_i32, %c0_i32_0, %c0_i32_1 : i32, i32, i32
  }
  func.func @transform_11(%arg0: i32) -> (i32, i32, i32) {
    %c0_i32 = arith.constant 0 : i32
    %c0_i32_0 = arith.constant 0 : i32
    %c0_i32_1 = arith.constant 0 : i32
    %c0_i32_2 = arith.constant 0 : i32
    return %c0_i32, %c0_i32_0, %c0_i32_1 : i32, i32, i32
  }
  func.func @transform_12(%arg0: i32) -> (i32, i32, i32) {
    %c0_i32 = arith.constant 0 : i32
    %c0_i32_0 = arith.constant 0 : i32
    %c0_i32_1 = arith.constant 0 : i32
    %c0_i32_2 = arith.constant 0 : i32
    return %c0_i32, %c0_i32_0, %c0_i32_1 : i32, i32, i32
  }
  func.func @transform_13(%arg0: i32) -> (i32, i32, i32) {
    %c0_i32 = arith.constant 0 : i32
    %c0_i32_0 = arith.constant 0 : i32
    %c0_i32_1 = arith.constant 0 : i32
    %c0_i32_2 = arith.constant 0 : i32
    return %c0_i32, %c0_i32_0, %c0_i32_1 : i32, i32, i32
  }
  func.func @transform_14(%arg0: i32) -> (i32, i32, i32) {
    %c0_i32 = arith.constant 0 : i32
    %c0_i32_0 = arith.constant 0 : i32
    %c0_i32_1 = arith.constant 0 : i32
    %c0_i32_2 = arith.constant 0 : i32
    return %c0_i32, %c0_i32_0, %c0_i32_1 : i32, i32, i32
  }
  func.func @transform_15(%arg0: i32) -> (i32, i32, i32) {
    %c0_i32 = arith.constant 0 : i32
    %c0_i32_0 = arith.constant 0 : i32
    %c0_i32_1 = arith.constant 0 : i32
    %c0_i32_2 = arith.constant 0 : i32
    return %c0_i32, %c0_i32_0, %c0_i32_1 : i32, i32, i32
  }
  func.func @transform_16(%arg0: i32) -> (i32, i32, i32) {
    %c0_i32 = arith.constant 0 : i32
    %c0_i32_0 = arith.constant 0 : i32
    %c0_i32_1 = arith.constant 0 : i32
    %c0_i32_2 = arith.constant 0 : i32
    return %c0_i32, %c0_i32_0, %c0_i32_1 : i32, i32, i32
  }
  func.func @transform_17(%arg0: i32) -> (i32, i32) {
    %c0_i32 = arith.constant 0 : i32
    %c0_i32_0 = arith.constant 0 : i32
    %c0_i32_1 = arith.constant 0 : i32
    return %c0_i32, %c0_i32_0 : i32, i32
  }
  func.func @transform_18(%arg0: i32) -> (i32, i32) {
    %c0_i32 = arith.constant 0 : i32
    %c0_i32_0 = arith.constant 0 : i32
    %c0_i32_1 = arith.constant 0 : i32
    return %c0_i32, %c0_i32_0 : i32, i32
  }
  func.func @transform_19(%arg0: i32) -> (i32, i32) {
    %c0_i32 = arith.constant 0 : i32
    %c0_i32_0 = arith.constant 0 : i32
    %c0_i32_1 = arith.constant 0 : i32
    return %c0_i32, %c0_i32_0 : i32, i32
  }
  func.func @transform_20(%arg0: i32) -> (i32, i32) {
    %c0_i32 = arith.constant 0 : i32
    %c0_i32_0 = arith.constant 0 : i32
    %c0_i32_1 = arith.constant 0 : i32
    return %c0_i32, %c0_i32_0 : i32, i32
  }
  func.func @transform_21(%arg0: i32) -> (i32, i32) {
    %c0_i32 = arith.constant 0 : i32
    %c0_i32_0 = arith.constant 0 : i32
    %c0_i32_1 = arith.constant 0 : i32
    return %c0_i32, %c0_i32_0 : i32, i32
  }
  func.func @transform_22(%arg0: i32) -> (i32, i32) {
    %c0_i32 = arith.constant 0 : i32
    %c0_i32_0 = arith.constant 0 : i32
    %c0_i32_1 = arith.constant 0 : i32
    return %c0_i32, %c0_i32_0 : i32, i32
  }
  func.func @transform_23(%arg0: i32) -> (i32, i32) {
    %c0_i32 = arith.constant 0 : i32
    %c0_i32_0 = arith.constant 0 : i32
    %c0_i32_1 = arith.constant 0 : i32
    return %c0_i32, %c0_i32_0 : i32, i32
  }
  func.func @transform_24(%arg0: i32) -> (i32, i32) {
    %c0_i32 = arith.constant 0 : i32
    %c0_i32_0 = arith.constant 0 : i32
    return %arg0, %c0_i32 : i32, i32
  }
}

</mosaic_0001>

<llo_original>
// kernel: image_classifier_forward.1
$region0: #{image_classifier_forward.1}
  #allocation0 [shape = 'u32[]', space=smem, size = 0x4, offset = 0x4, fixed_abs, tag = 'smem constant byte address 0x4 - core index']
  #allocation1 [shape = 'u32[144,128]{1,0:T(1,128)}', space=vmem, size = 0x12000, scoped, tag = 'internal scratch']
  %s0 = inlined_call_operand.vmem [shape: bf16[128,768], index: 0, kind: input, shape index: {}]
  %s1 = inlined_call_operand.vmem [shape: f32[64,128], index: 1, kind: input, shape index: {}]
  %s2 = inlined_call_operand.vmem [shape: bf16[768,128], index: 2, kind: input, shape index: {}]
  %s3 = inlined_call_operand.vmem [shape: f32[1,128], index: 3, kind: input, shape index: {}]
  %s4 = inlined_call_operand.vmem [shape: f32[1,128], index: 4, kind: input, shape index: {}]
  %s5 = inlined_call_operand.vmem [shape: f32[2,1,128], index: 5, kind: input, shape index: {}]
  %s6 = inlined_call_operand.vmem [shape: f32[2,1,128], index: 6, kind: input, shape index: {}]
  %s7 = inlined_call_operand.vmem [shape: bf16[2,128,384], index: 7, kind: input, shape index: {}]
  %s8 = inlined_call_operand.vmem [shape: f32[2,1,384], index: 8, kind: input, shape index: {}]
  %s9 = inlined_call_operand.vmem [shape: bf16[2,128,128], index: 9, kind: input, shape index: {}]
  %s10 = inlined_call_operand.vmem [shape: f32[2,1,128], index: 10, kind: input, shape index: {}]
  %s11 = inlined_call_operand.vmem [shape: f32[2,1,128], index: 11, kind: input, shape index: {}]
  %s12 = inlined_call_operand.vmem [shape: f32[2,1,128], index: 12, kind: input, shape index: {}]
  %s13 = inlined_call_operand.vmem [shape: bf16[2,128,512], index: 13, kind: input, shape index: {}]
  %s14 = inlined_call_operand.vmem [shape: f32[2,1,512], index: 14, kind: input, shape index: {}]
  %s15 = inlined_call_operand.vmem [shape: bf16[2,512,128], index: 15, kind: input, shape index: {}]
  %s16 = inlined_call_operand.vmem [shape: f32[2,1,128], index: 16, kind: input, shape index: {}]
  %s17 = inlined_call_operand.vmem [shape: f32[1,128], index: 17, kind: input, shape index: {}]
  %s18 = inlined_call_operand.vmem [shape: f32[1,128], index: 18, kind: input, shape index: {}]
  %s19 = inlined_call_operand.vmem [shape: bf16[128,1024], index: 19, kind: input, shape index: {}]
  %s20 = inlined_call_operand.vmem [shape: bf16[1024,512], index: 20, kind: input, shape index: {}]
  %s21 = inlined_call_operand.vmem [shape: f32[1,512], index: 21, kind: input, shape index: {}]
  %s22 = inlined_call_operand.vmem [shape: bf16[512,128], index: 22, kind: input, shape index: {}]
  %s23 = inlined_call_operand.vmem [shape: f32[1,128], index: 23, kind: input, shape index: {}]
  %s24 = inlined_call_operand.hbm [shape: f32[16,128], index: 24, kind: output, shape index: {}]
  %s25 = sld [smem:[#allocation0]]
  $region129: #{image_classifier_forward.1} parent=0
    _
  %s27 = ssub.s32 1, %s25
  %s28 = scalar_select 0, %s27, %s25
  $region1: #{image_classifier_forward.1} parent=0
    #allocation2 [shape = 'u8[8192]{0}', space=vmem, size = 0x2000, scoped, tag = 'output window, operand 0']
    #allocation3 [shape = 's32[2]{0}', space=sflag, size = 0x8, scoped, tag = 'scoped memory for image_classifier_forward.1']
    %29 = vsyncpa [#allocation3], 0
    %s30 = scalar_lea.sflag [#allocation3], 1
    %31 = vsyncpa %s30, 0
    loop: start=0, step=1, limit=4
    $region2: #{image_classifier_forward.1} parent=1 // loop_pre_header
      _
    $region3: #{image_classifier_forward.1} parent=1 // loop_header
      %s33 = sphi 0, %s37
      %p34 = scmp.ge.s32.totalorder %s33, 4
      %s43 = sphi 0, %s45
      %s46 = sphi 0, %s43
      %s47 = sphi 0, %s46
      %s63 = sphi 0, %s47
      %s67 = sphi 0, %s67
      %s69 = sphi 0, %s67
      %s70 = sphi 0, %s69
      %s84 = sphi 0, %s70
      %s88 = sphi 0, %s88
      %s90 = sphi 0, %s88
      %s91 = sphi 0, %s90
      %s105 = sphi 0, %s91
      %s109 = sphi 0, %s109
      %s111 = sphi 0, %s109
      %s112 = sphi 0, %s111
      %s126 = sphi 0, %s112
      %s130 = sphi 0, %s130
      %s132 = sphi 0, %s130
      %s133 = sphi 0, %s132
      %s147 = sphi 0, %s133
      %s151 = sphi 0, %s151
      %s153 = sphi 0, %s151
      %s154 = sphi 0, %s153
      %s168 = sphi 0, %s154
      %s172 = sphi 0, %s172
      %s174 = sphi 0, %s172
      %s175 = sphi 0, %s174
      %s189 = sphi 0, %s175
      %s193 = sphi 0, %s193
      %s195 = sphi 0, %s193
      %s196 = sphi 0, %s195
      %s210 = sphi 0, %s196
      %s214 = sphi 0, %s214
      %s216 = sphi 0, %s214
      %s217 = sphi 0, %s216
      %s231 = sphi 0, %s217
      %s235 = sphi 0, %s235
      %s237 = sphi 0, %s235
      %s238 = sphi 0, %s237
      %s252 = sphi 0, %s238
      %s256 = sphi 0, %s256
      %s258 = sphi 0, %s256
      %s259 = sphi 0, %s258
      %s273 = sphi 0, %s259
      %s277 = sphi 0, %s277
      %s279 = sphi 0, %s277
      %s280 = sphi 0, %s279
      %s294 = sphi 0, %s280
      %s298 = sphi 0, %s298
      %s300 = sphi 0, %s298
      %s301 = sphi 0, %s300
      %s315 = sphi 0, %s301
      %s319 = sphi 0, %s319
      %s321 = sphi 0, %s319
      %s322 = sphi 0, %s321
      %s336 = sphi 0, %s322
      %s340 = sphi 0, %s340
      %s342 = sphi 0, %s340
      %s343 = sphi 0, %s342
      %s357 = sphi 0, %s343
      %s361 = sphi 0, %s361
      %s363 = sphi 0, %s361
      %s364 = sphi 0, %s363
      %s378 = sphi 0, %s364
      %s382 = sphi 0, %s382
      %s384 = sphi 0, %s382
      %s385 = sphi 0, %s384
      %s399 = sphi 0, %s385
      %s403 = sphi 0, %s403
      %s405 = sphi 0, %s403
      %s406 = sphi 0, %s405
      %s420 = sphi 0, %s406
      %s424 = sphi 0, %s424
      %s426 = sphi 0, %s424
      %s427 = sphi 0, %s426
      %s441 = sphi 0, %s427
      %s445 = sphi 0, %s445
      %s447 = sphi 0, %s445
      %s448 = sphi 0, %s447
      %s462 = sphi 0, %s448
      %s466 = sphi 0, %s466
      %s468 = sphi 0, %s466
      %s469 = sphi 0, %s468
      %s483 = sphi 0, %s469
      %s487 = sphi 0, %s487
      %s489 = sphi 0, %s487
      %s490 = sphi 0, %s489
      %s504 = sphi 0, %s490
      %s508 = sphi 0, %s508
      %s510 = sphi 0, %s508
      %s511 = sphi 0, %s510
      %s525 = sphi 0, %s511
      %s529 = sphi 0, %s529
      %s531 = sphi 0, %s529
      %s532 = sphi 0, %s531
      %s546 = sphi 0, %s532
      %s552 = sphi 0, %s554
      %s555 = sphi 0, %s552
      %s556 = sphi 0, %s555
      %s572 = sphi 0, %s556
    $region4: #{image_classifier_forward.1} parent=1 // loop_header_branch
      %36 = sbr.rel (%p34) target = $region8
    $region5: #{image_classifier_forward.1} parent=1 // loop_body
      %s38 = ssub.s32 %s33, 1
      %s39 = ssub.s32 %s33, 2
      %s40 = sadd.s32 %s33, 1
      %s41 = ssub.s32 %s33, %s40
      %p42 = scmp.eq.s32.totalorder %s41, 0
      %s44 = sadd.s32 %s43, 1
      %s45 = scalar_select %p42, %s43, %s44
      %p48 = pneg %p42
      %p49 = scmp.eq.s32.totalorder %s33, 1
      %p50 = por %p48, %p49
      %p51 = scmp.ne.s32.totalorder %s43, %s46
      %p52 = scmp.eq.s32.totalorder %s33, 0
      %p53 = por %p51, %p52
      %p54 = scmp.ne.s32.totalorder %s43, %s46
      %p55 = scmp.eq.s32.totalorder %s38, 1
      %p56 = por %p54, %p55
      %p57 = scmp.ne.s32.totalorder %s46, %s47
      %p58 = scmp.eq.s32.totalorder %s38, 0
      %p59 = por %p57, %p58
      %p60 = scmp.ne.s32.totalorder %s46, %s47
      %p61 = scmp.eq.s32.totalorder %s39, 1
      %p62 = por %p60, %p61
      %p64 = scmp.ne.s32.totalorder %s47, %s63
      %p65 = scmp.eq.s32.totalorder %s39, 0
      %p66 = por %p64, %p65
      %s68 = sadd.s32 %s67, 1
      %p71 = scmp.eq.s32.totalorder %s33, 1
      %p72 = scmp.ne.s32.totalorder %s67, %s69
      %p73 = scmp.eq.s32.totalorder %s33, 0
      %p74 = por %p72, %p73
      %p75 = scmp.ne.s32.totalorder %s67, %s69
      %p76 = scmp.eq.s32.totalorder %s38, 1
      %p77 = por %p75, %p76
      %p78 = scmp.ne.s32.totalorder %s69, %s70
      %p79 = scmp.eq.s32.totalorder %s38, 0
      %p80 = por %p78, %p79
      %p81 = scmp.ne.s32.totalorder %s69, %s70
      %p82 = scmp.eq.s32.totalorder %s39, 1
      %p83 = por %p81, %p82
      %p85 = scmp.ne.s32.totalorder %s70, %s84
      %p86 = scmp.eq.s32.totalorder %s39, 0
      %p87 = por %p85, %p86
      %s89 = sadd.s32 %s88, 1
      %p92 = scmp.eq.s32.totalorder %s33, 1
      %p93 = scmp.ne.s32.totalorder %s88, %s90
      %p94 = scmp.eq.s32.totalorder %s33, 0
      %p95 = por %p93, %p94
      %p96 = scmp.ne.s32.totalorder %s88, %s90
      %p97 = scmp.eq.s32.totalorder %s38, 1
      %p98 = por %p96, %p97
      %p99 = scmp.ne.s32.totalorder %s90, %s91
      %p100 = scmp.eq.s32.totalorder %s38, 0
      %p101 = por %p99, %p100
      %p102 = scmp.ne.s32.totalorder %s90, %s91
      %p103 = scmp.eq.s32.totalorder %s39, 1
      %p104 = por %p102, %p103
      %p106 = scmp.ne.s32.totalorder %s91, %s105
      %p107 = scmp.eq.s32.totalorder %s39, 0
      %p108 = por %p106, %p107
      %s110 = sadd.s32 %s109, 1
      %p113 = scmp.eq.s32.totalorder %s33, 1
      %p114 = scmp.ne.s32.totalorder %s109, %s111
      %p115 = scmp.eq.s32.totalorder %s33, 0
      %p116 = por %p114, %p115
      %p117 = scmp.ne.s32.totalorder %s109, %s111
      %p118 = scmp.eq.s32.totalorder %s38, 1
      %p119 = por %p117, %p118
      %p120 = scmp.ne.s32.totalorder %s111, %s112
      %p121 = scmp.eq.s32.totalorder %s38, 0
      %p122 = por %p120, %p121
      %p123 = scmp.ne.s32.totalorder %s111, %s112
      %p124 = scmp.eq.s32.totalorder %s39, 1
      %p125 = por %p123, %p124
      %p127 = scmp.ne.s32.totalorder %s112, %s126
      %p128 = scmp.eq.s32.totalorder %s39, 0
      %p129 = por %p127, %p128
      %s131 = sadd.s32 %s130, 1
      %p134 = scmp.eq.s32.totalorder %s33, 1
      %p135 = scmp.ne.s32.totalorder %s130, %s132
      %p136 = scmp.eq.s32.totalorder %s33, 0
      %p137 = por %p135, %p136
      %p138 = scmp.ne.s32.totalorder %s130, %s132
      %p139 = scmp.eq.s32.totalorder %s38, 1
      %p140 = por %p138, %p139
      %p141 = scmp.ne.s32.totalorder %s132, %s133
      %p142 = scmp.eq.s32.totalorder %s38, 0
      %p143 = por %p141, %p142
      %p144 = scmp.ne.s32.totalorder %s132, %s133
      %p145 = scmp.eq.s32.totalorder %s39, 1
      %p146 = por %p144, %p145
      %p148 = scmp.ne.s32.totalorder %s133, %s147
      %p149 = scmp.eq.s32.totalorder %s39, 0
      %p150 = por %p148, %p149
      %s152 = sadd.s32 %s151, 1
      %p155 = scmp.eq.s32.totalorder %s33, 1
      %p156 = scmp.ne.s32.totalorder %s151, %s153
      %p157 = scmp.eq.s32.totalorder %s33, 0
      %p158 = por %p156, %p157
      %p159 = scmp.ne.s32.totalorder %s151, %s153
      %p160 = scmp.eq.s32.totalorder %s38, 1
      %p161 = por %p159, %p160
      %p162 = scmp.ne.s32.totalorder %s153, %s154
      %p163 = scmp.eq.s32.totalorder %s38, 0
      %p164 = por %p162, %p163
      %p165 = scmp.ne.s32.totalorder %s153, %s154
      %p166 = scmp.eq.s32.totalorder %s39, 1
      %p167 = por %p165, %p166
      %p169 = scmp.ne.s32.totalorder %s154, %s168
      %p170 = scmp.eq.s32.totalorder %s39, 0
      %p171 = por %p169, %p170
      %s173 = sadd.s32 %s172, 1
      %p176 = scmp.eq.s32.totalorder %s33, 1
      %p177 = scmp.ne.s32.totalorder %s172, %s174
      %p178 = scmp.eq.s32.totalorder %s33, 0
      %p179 = por %p177, %p178
      %p180 = scmp.ne.s32.totalorder %s172, %s174
      %p181 = scmp.eq.s32.totalorder %s38, 1
      %p182 = por %p180, %p181
      %p183 = scmp.ne.s32.totalorder %s174, %s175
      %p184 = scmp.eq.s32.totalorder %s38, 0
      %p185 = por %p183, %p184
      %p186 = scmp.ne.s32.totalorder %s174, %s175
      %p187 = scmp.eq.s32.totalorder %s39, 1
      %p188 = por %p186, %p187
      %p190 = scmp.ne.s32.totalorder %s175, %s189
      %p191 = scmp.eq.s32.totalorder %s39, 0
      %p192 = por %p190, %p191
      %s194 = sadd.s32 %s193, 1
      %p197 = scmp.eq.s32.totalorder %s33, 1
      %p198 = scmp.ne.s32.totalorder %s193, %s195
      %p199 = scmp.eq.s32.totalorder %s33, 0
      %p200 = por %p198, %p199
      %p201 = scmp.ne.s32.totalorder %s193, %s195
      %p202 = scmp.eq.s32.totalorder %s38, 1
      %p203 = por %p201, %p202
      %p204 = scmp.ne.s32.totalorder %s195, %s196
      %p205 = scmp.eq.s32.totalorder %s38, 0
      %p206 = por %p204, %p205
      %p207 = scmp.ne.s32.totalorder %s195, %s196
      %p208 = scmp.eq.s32.totalorder %s39, 1
      %p209 = por %p207, %p208
      %p211 = scmp.ne.s32.totalorder %s196, %s210
      %p212 = scmp.eq.s32.totalorder %s39, 0
      %p213 = por %p211, %p212
      %s215 = sadd.s32 %s214, 1
      %p218 = scmp.eq.s32.totalorder %s33, 1
      %p219 = scmp.ne.s32.totalorder %s214, %s216
      %p220 = scmp.eq.s32.totalorder %s33, 0
      %p221 = por %p219, %p220
      %p222 = scmp.ne.s32.totalorder %s214, %s216
      %p223 = scmp.eq.s32.totalorder %s38, 1
      %p224 = por %p222, %p223
      %p225 = scmp.ne.s32.totalorder %s216, %s217
      %p226 = scmp.eq.s32.totalorder %s38, 0
      %p227 = por %p225, %p226
      %p228 = scmp.ne.s32.totalorder %s216, %s217
      %p229 = scmp.eq.s32.totalorder %s39, 1
      %p230 = por %p228, %p229
      %p232 = scmp.ne.s32.totalorder %s217, %s231
      %p233 = scmp.eq.s32.totalorder %s39, 0
      %p234 = por %p232, %p233
      %s236 = sadd.s32 %s235, 1
      %p239 = scmp.eq.s32.totalorder %s33, 1
      %p240 = scmp.ne.s32.totalorder %s235, %s237
      %p241 = scmp.eq.s32.totalorder %s33, 0
      %p242 = por %p240, %p241
      %p243 = scmp.ne.s32.totalorder %s235, %s237
      %p244 = scmp.eq.s32.totalorder %s38, 1
      %p245 = por %p243, %p244
      %p246 = scmp.ne.s32.totalorder %s237, %s238
      %p247 = scmp.eq.s32.totalorder %s38, 0
      %p248 = por %p246, %p247
      %p249 = scmp.ne.s32.totalorder %s237, %s238
      %p250 = scmp.eq.s32.totalorder %s39, 1
      %p251 = por %p249, %p250
      %p253 = scmp.ne.s32.totalorder %s238, %s252
      %p254 = scmp.eq.s32.totalorder %s39, 0
      %p255 = por %p253, %p254
      %s257 = sadd.s32 %s256, 1
      %p260 = scmp.eq.s32.totalorder %s33, 1
      %p261 = scmp.ne.s32.totalorder %s256, %s258
      %p262 = scmp.eq.s32.totalorder %s33, 0
      %p263 = por %p261, %p262
      %p264 = scmp.ne.s32.totalorder %s256, %s258
      %p265 = scmp.eq.s32.totalorder %s38, 1
      %p266 = por %p264, %p265
      %p267 = scmp.ne.s32.totalorder %s258, %s259
      %p268 = scmp.eq.s32.totalorder %s38, 0
      %p269 = por %p267, %p268
      %p270 = scmp.ne.s32.totalorder %s258, %s259
      %p271 = scmp.eq.s32.totalorder %s39, 1
      %p272 = por %p270, %p271
      %p274 = scmp.ne.s32.totalorder %s259, %s273
      %p275 = scmp.eq.s32.totalorder %s39, 0
      %p276 = por %p274, %p275
      %s278 = sadd.s32 %s277, 1
      %p281 = scmp.eq.s32.totalorder %s33, 1
      %p282 = scmp.ne.s32.totalorder %s277, %s279
      %p283 = scmp.eq.s32.totalorder %s33, 0
      %p284 = por %p282, %p283
      %p285 = scmp.ne.s32.totalorder %s277, %s279
      %p286 = scmp.eq.s32.totalorder %s38, 1
      %p287 = por %p285, %p286
      %p288 = scmp.ne.s32.totalorder %s279, %s280
      %p289 = scmp.eq.s32.totalorder %s38, 0
      %p290 = por %p288, %p289
      %p291 = scmp.ne.s32.totalorder %s279, %s280
      %p292 = scmp.eq.s32.totalorder %s39, 1
      %p293 = por %p291, %p292
      %p295 = scmp.ne.s32.totalorder %s280, %s294
      %p296 = scmp.eq.s32.totalorder %s39, 0
      %p297 = por %p295, %p296
      %s299 = sadd.s32 %s298, 1
      %p302 = scmp.eq.s32.totalorder %s33, 1
      %p303 = scmp.ne.s32.totalorder %s298, %s300
      %p304 = scmp.eq.s32.totalorder %s33, 0
      %p305 = por %p303, %p304
      %p306 = scmp.ne.s32.totalorder %s298, %s300
      %p307 = scmp.eq.s32.totalorder %s38, 1
      %p308 = por %p306, %p307
      %p309 = scmp.ne.s32.totalorder %s300, %s301
      %p310 = scmp.eq.s32.totalorder %s38, 0
      %p311 = por %p309, %p310
      %p312 = scmp.ne.s32.totalorder %s300, %s301
      %p313 = scmp.eq.s32.totalorder %s39, 1
      %p314 = por %p312, %p313
      %p316 = scmp.ne.s32.totalorder %s301, %s315
      %p317 = scmp.eq.s32.totalorder %s39, 0
      %p318 = por %p316, %p317
      %s320 = sadd.s32 %s319, 1
      %p323 = scmp.eq.s32.totalorder %s33, 1
      %p324 = scmp.ne.s32.totalorder %s319, %s321
      %p325 = scmp.eq.s32.totalorder %s33, 0
      %p326 = por %p324, %p325
      %p327 = scmp.ne.s32.totalorder %s319, %s321
      %p328 = scmp.eq.s32.totalorder %s38, 1
      %p329 = por %p327, %p328
      %p330 = scmp.ne.s32.totalorder %s321, %s322
      %p331 = scmp.eq.s32.totalorder %s38, 0
      %p332 = por %p330, %p331
      %p333 = scmp.ne.s32.totalorder %s321, %s322
      %p334 = scmp.eq.s32.totalorder %s39, 1
      %p335 = por %p333, %p334
      %p337 = scmp.ne.s32.totalorder %s322, %s336
      %p338 = scmp.eq.s32.totalorder %s39, 0
      %p339 = por %p337, %p338
      %s341 = sadd.s32 %s340, 1
      %p344 = scmp.eq.s32.totalorder %s33, 1
      %p345 = scmp.ne.s32.totalorder %s340, %s342
      %p346 = scmp.eq.s32.totalorder %s33, 0
      %p347 = por %p345, %p346
      %p348 = scmp.ne.s32.totalorder %s340, %s342
      %p349 = scmp.eq.s32.totalorder %s38, 1
      %p350 = por %p348, %p349
      %p351 = scmp.ne.s32.totalorder %s342, %s343
      %p352 = scmp.eq.s32.totalorder %s38, 0
      %p353 = por %p351, %p352
      %p354 = scmp.ne.s32.totalorder %s342, %s343
      %p355 = scmp.eq.s32.totalorder %s39, 1
      %p356 = por %p354, %p355
      %p358 = scmp.ne.s32.totalorder %s343, %s357
      %p359 = scmp.eq.s32.totalorder %s39, 0
      %p360 = por %p358, %p359
      %s362 = sadd.s32 %s361, 1
      %p365 = scmp.eq.s32.totalorder %s33, 1
      %p366 = scmp.ne.s32.totalorder %s361, %s363
      %p367 = scmp.eq.s32.totalorder %s33, 0
      %p368 = por %p366, %p367
      %p369 = scmp.ne.s32.totalorder %s361, %s363
      %p370 = scmp.eq.s32.totalorder %s38, 1
      %p371 = por %p369, %p370
      %p372 = scmp.ne.s32.totalorder %s363, %s364
      %p373 = scmp.eq.s32.totalorder %s38, 0
      %p374 = por %p372, %p373
      %p375 = scmp.ne.s32.totalorder %s363, %s364
      %p376 = scmp.eq.s32.totalorder %s39, 1
      %p377 = por %p375, %p376
      %p379 = scmp.ne.s32.totalorder %s364, %s378
      %p380 = scmp.eq.s32.totalorder %s39, 0
      %p381 = por %p379, %p380
      %s383 = sadd.s32 %s382, 1
      %p386 = scmp.eq.s32.totalorder %s33, 1
      %p387 = scmp.ne.s32.totalorder %s382, %s384
      %p388 = scmp.eq.s32.totalorder %s33, 0
      %p389 = por %p387, %p388
      %p390 = scmp.ne.s32.totalorder %s382, %s384
      %p391 = scmp.eq.s32.totalorder %s38, 1
      %p392 = por %p390, %p391
      %p393 = scmp.ne.s32.totalorder %s384, %s385
      %p394 = scmp.eq.s32.totalorder %s38, 0
      %p395 = por %p393, %p394
      %p396 = scmp.ne.s32.totalorder %s384, %s385
      %p397 = scmp.eq.s32.totalorder %s39, 1
      %p398 = por %p396, %p397
      %p400 = scmp.ne.s32.totalorder %s385, %s399
      %p401 = scmp.eq.s32.totalorder %s39, 0
      %p402 = por %p400, %p401
      %s404 = sadd.s32 %s403, 1
      %p407 = scmp.eq.s32.totalorder %s33, 1
      %p408 = scmp.ne.s32.totalorder %s403, %s405
      %p409 = scmp.eq.s32.totalorder %s33, 0
      %p410 = por %p408, %p409
      %p411 = scmp.ne.s32.totalorder %s403, %s405
      %p412 = scmp.eq.s32.totalorder %s38, 1
      %p413 = por %p411, %p412
      %p414 = scmp.ne.s32.totalorder %s405, %s406
      %p415 = scmp.eq.s32.totalorder %s38, 0
      %p416 = por %p414, %p415
      %p417 = scmp.ne.s32.totalorder %s405, %s406
      %p418 = scmp.eq.s32.totalorder %s39, 1
      %p419 = por %p417, %p418
      %p421 = scmp.ne.s32.totalorder %s406, %s420
      %p422 = scmp.eq.s32.totalorder %s39, 0
      %p423 = por %p421, %p422
      %s425 = sadd.s32 %s424, 1
      %p428 = scmp.eq.s32.totalorder %s33, 1
      %p429 = scmp.ne.s32.totalorder %s424, %s426
      %p430 = scmp.eq.s32.totalorder %s33, 0
      %p431 = por %p429, %p430
      %p432 = scmp.ne.s32.totalorder %s424, %s426
      %p433 = scmp.eq.s32.totalorder %s38, 1
      %p434 = por %p432, %p433
      %p435 = scmp.ne.s32.totalorder %s426, %s427
      %p436 = scmp.eq.s32.totalorder %s38, 0
      %p437 = por %p435, %p436
      %p438 = scmp.ne.s32.totalorder %s426, %s427
      %p439 = scmp.eq.s32.totalorder %s39, 1
      %p440 = por %p438, %p439
      %p442 = scmp.ne.s32.totalorder %s427, %s441
      %p443 = scmp.eq.s32.totalorder %s39, 0
      %p444 = por %p442, %p443
      %s446 = sadd.s32 %s445, 1
      %p449 = scmp.eq.s32.totalorder %s33, 1
      %p450 = scmp.ne.s32.totalorder %s445, %s447
      %p451 = scmp.eq.s32.totalorder %s33, 0
      %p452 = por %p450, %p451
      %p453 = scmp.ne.s32.totalorder %s445, %s447
      %p454 = scmp.eq.s32.totalorder %s38, 1
      %p455 = por %p453, %p454
      %p456 = scmp.ne.s32.totalorder %s447, %s448
      %p457 = scmp.eq.s32.totalorder %s38, 0
      %p458 = por %p456, %p457
      %p459 = scmp.ne.s32.totalorder %s447, %s448
      %p460 = scmp.eq.s32.totalorder %s39, 1
      %p461 = por %p459, %p460
      %p463 = scmp.ne.s32.totalorder %s448, %s462
      %p464 = scmp.eq.s32.totalorder %s39, 0
      %p465 = por %p463, %p464
      %s467 = sadd.s32 %s466, 1
      %p470 = scmp.eq.s32.totalorder %s33, 1
      %p471 = scmp.ne.s32.totalorder %s466, %s468
      %p472 = scmp.eq.s32.totalorder %s33, 0
      %p473 = por %p471, %p472
      %p474 = scmp.ne.s32.totalorder %s466, %s468
      %p475 = scmp.eq.s32.totalorder %s38, 1
      %p476 = por %p474, %p475
      %p477 = scmp.ne.s32.totalorder %s468, %s469
      %p478 = scmp.eq.s32.totalorder %s38, 0
      %p479 = por %p477, %p478
      %p480 = scmp.ne.s32.totalorder %s468, %s469
      %p481 = scmp.eq.s32.totalorder %s39, 1
      %p482 = por %p480, %p481
      %p484 = scmp.ne.s32.totalorder %s469, %s483
      %p485 = scmp.eq.s32.totalorder %s39, 0
      %p486 = por %p484, %p485
      %s488 = sadd.s32 %s487, 1
      %p491 = scmp.eq.s32.totalorder %s33, 1
      %p492 = scmp.ne.s32.totalorder %s487, %s489
      %p493 = scmp.eq.s32.totalorder %s33, 0
      %p494 = por %p492, %p493
      %p495 = scmp.ne.s32.totalorder %s487, %s489
      %p496 = scmp.eq.s32.totalorder %s38, 1
      %p497 = por %p495, %p496
      %p498 = scmp.ne.s32.totalorder %s489, %s490
      %p499 = scmp.eq.s32.totalorder %s38, 0
      %p500 = por %p498, %p499
      %p501 = scmp.ne.s32.totalorder %s489, %s490
      %p502 = scmp.eq.s32.totalorder %s39, 1
      %p503 = por %p501, %p502
      %p505 = scmp.ne.s32.totalorder %s490, %s504
      %p506 = scmp.eq.s32.totalorder %s39, 0
      %p507 = por %p505, %p506
      %s509 = sadd.s32 %s508, 1
      %p512 = scmp.eq.s32.totalorder %s33, 1
      %p513 = scmp.ne.s32.totalorder %s508, %s510
      %p514 = scmp.eq.s32.totalorder %s33, 0
      %p515 = por %p513, %p514
      %p516 = scmp.ne.s32.totalorder %s508, %s510
      %p517 = scmp.eq.s32.totalorder %s38, 1
      %p518 = por %p516, %p517
      %p519 = scmp.ne.s32.totalorder %s510, %s511
      %p520 = scmp.eq.s32.totalorder %s38, 0
      %p521 = por %p519, %p520
      %p522 = scmp.ne.s32.totalorder %s510, %s511
      %p523 = scmp.eq.s32.totalorder %s39, 1
      %p524 = por %p522, %p523
      %p526 = scmp.ne.s32.totalorder %s511, %s525
      %p527 = scmp.eq.s32.totalorder %s39, 0
      %p528 = por %p526, %p527
      %s530 = sadd.s32 %s529, 1
      %p533 = scmp.eq.s32.totalorder %s33, 1
      %p534 = scmp.ne.s32.totalorder %s529, %s531
      %p535 = scmp.eq.s32.totalorder %s33, 0
      %p536 = por %p534, %p535
      %p537 = scmp.ne.s32.totalorder %s529, %s531
      %p538 = scmp.eq.s32.totalorder %s38, 1
      %p539 = por %p537, %p538
      %p540 = scmp.ne.s32.totalorder %s531, %s532
      %p541 = scmp.eq.s32.totalorder %s38, 0
      %p542 = por %p540, %p541
      %p543 = scmp.ne.s32.totalorder %s531, %s532
      %p544 = scmp.eq.s32.totalorder %s39, 1
      %p545 = por %p543, %p544
      %p547 = scmp.ne.s32.totalorder %s532, %s546
      %p548 = scmp.eq.s32.totalorder %s39, 0
      %p549 = por %p547, %p548
      %s550 = ssub.s32 %s33, %s40
      %p551 = scmp.eq.s32.totalorder %s550, 0
      %s553 = sadd.s32 %s552, 1
      %s554 = scalar_select %p551, %s552, %s553
      %p557 = pneg %p551
      %p558 = scmp.eq.s32.totalorder %s33, 1
      %p559 = por %p557, %p558
      %p560 = scmp.ne.s32.totalorder %s552, %s555
      %p561 = scmp.eq.s32.totalorder %s33, 0
      %p562 = por %p560, %p561
      %p563 = scmp.ne.s32.totalorder %s552, %s555
      %p564 = scmp.eq.s32.totalorder %s38, 1
      %p565 = por %p563, %p564
      %p566 = scmp.ne.s32.totalorder %s555, %s556
      %p567 = scmp.eq.s32.totalorder %s38, 0
      %p568 = por %p566, %p567
      %p569 = scmp.ne.s32.totalorder %s555, %s556
      %p570 = scmp.eq.s32.totalorder %s39, 1
      %p571 = por %p569, %p570
      %p573 = scmp.ne.s32.totalorder %s556, %s572
      %p574 = scmp.eq.s32.totalorder %s39, 0
      %p575 = por %p573, %p574
      %p576 = scmp.le.s32.totalorder 1, %s33
      %p577 = scmp.lt.s32.totalorder %s33, 3
      %p578 = pnand %p576, %p577
      %p579 = pneg %p578
      // Predicated region
      $region9: #{image_classifier_forward.1} parent=5 // pred_check
        _
      $region10: #{image_classifier_forward.1} parent=5 // pred_check_branch
        %581 = sbr.rel (%p578) target = $region12
      $region11: #{image_classifier_forward.1} parent=5 // pred_region
        %s582 = ssub.s32 %s33, 1
        // Predicated region
        $region13: #{image_classifier_forward.1} parent=11 // pred_check
          %p583 = pneg %p80
        $region14: #{image_classifier_forward.1} parent=11 // pred_check_branch
          %585 = sbr.rel (%p583) target = $region16
        $region15: #{image_classifier_forward.1} parent=11 // pred_region
          _
        $region16: #{image_classifier_forward.1} parent=11 // pred_fallthru
          _
        // Predicated region
        $region17: #{image_classifier_forward.1} parent=11 // pred_check
          %p586 = pneg %p101
        $region18: #{image_classifier_forward.1} parent=11 // pred_check_branch
          %588 = sbr.rel (%p586) target = $region20
        $region19: #{image_classifier_forward.1} parent=11 // pred_region
          _
        $region20: #{image_classifier_forward.1} parent=11 // pred_fallthru
          _
        // Predicated region
        $region21: #{image_classifier_forward.1} parent=11 // pred_check
          %p589 = pneg %p122
        $region22: #{image_classifier_forward.1} parent=11 // pred_check_branch
          %591 = sbr.rel (%p589) target = $region24
        $region23: #{image_classifier_forward.1} parent=11 // pred_region
          _
        $region24: #{image_classifier_forward.1} parent=11 // pred_fallthru
          _
        // Predicated region
        $region25: #{image_classifier_forward.1} parent=11 // pred_check
          %p592 = pneg %p143
        $region26: #{image_classifier_forward.1} parent=11 // pred_check_branch
          %594 = sbr.rel (%p592) target = $region28
        $region27: #{image_classifier_forward.1} parent=11 // pred_region
          _
        $region28: #{image_classifier_forward.1} parent=11 // pred_fallthru
          _
        // Predicated region
        $region29: #{image_classifier_forward.1} parent=11 // pred_check
          %p595 = pneg %p164
        $region30: #{image_classifier_forward.1} parent=11 // pred_check_branch
          %597 = sbr.rel (%p595) target = $region32
        $region31: #{image_classifier_forward.1} parent=11 // pred_region
          _
        $region32: #{image_classifier_forward.1} parent=11 // pred_fallthru
          _
        // Predicated region
        $region33: #{image_classifier_forward.1} parent=11 // pred_check
          %p598 = pneg %p185
        $region34: #{image_classifier_forward.1} parent=11 // pred_check_branch
          %600 = sbr.rel (%p598) target = $region36
        $region35: #{image_classifier_forward.1} parent=11 // pred_region
          _
        $region36: #{image_classifier_forward.1} parent=11 // pred_fallthru
          _
        // Predicated region
        $region37: #{image_classifier_forward.1} parent=11 // pred_check
          %p601 = pneg %p206
        $region38: #{image_classifier_forward.1} parent=11 // pred_check_branch
          %603 = sbr.rel (%p601) target = $region40
        $region39: #{image_classifier_forward.1} parent=11 // pred_region
          _
        $region40: #{image_classifier_forward.1} parent=11 // pred_fallthru
          _
        // Predicated region
        $region41: #{image_classifier_forward.1} parent=11 // pred_check
          %p604 = pneg %p227
        $region42: #{image_classifier_forward.1} parent=11 // pred_check_branch
          %606 = sbr.rel (%p604) target = $region44
        $region43: #{image_classifier_forward.1} parent=11 // pred_region
          _
        $region44: #{image_classifier_forward.1} parent=11 // pred_fallthru
          _
        // Predicated region
        $region45: #{image_classifier_forward.1} parent=11 // pred_check
          %p607 = pneg %p248
        $region46: #{image_classifier_forward.1} parent=11 // pred_check_branch
          %609 = sbr.rel (%p607) target = $region48
        $region47: #{image_classifier_forward.1} parent=11 // pred_region
          _
        $region48: #{image_classifier_forward.1} parent=11 // pred_fallthru
          _
        // Predicated region
        $region49: #{image_classifier_forward.1} parent=11 // pred_check
          %p610 = pneg %p269
        $region50: #{image_classifier_forward.1} parent=11 // pred_check_branch
          %612 = sbr.rel (%p610) target = $region52
        $region51: #{image_classifier_forward.1} parent=11 // pred_region
          _
        $region52: #{image_classifier_forward.1} parent=11 // pred_fallthru
          _
        // Predicated region
        $region53: #{image_classifier_forward.1} parent=11 // pred_check
          %p613 = pneg %p290
        $region54: #{image_classifier_forward.1} parent=11 // pred_check_branch
          %615 = sbr.rel (%p613) target = $region56
        $region55: #{image_classifier_forward.1} parent=11 // pred_region
          _
        $region56: #{image_classifier_forward.1} parent=11 // pred_fallthru
          _
        // Predicated region
        $region57: #{image_classifier_forward.1} parent=11 // pred_check
          %p616 = pneg %p311
        $region58: #{image_classifier_forward.1} parent=11 // pred_check_branch
          %618 = sbr.rel (%p616) target = $region60
        $region59: #{image_classifier_forward.1} parent=11 // pred_region
          _
        $region60: #{image_classifier_forward.1} parent=11 // pred_fallthru
          _
        // Predicated region
        $region61: #{image_classifier_forward.1} parent=11 // pred_check
          %p619 = pneg %p332
        $region62: #{image_classifier_forward.1} parent=11 // pred_check_branch
          %621 = sbr.rel (%p619) target = $region64
        $region63: #{image_classifier_forward.1} parent=11 // pred_region
          _
        $region64: #{image_classifier_forward.1} parent=11 // pred_fallthru
          _
        // Predicated region
        $region65: #{image_classifier_forward.1} parent=11 // pred_check
          %p622 = pneg %p353
        $region66: #{image_classifier_forward.1} parent=11 // pred_check_branch
          %624 = sbr.rel (%p622) target = $region68
        $region67: #{image_classifier_forward.1} parent=11 // pred_region
          _
        $region68: #{image_classifier_forward.1} parent=11 // pred_fallthru
          _
        // Predicated region
        $region69: #{image_classifier_forward.1} parent=11 // pred_check
          %p625 = pneg %p374
        $region70: #{image_classifier_forward.1} parent=11 // pred_check_branch
          %627 = sbr.rel (%p625) target = $region72
        $region71: #{image_classifier_forward.1} parent=11 // pred_region
          _
        $region72: #{image_classifier_forward.1} parent=11 // pred_fallthru
          _
        // Predicated region
        $region73: #{image_classifier_forward.1} parent=11 // pred_check
          %p628 = pneg %p395
        $region74: #{image_classifier_forward.1} parent=11 // pred_check_branch
          %630 = sbr.rel (%p628) target = $region76
        $region75: #{image_classifier_forward.1} parent=11 // pred_region
          _
        $region76: #{image_classifier_forward.1} parent=11 // pred_fallthru
          _
        // Predicated region
        $region77: #{image_classifier_forward.1} parent=11 // pred_check
          %p631 = pneg %p416
        $region78: #{image_classifier_forward.1} parent=11 // pred_check_branch
          %633 = sbr.rel (%p631) target = $region80
        $region79: #{image_classifier_forward.1} parent=11 // pred_region
          _
        $region80: #{image_classifier_forward.1} parent=11 // pred_fallthru
          _
        // Predicated region
        $region81: #{image_classifier_forward.1} parent=11 // pred_check
          %p634 = pneg %p437
        $region82: #{image_classifier_forward.1} parent=11 // pred_check_branch
          %636 = sbr.rel (%p634) target = $region84
        $region83: #{image_classifier_forward.1} parent=11 // pred_region
          _
        $region84: #{image_classifier_forward.1} parent=11 // pred_fallthru
          _
        // Predicated region
        $region85: #{image_classifier_forward.1} parent=11 // pred_check
          %p637 = pneg %p458
        $region86: #{image_classifier_forward.1} parent=11 // pred_check_branch
          %639 = sbr.rel (%p637) target = $region88
        $region87: #{image_classifier_forward.1} parent=11 // pred_region
          _
        $region88: #{image_classifier_forward.1} parent=11 // pred_fallthru
          _
        // Predicated region
        $region89: #{image_classifier_forward.1} parent=11 // pred_check
          %p640 = pneg %p479
        $region90: #{image_classifier_forward.1} parent=11 // pred_check_branch
          %642 = sbr.rel (%p640) target = $region92
        $region91: #{image_classifier_forward.1} parent=11 // pred_region
          _
        $region92: #{image_classifier_forward.1} parent=11 // pred_fallthru
          _
        // Predicated region
        $region93: #{image_classifier_forward.1} parent=11 // pred_check
          %p643 = pneg %p500
        $region94: #{image_classifier_forward.1} parent=11 // pred_check_branch
          %645 = sbr.rel (%p643) target = $region96
        $region95: #{image_classifier_forward.1} parent=11 // pred_region
          _
        $region96: #{image_classifier_forward.1} parent=11 // pred_fallthru
          _
        // Predicated region
        $region97: #{image_classifier_forward.1} parent=11 // pred_check
          %p646 = pneg %p521
        $region98: #{image_classifier_forward.1} parent=11 // pred_check_branch
          %648 = sbr.rel (%p646) target = $region100
        $region99: #{image_classifier_forward.1} parent=11 // pred_region
          _
        $region100: #{image_classifier_forward.1} parent=11 // pred_fallthru
          _
        // Predicated region
        $region101: #{image_classifier_forward.1} parent=11 // pred_check
          %p649 = pneg %p542
        $region102: #{image_classifier_forward.1} parent=11 // pred_check_branch
          %651 = sbr.rel (%p649) target = $region104
        $region103: #{image_classifier_forward.1} parent=11 // pred_region
          _
        $region104: #{image_classifier_forward.1} parent=11 // pred_fallthru
          _
      $region12: #{image_classifier_forward.1} parent=5 // pred_fallthru
        _
      %p652 = scmp.lt.s32.totalorder %s33, 2
      // Predicated region
      $region105: #{image_classifier_forward.1} parent=5 // pred_check
        %p653 = pneg %p652
      $region106: #{image_classifier_forward.1} parent=5 // pred_check_branch
        %655 = sbr.rel (%p653) target = $region108
      $region107: #{image_classifier_forward.1} parent=5 // pred_region
        // Predicated region
        $region109: #{image_classifier_forward.1} parent=107 // pred_check
          %p656 = pneg %p53
        $region110: #{image_classifier_forward.1} parent=107 // pred_check_branch
          %658 = sbr.rel (%p656) target = $region112
        $region111: #{image_classifier_forward.1} parent=107 // pred_region
          %s659 = smul.u32 8, %s33
          %p660 = scmp.lt.s32.totalorder %s659, 15
          %s661 = scalar_select %p660, %s659, 15
          %s662 = smul.addr %s661, 6
          %s663 = smul.addr %s662, 4
          %s664 = scalar_lea.vmem %s0, %s663
          %s665 = smul.u32 8, %s33
        $region112: #{image_classifier_forward.1} parent=107 // pred_fallthru
          _
      $region108: #{image_classifier_forward.1} parent=5 // pred_fallthru
        _
      %p666 = scmp.le.s32.totalorder 1, %s33
      %p667 = scmp.lt.s32.totalorder %s33, 3
      %p668 = pnand %p666, %p667
      %p669 = pneg %p668
      // Predicated region
      $region113: #{image_classifier_forward.1} parent=5 // pred_check
        _
      $region114: #{image_classifier_forward.1} parent=5 // pred_check_branch
        %671 = sbr.rel (%p668) target = $region116
      $region115: #{image_classifier_forward.1} parent=5 // pred_region
        %s672 = ssub.s32 %s33, 1
        %s673 = smul.u32 8, %s38
        %p674 = scmp.lt.s32.totalorder %s673, 15
        %s675 = scalar_select %p674, %s673, 15
        %s676 = smul.addr %s675, 6
        %s677 = smul.addr %s676, 4
        %s678 = scalar_lea.vmem %s0, %s677
        %p679 = pneg %p59
        %p680 = pneg %p56
        %p681 = pneg %p80
        %p682 = pneg %p77
        %p683 = pneg %p101
        %p684 = pneg %p98
        %p685 = pneg %p122
        %p686 = pneg %p119
        %p687 = pneg %p143
        %p688 = pneg %p140
        %p689 = pneg %p164
        %p690 = pneg %p161
        %p691 = pneg %p185
        %p692 = pneg %p182
        %p693 = pneg %p206
        %p694 = pneg %p203
        %p695 = pneg %p227
        %p696 = pneg %p224
        %p697 = pneg %p248
        %p698 = pneg %p245
        %p699 = pneg %p269
        %p700 = pneg %p266
        %p701 = pneg %p290
        %p702 = pneg %p287
        %p703 = pneg %p311
        %p704 = pneg %p308
        %p705 = pneg %p332
        %p706 = pneg %p329
        %p707 = pneg %p353
        %p708 = pneg %p350
        %p709 = pneg %p374
        %p710 = pneg %p371
        %p711 = pneg %p395
        %p712 = pneg %p392
        %p713 = pneg %p416
        %p714 = pneg %p413
        %p715 = pneg %p437
        %p716 = pneg %p434
        %p717 = pneg %p458
        %p718 = pneg %p455
        %p719 = pneg %p479
        %p720 = pneg %p476
        %p721 = pneg %p500
        %p722 = pneg %p497
        %p723 = pneg %p521
        %p724 = pneg %p518
        %p725 = pneg %p542
        %p726 = pneg %p539
        %p727 = pneg %p568
        %p728 = pneg %p565
        %s729 = sand.u32 %s555, 1
        %s730 = scalar_lea.sflag [#allocation3], %s729
        %s731 = sand.u32 %s555, 1
        %s732 = smul.addr %s731, 8
        %s733 = scalar_lea.vmem [#allocation2], %s732
        %s734 = smul.u32 8, %s38
        %p735 = scmp.lt.s32.totalorder %s734, 15
        %s736 = scalar_select %p735, %s734, 15
        %s737 = smul.addr %s736, 6
        %s738 = smul.addr %s737, 4
        %s739 = scalar_lea.vmem %s0, %s738
        %s740 = smul.u32 8, %s38
        %v742 = vld [vmem:[%s739] sm:$0xff]
        %v743 = vld [vmem:[%s739 + $0x8] sm:$0xff]
        %v744 = vld [vmem:[%s739 + $0x10] sm:$0xff]
        %v745 = vld [vmem:[%s739 + $0x18] sm:$0xff]
        %v746 = vld [vmem:[%s739 + $0x20] sm:$0xff]
        %v747 = vld [vmem:[%s739 + $0x28] sm:$0xff]
        %v748 = vld [vmem:[%s739 + $0x30] sm:$0xff]
        %v749 = vld [vmem:[%s739 + $0x38] sm:$0xff]
        %v750 = vld [vmem:[%s739 + $0x40] sm:$0xff]
        %v751 = vld [vmem:[%s739 + $0x48] sm:$0xff]
        %v752 = vld [vmem:[%s739 + $0x50] sm:$0xff]
        %v753 = vld [vmem:[%s739 + $0x58] sm:$0xff]
        %v754 = vld [vmem:[%s739 + $0x60] sm:$0xff]
        %v755 = vld [vmem:[%s739 + $0x68] sm:$0xff]
        %v756 = vld [vmem:[%s739 + $0x70] sm:$0xff]
        %v757 = vld [vmem:[%s739 + $0x78] sm:$0xff]
        %v758 = vld [vmem:[%s739 + $0x80] sm:$0xff]
        %v759 = vld [vmem:[%s739 + $0x88] sm:$0xff]
        %v760 = vld [vmem:[%s739 + $0x90] sm:$0xff]
        %v761 = vld [vmem:[%s739 + $0x98] sm:$0xff]
        %v762 = vld [vmem:[%s739 + $0xa0] sm:$0xff]
        %v763 = vld [vmem:[%s739 + $0xa8] sm:$0xff]
        %v764 = vld [vmem:[%s739 + $0xb0] sm:$0xff]
        %v765 = vld [vmem:[%s739 + $0xb8] sm:$0xff]
        %v766 = vld [vmem:[%s2] sm:$0xf]
        %v767 = vld [vmem:[%s2 + $0x4] sm:$0xf]
        %v768 = vld [vmem:[%s2 + $0x8] sm:$0xf]
        %v769 = vld [vmem:[%s2 + $0xc] sm:$0xf]
        %v770 = vld [vmem:[%s2 + $0x10] sm:$0xf]
        %v771 = vld [vmem:[%s2 + $0x14] sm:$0xf]
        %v772 = vld [vmem:[%s2 + $0x18] sm:$0xf]
        %v773 = vld [vmem:[%s2 + $0x1c] sm:$0xf]
        %v774 = vld [vmem:[%s2 + $0x20] sm:$0xf]
        %v775 = vld [vmem:[%s2 + $0x24] sm:$0xf]
        %v776 = vld [vmem:[%s2 + $0x28] sm:$0xf]
        %v777 = vld [vmem:[%s2 + $0x2c] sm:$0xf]
        %v778 = vld [vmem:[%s2 + $0x30] sm:$0xf]
        %v779 = vld [vmem:[%s2 + $0x34] sm:$0xf]
        %v780 = vld [vmem:[%s2 + $0x38] sm:$0xf]
        %v781 = vld [vmem:[%s2 + $0x3c] sm:$0xf]
        %v782 = vld [vmem:[%s2 + $0x40] sm:$0xf]
        %v783 = vld [vmem:[%s2 + $0x44] sm:$0xf]
        %v784 = vld [vmem:[%s2 + $0x48] sm:$0xf]
        %v785 = vld [vmem:[%s2 + $0x4c] sm:$0xf]
        %v786 = vld [vmem:[%s2 + $0x50] sm:$0xf]
        %v787 = vld [vmem:[%s2 + $0x54] sm:$0xf]
        %v788 = vld [vmem:[%s2 + $0x58] sm:$0xf]
        %v789 = vld [vmem:[%s2 + $0x5c] sm:$0xf]
        %v790 = vld [vmem:[%s2 + $0x60] sm:$0xf]
        %v791 = vld [vmem:[%s2 + $0x64] sm:$0xf]
        %v792 = vld [vmem:[%s2 + $0x68] sm:$0xf]
        %v793 = vld [vmem:[%s2 + $0x6c] sm:$0xf]
        %v794 = vld [vmem:[%s2 + $0x70] sm:$0xf]
        %v795 = vld [vmem:[%s2 + $0x74] sm:$0xf]
        %v796 = vld [vmem:[%s2 + $0x78] sm:$0xf]
        %v797 = vld [vmem:[%s2 + $0x7c] sm:$0xf]
        %v798 = vld [vmem:[%s2 + $0x80] sm:$0xf]
        %v799 = vld [vmem:[%s2 + $0x84] sm:$0xf]
        %v800 = vld [vmem:[%s2 + $0x88] sm:$0xf]
        %v801 = vld [vmem:[%s2 + $0x8c] sm:$0xf]
        %v802 = vld [vmem:[%s2 + $0x90] sm:$0xf]
        %v803 = vld [vmem:[%s2 + $0x94] sm:$0xf]
        %v804 = vld [vmem:[%s2 + $0x98] sm:$0xf]
        %v805 = vld [vmem:[%s2 + $0x9c] sm:$0xf]
        %v806 = vld [vmem:[%s2 + $0xa0] sm:$0xf]
        %v807 = vld [vmem:[%s2 + $0xa4] sm:$0xf]
        %v808 = vld [vmem:[%s2 + $0xa8] sm:$0xf]
        %v809 = vld [vmem:[%s2 + $0xac] sm:$0xf]
        %v810 = vld [vmem:[%s2 + $0xb0] sm:$0xf]
        %v811 = vld [vmem:[%s2 + $0xb4] sm:$0xf]
        %v812 = vld [vmem:[%s2 + $0xb8] sm:$0xf]
        %v813 = vld [vmem:[%s2 + $0xbc] sm:$0xf]
        %v814 = vld [vmem:[%s2 + $0xc0] sm:$0xf]
        %v815 = vld [vmem:[%s2 + $0xc4] sm:$0xf]
        %v816 = vld [vmem:[%s2 + $0xc8] sm:$0xf]
        %v817 = vld [vmem:[%s2 + $0xcc] sm:$0xf]
        %v818 = vld [vmem:[%s2 + $0xd0] sm:$0xf]
        %v819 = vld [vmem:[%s2 + $0xd4] sm:$0xf]
        %v820 = vld [vmem:[%s2 + $0xd8] sm:$0xf]
        %v821 = vld [vmem:[%s2 + $0xdc] sm:$0xf]
        %v822 = vld [vmem:[%s2 + $0xe0] sm:$0xf]
        %v823 = vld [vmem:[%s2 + $0xe4] sm:$0xf]
        %v824 = vld [vmem:[%s2 + $0xe8] sm:$0xf]
        %v825 = vld [vmem:[%s2 + $0xec] sm:$0xf]
        %v826 = vld [vmem:[%s2 + $0xf0] sm:$0xf]
        %v827 = vld [vmem:[%s2 + $0xf4] sm:$0xf]
        %v828 = vld [vmem:[%s2 + $0xf8] sm:$0xf]
        %v829 = vld [vmem:[%s2 + $0xfc] sm:$0xf]
        %v830 = vld [vmem:[%s2 + $0x100] sm:$0xf]
        %v831 = vld [vmem:[%s2 + $0x104] sm:$0xf]
        %v832 = vld [vmem:[%s2 + $0x108] sm:$0xf]
        %v833 = vld [vmem:[%s2 + $0x10c] sm:$0xf]
        %v834 = vld [vmem:[%s2 + $0x110] sm:$0xf]
        %v835 = vld [vmem:[%s2 + $0x114] sm:$0xf]
        %v836 = vld [vmem:[%s2 + $0x118] sm:$0xf]
        %v837 = vld [vmem:[%s2 + $0x11c] sm:$0xf]
        %v838 = vld [vmem:[%s2 + $0x120] sm:$0xf]
        %v839 = vld [vmem:[%s2 + $0x124] sm:$0xf]
        %v840 = vld [vmem:[%s2 + $0x128] sm:$0xf]
        %v841 = vld [vmem:[%s2 + $0x12c] sm:$0xf]
        %v842 = vld [vmem:[%s2 + $0x130] sm:$0xf]
        %v843 = vld [vmem:[%s2 + $0x134] sm:$0xf]
        %v844 = vld [vmem:[%s2 + $0x138] sm:$0xf]
        %v845 = vld [vmem:[%s2 + $0x13c] sm:$0xf]
        %v846 = vld [vmem:[%s2 + $0x140] sm:$0xf]
        %v847 = vld [vmem:[%s2 + $0x144] sm:$0xf]
        %v848 = vld [vmem:[%s2 + $0x148] sm:$0xf]
        %v849 = vld [vmem:[%s2 + $0x14c] sm:$0xf]
        %v850 = vld [vmem:[%s2 + $0x150] sm:$0xf]
        %v851 = vld [vmem:[%s2 + $0x154] sm:$0xf]
        %v852 = vld [vmem:[%s2 + $0x158] sm:$0xf]
        %v853 = vld [vmem:[%s2 + $0x15c] sm:$0xf]
        %v854 = vld [vmem:[%s2 + $0x160] sm:$0xf]
        %v855 = vld [vmem:[%s2 + $0x164] sm:$0xf]
        %v856 = vld [vmem:[%s2 + $0x168] sm:$0xf]
        %v857 = vld [vmem:[%s2 + $0x16c] sm:$0xf]
        %v858 = vld [vmem:[%s2 + $0x170] sm:$0xf]
        %v859 = vld [vmem:[%s2 + $0x174] sm:$0xf]
        %v860 = vld [vmem:[%s2 + $0x178] sm:$0xf]
        %v861 = vld [vmem:[%s2 + $0x17c] sm:$0xf]
        %v862 = vld [vmem:[%s1] sm:$0xff]
        %v863 = vld [vmem:[%s1 + $0x8] sm:$0xff]
        %v864 = vld [vmem:[%s1 + $0x10] sm:$0xff]
        %v865 = vld [vmem:[%s1 + $0x18] sm:$0xff]
        %v866 = vld [vmem:[%s1 + $0x20] sm:$0xff]
        %v867 = vld [vmem:[%s1 + $0x28] sm:$0xff]
        %v868 = vld [vmem:[%s1 + $0x30] sm:$0xff]
        %v869 = vld [vmem:[%s1 + $0x38] sm:$0xff]
        %v894 = vunpack.c.l.b16 %v742
        %v895 = vunpack.c.h.b16 %v742
        %v896 = vunpack.c.l.b16 %v743
        %v897 = vunpack.c.h.b16 %v743
        %v898 = vunpack.c.l.b16 %v744
        %v899 = vunpack.c.h.b16 %v744
        %v900 = vunpack.c.l.b16 %v745
        %v901 = vunpack.c.h.b16 %v745
        %v902 = vunpack.c.l.b16 %v746
        %v903 = vunpack.c.h.b16 %v746
        %v904 = vunpack.c.l.b16 %v747
        %v905 = vunpack.c.h.b16 %v747
        %v906 = vunpack.c.l.b16 %v748
        %v907 = vunpack.c.h.b16 %v748
        %v908 = vunpack.c.l.b16 %v749
        %v909 = vunpack.c.h.b16 %v749
        %v910 = vunpack.c.l.b16 %v750
        %v911 = vunpack.c.h.b16 %v750
        %v912 = vunpack.c.l.b16 %v751
        %v913 = vunpack.c.h.b16 %v751
        %v914 = vunpack.c.l.b16 %v752
        %v915 = vunpack.c.h.b16 %v752
        %v916 = vunpack.c.l.b16 %v753
        %v917 = vunpack.c.h.b16 %v753
        %v918 = vunpack.c.l.b16 %v754
        %v919 = vunpack.c.h.b16 %v754
        %v920 = vunpack.c.l.b16 %v755
        %v921 = vunpack.c.h.b16 %v755
        %v922 = vunpack.c.l.b16 %v756
        %v923 = vunpack.c.h.b16 %v756
        %v924 = vunpack.c.l.b16 %v757
        %v925 = vunpack.c.h.b16 %v757
        %v926 = vunpack.c.l.b16 %v758
        %v927 = vunpack.c.h.b16 %v758
        %v928 = vunpack.c.l.b16 %v759
        %v929 = vunpack.c.h.b16 %v759
        %v930 = vunpack.c.l.b16 %v760
        %v931 = vunpack.c.h.b16 %v760
        %v932 = vunpack.c.l.b16 %v761
        %v933 = vunpack.c.h.b16 %v761
        %v934 = vunpack.c.l.b16 %v762
        %v935 = vunpack.c.h.b16 %v762
        %v936 = vunpack.c.l.b16 %v763
        %v937 = vunpack.c.h.b16 %v763
        %v938 = vunpack.c.l.b16 %v764
        %v939 = vunpack.c.h.b16 %v764
        %v940 = vunpack.c.l.b16 %v765
        %v941 = vunpack.c.h.b16 %v765
        %v942 = vpack.c.b16 %v900, %v894
        %v943 = vpack.c.b16 %v901, %v895
        %v944 = vpack.c.b16 %v902, %v896
        %v945 = vpack.c.b16 %v903, %v897
        %v946 = vpack.c.b16 %v904, %v898
        %v947 = vpack.c.b16 %v905, %v899
        %v948 = vpack.c.b16 %v912, %v906
        %v949 = vpack.c.b16 %v913, %v907
        %v950 = vpack.c.b16 %v914, %v908
        %v951 = vpack.c.b16 %v915, %v909
        %v952 = vpack.c.b16 %v916, %v910
        %v953 = vpack.c.b16 %v917, %v911
        %v954 = vpack.c.b16 %v924, %v918
        %v955 = vpack.c.b16 %v925, %v919
        %v956 = vpack.c.b16 %v926, %v920
        %v957 = vpack.c.b16 %v927, %v921
        %v958 = vpack.c.b16 %v928, %v922
        %v959 = vpack.c.b16 %v929, %v923
        %v960 = vpack.c.b16 %v936, %v930
        %v961 = vpack.c.b16 %v937, %v931
        %v962 = vpack.c.b16 %v938, %v932
        %v963 = vpack.c.b16 %v939, %v933
        %v964 = vpack.c.b16 %v940, %v934
        %v965 = vpack.c.b16 %v941, %v935
        %v1086 = vunpack.c.l.b16 %v766
        %v1087 = vunpack.c.l.b16 %v767
        %v1088 = vunpack.c.l.b16 %v768
        %v1089 = vunpack.c.l.b16 %v769
        %v1090 = vunpack.c.l.b16 %v770
        %v1091 = vunpack.c.l.b16 %v771
        %v1092 = vunpack.c.l.b16 %v772
        %v1093 = vunpack.c.l.b16 %v773
        %v1094 = vunpack.c.l.b16 %v774
        %v1095 = vunpack.c.l.b16 %v775
        %v1096 = vunpack.c.l.b16 %v776
        %v1097 = vunpack.c.l.b16 %v777
        %v1098 = vunpack.c.l.b16 %v778
        %v1099 = vunpack.c.l.b16 %v779
        %v1100 = vunpack.c.l.b16 %v780
        %v1101 = vunpack.c.l.b16 %v781
        %v1102 = vunpack.c.l.b16 %v782
        %v1103 = vunpack.c.l.b16 %v783
        %v1104 = vunpack.c.l.b16 %v784
        %v1105 = vunpack.c.l.b16 %v785
        %v1106 = vunpack.c.l.b16 %v786
        %v1107 = vunpack.c.l.b16 %v787
        %v1108 = vunpack.c.l.b16 %v788
        %v1109 = vunpack.c.l.b16 %v789
        %v1110 = vunpack.c.l.b16 %v790
        %v1111 = vunpack.c.l.b16 %v791
        %v1112 = vunpack.c.l.b16 %v792
        %v1113 = vunpack.c.l.b16 %v793
        %v1114 = vunpack.c.l.b16 %v794
        %v1115 = vunpack.c.l.b16 %v795
        %v1116 = vunpack.c.l.b16 %v796
        %v1117 = vunpack.c.l.b16 %v797
        %v1118 = vunpack.c.l.b16 %v798
        %v1119 = vunpack.c.l.b16 %v799
        %v1120 = vunpack.c.l.b16 %v800
        %v1121 = vunpack.c.l.b16 %v801
        %v1122 = vunpack.c.l.b16 %v802
        %v1123 = vunpack.c.l.b16 %v803
        %v1124 = vunpack.c.l.b16 %v804
        %v1125 = vunpack.c.l.b16 %v805
        %v1126 = vunpack.c.l.b16 %v806
        %v1127 = vunpack.c.l.b16 %v807
        %v1128 = vunpack.c.l.b16 %v808
        %v1129 = vunpack.c.l.b16 %v809
        %v1130 = vunpack.c.l.b16 %v810
        %v1131 = vunpack.c.l.b16 %v811
        %v1132 = vunpack.c.l.b16 %v812
        %v1133 = vunpack.c.l.b16 %v813
        %v1134 = vunpack.c.l.b16 %v814
        %v1135 = vunpack.c.l.b16 %v815
        %v1136 = vunpack.c.l.b16 %v816
        %v1137 = vunpack.c.l.b16 %v817
        %v1138 = vunpack.c.l.b16 %v818
        %v1139 = vunpack.c.l.b16 %v819
        %v1140 = vunpack.c.l.b16 %v820
        %v1141 = vunpack.c.l.b16 %v821
        %v1142 = vunpack.c.l.b16 %v822
        %v1143 = vunpack.c.l.b16 %v823
        %v1144 = vunpack.c.l.b16 %v824
        %v1145 = vunpack.c.l.b16 %v825
        %v1146 = vunpack.c.l.b16 %v826
        %v1147 = vunpack.c.l.b16 %v827
        %v1148 = vunpack.c.l.b16 %v828
        %v1149 = vunpack.c.l.b16 %v829
        %v1150 = vunpack.c.l.b16 %v830
        %v1151 = vunpack.c.l.b16 %v831
        %v1152 = vunpack.c.l.b16 %v832
        %v1153 = vunpack.c.l.b16 %v833
        %v1154 = vunpack.c.l.b16 %v834
        %v1155 = vunpack.c.l.b16 %v835
        %v1156 = vunpack.c.l.b16 %v836
        %v1157 = vunpack.c.l.b16 %v837
        %v1158 = vunpack.c.l.b16 %v838
        %v1159 = vunpack.c.l.b16 %v839
        %v1160 = vunpack.c.l.b16 %v840
        %v1161 = vunpack.c.l.b16 %v841
        %v1162 = vunpack.c.l.b16 %v842
        %v1163 = vunpack.c.l.b16 %v843
        %v1164 = vunpack.c.l.b16 %v844
        %v1165 = vunpack.c.l.b16 %v845
        %v1166 = vunpack.c.l.b16 %v846
        %v1167 = vunpack.c.l.b16 %v847
        %v1168 = vunpack.c.l.b16 %v848
        %v1169 = vunpack.c.l.b16 %v849
        %v1170 = vunpack.c.l.b16 %v850
        %v1171 = vunpack.c.l.b16 %v851
        %v1172 = vunpack.c.l.b16 %v852
        %v1173 = vunpack.c.l.b16 %v853
        %v1174 = vunpack.c.l.b16 %v854
        %v1175 = vunpack.c.l.b16 %v855
        %v1176 = vunpack.c.l.b16 %v856
        %v1177 = vunpack.c.l.b16 %v857
        %v1178 = vunpack.c.l.b16 %v858
        %v1179 = vunpack.c.l.b16 %v859
        %v1180 = vunpack.c.l.b16 %v860
        %v1181 = vunpack.c.l.b16 %v861
        %v1182 = vpack.c.b16 %v1087, %v1086
        %v1183 = vpack.c.b16 %v1089, %v1088
        %v1184 = vpack.c.b16 %v1091, %v1090
        %v1185 = vpack.c.b16 %v1093, %v1092
        %v1186 = vpack.c.b16 %v1095, %v1094
        %v1187 = vpack.c.b16 %v1097, %v1096
        %v1188 = vpack.c.b16 %v1099, %v1098
        %v1189 = vpack.c.b16 %v1101, %v1100
        %v1190 = vpack.c.b16 %v1103, %v1102
        %v1191 = vpack.c.b16 %v1105, %v1104
        %v1192 = vpack.c.b16 %v1107, %v1106
        %v1193 = vpack.c.b16 %v1109, %v1108
        %v1194 = vpack.c.b16 %v1111, %v1110
        %v1195 = vpack.c.b16 %v1113, %v1112
        %v1196 = vpack.c.b16 %v1115, %v1114
        %v1197 = vpack.c.b16 %v1117, %v1116
        %v1198 = vpack.c.b16 %v1119, %v1118
        %v1199 = vpack.c.b16 %v1121, %v1120
        %v1200 = vpack.c.b16 %v1123, %v1122
        %v1201 = vpack.c.b16 %v1125, %v1124
        %v1202 = vpack.c.b16 %v1127, %v1126
        %v1203 = vpack.c.b16 %v1129, %v1128
        %v1204 = vpack.c.b16 %v1131, %v1130
        %v1205 = vpack.c.b16 %v1133, %v1132
        %v1206 = vpack.c.b16 %v1135, %v1134
        %v1207 = vpack.c.b16 %v1137, %v1136
        %v1208 = vpack.c.b16 %v1139, %v1138
        %v1209 = vpack.c.b16 %v1141, %v1140
        %v1210 = vpack.c.b16 %v1143, %v1142
        %v1211 = vpack.c.b16 %v1145, %v1144
        %v1212 = vpack.c.b16 %v1147, %v1146
        %v1213 = vpack.c.b16 %v1149, %v1148
        %v1214 = vpack.c.b16 %v1151, %v1150
        %v1215 = vpack.c.b16 %v1153, %v1152
        %v1216 = vpack.c.b16 %v1155, %v1154
        %v1217 = vpack.c.b16 %v1157, %v1156
        %v1218 = vpack.c.b16 %v1159, %v1158
        %v1219 = vpack.c.b16 %v1161, %v1160
        %v1220 = vpack.c.b16 %v1163, %v1162
        %v1221 = vpack.c.b16 %v1165, %v1164
        %v1222 = vpack.c.b16 %v1167, %v1166
        %v1223 = vpack.c.b16 %v1169, %v1168
        %v1224 = vpack.c.b16 %v1171, %v1170
        %v1225 = vpack.c.b16 %v1173, %v1172
        %v1226 = vpack.c.b16 %v1175, %v1174
        %v1227 = vpack.c.b16 %v1177, %v1176
        %v1228 = vpack.c.b16 %v1179, %v1178
        %v1229 = vpack.c.b16 %v1181, %v1180
        %1278 = vmatprep.subr.bf16.mxu0 0
        %1279 = vmatpush1.bf16.msra.mxu0 %v1189
        %1280 = vmatprep.subr.bf16.mxu0 0
        %1281 = vmatpush1.bf16.msra.mxu0 %v1188
        %1282 = vmatprep.subr.bf16.mxu0 0
        %1283 = vmatpush1.bf16.msra.mxu0 %v1187
        %1284 = vmatprep.subr.bf16.mxu0 0
        %1285 = vmatpush1.bf16.msra.mxu0 %v1186
        %1286 = vmatprep.subr.bf16.mxu0 0
        %1287 = vmatpush1.bf16.msra.mxu0 %v1185
        %1288 = vmatprep.subr.bf16.mxu0 0
        %1289 = vmatpush1.bf16.msra.mxu0 %v1184
        %1290 = vmatprep.subr.bf16.mxu0 0
        %1291 = vmatpush1.bf16.msra.mxu0 %v1183
        %1292 = vmatprep.subr.bf16.mxu0 0
        %1293 = vmatpush1.bf16.msra.mxu0 %v1182
        %1294 = vmatprep.subr.bf16.mxu0 0
        %1295 = vmatpush2.bf16.msra.mxu0 %v1197
        %1296 = vmatprep.subr.bf16.mxu0 0
        %1297 = vmatpush2.bf16.msra.mxu0 %v1196
        %1298 = vmatprep.subr.bf16.mxu0 0
        %1299 = vmatpush2.bf16.msra.mxu0 %v1195
        %1300 = vmatprep.subr.bf16.mxu0 0
        %1301 = vmatpush2.bf16.msra.mxu0 %v1194
        %1302 = vmatprep.subr.bf16.mxu0 0
        %1303 = vmatpush2.bf16.msra.mxu0 %v1193
        %1304 = vmatprep.subr.bf16.mxu0 0
        %1305 = vmatpush2.bf16.msra.mxu0 %v1192
        %1306 = vmatprep.subr.bf16.mxu0 0
        %1307 = vmatpush2.bf16.msra.mxu0 %v1191
        %1308 = vmatprep.subr.bf16.mxu0 0
        %1309 = vmatpush2.bf16.msra.mxu0 %v1190
        %1310 = vmatprep.mubr.bf16.mxu0 %v943
        %1311 = vmatmul.mubr.bf16.gmra.mxu0 %v942
        %v1312 = vpop.f32.mrf.mxu0
        %v1313 = vadd.f32 %v862, %v1312
        %v1314 = vpop.f32.mrf.mxu0
        %v1315 = vpop.f32.mrf.mxu0
        %v1316 = vadd.f32 %v863, %v1315
        %v1317 = vpop.f32.mrf.mxu0
        %1318 = vmatprep.mubr.bf16.mxu0 %v949
        %1319 = vmatmul.mubr.bf16.gmra.mxu0 %v948
        %v1320 = vpop.f32.mrf.mxu0
        %v1321 = vadd.f32 %v864, %v1320
        %v1322 = vpop.f32.mrf.mxu0
        %v1323 = vpop.f32.mrf.mxu0
        %v1324 = vadd.f32 %v865, %v1323
        %v1325 = vpop.f32.mrf.mxu0
        %1326 = vmatprep.mubr.bf16.mxu0 %v955
        %1327 = vmatmul.mubr.bf16.gmra.mxu0 %v954
        %v1328 = vpop.f32.mrf.mxu0
        %v1329 = vadd.f32 %v866, %v1328
        %v1330 = vpop.f32.mrf.mxu0
        %v1331 = vpop.f32.mrf.mxu0
        %v1332 = vadd.f32 %v867, %v1331
        %v1333 = vpop.f32.mrf.mxu0
        %1334 = vmatprep.mubr.bf16.mxu0 %v961
        %1335 = vmatmul.mubr.bf16.gmra.mxu0 %v960
        %v1336 = vpop.f32.mrf.mxu0
        %v1337 = vadd.f32 %v868, %v1336
        %v1338 = vpop.f32.mrf.mxu0
        %v1339 = vpop.f32.mrf.mxu0
        %v1340 = vadd.f32 %v869, %v1339
        %v1341 = vpop.f32.mrf.mxu0
        %1342 = vdwg.mxu0
        %1343 = vmatprep.subr.bf16.mxu0 0
        %1344 = vmatpush1.bf16.msra.mxu0 %v1205
        %1345 = vmatprep.subr.bf16.mxu0 0
        %1346 = vmatpush1.bf16.msra.mxu0 %v1204
        %1347 = vmatprep.subr.bf16.mxu0 0
        %1348 = vmatpush1.bf16.msra.mxu0 %v1203
        %1349 = vmatprep.subr.bf16.mxu0 0
        %1350 = vmatpush1.bf16.msra.mxu0 %v1202
        %1351 = vmatprep.subr.bf16.mxu0 0
        %1352 = vmatpush1.bf16.msra.mxu0 %v1201
        %1353 = vmatprep.subr.bf16.mxu0 0
        %1354 = vmatpush1.bf16.msra.mxu0 %v1200
        %1355 = vmatprep.subr.bf16.mxu0 0
        %1356 = vmatpush1.bf16.msra.mxu0 %v1199
        %1357 = vmatprep.subr.bf16.mxu0 0
        %1358 = vmatpush1.bf16.msra.mxu0 %v1198
        %1359 = vmatprep.subr.bf16.mxu0 0
        %1360 = vmatpush2.bf16.msra.mxu0 %v1213
        %1361 = vmatprep.subr.bf16.mxu0 0
        %1362 = vmatpush2.bf16.msra.mxu0 %v1212
        %1363 = vmatprep.subr.bf16.mxu0 0
        %1364 = vmatpush2.bf16.msra.mxu0 %v1211
        %1365 = vmatprep.subr.bf16.mxu0 0
        %1366 = vmatpush2.bf16.msra.mxu0 %v1210
        %1367 = vmatprep.subr.bf16.mxu0 0
        %1368 = vmatpush2.bf16.msra.mxu0 %v1209
        %1369 = vmatprep.subr.bf16.mxu0 0
        %1370 = vmatpush2.bf16.msra.mxu0 %v1208
        %1371 = vmatprep.subr.bf16.mxu0 0
        %1372 = vmatpush2.bf16.msra.mxu0 %v1207
        %1373 = vmatprep.subr.bf16.mxu0 0
        %1374 = vmatpush2.bf16.msra.mxu0 %v1206
        %1375 = vmatprep.mubr.bf16.mxu0 %v945
        %1376 = vmatmul.mubr.bf16.gmra.mxu0 %v944
        %v1377 = vpop.f32.mrf.mxu0
        %v1378 = vadd.f32 %v1313, %v1377
        %v1379 = vpop.f32.mrf.mxu0
        %v1380 = vpop.f32.mrf.mxu0
        %v1381 = vadd.f32 %v1316, %v1380
        %v1382 = vpop.f32.mrf.mxu0
        %1383 = vmatprep.mubr.bf16.mxu0 %v951
        %1384 = vmatmul.mubr.bf16.gmra.mxu0 %v950
        %v1385 = vpop.f32.mrf.mxu0
        %v1386 = vadd.f32 %v1321, %v1385
        %v1387 = vpop.f32.mrf.mxu0
        %v1388 = vpop.f32.mrf.mxu0
        %v1389 = vadd.f32 %v1324, %v1388
        %v1390 = vpop.f32.mrf.mxu0
        %1391 = vmatprep.mubr.bf16.mxu0 %v957
        %1392 = vmatmul.mubr.bf16.gmra.mxu0 %v956
        %v1393 = vpop.f32.mrf.mxu0
        %v1394 = vadd.f32 %v1329, %v1393
        %v1395 = vpop.f32.mrf.mxu0
        %v1396 = vpop.f32.mrf.mxu0
        %v1397 = vadd.f32 %v1332, %v1396
        %v1398 = vpop.f32.mrf.mxu0
        %1399 = vmatprep.mubr.bf16.mxu0 %v963
        %1400 = vmatmul.mubr.bf16.gmra.mxu0 %v962
        %v1401 = vpop.f32.mrf.mxu0
        %v1402 = vadd.f32 %v1337, %v1401
        %v1403 = vpop.f32.mrf.mxu0
        %v1404 = vpop.f32.mrf.mxu0
        %v1405 = vadd.f32 %v1340, %v1404
        %v1406 = vpop.f32.mrf.mxu0
        %1407 = vdwg.mxu0
        %1408 = vmatprep.subr.bf16.mxu0 0
        %1409 = vmatpush1.bf16.msra.mxu0 %v1221
        %1410 = vmatprep.subr.bf16.mxu0 0
        %1411 = vmatpush1.bf16.msra.mxu0 %v1220
        %1412 = vmatprep.subr.bf16.mxu0 0
        %1413 = vmatpush1.bf16.msra.mxu0 %v1219
        %1414 = vmatprep.subr.bf16.mxu0 0
        %1415 = vmatpush1.bf16.msra.mxu0 %v1218
        %1416 = vmatprep.subr.bf16.mxu0 0
        %1417 = vmatpush1.bf16.msra.mxu0 %v1217
        %1418 = vmatprep.subr.bf16.mxu0 0
        %1419 = vmatpush1.bf16.msra.mxu0 %v1216
        %1420 = vmatprep.subr.bf16.mxu0 0
        %1421 = vmatpush1.bf16.msra.mxu0 %v1215
        %1422 = vmatprep.subr.bf16.mxu0 0
        %1423 = vmatpush1.bf16.msra.mxu0 %v1214
        %1424 = vmatprep.subr.bf16.mxu0 0
        %1425 = vmatpush2.bf16.msra.mxu0 %v1229
        %1426 = vmatprep.subr.bf16.mxu0 0
        %1427 = vmatpush2.bf16.msra.mxu0 %v1228
        %1428 = vmatprep.subr.bf16.mxu0 0
        %1429 = vmatpush2.bf16.msra.mxu0 %v1227
        %1430 = vmatprep.subr.bf16.mxu0 0
        %1431 = vmatpush2.bf16.msra.mxu0 %v1226
        %1432 = vmatprep.subr.bf16.mxu0 0
        %1433 = vmatpush2.bf16.msra.mxu0 %v1225
        %1434 = vmatprep.subr.bf16.mxu0 0
        %1435 = vmatpush2.bf16.msra.mxu0 %v1224
        %1436 = vmatprep.subr.bf16.mxu0 0
        %1437 = vmatpush2.bf16.msra.mxu0 %v1223
        %1438 = vmatprep.subr.bf16.mxu0 0
        %1439 = vmatpush2.bf16.msra.mxu0 %v1222
        %1440 = vmatprep.mubr.bf16.mxu0 %v947
        %1441 = vmatmul.mubr.bf16.gmra.mxu0 %v946
        %v1442 = vpop.f32.mrf.mxu0
        %v1443 = vadd.f32 %v1378, %v1442
        %v1444 = vpop.f32.mrf.mxu0
        %v1445 = vpop.f32.mrf.mxu0
        %v1446 = vadd.f32 %v1381, %v1445
        %v1447 = vpop.f32.mrf.mxu0
        %1448 = vmatprep.mubr.bf16.mxu0 %v953
        %1449 = vmatmul.mubr.bf16.gmra.mxu0 %v952
        %v1450 = vpop.f32.mrf.mxu0
        %v1451 = vadd.f32 %v1386, %v1450
        %v1452 = vpop.f32.mrf.mxu0
        %v1453 = vpop.f32.mrf.mxu0
        %v1454 = vadd.f32 %v1389, %v1453
        %v1455 = vpop.f32.mrf.mxu0
        %1456 = vmatprep.mubr.bf16.mxu0 %v959
        %1457 = vmatmul.mubr.bf16.gmra.mxu0 %v958
        %v1458 = vpop.f32.mrf.mxu0
        %v1459 = vadd.f32 %v1394, %v1458
        %v1460 = vpop.f32.mrf.mxu0
        %v1461 = vpop.f32.mrf.mxu0
        %v1462 = vadd.f32 %v1397, %v1461
        %v1463 = vpop.f32.mrf.mxu0
        %1464 = vmatprep.mubr.bf16.mxu0 %v965
        %1465 = vmatmul.mubr.bf16.gmra.mxu0 %v964
        %v1466 = vpop.f32.mrf.mxu0
        %v1467 = vadd.f32 %v1402, %v1466
        %v1468 = vpop.f32.mrf.mxu0
        %v1469 = vpop.f32.mrf.mxu0
        %v1470 = vadd.f32 %v1405, %v1469
        %v1471 = vpop.f32.mrf.mxu0
        %1472 = vdwg.mxu0
        %v1473 = vld [vmem:[%s3] sm:$0x1]
        %v1474 = vld [vmem:[%s4] sm:$0x1]
        %1475 = vadd.xlane.f32.xlu0 %v1443
        %v1476 = vpop.xlane.xlu0 %1475
        %1477 = vadd.xlane.f32.xlu0 %v1446
        %v1478 = vpop.xlane.xlu0 %1477
        %1479 = vadd.xlane.f32.xlu0 %v1451
        %v1480 = vpop.xlane.xlu0 %1479
        %1481 = vadd.xlane.f32.xlu0 %v1454
        %v1482 = vpop.xlane.xlu0 %1481
        %1483 = vadd.xlane.f32.xlu0 %v1459
        %v1484 = vpop.xlane.xlu0 %1483
        %1485 = vadd.xlane.f32.xlu0 %v1462
        %v1486 = vpop.xlane.xlu0 %1485
        %1487 = vadd.xlane.f32.xlu0 %v1467
        %v1488 = vpop.xlane.xlu0 %1487
        %1489 = vadd.xlane.f32.xlu0 %v1470
        %v1490 = vpop.xlane.xlu0 %1489
        %v1491 = vrcp.pop 128.0
        %v1492 = vmul.f32 %v1476, %v1491
        %v1493 = vmul.f32 %v1478, %v1491
        %v1494 = vmul.f32 %v1480, %v1491
        %v1495 = vmul.f32 %v1482, %v1491
        %v1496 = vmul.f32 %v1484, %v1491
        %v1497 = vmul.f32 %v1486, %v1491
        %v1498 = vmul.f32 %v1488, %v1491
        %v1499 = vmul.f32 %v1490, %v1491
        %v1500 = vsub.f32 %v1443, %v1492
        %v1501 = vsub.f32 %v1446, %v1493
        %v1502 = vsub.f32 %v1451, %v1494
        %v1503 = vsub.f32 %v1454, %v1495
        %v1504 = vsub.f32 %v1459, %v1496
        %v1505 = vsub.f32 %v1462, %v1497
        %v1506 = vsub.f32 %v1467, %v1498
        %v1507 = vsub.f32 %v1470, %v1499
        %v1508 = vmul.f32 %v1500, %v1500
        %v1509 = vmul.f32 %v1501, %v1501
        %v1510 = vmul.f32 %v1502, %v1502
        %v1511 = vmul.f32 %v1503, %v1503
        %v1512 = vmul.f32 %v1504, %v1504
        %v1513 = vmul.f32 %v1505, %v1505
        %v1514 = vmul.f32 %v1506, %v1506
        %v1515 = vmul.f32 %v1507, %v1507
        %1516 = vadd.xlane.f32.xlu0 %v1508
        %v1517 = vpop.xlane.xlu0 %1516
        %1518 = vadd.xlane.f32.xlu0 %v1509
        %v1519 = vpop.xlane.xlu0 %1518
        %1520 = vadd.xlane.f32.xlu0 %v1510
        %v1521 = vpop.xlane.xlu0 %1520
        %1522 = vadd.xlane.f32.xlu0 %v1511
        %v1523 = vpop.xlane.xlu0 %1522
        %1524 = vadd.xlane.f32.xlu0 %v1512
        %v1525 = vpop.xlane.xlu0 %1524
        %1526 = vadd.xlane.f32.xlu0 %v1513
        %v1527 = vpop.xlane.xlu0 %1526
        %1528 = vadd.xlane.f32.xlu0 %v1514
        %v1529 = vpop.xlane.xlu0 %1528
        %1530 = vadd.xlane.f32.xlu0 %v1515
        %v1531 = vpop.xlane.xlu0 %1530
        %v1532 = vmul.f32 %v1517, %v1491
        %v1533 = vmul.f32 %v1519, %v1491
        %v1534 = vmul.f32 %v1521, %v1491
        %v1535 = vmul.f32 %v1523, %v1491
        %v1536 = vmul.f32 %v1525, %v1491
        %v1537 = vmul.f32 %v1527, %v1491
        %v1538 = vmul.f32 %v1529, %v1491
        %v1539 = vmul.f32 %v1531, %v1491
        %v1540 = vadd.f32 %v1532, 1e-05
        %v1541 = vadd.f32 %v1533, 1e-05
        %v1542 = vadd.f32 %v1534, 1e-05
        %v1543 = vadd.f32 %v1535, 1e-05
        %v1544 = vadd.f32 %v1536, 1e-05
        %v1545 = vadd.f32 %v1537, 1e-05
        %v1546 = vadd.f32 %v1538, 1e-05
        %v1547 = vadd.f32 %v1539, 1e-05
        %v1548 = vrsqrt.pop %v1540
        %v1549 = vrsqrt.pop %v1541
        %v1550 = vrsqrt.pop %v1542
        %v1551 = vrsqrt.pop %v1543
        %v1552 = vrsqrt.pop %v1544
        %v1553 = vrsqrt.pop %v1545
        %v1554 = vrsqrt.pop %v1546
        %v1555 = vrsqrt.pop %v1547
        %v1556 = vmul.f32 %v1500, %v1548
        %v1557 = vmul.f32 %v1501, %v1549
        %v1558 = vmul.f32 %v1502, %v1550
        %v1559 = vmul.f32 %v1503, %v1551
        %v1560 = vmul.f32 %v1504, %v1552
        %v1561 = vmul.f32 %v1505, %v1553
        %v1562 = vmul.f32 %v1506, %v1554
        %v1563 = vmul.f32 %v1507, %v1555
        %v1565 = vlaneseq
        %v1566 = vshrl.u32 %v1565, 7
        %v1567 = vsub.s32 0, %v1566
        %v1568 = vrot.slane %v1473, %v1567
        %v1570 = vmul.f32 %v1556, %v1568
        %v1571 = vmul.f32 %v1557, %v1568
        %v1572 = vmul.f32 %v1558, %v1568
        %v1573 = vmul.f32 %v1559, %v1568
        %v1574 = vmul.f32 %v1560, %v1568
        %v1575 = vmul.f32 %v1561, %v1568
        %v1576 = vmul.f32 %v1562, %v1568
        %v1577 = vmul.f32 %v1563, %v1568
        %v1579 = vlaneseq
        %v1580 = vshrl.u32 %v1579, 7
        %v1581 = vsub.s32 0, %v1580
        %v1582 = vrot.slane %v1474, %v1581
        %v1584 = vadd.f32 %v1570, %v1582
        %v1585 = vadd.f32 %v1571, %v1582
        %v1586 = vadd.f32 %v1572, %v1582
        %v1587 = vadd.f32 %v1573, %v1582
        %v1588 = vadd.f32 %v1574, %v1582
        %v1589 = vadd.f32 %v1575, %v1582
        %v1590 = vadd.f32 %v1576, %v1582
        %v1591 = vadd.f32 %v1577, %v1582
        %v1592 = vlaneseq
        %v1593 = vshrl.u32 %v1592, 7
        %v1594 = vadd.s32 %v1593, 8
        %v1595 = vadd.s32 %v1593, 16
        %v1596 = vadd.s32 %v1593, 24
        %v1597 = vadd.s32 %v1593, 32
        %v1598 = vadd.s32 %v1593, 40
        %v1599 = vadd.s32 %v1593, 48
        %v1600 = vadd.s32 %v1593, 56
        %v1601 = vlaneseq
        %v1602 = vand.u32 %v1601, 127
        %v1603 = vshra.s32 %v1593, 3
        %v1604 = vshra.s32 %v1594, 3
        %v1605 = vshra.s32 %v1595, 3
        %v1606 = vshra.s32 %v1596, 3
        %v1607 = vshra.s32 %v1597, 3
        %v1608 = vshra.s32 %v1598, 3
        %v1609 = vshra.s32 %v1599, 3
        %v1610 = vshra.s32 %v1600, 3
        %v1611 = vshra.s32 %v1602, 3
        %vm1612 = vcmp.eq.s32.totalorder %v1603, %v1611
        %vm1613 = vcmp.eq.s32.totalorder %v1604, %v1611
        %vm1614 = vcmp.eq.s32.totalorder %v1605, %v1611
        %vm1615 = vcmp.eq.s32.totalorder %v1606, %v1611
        %vm1616 = vcmp.eq.s32.totalorder %v1607, %v1611
        %vm1617 = vcmp.eq.s32.totalorder %v1608, %v1611
        %vm1618 = vcmp.eq.s32.totalorder %v1609, %v1611
        %vm1619 = vcmp.eq.s32.totalorder %v1610, %v1611
        %v1620 = vand.u32 %v1602, 7
        %vm1621 = vcmp.lt.s32.totalorder %v1620, 5
        %vm1622 = vmand %vm1612, %vm1621
        %vm1623 = vmand %vm1613, %vm1621
        %vm1624 = vmand %vm1614, %vm1621
        %vm1625 = vmand %vm1615, %vm1621
        %vm1626 = vmand %vm1616, %vm1621
        %vm1627 = vmand %vm1617, %vm1621
        %vm1628 = vmand %vm1618, %vm1621
        %vm1629 = vmand %vm1619, %vm1621
        %v1630 = vsel %vm1622, 0.0, -1e+30
        %v1631 = vsel %vm1623, 0.0, -1e+30
        %v1632 = vsel %vm1624, 0.0, -1e+30
        %v1633 = vsel %vm1625, 0.0, -1e+30
        %v1634 = vsel %vm1626, 0.0, -1e+30
        %v1635 = vsel %vm1627, 0.0, -1e+30
        %v1636 = vsel %vm1628, 0.0, -1e+30
        %v1637 = vsel %vm1629, 0.0, -1e+30
        %v1638 = vshra.s32 %v1602, 5
        %v1639 = vld [vmem:[%s5] sm:$0x1]
        %v1640 = vld [vmem:[%s6] sm:$0x1]
        %1641 = vadd.xlane.f32.xlu0 %v1584
        %v1642 = vpop.xlane.xlu0 %1641
        %1643 = vadd.xlane.f32.xlu0 %v1585
        %v1644 = vpop.xlane.xlu0 %1643
        %1645 = vadd.xlane.f32.xlu0 %v1586
        %v1646 = vpop.xlane.xlu0 %1645
        %1647 = vadd.xlane.f32.xlu0 %v1587
        %v1648 = vpop.xlane.xlu0 %1647
        %1649 = vadd.xlane.f32.xlu0 %v1588
        %v1650 = vpop.xlane.xlu0 %1649
        %1651 = vadd.xlane.f32.xlu0 %v1589
        %v1652 = vpop.xlane.xlu0 %1651
        %1653 = vadd.xlane.f32.xlu0 %v1590
        %v1654 = vpop.xlane.xlu0 %1653
        %1655 = vadd.xlane.f32.xlu0 %v1591
        %v1656 = vpop.xlane.xlu0 %1655
        %v1657 = vmul.f32 %v1642, %v1491
        %v1658 = vmul.f32 %v1644, %v1491
        %v1659 = vmul.f32 %v1646, %v1491
        %v1660 = vmul.f32 %v1648, %v1491
        %v1661 = vmul.f32 %v1650, %v1491
        %v1662 = vmul.f32 %v1652, %v1491
        %v1663 = vmul.f32 %v1654, %v1491
        %v1664 = vmul.f32 %v1656, %v1491
        %v1665 = vsub.f32 %v1584, %v1657
        %v1666 = vsub.f32 %v1585, %v1658
        %v1667 = vsub.f32 %v1586, %v1659
        %v1668 = vsub.f32 %v1587, %v1660
        %v1669 = vsub.f32 %v1588, %v1661
        %v1670 = vsub.f32 %v1589, %v1662
        %v1671 = vsub.f32 %v1590, %v1663
        %v1672 = vsub.f32 %v1591, %v1664
        %v1673 = vmul.f32 %v1665, %v1665
        %v1674 = vmul.f32 %v1666, %v1666
        %v1675 = vmul.f32 %v1667, %v1667
        %v1676 = vmul.f32 %v1668, %v1668
        %v1677 = vmul.f32 %v1669, %v1669
        %v1678 = vmul.f32 %v1670, %v1670
        %v1679 = vmul.f32 %v1671, %v1671
        %v1680 = vmul.f32 %v1672, %v1672
        %1681 = vadd.xlane.f32.xlu0 %v1673
        %v1682 = vpop.xlane.xlu0 %1681
        %1683 = vadd.xlane.f32.xlu0 %v1674
        %v1684 = vpop.xlane.xlu0 %1683
        %1685 = vadd.xlane.f32.xlu0 %v1675
        %v1686 = vpop.xlane.xlu0 %1685
        %1687 = vadd.xlane.f32.xlu0 %v1676
        %v1688 = vpop.xlane.xlu0 %1687
        %1689 = vadd.xlane.f32.xlu0 %v1677
        %v1690 = vpop.xlane.xlu0 %1689
        %1691 = vadd.xlane.f32.xlu0 %v1678
        %v1692 = vpop.xlane.xlu0 %1691
        %1693 = vadd.xlane.f32.xlu0 %v1679
        %v1694 = vpop.xlane.xlu0 %1693
        %1695 = vadd.xlane.f32.xlu0 %v1680
        %v1696 = vpop.xlane.xlu0 %1695
        %v1697 = vmul.f32 %v1682, %v1491
        %v1698 = vmul.f32 %v1684, %v1491
        %v1699 = vmul.f32 %v1686, %v1491
        %v1700 = vmul.f32 %v1688, %v1491
        %v1701 = vmul.f32 %v1690, %v1491
        %v1702 = vmul.f32 %v1692, %v1491
        %v1703 = vmul.f32 %v1694, %v1491
        %v1704 = vmul.f32 %v1696, %v1491
        %v1705 = vadd.f32 %v1697, 1e-05
        %v1706 = vadd.f32 %v1698, 1e-05
        %v1707 = vadd.f32 %v1699, 1e-05
        %v1708 = vadd.f32 %v1700, 1e-05
        %v1709 = vadd.f32 %v1701, 1e-05
        %v1710 = vadd.f32 %v1702, 1e-05
        %v1711 = vadd.f32 %v1703, 1e-05
        %v1712 = vadd.f32 %v1704, 1e-05
        %v1713 = vrsqrt.pop %v1705
        %v1714 = vrsqrt.pop %v1706
        %v1715 = vrsqrt.pop %v1707
        %v1716 = vrsqrt.pop %v1708
        %v1717 = vrsqrt.pop %v1709
        %v1718 = vrsqrt.pop %v1710
        %v1719 = vrsqrt.pop %v1711
        %v1720 = vrsqrt.pop %v1712
        %v1721 = vmul.f32 %v1665, %v1713
        %v1722 = vmul.f32 %v1666, %v1714
        %v1723 = vmul.f32 %v1667, %v1715
        %v1724 = vmul.f32 %v1668, %v1716
        %v1725 = vmul.f32 %v1669, %v1717
        %v1726 = vmul.f32 %v1670, %v1718
        %v1727 = vmul.f32 %v1671, %v1719
        %v1728 = vmul.f32 %v1672, %v1720
        %v1730 = vlaneseq
        %v1731 = vshrl.u32 %v1730, 7
        %v1732 = vsub.s32 0, %v1731
        %v1733 = vrot.slane %v1639, %v1732
        %v1735 = vmul.f32 %v1721, %v1733
        %v1736 = vmul.f32 %v1722, %v1733
        %v1737 = vmul.f32 %v1723, %v1733
        %v1738 = vmul.f32 %v1724, %v1733
        %v1739 = vmul.f32 %v1725, %v1733
        %v1740 = vmul.f32 %v1726, %v1733
        %v1741 = vmul.f32 %v1727, %v1733
        %v1742 = vmul.f32 %v1728, %v1733
        %v1744 = vlaneseq
        %v1745 = vshrl.u32 %v1744, 7
        %v1746 = vsub.s32 0, %v1745
        %v1747 = vrot.slane %v1640, %v1746
        %v1749 = vadd.f32 %v1735, %v1747
        %v1750 = vadd.f32 %v1736, %v1747
        %v1751 = vadd.f32 %v1737, %v1747
        %v1752 = vadd.f32 %v1738, %v1747
        %v1753 = vadd.f32 %v1739, %v1747
        %v1754 = vadd.f32 %v1740, %v1747
        %v1755 = vadd.f32 %v1741, %v1747
        %v1756 = vadd.f32 %v1742, %v1747
        %v1757 = vpack.c.bf16 %v1750, %v1749
        %v1758 = vpack.c.bf16 %v1752, %v1751
        %v1759 = vpack.c.bf16 %v1754, %v1753
        %v1760 = vpack.c.bf16 %v1756, %v1755
        %v1761 = vld [vmem:[%s7] sm:$0xff]
        %v1762 = vld [vmem:[%s7 + $0x8] sm:$0xf]
        %v1763 = vld [vmem:[%s7 + $0xc] sm:$0xff]
        %v1764 = vld [vmem:[%s7 + $0x14] sm:$0xf]
        %v1765 = vld [vmem:[%s7 + $0x18] sm:$0xff]
        %v1766 = vld [vmem:[%s7 + $0x20] sm:$0xf]
        %v1767 = vld [vmem:[%s7 + $0x24] sm:$0xff]
        %v1768 = vld [vmem:[%s7 + $0x2c] sm:$0xf]
        %v1769 = vld [vmem:[%s7 + $0x30] sm:$0xff]
        %v1770 = vld [vmem:[%s7 + $0x38] sm:$0xf]
        %v1771 = vld [vmem:[%s7 + $0x3c] sm:$0xff]
        %v1772 = vld [vmem:[%s7 + $0x44] sm:$0xf]
        %v1773 = vld [vmem:[%s7 + $0x48] sm:$0xff]
        %v1774 = vld [vmem:[%s7 + $0x50] sm:$0xf]
        %v1775 = vld [vmem:[%s7 + $0x54] sm:$0xff]
        %v1776 = vld [vmem:[%s7 + $0x5c] sm:$0xf]
        %v1777 = vld [vmem:[%s7 + $0x60] sm:$0xff]
        %v1778 = vld [vmem:[%s7 + $0x68] sm:$0xf]
        %v1779 = vld [vmem:[%s7 + $0x6c] sm:$0xff]
        %v1780 = vld [vmem:[%s7 + $0x74] sm:$0xf]
        %v1781 = vld [vmem:[%s7 + $0x78] sm:$0xff]
        %v1782 = vld [vmem:[%s7 + $0x80] sm:$0xf]
        %v1783 = vld [vmem:[%s7 + $0x84] sm:$0xff]
        %v1784 = vld [vmem:[%s7 + $0x8c] sm:$0xf]
        %v1785 = vld [vmem:[%s7 + $0x90] sm:$0xff]
        %v1786 = vld [vmem:[%s7 + $0x98] sm:$0xf]
        %v1787 = vld [vmem:[%s7 + $0x9c] sm:$0xff]
        %v1788 = vld [vmem:[%s7 + $0xa4] sm:$0xf]
        %v1789 = vld [vmem:[%s7 + $0xa8] sm:$0xff]
        %v1790 = vld [vmem:[%s7 + $0xb0] sm:$0xf]
        %v1791 = vld [vmem:[%s7 + $0xb4] sm:$0xff]
        %v1792 = vld [vmem:[%s7 + $0xbc] sm:$0xf]
        %v1793 = vld [vmem:[%s8] sm:$0x7]
        %v1795 = vlaneseq
        %v1796 = vshrl.u32 %v1795, 7
        %v1797 = vsub.s32 0, %v1796
        %v1798 = vrot.slane %v1793, %v1797
        %v1799 = vlaneseq
        %v1800 = vshrl.u32 %v1799, 7
        %v1801 = vsub.s32 1, %v1800
        %v1802 = vrot.slane %v1793, %v1801
        %v1803 = vlaneseq
        %v1804 = vshrl.u32 %v1803, 7
        %v1805 = vsub.s32 2, %v1804
        %v1806 = vrot.slane %v1793, %v1805
        %v1842 = vunpack.c.l.b16 %v1761
        %v1843 = vunpack.c.h.b16 %v1761
        %v1844 = vunpack.c.l.b16 %v1762
        %v1845 = vunpack.c.l.b16 %v1763
        %v1846 = vunpack.c.h.b16 %v1763
        %v1847 = vunpack.c.l.b16 %v1764
        %v1848 = vunpack.c.l.b16 %v1765
        %v1849 = vunpack.c.h.b16 %v1765
        %v1850 = vunpack.c.l.b16 %v1766
        %v1851 = vunpack.c.l.b16 %v1767
        %v1852 = vunpack.c.h.b16 %v1767
        %v1853 = vunpack.c.l.b16 %v1768
        %v1854 = vunpack.c.l.b16 %v1769
        %v1855 = vunpack.c.h.b16 %v1769
        %v1856 = vunpack.c.l.b16 %v1770
        %v1857 = vunpack.c.l.b16 %v1771
        %v1858 = vunpack.c.h.b16 %v1771
        %v1859 = vunpack.c.l.b16 %v1772
        %v1860 = vunpack.c.l.b16 %v1773
        %v1861 = vunpack.c.h.b16 %v1773
        %v1862 = vunpack.c.l.b16 %v1774
        %v1863 = vunpack.c.l.b16 %v1775
        %v1864 = vunpack.c.h.b16 %v1775
        %v1865 = vunpack.c.l.b16 %v1776
        %v1866 = vunpack.c.l.b16 %v1777
        %v1867 = vunpack.c.h.b16 %v1777
        %v1868 = vunpack.c.l.b16 %v1778
        %v1869 = vunpack.c.l.b16 %v1779
        %v1870 = vunpack.c.h.b16 %v1779
        %v1871 = vunpack.c.l.b16 %v1780
        %v1872 = vunpack.c.l.b16 %v1781
        %v1873 = vunpack.c.h.b16 %v1781
        %v1874 = vunpack.c.l.b16 %v1782
        %v1875 = vunpack.c.l.b16 %v1783
        %v1876 = vunpack.c.h.b16 %v1783
        %v1877 = vunpack.c.l.b16 %v1784
        %v1878 = vunpack.c.l.b16 %v1785
        %v1879 = vunpack.c.h.b16 %v1785
        %v1880 = vunpack.c.l.b16 %v1786
        %v1881 = vunpack.c.l.b16 %v1787
        %v1882 = vunpack.c.h.b16 %v1787
        %v1883 = vunpack.c.l.b16 %v1788
        %v1884 = vunpack.c.l.b16 %v1789
        %v1885 = vunpack.c.h.b16 %v1789
        %v1886 = vunpack.c.l.b16 %v1790
        %v1887 = vunpack.c.l.b16 %v1791
        %v1888 = vunpack.c.h.b16 %v1791
        %v1889 = vunpack.c.l.b16 %v1792
        %v1890 = vpack.c.b16 %v1845, %v1842
        %v1891 = vpack.c.b16 %v1846, %v1843
        %v1892 = vpack.c.b16 %v1847, %v1844
        %v1893 = vpack.c.b16 %v1851, %v1848
        %v1894 = vpack.c.b16 %v1852, %v1849
        %v1895 = vpack.c.b16 %v1853, %v1850
        %v1896 = vpack.c.b16 %v1857, %v1854
        %v1897 = vpack.c.b16 %v1858, %v1855
        %v1898 = vpack.c.b16 %v1859, %v1856
        %v1899 = vpack.c.b16 %v1863, %v1860
        %v1900 = vpack.c.b16 %v1864, %v1861
        %v1901 = vpack.c.b16 %v1865, %v1862
        %v1902 = vpack.c.b16 %v1869, %v1866
        %v1903 = vpack.c.b16 %v1870, %v1867
        %v1904 = vpack.c.b16 %v1871, %v1868
        %v1905 = vpack.c.b16 %v1875, %v1872
        %v1906 = vpack.c.b16 %v1876, %v1873
        %v1907 = vpack.c.b16 %v1877, %v1874
        %v1908 = vpack.c.b16 %v1881, %v1878
        %v1909 = vpack.c.b16 %v1882, %v1879
        %v1910 = vpack.c.b16 %v1883, %v1880
        %v1911 = vpack.c.b16 %v1887, %v1884
        %v1912 = vpack.c.b16 %v1888, %v1885
        %v1913 = vpack.c.b16 %v1889, %v1886
        %1938 = vmatprep.subr.bf16.mxu0 %v1912
        %1939 = vmatpush1.bf16.msra.mxu0 %v1911
        %1940 = vmatprep.subr.bf16.mxu0 %v1909
        %1941 = vmatpush1.bf16.msra.mxu0 %v1908
        %1942 = vmatprep.subr.bf16.mxu0 %v1906
        %1943 = vmatpush1.bf16.msra.mxu0 %v1905
        %1944 = vmatprep.subr.bf16.mxu0 %v1903
        %1945 = vmatpush1.bf16.msra.mxu0 %v1902
        %1946 = vmatprep.subr.bf16.mxu0 %v1900
        %1947 = vmatpush1.bf16.msra.mxu0 %v1899
        %1948 = vmatprep.subr.bf16.mxu0 %v1897
        %1949 = vmatpush1.bf16.msra.mxu0 %v1896
        %1950 = vmatprep.subr.bf16.mxu0 %v1894
        %1951 = vmatpush1.bf16.msra.mxu0 %v1893
        %1952 = vmatprep.subr.bf16.mxu0 %v1891
        %1953 = vmatpush1.bf16.msra.mxu0 %v1890
        %1954 = vmatprep.subr.bf16.mxu0 0
        %1955 = vmatpush2.bf16.msra.mxu0 0
        %1956 = vmatprep.subr.bf16.mxu0 0
        %1957 = vmatpush2.bf16.msra.mxu0 0
        %1958 = vmatprep.subr.bf16.mxu0 0
        %1959 = vmatpush2.bf16.msra.mxu0 0
        %1960 = vmatprep.subr.bf16.mxu0 0
        %1961 = vmatpush2.bf16.msra.mxu0 0
        %1962 = vmatprep.subr.bf16.mxu0 0
        %1963 = vmatpush2.bf16.msra.mxu0 0
        %1964 = vmatprep.subr.bf16.mxu0 0
        %1965 = vmatpush2.bf16.msra.mxu0 0
        %1966 = vmatprep.subr.bf16.mxu0 0
        %1967 = vmatpush2.bf16.msra.mxu0 0
        %1968 = vmatprep.subr.bf16.mxu0 0
        %1969 = vmatpush2.bf16.msra.mxu0 0
        %1970 = vmatprep.mubr.bf16.mxu0 0
        %1971 = vmatmul.mubr.bf16.gmra.mxu0 %v1757
        %v1972 = vpop.f32.mrf.mxu0
        %v1973 = vadd.f32 %v1798, %v1972
        %v1974 = vpop.f32.mrf.mxu0
        %v1975 = vadd.f32 %v1802, %v1974
        %v1976 = vpop.f32.mrf.mxu0
        %v1977 = vadd.f32 %v1798, %v1976
        %v1978 = vpop.f32.mrf.mxu0
        %v1979 = vadd.f32 %v1802, %v1978
        %1980 = vmatprep.mubr.bf16.mxu0 0
        %1981 = vmatmul.mubr.bf16.gmra.mxu0 %v1758
        %v1982 = vpop.f32.mrf.mxu0
        %v1983 = vadd.f32 %v1798, %v1982
        %v1984 = vpop.f32.mrf.mxu0
        %v1985 = vadd.f32 %v1802, %v1984
        %v1986 = vpop.f32.mrf.mxu0
        %v1987 = vadd.f32 %v1798, %v1986
        %v1988 = vpop.f32.mrf.mxu0
        %v1989 = vadd.f32 %v1802, %v1988
        %1990 = vmatprep.mubr.bf16.mxu0 0
        %1991 = vmatmul.mubr.bf16.gmra.mxu0 %v1759
        %v1992 = vpop.f32.mrf.mxu0
        %v1993 = vadd.f32 %v1798, %v1992
        %v1994 = vpop.f32.mrf.mxu0
        %v1995 = vadd.f32 %v1802, %v1994
        %v1996 = vpop.f32.mrf.mxu0
        %v1997 = vadd.f32 %v1798, %v1996
        %v1998 = vpop.f32.mrf.mxu0
        %v1999 = vadd.f32 %v1802, %v1998
        %2000 = vmatprep.mubr.bf16.mxu0 0
        %2001 = vmatmul.mubr.bf16.gmra.mxu0 %v1760
        %v2002 = vpop.f32.mrf.mxu0
        %v2003 = vadd.f32 %v1798, %v2002
        %v2004 = vpop.f32.mrf.mxu0
        %v2005 = vadd.f32 %v1802, %v2004
        %v2006 = vpop.f32.mrf.mxu0
        %v2007 = vadd.f32 %v1798, %v2006
        %v2008 = vpop.f32.mrf.mxu0
        %v2009 = vadd.f32 %v1802, %v2008
        %2010 = vdwg.mxu0
        %2011 = vmatprep.subr.bf16.mxu0 0
        %2012 = vmatpush1.bf16.msra.mxu0 %v1913
        %2013 = vmatprep.subr.bf16.mxu0 0
        %2014 = vmatpush1.bf16.msra.mxu0 %v1910
        %2015 = vmatprep.subr.bf16.mxu0 0
        %2016 = vmatpush1.bf16.msra.mxu0 %v1907
        %2017 = vmatprep.subr.bf16.mxu0 0
        %2018 = vmatpush1.bf16.msra.mxu0 %v1904
        %2019 = vmatprep.subr.bf16.mxu0 0
        %2020 = vmatpush1.bf16.msra.mxu0 %v1901
        %2021 = vmatprep.subr.bf16.mxu0 0
        %2022 = vmatpush1.bf16.msra.mxu0 %v1898
        %2023 = vmatprep.subr.bf16.mxu0 0
        %2024 = vmatpush1.bf16.msra.mxu0 %v1895
        %2025 = vmatprep.subr.bf16.mxu0 0
        %2026 = vmatpush1.bf16.msra.mxu0 %v1892
        %2027 = vmatprep.subr.bf16.mxu0 0
        %2028 = vmatpush2.bf16.msra.mxu0 0
        %2029 = vmatprep.subr.bf16.mxu0 0
        %2030 = vmatpush2.bf16.msra.mxu0 0
        %2031 = vmatprep.subr.bf16.mxu0 0
        %2032 = vmatpush2.bf16.msra.mxu0 0
        %2033 = vmatprep.subr.bf16.mxu0 0
        %2034 = vmatpush2.bf16.msra.mxu0 0
        %2035 = vmatprep.subr.bf16.mxu0 0
        %2036 = vmatpush2.bf16.msra.mxu0 0
        %2037 = vmatprep.subr.bf16.mxu0 0
        %2038 = vmatpush2.bf16.msra.mxu0 0
        %2039 = vmatprep.subr.bf16.mxu0 0
        %2040 = vmatpush2.bf16.msra.mxu0 0
        %2041 = vmatprep.subr.bf16.mxu0 0
        %2042 = vmatpush2.bf16.msra.mxu0 0
        %2043 = vmatprep.mubr.bf16.mxu0 0
        %2044 = vmatmul.mubr.bf16.gmra.mxu0 %v1757
        %v2045 = vpop.f32.mrf.mxu0
        %v2046 = vadd.f32 %v1806, %v2045
        %v2047 = vpop.f32.mrf.mxu0
        %v2048 = vpop.f32.mrf.mxu0
        %v2049 = vadd.f32 %v1806, %v2048
        %v2050 = vpop.f32.mrf.mxu0
        %2051 = vmatprep.mubr.bf16.mxu0 0
        %2052 = vmatmul.mubr.bf16.gmra.mxu0 %v1758
        %v2053 = vpop.f32.mrf.mxu0
        %v2054 = vadd.f32 %v1806, %v2053
        %v2055 = vpop.f32.mrf.mxu0
        %v2056 = vpop.f32.mrf.mxu0
        %v2057 = vadd.f32 %v1806, %v2056
        %v2058 = vpop.f32.mrf.mxu0
        %2059 = vmatprep.mubr.bf16.mxu0 0
        %2060 = vmatmul.mubr.bf16.gmra.mxu0 %v1759
        %v2061 = vpop.f32.mrf.mxu0
        %v2062 = vadd.f32 %v1806, %v2061
        %v2063 = vpop.f32.mrf.mxu0
        %v2064 = vpop.f32.mrf.mxu0
        %v2065 = vadd.f32 %v1806, %v2064
        %v2066 = vpop.f32.mrf.mxu0
        %2067 = vmatprep.mubr.bf16.mxu0 0
        %2068 = vmatmul.mubr.bf16.gmra.mxu0 %v1760
        %v2069 = vpop.f32.mrf.mxu0
        %v2070 = vadd.f32 %v1806, %v2069
        %v2071 = vpop.f32.mrf.mxu0
        %v2072 = vpop.f32.mrf.mxu0
        %v2073 = vadd.f32 %v1806, %v2072
        %v2074 = vpop.f32.mrf.mxu0
        %2075 = vdwg.mxu0
        %v2076 = vpack.c.bf16 %v1979, %v1975
        %v2077 = vpack.c.bf16 %v1989, %v1985
        %v2078 = vpack.c.bf16 %v1999, %v1995
        %v2079 = vpack.c.bf16 %v2009, %v2005
        %v2080 = vpack.c.bf16 %v2049, %v2046
        %v2081 = vpack.c.bf16 %v2057, %v2054
        %v2082 = vpack.c.bf16 %v2065, %v2062
        %v2083 = vpack.c.bf16 %v2073, %v2070
        %vm2084 = vcmp.eq.s32.totalorder %v1638, 0
        %v2085 = vsel %vm2084, %v1973, 0.0
        %v2086 = vsel %vm2084, %v1977, 0.0
        %v2087 = vsel %vm2084, %v1983, 0.0
        %v2088 = vsel %vm2084, %v1987, 0.0
        %v2089 = vsel %vm2084, %v1993, 0.0
        %v2090 = vsel %vm2084, %v1997, 0.0
        %v2091 = vsel %vm2084, %v2003, 0.0
        %v2092 = vsel %vm2084, %v2007, 0.0
        %v2093 = vpack.c.bf16 %v2086, %v2085
        %v2094 = vpack.c.bf16 %v2088, %v2087
        %v2095 = vpack.c.bf16 %v2090, %v2089
        %v2096 = vpack.c.bf16 %v2092, %v2091
        %2097 = vmatprep.subr.bf16.mxu0 0
        %2098 = vmatpush1.bf16.xpose.msra.mxu0 0
        %2099 = vmatprep.subr.bf16.mxu0 0
        %2100 = vmatpush1.bf16.xpose.msra.mxu0 0
        %2101 = vmatprep.subr.bf16.mxu0 0
        %2102 = vmatpush1.bf16.xpose.msra.mxu0 0
        %2103 = vmatprep.subr.bf16.mxu0 0
        %2104 = vmatpush1.bf16.xpose.msra.mxu0 0
        %2105 = vmatprep.subr.bf16.mxu0 0
        %2106 = vmatpush1.bf16.xpose.msra.mxu0 %v2079
        %2107 = vmatprep.subr.bf16.mxu0 0
        %2108 = vmatpush1.bf16.xpose.msra.mxu0 %v2078
        %2109 = vmatprep.subr.bf16.mxu0 0
        %2110 = vmatpush1.bf16.xpose.msra.mxu0 %v2077
        %2111 = vmatprep.subr.bf16.mxu0 0
        %2112 = vmatpush1.bf16.xpose.msra.mxu0 %v2076
        %2113 = vmatprep.subr.bf16.mxu0 0
        %2114 = vmatpush2.bf16.xpose.msra.mxu0 0
        %2115 = vmatprep.subr.bf16.mxu0 0
        %2116 = vmatpush2.bf16.xpose.msra.mxu0 0
        %2117 = vmatprep.subr.bf16.mxu0 0
        %2118 = vmatpush2.bf16.xpose.msra.mxu0 0
        %2119 = vmatprep.subr.bf16.mxu0 0
        %2120 = vmatpush2.bf16.xpose.msra.mxu0 0
        %2121 = vmatprep.subr.bf16.mxu0 0
        %2122 = vmatpush2.bf16.xpose.msra.mxu0 0
        %2123 = vmatprep.subr.bf16.mxu0 0
        %2124 = vmatpush2.bf16.xpose.msra.mxu0 0
        %2125 = vmatprep.subr.bf16.mxu0 0
        %2126 = vmatpush2.bf16.xpose.msra.mxu0 0
        %2127 = vmatprep.subr.bf16.mxu0 0
        %2128 = vmatpush2.bf16.xpose.msra.mxu0 0
        %2129 = vmatprep.mubr.bf16.mxu0 0
        %2130 = vmatmul.mubr.bf16.gmra.mxu0 %v2093
        %v2131 = vpop.f32.mrf.mxu0
        %v2132 = vadd.f32 %v1630, %v2131
        %v2133 = vpop.f32.mrf.mxu0
        %v2134 = vpop.f32.mrf.mxu0
        %v2135 = vadd.f32 %v1631, %v2134
        %v2136 = vpop.f32.mrf.mxu0
        %2137 = vmatprep.mubr.bf16.mxu0 0
        %2138 = vmatmul.mubr.bf16.gmra.mxu0 %v2094
        %v2139 = vpop.f32.mrf.mxu0
        %v2140 = vadd.f32 %v1632, %v2139
        %v2141 = vpop.f32.mrf.mxu0
        %v2142 = vpop.f32.mrf.mxu0
        %v2143 = vadd.f32 %v1633, %v2142
        %v2144 = vpop.f32.mrf.mxu0
        %2145 = vmatprep.mubr.bf16.mxu0 0
        %2146 = vmatmul.mubr.bf16.gmra.mxu0 %v2095
        %v2147 = vpop.f32.mrf.mxu0
        %v2148 = vadd.f32 %v1634, %v2147
        %v2149 = vpop.f32.mrf.mxu0
        %v2150 = vpop.f32.mrf.mxu0
        %v2151 = vadd.f32 %v1635, %v2150
        %v2152 = vpop.f32.mrf.mxu0
        %2153 = vmatprep.mubr.bf16.mxu0 0
        %2154 = vmatmul.mubr.bf16.gmra.mxu0 %v2096
        %v2155 = vpop.f32.mrf.mxu0
        %v2156 = vadd.f32 %v1636, %v2155
        %v2157 = vpop.f32.mrf.mxu0
        %v2158 = vpop.f32.mrf.mxu0
        %v2159 = vadd.f32 %v1637, %v2158
        %v2160 = vpop.f32.mrf.mxu0
        %2161 = vdwg.mxu0
        %vm2162 = vcmask 523264
        %v2163 = vsel %vm2162, %v2132, -inf
        %2164 = vmax.xlane.f32.xlu0 %v2163
        %v2165 = vpop.xlane.xlu0 %2164
        %v2166 = vsel %vm2162, %v2135, -inf
        %2167 = vmax.xlane.f32.xlu0 %v2166
        %v2168 = vpop.xlane.xlu0 %2167
        %v2169 = vsel %vm2162, %v2140, -inf
        %2170 = vmax.xlane.f32.xlu0 %v2169
        %v2171 = vpop.xlane.xlu0 %2170
        %v2172 = vsel %vm2162, %v2143, -inf
        %2173 = vmax.xlane.f32.xlu0 %v2172
        %v2174 = vpop.xlane.xlu0 %2173
        %v2175 = vsel %vm2162, %v2148, -inf
        %2176 = vmax.xlane.f32.xlu0 %v2175
        %v2177 = vpop.xlane.xlu0 %2176
        %v2178 = vsel %vm2162, %v2151, -inf
        %2179 = vmax.xlane.f32.xlu0 %v2178
        %v2180 = vpop.xlane.xlu0 %2179
        %v2181 = vsel %vm2162, %v2156, -inf
        %2182 = vmax.xlane.f32.xlu0 %v2181
        %v2183 = vpop.xlane.xlu0 %2182
        %v2184 = vsel %vm2162, %v2159, -inf
        %2185 = vmax.xlane.f32.xlu0 %v2184
        %v2186 = vpop.xlane.xlu0 %2185
        %v2187 = vsub.f32 %v2132, %v2165
        %v2188 = vsub.f32 %v2135, %v2168
        %v2189 = vsub.f32 %v2140, %v2171
        %v2190 = vsub.f32 %v2143, %v2174
        %v2191 = vsub.f32 %v2148, %v2177
        %v2192 = vsub.f32 %v2151, %v2180
        %v2193 = vsub.f32 %v2156, %v2183
        %v2194 = vsub.f32 %v2159, %v2186
        %v2195 = vmul.f32 %v2187, 1.442695
        %v2196 = vpow.pop %v2195
        %v2197 = vmul.f32 %v2188, 1.442695
        %v2198 = vpow.pop %v2197
        %v2199 = vmul.f32 %v2189, 1.442695
        %v2200 = vpow.pop %v2199
        %v2201 = vmul.f32 %v2190, 1.442695
        %v2202 = vpow.pop %v2201
        %v2203 = vmul.f32 %v2191, 1.442695
        %v2204 = vpow.pop %v2203
        %v2205 = vmul.f32 %v2192, 1.442695
        %v2206 = vpow.pop %v2205
        %v2207 = vmul.f32 %v2193, 1.442695
        %v2208 = vpow.pop %v2207
        %v2209 = vmul.f32 %v2194, 1.442695
        %v2210 = vpow.pop %v2209
        %v2211 = vsel %vm2162, %v2196, 0.0
        %2212 = vadd.xlane.f32.xlu0 %v2211
        %v2213 = vpop.xlane.xlu0 %2212
        %v2214 = vsel %vm2162, %v2198, 0.0
        %2215 = vadd.xlane.f32.xlu0 %v2214
        %v2216 = vpop.xlane.xlu0 %2215
        %v2217 = vsel %vm2162, %v2200, 0.0
        %2218 = vadd.xlane.f32.xlu0 %v2217
        %v2219 = vpop.xlane.xlu0 %2218
        %v2220 = vsel %vm2162, %v2202, 0.0
        %2221 = vadd.xlane.f32.xlu0 %v2220
        %v2222 = vpop.xlane.xlu0 %2221
        %v2223 = vsel %vm2162, %v2204, 0.0
        %2224 = vadd.xlane.f32.xlu0 %v2223
        %v2225 = vpop.xlane.xlu0 %2224
        %v2226 = vsel %vm2162, %v2206, 0.0
        %2227 = vadd.xlane.f32.xlu0 %v2226
        %v2228 = vpop.xlane.xlu0 %2227
        %v2229 = vsel %vm2162, %v2208, 0.0
        %2230 = vadd.xlane.f32.xlu0 %v2229
        %v2231 = vpop.xlane.xlu0 %2230
        %v2232 = vsel %vm2162, %v2210, 0.0
        %2233 = vadd.xlane.f32.xlu0 %v2232
        %v2234 = vpop.xlane.xlu0 %2233
        %v2235 = vrcp.pop %v2213
        %v2236 = vrcp.pop %v2216
        %v2237 = vrcp.pop %v2219
        %v2238 = vrcp.pop %v2222
        %v2239 = vrcp.pop %v2225
        %v2240 = vrcp.pop %v2228
        %v2241 = vrcp.pop %v2231
        %v2242 = vrcp.pop %v2234
        %v2243 = vmul.f32 %v2196, %v2235
        %v2244 = vmul.f32 %v2198, %v2236
        %v2245 = vmul.f32 %v2200, %v2237
        %v2246 = vmul.f32 %v2202, %v2238
        %v2247 = vmul.f32 %v2204, %v2239
        %v2248 = vmul.f32 %v2206, %v2240
        %v2249 = vmul.f32 %v2208, %v2241
        %v2250 = vmul.f32 %v2210, %v2242
        %v2251 = vpack.c.bf16 %v2244, %v2243
        %v2252 = vpack.c.bf16 %v2246, %v2245
        %v2253 = vpack.c.bf16 %v2248, %v2247
        %v2254 = vpack.c.bf16 %v2250, %v2249
        %v2256 = vsel %vm2162, %v2251, 0
        %v2259 = vsel %vm2162, %v2252, 0
        %v2262 = vsel %vm2162, %v2253, 0
        %v2265 = vsel %vm2162, %v2254, 0
        %2267 = vmatprep.subr.bf16.mxu0 0
        %2268 = vmatpush1.bf16.msra.mxu0 0
        %2269 = vmatprep.subr.bf16.mxu0 0
        %2270 = vmatpush1.bf16.msra.mxu0 0
        %2271 = vmatprep.subr.bf16.mxu0 0
        %2272 = vmatpush1.bf16.msra.mxu0 0
        %2273 = vmatprep.subr.bf16.mxu0 0
        %2274 = vmatpush1.bf16.msra.mxu0 0
        %2275 = vmatprep.subr.bf16.mxu0 0
        %2276 = vmatpush1.bf16.msra.mxu0 %v2083
        %2277 = vmatprep.subr.bf16.mxu0 0
        %2278 = vmatpush1.bf16.msra.mxu0 %v2082
        %2279 = vmatprep.subr.bf16.mxu0 0
        %2280 = vmatpush1.bf16.msra.mxu0 %v2081
        %2281 = vmatprep.subr.bf16.mxu0 0
        %2282 = vmatpush1.bf16.msra.mxu0 %v2080
        %2283 = vmatprep.subr.bf16.mxu0 0
        %2284 = vmatpush2.bf16.msra.mxu0 0
        %2285 = vmatprep.subr.bf16.mxu0 0
        %2286 = vmatpush2.bf16.msra.mxu0 0
        %2287 = vmatprep.subr.bf16.mxu0 0
        %2288 = vmatpush2.bf16.msra.mxu0 0
        %2289 = vmatprep.subr.bf16.mxu0 0
        %2290 = vmatpush2.bf16.msra.mxu0 0
        %2291 = vmatprep.subr.bf16.mxu0 0
        %2292 = vmatpush2.bf16.msra.mxu0 0
        %2293 = vmatprep.subr.bf16.mxu0 0
        %2294 = vmatpush2.bf16.msra.mxu0 0
        %2295 = vmatprep.subr.bf16.mxu0 0
        %2296 = vmatpush2.bf16.msra.mxu0 0
        %2297 = vmatprep.subr.bf16.mxu0 0
        %2298 = vmatpush2.bf16.msra.mxu0 0
        %2299 = vmatprep.mubr.bf16.mxu0 0
        %2300 = vmatmul.mubr.bf16.gmra.mxu0 %v2256
        %v2301 = vpop.f32.mrf.mxu0
        %v2302 = vadd.f32 0.0, %v2301
        %v2303 = vpop.f32.mrf.mxu0
        %v2304 = vpop.f32.mrf.mxu0
        %v2305 = vadd.f32 0.0, %v2304
        %v2306 = vpop.f32.mrf.mxu0
        %2307 = vmatprep.mubr.bf16.mxu0 0
        %2308 = vmatmul.mubr.bf16.gmra.mxu0 %v2259
        %v2309 = vpop.f32.mrf.mxu0
        %v2310 = vadd.f32 0.0, %v2309
        %v2311 = vpop.f32.mrf.mxu0
        %v2312 = vpop.f32.mrf.mxu0
        %v2313 = vadd.f32 0.0, %v2312
        %v2314 = vpop.f32.mrf.mxu0
        %2315 = vmatprep.mubr.bf16.mxu0 0
        %2316 = vmatmul.mubr.bf16.gmra.mxu0 %v2262
        %v2317 = vpop.f32.mrf.mxu0
        %v2318 = vadd.f32 0.0, %v2317
        %v2319 = vpop.f32.mrf.mxu0
        %v2320 = vpop.f32.mrf.mxu0
        %v2321 = vadd.f32 0.0, %v2320
        %v2322 = vpop.f32.mrf.mxu0
        %2323 = vmatprep.mubr.bf16.mxu0 0
        %2324 = vmatmul.mubr.bf16.gmra.mxu0 %v2265
        %v2325 = vpop.f32.mrf.mxu0
        %v2326 = vadd.f32 0.0, %v2325
        %v2327 = vpop.f32.mrf.mxu0
        %v2328 = vpop.f32.mrf.mxu0
        %v2329 = vadd.f32 0.0, %v2328
        %v2330 = vpop.f32.mrf.mxu0
        %2331 = vdwg.mxu0
        %v2332 = vsel %vm2084, %v2302, 0.0
        %v2333 = vsel %vm2084, %v2305, 0.0
        %v2334 = vsel %vm2084, %v2310, 0.0
        %v2335 = vsel %vm2084, %v2313, 0.0
        %v2336 = vsel %vm2084, %v2318, 0.0
        %v2337 = vsel %vm2084, %v2321, 0.0
        %v2338 = vsel %vm2084, %v2326, 0.0
        %v2339 = vsel %vm2084, %v2329, 0.0
        %vm2340 = vcmp.eq.s32.totalorder %v1638, 1
        %v2341 = vsel %vm2340, %v1973, 0.0
        %v2342 = vsel %vm2340, %v1977, 0.0
        %v2343 = vsel %vm2340, %v1983, 0.0
        %v2344 = vsel %vm2340, %v1987, 0.0
        %v2345 = vsel %vm2340, %v1993, 0.0
        %v2346 = vsel %vm2340, %v1997, 0.0
        %v2347 = vsel %vm2340, %v2003, 0.0
        %v2348 = vsel %vm2340, %v2007, 0.0
        %v2349 = vpack.c.bf16 %v2342, %v2341
        %v2350 = vpack.c.bf16 %v2344, %v2343
        %v2351 = vpack.c.bf16 %v2346, %v2345
        %v2352 = vpack.c.bf16 %v2348, %v2347
        %2353 = vmatprep.subr.bf16.mxu0 0
        %2354 = vmatpush1.bf16.xpose.msra.mxu0 0
        %2355 = vmatprep.subr.bf16.mxu0 0
        %2356 = vmatpush1.bf16.xpose.msra.mxu0 0
        %2357 = vmatprep.subr.bf16.mxu0 0
        %2358 = vmatpush1.bf16.xpose.msra.mxu0 0
        %2359 = vmatprep.subr.bf16.mxu0 0
        %2360 = vmatpush1.bf16.xpose.msra.mxu0 0
        %2361 = vmatprep.subr.bf16.mxu0 0
        %2362 = vmatpush1.bf16.xpose.msra.mxu0 %v2079
        %2363 = vmatprep.subr.bf16.mxu0 0
        %2364 = vmatpush1.bf16.xpose.msra.mxu0 %v2078
        %2365 = vmatprep.subr.bf16.mxu0 0
        %2366 = vmatpush1.bf16.xpose.msra.mxu0 %v2077
        %2367 = vmatprep.subr.bf16.mxu0 0
        %2368 = vmatpush1.bf16.xpose.msra.mxu0 %v2076
        %2369 = vmatprep.subr.bf16.mxu0 0
        %2370 = vmatpush2.bf16.xpose.msra.mxu0 0
        %2371 = vmatprep.subr.bf16.mxu0 0
        %2372 = vmatpush2.bf16.xpose.msra.mxu0 0
        %2373 = vmatprep.subr.bf16.mxu0 0
        %2374 = vmatpush2.bf16.xpose.msra.mxu0 0
        %2375 = vmatprep.subr.bf16.mxu0 0
        %2376 = vmatpush2.bf16.xpose.msra.mxu0 0
        %2377 = vmatprep.subr.bf16.mxu0 0
        %2378 = vmatpush2.bf16.xpose.msra.mxu0 0
        %2379 = vmatprep.subr.bf16.mxu0 0
        %2380 = vmatpush2.bf16.xpose.msra.mxu0 0
        %2381 = vmatprep.subr.bf16.mxu0 0
        %2382 = vmatpush2.bf16.xpose.msra.mxu0 0
        %2383 = vmatprep.subr.bf16.mxu0 0
        %2384 = vmatpush2.bf16.xpose.msra.mxu0 0
        %2385 = vmatprep.mubr.bf16.mxu0 0
        %2386 = vmatmul.mubr.bf16.gmra.mxu0 %v2349
        %v2387 = vpop.f32.mrf.mxu0
        %v2388 = vadd.f32 %v1630, %v2387
        %v2389 = vpop.f32.mrf.mxu0
        %v2390 = vpop.f32.mrf.mxu0
        %v2391 = vadd.f32 %v1631, %v2390
        %v2392 = vpop.f32.mrf.mxu0
        %2393 = vmatprep.mubr.bf16.mxu0 0
        %2394 = vmatmul.mubr.bf16.gmra.mxu0 %v2350
        %v2395 = vpop.f32.mrf.mxu0
        %v2396 = vadd.f32 %v1632, %v2395
        %v2397 = vpop.f32.mrf.mxu0
        %v2398 = vpop.f32.mrf.mxu0
        %v2399 = vadd.f32 %v1633, %v2398
        %v2400 = vpop.f32.mrf.mxu0
        %2401 = vmatprep.mubr.bf16.mxu0 0
        %2402 = vmatmul.mubr.bf16.gmra.mxu0 %v2351
        %v2403 = vpop.f32.mrf.mxu0
        %v2404 = vadd.f32 %v1634, %v2403
        %v2405 = vpop.f32.mrf.mxu0
        %v2406 = vpop.f32.mrf.mxu0
        %v2407 = vadd.f32 %v1635, %v2406
        %v2408 = vpop.f32.mrf.mxu0
        %2409 = vmatprep.mubr.bf16.mxu0 0
        %2410 = vmatmul.mubr.bf16.gmra.mxu0 %v2352
        %v2411 = vpop.f32.mrf.mxu0
        %v2412 = vadd.f32 %v1636, %v2411
        %v2413 = vpop.f32.mrf.mxu0
        %v2414 = vpop.f32.mrf.mxu0
        %v2415 = vadd.f32 %v1637, %v2414
        %v2416 = vpop.f32.mrf.mxu0
        %2417 = vdwg.mxu0
        %v2418 = vsel %vm2162, %v2388, -inf
        %2419 = vmax.xlane.f32.xlu0 %v2418
        %v2420 = vpop.xlane.xlu0 %2419
        %v2421 = vsel %vm2162, %v2391, -inf
        %2422 = vmax.xlane.f32.xlu0 %v2421
        %v2423 = vpop.xlane.xlu0 %2422
        %v2424 = vsel %vm2162, %v2396, -inf
        %2425 = vmax.xlane.f32.xlu0 %v2424
        %v2426 = vpop.xlane.xlu0 %2425
        %v2427 = vsel %vm2162, %v2399, -inf
        %2428 = vmax.xlane.f32.xlu0 %v2427
        %v2429 = vpop.xlane.xlu0 %2428
        %v2430 = vsel %vm2162, %v2404, -inf
        %2431 = vmax.xlane.f32.xlu0 %v2430
        %v2432 = vpop.xlane.xlu0 %2431
        %v2433 = vsel %vm2162, %v2407, -inf
        %2434 = vmax.xlane.f32.xlu0 %v2433
        %v2435 = vpop.xlane.xlu0 %2434
        %v2436 = vsel %vm2162, %v2412, -inf
        %2437 = vmax.xlane.f32.xlu0 %v2436
        %v2438 = vpop.xlane.xlu0 %2437
        %v2439 = vsel %vm2162, %v2415, -inf
        %2440 = vmax.xlane.f32.xlu0 %v2439
        %v2441 = vpop.xlane.xlu0 %2440
        %v2442 = vsub.f32 %v2388, %v2420
        %v2443 = vsub.f32 %v2391, %v2423
        %v2444 = vsub.f32 %v2396, %v2426
        %v2445 = vsub.f32 %v2399, %v2429
        %v2446 = vsub.f32 %v2404, %v2432
        %v2447 = vsub.f32 %v2407, %v2435
        %v2448 = vsub.f32 %v2412, %v2438
        %v2449 = vsub.f32 %v2415, %v2441
        %v2450 = vmul.f32 %v2442, 1.442695
        %v2451 = vpow.pop %v2450
        %v2452 = vmul.f32 %v2443, 1.442695
        %v2453 = vpow.pop %v2452
        %v2454 = vmul.f32 %v2444, 1.442695
        %v2455 = vpow.pop %v2454
        %v2456 = vmul.f32 %v2445, 1.442695
        %v2457 = vpow.pop %v2456
        %v2458 = vmul.f32 %v2446, 1.442695
        %v2459 = vpow.pop %v2458
        %v2460 = vmul.f32 %v2447, 1.442695
        %v2461 = vpow.pop %v2460
        %v2462 = vmul.f32 %v2448, 1.442695
        %v2463 = vpow.pop %v2462
        %v2464 = vmul.f32 %v2449, 1.442695
        %v2465 = vpow.pop %v2464
        %v2466 = vsel %vm2162, %v2451, 0.0
        %2467 = vadd.xlane.f32.xlu0 %v2466
        %v2468 = vpop.xlane.xlu0 %2467
        %v2469 = vsel %vm2162, %v2453, 0.0
        %2470 = vadd.xlane.f32.xlu0 %v2469
        %v2471 = vpop.xlane.xlu0 %2470
        %v2472 = vsel %vm2162, %v2455, 0.0
        %2473 = vadd.xlane.f32.xlu0 %v2472
        %v2474 = vpop.xlane.xlu0 %2473
        %v2475 = vsel %vm2162, %v2457, 0.0
        %2476 = vadd.xlane.f32.xlu0 %v2475
        %v2477 = vpop.xlane.xlu0 %2476
        %v2478 = vsel %vm2162, %v2459, 0.0
        %2479 = vadd.xlane.f32.xlu0 %v2478
        %v2480 = vpop.xlane.xlu0 %2479
        %v2481 = vsel %vm2162, %v2461, 0.0
        %2482 = vadd.xlane.f32.xlu0 %v2481
        %v2483 = vpop.xlane.xlu0 %2482
        %v2484 = vsel %vm2162, %v2463, 0.0
        %2485 = vadd.xlane.f32.xlu0 %v2484
        %v2486 = vpop.xlane.xlu0 %2485
        %v2487 = vsel %vm2162, %v2465, 0.0
        %2488 = vadd.xlane.f32.xlu0 %v2487
        %v2489 = vpop.xlane.xlu0 %2488
        %v2490 = vrcp.pop %v2468
        %v2491 = vrcp.pop %v2471
        %v2492 = vrcp.pop %v2474
        %v2493 = vrcp.pop %v2477
        %v2494 = vrcp.pop %v2480
        %v2495 = vrcp.pop %v2483
        %v2496 = vrcp.pop %v2486
        %v2497 = vrcp.pop %v2489
        %v2498 = vmul.f32 %v2451, %v2490
        %v2499 = vmul.f32 %v2453, %v2491
        %v2500 = vmul.f32 %v2455, %v2492
        %v2501 = vmul.f32 %v2457, %v2493
        %v2502 = vmul.f32 %v2459, %v2494
        %v2503 = vmul.f32 %v2461, %v2495
        %v2504 = vmul.f32 %v2463, %v2496
        %v2505 = vmul.f32 %v2465, %v2497
        %v2506 = vpack.c.bf16 %v2499, %v2498
        %v2507 = vpack.c.bf16 %v2501, %v2500
        %v2508 = vpack.c.bf16 %v2503, %v2502
        %v2509 = vpack.c.bf16 %v2505, %v2504
        %v2511 = vsel %vm2162, %v2506, 0
        %v2514 = vsel %vm2162, %v2507, 0
        %v2517 = vsel %vm2162, %v2508, 0
        %v2520 = vsel %vm2162, %v2509, 0
        %2522 = vmatprep.subr.bf16.mxu0 0
        %2523 = vmatpush1.bf16.msra.mxu0 0
        %2524 = vmatprep.subr.bf16.mxu0 0
        %2525 = vmatpush1.bf16.msra.mxu0 0
        %2526 = vmatprep.subr.bf16.mxu0 0
        %2527 = vmatpush1.bf16.msra.mxu0 0
        %2528 = vmatprep.subr.bf16.mxu0 0
        %2529 = vmatpush1.bf16.msra.mxu0 0
        %2530 = vmatprep.subr.bf16.mxu0 0
        %2531 = vmatpush1.bf16.msra.mxu0 %v2083
        %2532 = vmatprep.subr.bf16.mxu0 0
        %2533 = vmatpush1.bf16.msra.mxu0 %v2082
        %2534 = vmatprep.subr.bf16.mxu0 0
        %2535 = vmatpush1.bf16.msra.mxu0 %v2081
        %2536 = vmatprep.subr.bf16.mxu0 0
        %2537 = vmatpush1.bf16.msra.mxu0 %v2080
        %2538 = vmatprep.subr.bf16.mxu0 0
        %2539 = vmatpush2.bf16.msra.mxu0 0
        %2540 = vmatprep.subr.bf16.mxu0 0
        %2541 = vmatpush2.bf16.msra.mxu0 0
        %2542 = vmatprep.subr.bf16.mxu0 0
        %2543 = vmatpush2.bf16.msra.mxu0 0
        %2544 = vmatprep.subr.bf16.mxu0 0
        %2545 = vmatpush2.bf16.msra.mxu0 0
        %2546 = vmatprep.subr.bf16.mxu0 0
        %2547 = vmatpush2.bf16.msra.mxu0 0
        %2548 = vmatprep.subr.bf16.mxu0 0
        %2549 = vmatpush2.bf16.msra.mxu0 0
        %2550 = vmatprep.subr.bf16.mxu0 0
        %2551 = vmatpush2.bf16.msra.mxu0 0
        %2552 = vmatprep.subr.bf16.mxu0 0
        %2553 = vmatpush2.bf16.msra.mxu0 0
        %2554 = vmatprep.mubr.bf16.mxu0 0
        %2555 = vmatmul.mubr.bf16.gmra.mxu0 %v2511
        %v2556 = vpop.f32.mrf.mxu0
        %v2557 = vadd.f32 0.0, %v2556
        %v2558 = vpop.f32.mrf.mxu0
        %v2559 = vpop.f32.mrf.mxu0
        %v2560 = vadd.f32 0.0, %v2559
        %v2561 = vpop.f32.mrf.mxu0
        %2562 = vmatprep.mubr.bf16.mxu0 0
        %2563 = vmatmul.mubr.bf16.gmra.mxu0 %v2514
        %v2564 = vpop.f32.mrf.mxu0
        %v2565 = vadd.f32 0.0, %v2564
        %v2566 = vpop.f32.mrf.mxu0
        %v2567 = vpop.f32.mrf.mxu0
        %v2568 = vadd.f32 0.0, %v2567
        %v2569 = vpop.f32.mrf.mxu0
        %2570 = vmatprep.mubr.bf16.mxu0 0
        %2571 = vmatmul.mubr.bf16.gmra.mxu0 %v2517
        %v2572 = vpop.f32.mrf.mxu0
        %v2573 = vadd.f32 0.0, %v2572
        %v2574 = vpop.f32.mrf.mxu0
        %v2575 = vpop.f32.mrf.mxu0
        %v2576 = vadd.f32 0.0, %v2575
        %v2577 = vpop.f32.mrf.mxu0
        %2578 = vmatprep.mubr.bf16.mxu0 0
        %2579 = vmatmul.mubr.bf16.gmra.mxu0 %v2520
        %v2580 = vpop.f32.mrf.mxu0
        %v2581 = vadd.f32 0.0, %v2580
        %v2582 = vpop.f32.mrf.mxu0
        %v2583 = vpop.f32.mrf.mxu0
        %v2584 = vadd.f32 0.0, %v2583
        %v2585 = vpop.f32.mrf.mxu0
        %2586 = vdwg.mxu0
        %v2587 = vsel %vm2340, %v2557, 0.0
        %v2588 = vsel %vm2340, %v2560, 0.0
        %v2589 = vsel %vm2340, %v2565, 0.0
        %v2590 = vsel %vm2340, %v2568, 0.0
        %v2591 = vsel %vm2340, %v2573, 0.0
        %v2592 = vsel %vm2340, %v2576, 0.0
        %v2593 = vsel %vm2340, %v2581, 0.0
        %v2594 = vsel %vm2340, %v2584, 0.0
        %v2595 = vadd.f32 %v2332, %v2587
        %v2596 = vadd.f32 %v2333, %v2588
        %v2597 = vadd.f32 %v2334, %v2589
        %v2598 = vadd.f32 %v2335, %v2590
        %v2599 = vadd.f32 %v2336, %v2591
        %v2600 = vadd.f32 %v2337, %v2592
        %v2601 = vadd.f32 %v2338, %v2593
        %v2602 = vadd.f32 %v2339, %v2594
        %vm2603 = vcmp.eq.s32.totalorder %v1638, 2
        %v2604 = vsel %vm2603, %v1973, 0.0
        %v2605 = vsel %vm2603, %v1977, 0.0
        %v2606 = vsel %vm2603, %v1983, 0.0
        %v2607 = vsel %vm2603, %v1987, 0.0
        %v2608 = vsel %vm2603, %v1993, 0.0
        %v2609 = vsel %vm2603, %v1997, 0.0
        %v2610 = vsel %vm2603, %v2003, 0.0
        %v2611 = vsel %vm2603, %v2007, 0.0
        %v2612 = vpack.c.bf16 %v2605, %v2604
        %v2613 = vpack.c.bf16 %v2607, %v2606
        %v2614 = vpack.c.bf16 %v2609, %v2608
        %v2615 = vpack.c.bf16 %v2611, %v2610
        %2616 = vmatprep.subr.bf16.mxu0 0
        %2617 = vmatpush1.bf16.xpose.msra.mxu0 0
        %2618 = vmatprep.subr.bf16.mxu0 0
        %2619 = vmatpush1.bf16.xpose.msra.mxu0 0
        %2620 = vmatprep.subr.bf16.mxu0 0
        %2621 = vmatpush1.bf16.xpose.msra.mxu0 0
        %2622 = vmatprep.subr.bf16.mxu0 0
        %2623 = vmatpush1.bf16.xpose.msra.mxu0 0
        %2624 = vmatprep.subr.bf16.mxu0 0
        %2625 = vmatpush1.bf16.xpose.msra.mxu0 %v2079
        %2626 = vmatprep.subr.bf16.mxu0 0
        %2627 = vmatpush1.bf16.xpose.msra.mxu0 %v2078
        %2628 = vmatprep.subr.bf16.mxu0 0
        %2629 = vmatpush1.bf16.xpose.msra.mxu0 %v2077
        %2630 = vmatprep.subr.bf16.mxu0 0
        %2631 = vmatpush1.bf16.xpose.msra.mxu0 %v2076
        %2632 = vmatprep.subr.bf16.mxu0 0
        %2633 = vmatpush2.bf16.xpose.msra.mxu0 0
        %2634 = vmatprep.subr.bf16.mxu0 0
        %2635 = vmatpush2.bf16.xpose.msra.mxu0 0
        %2636 = vmatprep.subr.bf16.mxu0 0
        %2637 = vmatpush2.bf16.xpose.msra.mxu0 0
        %2638 = vmatprep.subr.bf16.mxu0 0
        %2639 = vmatpush2.bf16.xpose.msra.mxu0 0
        %2640 = vmatprep.subr.bf16.mxu0 0
        %2641 = vmatpush2.bf16.xpose.msra.mxu0 0
        %2642 = vmatprep.subr.bf16.mxu0 0
        %2643 = vmatpush2.bf16.xpose.msra.mxu0 0
        %2644 = vmatprep.subr.bf16.mxu0 0
        %2645 = vmatpush2.bf16.xpose.msra.mxu0 0
        %2646 = vmatprep.subr.bf16.mxu0 0
        %2647 = vmatpush2.bf16.xpose.msra.mxu0 0
        %2648 = vmatprep.mubr.bf16.mxu0 0
        %2649 = vmatmul.mubr.bf16.gmra.mxu0 %v2612
        %v2650 = vpop.f32.mrf.mxu0
        %v2651 = vadd.f32 %v1630, %v2650
        %v2652 = vpop.f32.mrf.mxu0
        %v2653 = vpop.f32.mrf.mxu0
        %v2654 = vadd.f32 %v1631, %v2653
        %v2655 = vpop.f32.mrf.mxu0
        %2656 = vmatprep.mubr.bf16.mxu0 0
        %2657 = vmatmul.mubr.bf16.gmra.mxu0 %v2613
        %v2658 = vpop.f32.mrf.mxu0
        %v2659 = vadd.f32 %v1632, %v2658
        %v2660 = vpop.f32.mrf.mxu0
        %v2661 = vpop.f32.mrf.mxu0
        %v2662 = vadd.f32 %v1633, %v2661
        %v2663 = vpop.f32.mrf.mxu0
        %2664 = vmatprep.mubr.bf16.mxu0 0
        %2665 = vmatmul.mubr.bf16.gmra.mxu0 %v2614
        %v2666 = vpop.f32.mrf.mxu0
        %v2667 = vadd.f32 %v1634, %v2666
        %v2668 = vpop.f32.mrf.mxu0
        %v2669 = vpop.f32.mrf.mxu0
        %v2670 = vadd.f32 %v1635, %v2669
        %v2671 = vpop.f32.mrf.mxu0
        %2672 = vmatprep.mubr.bf16.mxu0 0
        %2673 = vmatmul.mubr.bf16.gmra.mxu0 %v2615
        %v2674 = vpop.f32.mrf.mxu0
        %v2675 = vadd.f32 %v1636, %v2674
        %v2676 = vpop.f32.mrf.mxu0
        %v2677 = vpop.f32.mrf.mxu0
        %v2678 = vadd.f32 %v1637, %v2677
        %v2679 = vpop.f32.mrf.mxu0
        %2680 = vdwg.mxu0
        %v2681 = vsel %vm2162, %v2651, -inf
        %2682 = vmax.xlane.f32.xlu0 %v2681
        %v2683 = vpop.xlane.xlu0 %2682
        %v2684 = vsel %vm2162, %v2654, -inf
        %2685 = vmax.xlane.f32.xlu0 %v2684
        %v2686 = vpop.xlane.xlu0 %2685
        %v2687 = vsel %vm2162, %v2659, -inf
        %2688 = vmax.xlane.f32.xlu0 %v2687
        %v2689 = vpop.xlane.xlu0 %2688
        %v2690 = vsel %vm2162, %v2662, -inf
        %2691 = vmax.xlane.f32.xlu0 %v2690
        %v2692 = vpop.xlane.xlu0 %2691
        %v2693 = vsel %vm2162, %v2667, -inf
        %2694 = vmax.xlane.f32.xlu0 %v2693
        %v2695 = vpop.xlane.xlu0 %2694
        %v2696 = vsel %vm2162, %v2670, -inf
        %2697 = vmax.xlane.f32.xlu0 %v2696
        %v2698 = vpop.xlane.xlu0 %2697
        %v2699 = vsel %vm2162, %v2675, -inf
        %2700 = vmax.xlane.f32.xlu0 %v2699
        %v2701 = vpop.xlane.xlu0 %2700
        %v2702 = vsel %vm2162, %v2678, -inf
        %2703 = vmax.xlane.f32.xlu0 %v2702
        %v2704 = vpop.xlane.xlu0 %2703
        %v2705 = vsub.f32 %v2651, %v2683
        %v2706 = vsub.f32 %v2654, %v2686
        %v2707 = vsub.f32 %v2659, %v2689
        %v2708 = vsub.f32 %v2662, %v2692
        %v2709 = vsub.f32 %v2667, %v2695
        %v2710 = vsub.f32 %v2670, %v2698
        %v2711 = vsub.f32 %v2675, %v2701
        %v2712 = vsub.f32 %v2678, %v2704
        %v2713 = vmul.f32 %v2705, 1.442695
        %v2714 = vpow.pop %v2713
        %v2715 = vmul.f32 %v2706, 1.442695
        %v2716 = vpow.pop %v2715
        %v2717 = vmul.f32 %v2707, 1.442695
        %v2718 = vpow.pop %v2717
        %v2719 = vmul.f32 %v2708, 1.442695
        %v2720 = vpow.pop %v2719
        %v2721 = vmul.f32 %v2709, 1.442695
        %v2722 = vpow.pop %v2721
        %v2723 = vmul.f32 %v2710, 1.442695
        %v2724 = vpow.pop %v2723
        %v2725 = vmul.f32 %v2711, 1.442695
        %v2726 = vpow.pop %v2725
        %v2727 = vmul.f32 %v2712, 1.442695
        %v2728 = vpow.pop %v2727
        %v2729 = vsel %vm2162, %v2714, 0.0
        %2730 = vadd.xlane.f32.xlu0 %v2729
        %v2731 = vpop.xlane.xlu0 %2730
        %v2732 = vsel %vm2162, %v2716, 0.0
        %2733 = vadd.xlane.f32.xlu0 %v2732
        %v2734 = vpop.xlane.xlu0 %2733
        %v2735 = vsel %vm2162, %v2718, 0.0
        %2736 = vadd.xlane.f32.xlu0 %v2735
        %v2737 = vpop.xlane.xlu0 %2736
        %v2738 = vsel %vm2162, %v2720, 0.0
        %2739 = vadd.xlane.f32.xlu0 %v2738
        %v2740 = vpop.xlane.xlu0 %2739
        %v2741 = vsel %vm2162, %v2722, 0.0
        %2742 = vadd.xlane.f32.xlu0 %v2741
        %v2743 = vpop.xlane.xlu0 %2742
        %v2744 = vsel %vm2162, %v2724, 0.0
        %2745 = vadd.xlane.f32.xlu0 %v2744
        %v2746 = vpop.xlane.xlu0 %2745
        %v2747 = vsel %vm2162, %v2726, 0.0
        %2748 = vadd.xlane.f32.xlu0 %v2747
        %v2749 = vpop.xlane.xlu0 %2748
        %v2750 = vsel %vm2162, %v2728, 0.0
        %2751 = vadd.xlane.f32.xlu0 %v2750
        %v2752 = vpop.xlane.xlu0 %2751
        %v2753 = vrcp.pop %v2731
        %v2754 = vrcp.pop %v2734
        %v2755 = vrcp.pop %v2737
        %v2756 = vrcp.pop %v2740
        %v2757 = vrcp.pop %v2743
        %v2758 = vrcp.pop %v2746
        %v2759 = vrcp.pop %v2749
        %v2760 = vrcp.pop %v2752
        %v2761 = vmul.f32 %v2714, %v2753
        %v2762 = vmul.f32 %v2716, %v2754
        %v2763 = vmul.f32 %v2718, %v2755
        %v2764 = vmul.f32 %v2720, %v2756
        %v2765 = vmul.f32 %v2722, %v2757
        %v2766 = vmul.f32 %v2724, %v2758
        %v2767 = vmul.f32 %v2726, %v2759
        %v2768 = vmul.f32 %v2728, %v2760
        %v2769 = vpack.c.bf16 %v2762, %v2761
        %v2770 = vpack.c.bf16 %v2764, %v2763
        %v2771 = vpack.c.bf16 %v2766, %v2765
        %v2772 = vpack.c.bf16 %v2768, %v2767
        %v2774 = vsel %vm2162, %v2769, 0
        %v2777 = vsel %vm2162, %v2770, 0
        %v2780 = vsel %vm2162, %v2771, 0
        %v2783 = vsel %vm2162, %v2772, 0
        %2785 = vmatprep.subr.bf16.mxu0 0
        %2786 = vmatpush1.bf16.msra.mxu0 0
        %2787 = vmatprep.subr.bf16.mxu0 0
        %2788 = vmatpush1.bf16.msra.mxu0 0
        %2789 = vmatprep.subr.bf16.mxu0 0
        %2790 = vmatpush1.bf16.msra.mxu0 0
        %2791 = vmatprep.subr.bf16.mxu0 0
        %2792 = vmatpush1.bf16.msra.mxu0 0
        %2793 = vmatprep.subr.bf16.mxu0 0
        %2794 = vmatpush1.bf16.msra.mxu0 %v2083
        %2795 = vmatprep.subr.bf16.mxu0 0
        %2796 = vmatpush1.bf16.msra.mxu0 %v2082
        %2797 = vmatprep.subr.bf16.mxu0 0
        %2798 = vmatpush1.bf16.msra.mxu0 %v2081
        %2799 = vmatprep.subr.bf16.mxu0 0
        %2800 = vmatpush1.bf16.msra.mxu0 %v2080
        %2801 = vmatprep.subr.bf16.mxu0 0
        %2802 = vmatpush2.bf16.msra.mxu0 0
        %2803 = vmatprep.subr.bf16.mxu0 0
        %2804 = vmatpush2.bf16.msra.mxu0 0
        %2805 = vmatprep.subr.bf16.mxu0 0
        %2806 = vmatpush2.bf16.msra.mxu0 0
        %2807 = vmatprep.subr.bf16.mxu0 0
        %2808 = vmatpush2.bf16.msra.mxu0 0
        %2809 = vmatprep.subr.bf16.mxu0 0
        %2810 = vmatpush2.bf16.msra.mxu0 0
        %2811 = vmatprep.subr.bf16.mxu0 0
        %2812 = vmatpush2.bf16.msra.mxu0 0
        %2813 = vmatprep.subr.bf16.mxu0 0
        %2814 = vmatpush2.bf16.msra.mxu0 0
        %2815 = vmatprep.subr.bf16.mxu0 0
        %2816 = vmatpush2.bf16.msra.mxu0 0
        %2817 = vmatprep.mubr.bf16.mxu0 0
        %2818 = vmatmul.mubr.bf16.gmra.mxu0 %v2774
        %v2819 = vpop.f32.mrf.mxu0
        %v2820 = vadd.f32 0.0, %v2819
        %v2821 = vpop.f32.mrf.mxu0
        %v2822 = vpop.f32.mrf.mxu0
        %v2823 = vadd.f32 0.0, %v2822
        %v2824 = vpop.f32.mrf.mxu0
        %2825 = vmatprep.mubr.bf16.mxu0 0
        %2826 = vmatmul.mubr.bf16.gmra.mxu0 %v2777
        %v2827 = vpop.f32.mrf.mxu0
        %v2828 = vadd.f32 0.0, %v2827
        %v2829 = vpop.f32.mrf.mxu0
        %v2830 = vpop.f32.mrf.mxu0
        %v2831 = vadd.f32 0.0, %v2830
        %v2832 = vpop.f32.mrf.mxu0
        %2833 = vmatprep.mubr.bf16.mxu0 0
        %2834 = vmatmul.mubr.bf16.gmra.mxu0 %v2780
        %v2835 = vpop.f32.mrf.mxu0
        %v2836 = vadd.f32 0.0, %v2835
        %v2837 = vpop.f32.mrf.mxu0
        %v2838 = vpop.f32.mrf.mxu0
        %v2839 = vadd.f32 0.0, %v2838
        %v2840 = vpop.f32.mrf.mxu0
        %2841 = vmatprep.mubr.bf16.mxu0 0
        %2842 = vmatmul.mubr.bf16.gmra.mxu0 %v2783
        %v2843 = vpop.f32.mrf.mxu0
        %v2844 = vadd.f32 0.0, %v2843
        %v2845 = vpop.f32.mrf.mxu0
        %v2846 = vpop.f32.mrf.mxu0
        %v2847 = vadd.f32 0.0, %v2846
        %v2848 = vpop.f32.mrf.mxu0
        %2849 = vdwg.mxu0
        %v2850 = vsel %vm2603, %v2820, 0.0
        %v2851 = vsel %vm2603, %v2823, 0.0
        %v2852 = vsel %vm2603, %v2828, 0.0
        %v2853 = vsel %vm2603, %v2831, 0.0
        %v2854 = vsel %vm2603, %v2836, 0.0
        %v2855 = vsel %vm2603, %v2839, 0.0
        %v2856 = vsel %vm2603, %v2844, 0.0
        %v2857 = vsel %vm2603, %v2847, 0.0
        %v2858 = vadd.f32 %v2595, %v2850
        %v2859 = vadd.f32 %v2596, %v2851
        %v2860 = vadd.f32 %v2597, %v2852
        %v2861 = vadd.f32 %v2598, %v2853
        %v2862 = vadd.f32 %v2599, %v2854
        %v2863 = vadd.f32 %v2600, %v2855
        %v2864 = vadd.f32 %v2601, %v2856
        %v2865 = vadd.f32 %v2602, %v2857
        %vm2866 = vcmp.eq.s32.totalorder %v1638, 3
        %v2867 = vsel %vm2866, %v1973, 0.0
        %v2868 = vsel %vm2866, %v1977, 0.0
        %v2869 = vsel %vm2866, %v1983, 0.0
        %v2870 = vsel %vm2866, %v1987, 0.0
        %v2871 = vsel %vm2866, %v1993, 0.0
        %v2872 = vsel %vm2866, %v1997, 0.0
        %v2873 = vsel %vm2866, %v2003, 0.0
        %v2874 = vsel %vm2866, %v2007, 0.0
        %v2875 = vpack.c.bf16 %v2868, %v2867
        %v2876 = vpack.c.bf16 %v2870, %v2869
        %v2877 = vpack.c.bf16 %v2872, %v2871
        %v2878 = vpack.c.bf16 %v2874, %v2873
        %2879 = vmatprep.subr.bf16.mxu0 0
        %2880 = vmatpush1.bf16.xpose.msra.mxu0 0
        %2881 = vmatprep.subr.bf16.mxu0 0
        %2882 = vmatpush1.bf16.xpose.msra.mxu0 0
        %2883 = vmatprep.subr.bf16.mxu0 0
        %2884 = vmatpush1.bf16.xpose.msra.mxu0 0
        %2885 = vmatprep.subr.bf16.mxu0 0
        %2886 = vmatpush1.bf16.xpose.msra.mxu0 0
        %2887 = vmatprep.subr.bf16.mxu0 0
        %2888 = vmatpush1.bf16.xpose.msra.mxu0 %v2079
        %2889 = vmatprep.subr.bf16.mxu0 0
        %2890 = vmatpush1.bf16.xpose.msra.mxu0 %v2078
        %2891 = vmatprep.subr.bf16.mxu0 0
        %2892 = vmatpush1.bf16.xpose.msra.mxu0 %v2077
        %2893 = vmatprep.subr.bf16.mxu0 0
        %2894 = vmatpush1.bf16.xpose.msra.mxu0 %v2076
        %2895 = vmatprep.subr.bf16.mxu0 0
        %2896 = vmatpush2.bf16.xpose.msra.mxu0 0
        %2897 = vmatprep.subr.bf16.mxu0 0
        %2898 = vmatpush2.bf16.xpose.msra.mxu0 0
        %2899 = vmatprep.subr.bf16.mxu0 0
        %2900 = vmatpush2.bf16.xpose.msra.mxu0 0
        %2901 = vmatprep.subr.bf16.mxu0 0
        %2902 = vmatpush2.bf16.xpose.msra.mxu0 0
        %2903 = vmatprep.subr.bf16.mxu0 0
        %2904 = vmatpush2.bf16.xpose.msra.mxu0 0
        %2905 = vmatprep.subr.bf16.mxu0 0
        %2906 = vmatpush2.bf16.xpose.msra.mxu0 0
        %2907 = vmatprep.subr.bf16.mxu0 0
        %2908 = vmatpush2.bf16.xpose.msra.mxu0 0
        %2909 = vmatprep.subr.bf16.mxu0 0
        %2910 = vmatpush2.bf16.xpose.msra.mxu0 0
        %2911 = vmatprep.mubr.bf16.mxu0 0
        %2912 = vmatmul.mubr.bf16.gmra.mxu0 %v2875
        %v2913 = vpop.f32.mrf.mxu0
        %v2914 = vadd.f32 %v1630, %v2913
        %v2915 = vpop.f32.mrf.mxu0
        %v2916 = vpop.f32.mrf.mxu0
        %v2917 = vadd.f32 %v1631, %v2916
        %v2918 = vpop.f32.mrf.mxu0
        %2919 = vmatprep.mubr.bf16.mxu0 0
        %2920 = vmatmul.mubr.bf16.gmra.mxu0 %v2876
        %v2921 = vpop.f32.mrf.mxu0
        %v2922 = vadd.f32 %v1632, %v2921
        %v2923 = vpop.f32.mrf.mxu0
        %v2924 = vpop.f32.mrf.mxu0
        %v2925 = vadd.f32 %v1633, %v2924
        %v2926 = vpop.f32.mrf.mxu0
        %2927 = vmatprep.mubr.bf16.mxu0 0
        %2928 = vmatmul.mubr.bf16.gmra.mxu0 %v2877
        %v2929 = vpop.f32.mrf.mxu0
        %v2930 = vadd.f32 %v1634, %v2929
        %v2931 = vpop.f32.mrf.mxu0
        %v2932 = vpop.f32.mrf.mxu0
        %v2933 = vadd.f32 %v1635, %v2932
        %v2934 = vpop.f32.mrf.mxu0
        %2935 = vmatprep.mubr.bf16.mxu0 0
        %2936 = vmatmul.mubr.bf16.gmra.mxu0 %v2878
        %v2937 = vpop.f32.mrf.mxu0
        %v2938 = vadd.f32 %v1636, %v2937
        %v2939 = vpop.f32.mrf.mxu0
        %v2940 = vpop.f32.mrf.mxu0
        %v2941 = vadd.f32 %v1637, %v2940
        %v2942 = vpop.f32.mrf.mxu0
        %2943 = vdwg.mxu0
        %v2944 = vsel %vm2162, %v2914, -inf
        %2945 = vmax.xlane.f32.xlu0 %v2944
        %v2946 = vpop.xlane.xlu0 %2945
        %v2947 = vsel %vm2162, %v2917, -inf
        %2948 = vmax.xlane.f32.xlu0 %v2947
        %v2949 = vpop.xlane.xlu0 %2948
        %v2950 = vsel %vm2162, %v2922, -inf
        %2951 = vmax.xlane.f32.xlu0 %v2950
        %v2952 = vpop.xlane.xlu0 %2951
        %v2953 = vsel %vm2162, %v2925, -inf
        %2954 = vmax.xlane.f32.xlu0 %v2953
        %v2955 = vpop.xlane.xlu0 %2954
        %v2956 = vsel %vm2162, %v2930, -inf
        %2957 = vmax.xlane.f32.xlu0 %v2956
        %v2958 = vpop.xlane.xlu0 %2957
        %v2959 = vsel %vm2162, %v2933, -inf
        %2960 = vmax.xlane.f32.xlu0 %v2959
        %v2961 = vpop.xlane.xlu0 %2960
        %v2962 = vsel %vm2162, %v2938, -inf
        %2963 = vmax.xlane.f32.xlu0 %v2962
        %v2964 = vpop.xlane.xlu0 %2963
        %v2965 = vsel %vm2162, %v2941, -inf
        %2966 = vmax.xlane.f32.xlu0 %v2965
        %v2967 = vpop.xlane.xlu0 %2966
        %v2968 = vsub.f32 %v2914, %v2946
        %v2969 = vsub.f32 %v2917, %v2949
        %v2970 = vsub.f32 %v2922, %v2952
        %v2971 = vsub.f32 %v2925, %v2955
        %v2972 = vsub.f32 %v2930, %v2958
        %v2973 = vsub.f32 %v2933, %v2961
        %v2974 = vsub.f32 %v2938, %v2964
        %v2975 = vsub.f32 %v2941, %v2967
        %v2976 = vmul.f32 %v2968, 1.442695
        %v2977 = vpow.pop %v2976
        %v2978 = vmul.f32 %v2969, 1.442695
        %v2979 = vpow.pop %v2978
        %v2980 = vmul.f32 %v2970, 1.442695
        %v2981 = vpow.pop %v2980
        %v2982 = vmul.f32 %v2971, 1.442695
        %v2983 = vpow.pop %v2982
        %v2984 = vmul.f32 %v2972, 1.442695
        %v2985 = vpow.pop %v2984
        %v2986 = vmul.f32 %v2973, 1.442695
        %v2987 = vpow.pop %v2986
        %v2988 = vmul.f32 %v2974, 1.442695
        %v2989 = vpow.pop %v2988
        %v2990 = vmul.f32 %v2975, 1.442695
        %v2991 = vpow.pop %v2990
        %v2992 = vsel %vm2162, %v2977, 0.0
        %2993 = vadd.xlane.f32.xlu0 %v2992
        %v2994 = vpop.xlane.xlu0 %2993
        %v2995 = vsel %vm2162, %v2979, 0.0
        %2996 = vadd.xlane.f32.xlu0 %v2995
        %v2997 = vpop.xlane.xlu0 %2996
        %v2998 = vsel %vm2162, %v2981, 0.0
        %2999 = vadd.xlane.f32.xlu0 %v2998
        %v3000 = vpop.xlane.xlu0 %2999
        %v3001 = vsel %vm2162, %v2983, 0.0
        %3002 = vadd.xlane.f32.xlu0 %v3001
        %v3003 = vpop.xlane.xlu0 %3002
        %v3004 = vsel %vm2162, %v2985, 0.0
        %3005 = vadd.xlane.f32.xlu0 %v3004
        %v3006 = vpop.xlane.xlu0 %3005
        %v3007 = vsel %vm2162, %v2987, 0.0
        %3008 = vadd.xlane.f32.xlu0 %v3007
        %v3009 = vpop.xlane.xlu0 %3008
        %v3010 = vsel %vm2162, %v2989, 0.0
        %3011 = vadd.xlane.f32.xlu0 %v3010
        %v3012 = vpop.xlane.xlu0 %3011
        %v3013 = vsel %vm2162, %v2991, 0.0
        %3014 = vadd.xlane.f32.xlu0 %v3013
        %v3015 = vpop.xlane.xlu0 %3014
        %v3016 = vrcp.pop %v2994
        %v3017 = vrcp.pop %v2997
        %v3018 = vrcp.pop %v3000
        %v3019 = vrcp.pop %v3003
        %v3020 = vrcp.pop %v3006
        %v3021 = vrcp.pop %v3009
        %v3022 = vrcp.pop %v3012
        %v3023 = vrcp.pop %v3015
        %v3024 = vmul.f32 %v2977, %v3016
        %v3025 = vmul.f32 %v2979, %v3017
        %v3026 = vmul.f32 %v2981, %v3018
        %v3027 = vmul.f32 %v2983, %v3019
        %v3028 = vmul.f32 %v2985, %v3020
        %v3029 = vmul.f32 %v2987, %v3021
        %v3030 = vmul.f32 %v2989, %v3022
        %v3031 = vmul.f32 %v2991, %v3023
        %v3032 = vpack.c.bf16 %v3025, %v3024
        %v3033 = vpack.c.bf16 %v3027, %v3026
        %v3034 = vpack.c.bf16 %v3029, %v3028
        %v3035 = vpack.c.bf16 %v3031, %v3030
        %v3037 = vsel %vm2162, %v3032, 0
        %v3040 = vsel %vm2162, %v3033, 0
        %v3043 = vsel %vm2162, %v3034, 0
        %v3046 = vsel %vm2162, %v3035, 0
        %3048 = vmatprep.subr.bf16.mxu0 0
        %3049 = vmatpush1.bf16.msra.mxu0 0
        %3050 = vmatprep.subr.bf16.mxu0 0
        %3051 = vmatpush1.bf16.msra.mxu0 0
        %3052 = vmatprep.subr.bf16.mxu0 0
        %3053 = vmatpush1.bf16.msra.mxu0 0
        %3054 = vmatprep.subr.bf16.mxu0 0
        %3055 = vmatpush1.bf16.msra.mxu0 0
        %3056 = vmatprep.subr.bf16.mxu0 0
        %3057 = vmatpush1.bf16.msra.mxu0 %v2083
        %3058 = vmatprep.subr.bf16.mxu0 0
        %3059 = vmatpush1.bf16.msra.mxu0 %v2082
        %3060 = vmatprep.subr.bf16.mxu0 0
        %3061 = vmatpush1.bf16.msra.mxu0 %v2081
        %3062 = vmatprep.subr.bf16.mxu0 0
        %3063 = vmatpush1.bf16.msra.mxu0 %v2080
        %3064 = vmatprep.subr.bf16.mxu0 0
        %3065 = vmatpush2.bf16.msra.mxu0 0
        %3066 = vmatprep.subr.bf16.mxu0 0
        %3067 = vmatpush2.bf16.msra.mxu0 0
        %3068 = vmatprep.subr.bf16.mxu0 0
        %3069 = vmatpush2.bf16.msra.mxu0 0
        %3070 = vmatprep.subr.bf16.mxu0 0
        %3071 = vmatpush2.bf16.msra.mxu0 0
        %3072 = vmatprep.subr.bf16.mxu0 0
        %3073 = vmatpush2.bf16.msra.mxu0 0
        %3074 = vmatprep.subr.bf16.mxu0 0
        %3075 = vmatpush2.bf16.msra.mxu0 0
        %3076 = vmatprep.subr.bf16.mxu0 0
        %3077 = vmatpush2.bf16.msra.mxu0 0
        %3078 = vmatprep.subr.bf16.mxu0 0
        %3079 = vmatpush2.bf16.msra.mxu0 0
        %3080 = vmatprep.mubr.bf16.mxu0 0
        %3081 = vmatmul.mubr.bf16.gmra.mxu0 %v3037
        %v3082 = vpop.f32.mrf.mxu0
        %v3083 = vadd.f32 0.0, %v3082
        %v3084 = vpop.f32.mrf.mxu0
        %v3085 = vpop.f32.mrf.mxu0
        %v3086 = vadd.f32 0.0, %v3085
        %v3087 = vpop.f32.mrf.mxu0
        %3088 = vmatprep.mubr.bf16.mxu0 0
        %3089 = vmatmul.mubr.bf16.gmra.mxu0 %v3040
        %v3090 = vpop.f32.mrf.mxu0
        %v3091 = vadd.f32 0.0, %v3090
        %v3092 = vpop.f32.mrf.mxu0
        %v3093 = vpop.f32.mrf.mxu0
        %v3094 = vadd.f32 0.0, %v3093
        %v3095 = vpop.f32.mrf.mxu0
        %3096 = vmatprep.mubr.bf16.mxu0 0
        %3097 = vmatmul.mubr.bf16.gmra.mxu0 %v3043
        %v3098 = vpop.f32.mrf.mxu0
        %v3099 = vadd.f32 0.0, %v3098
        %v3100 = vpop.f32.mrf.mxu0
        %v3101 = vpop.f32.mrf.mxu0
        %v3102 = vadd.f32 0.0, %v3101
        %v3103 = vpop.f32.mrf.mxu0
        %3104 = vmatprep.mubr.bf16.mxu0 0
        %3105 = vmatmul.mubr.bf16.gmra.mxu0 %v3046
        %v3106 = vpop.f32.mrf.mxu0
        %v3107 = vadd.f32 0.0, %v3106
        %v3108 = vpop.f32.mrf.mxu0
        %v3109 = vpop.f32.mrf.mxu0
        %v3110 = vadd.f32 0.0, %v3109
        %v3111 = vpop.f32.mrf.mxu0
        %3112 = vdwg.mxu0
        %v3113 = vsel %vm2866, %v3083, 0.0
        %v3114 = vsel %vm2866, %v3086, 0.0
        %v3115 = vsel %vm2866, %v3091, 0.0
        %v3116 = vsel %vm2866, %v3094, 0.0
        %v3117 = vsel %vm2866, %v3099, 0.0
        %v3118 = vsel %vm2866, %v3102, 0.0
        %v3119 = vsel %vm2866, %v3107, 0.0
        %v3120 = vsel %vm2866, %v3110, 0.0
        %v3121 = vadd.f32 %v2858, %v3113
        %v3122 = vadd.f32 %v2859, %v3114
        %v3123 = vadd.f32 %v2860, %v3115
        %v3124 = vadd.f32 %v2861, %v3116
        %v3125 = vadd.f32 %v2862, %v3117
        %v3126 = vadd.f32 %v2863, %v3118
        %v3127 = vadd.f32 %v2864, %v3119
        %v3128 = vadd.f32 %v2865, %v3120
        %v3129 = vpack.c.bf16 %v3122, %v3121
        %v3130 = vpack.c.bf16 %v3124, %v3123
        %v3131 = vpack.c.bf16 %v3126, %v3125
        %v3132 = vpack.c.bf16 %v3128, %v3127
        %v3133 = vld [vmem:[%s9] sm:$0xf]
        %v3134 = vld [vmem:[%s9 + $0x4] sm:$0xf]
        %v3135 = vld [vmem:[%s9 + $0x8] sm:$0xf]
        %v3136 = vld [vmem:[%s9 + $0xc] sm:$0xf]
        %v3137 = vld [vmem:[%s9 + $0x10] sm:$0xf]
        %v3138 = vld [vmem:[%s9 + $0x14] sm:$0xf]
        %v3139 = vld [vmem:[%s9 + $0x18] sm:$0xf]
        %v3140 = vld [vmem:[%s9 + $0x1c] sm:$0xf]
        %v3141 = vld [vmem:[%s9 + $0x20] sm:$0xf]
        %v3142 = vld [vmem:[%s9 + $0x24] sm:$0xf]
        %v3143 = vld [vmem:[%s9 + $0x28] sm:$0xf]
        %v3144 = vld [vmem:[%s9 + $0x2c] sm:$0xf]
        %v3145 = vld [vmem:[%s9 + $0x30] sm:$0xf]
        %v3146 = vld [vmem:[%s9 + $0x34] sm:$0xf]
        %v3147 = vld [vmem:[%s9 + $0x38] sm:$0xf]
        %v3148 = vld [vmem:[%s9 + $0x3c] sm:$0xf]
        %v3165 = vunpack.c.l.b16 %v3133
        %v3166 = vunpack.c.l.b16 %v3134
        %v3167 = vunpack.c.l.b16 %v3135
        %v3168 = vunpack.c.l.b16 %v3136
        %v3169 = vunpack.c.l.b16 %v3137
        %v3170 = vunpack.c.l.b16 %v3138
        %v3171 = vunpack.c.l.b16 %v3139
        %v3172 = vunpack.c.l.b16 %v3140
        %v3173 = vunpack.c.l.b16 %v3141
        %v3174 = vunpack.c.l.b16 %v3142
        %v3175 = vunpack.c.l.b16 %v3143
        %v3176 = vunpack.c.l.b16 %v3144
        %v3177 = vunpack.c.l.b16 %v3145
        %v3178 = vunpack.c.l.b16 %v3146
        %v3179 = vunpack.c.l.b16 %v3147
        %v3180 = vunpack.c.l.b16 %v3148
        %v3181 = vpack.c.b16 %v3166, %v3165
        %v3182 = vpack.c.b16 %v3168, %v3167
        %v3183 = vpack.c.b16 %v3170, %v3169
        %v3184 = vpack.c.b16 %v3172, %v3171
        %v3185 = vpack.c.b16 %v3174, %v3173
        %v3186 = vpack.c.b16 %v3176, %v3175
        %v3187 = vpack.c.b16 %v3178, %v3177
        %v3188 = vpack.c.b16 %v3180, %v3179
        %3197 = vmatprep.subr.bf16.mxu0 0
        %3198 = vmatpush1.bf16.msra.mxu0 %v3188
        %3199 = vmatprep.subr.bf16.mxu0 0
        %3200 = vmatpush1.bf16.msra.mxu0 %v3187
        %3201 = vmatprep.subr.bf16.mxu0 0
        %3202 = vmatpush1.bf16.msra.mxu0 %v3186
        %3203 = vmatprep.subr.bf16.mxu0 0
        %3204 = vmatpush1.bf16.msra.mxu0 %v3185
        %3205 = vmatprep.subr.bf16.mxu0 0
        %3206 = vmatpush1.bf16.msra.mxu0 %v3184
        %3207 = vmatprep.subr.bf16.mxu0 0
        %3208 = vmatpush1.bf16.msra.mxu0 %v3183
        %3209 = vmatprep.subr.bf16.mxu0 0
        %3210 = vmatpush1.bf16.msra.mxu0 %v3182
        %3211 = vmatprep.subr.bf16.mxu0 0
        %3212 = vmatpush1.bf16.msra.mxu0 %v3181
        %3213 = vmatprep.subr.bf16.mxu0 0
        %3214 = vmatpush2.bf16.msra.mxu0 0
        %3215 = vmatprep.subr.bf16.mxu0 0
        %3216 = vmatpush2.bf16.msra.mxu0 0
        %3217 = vmatprep.subr.bf16.mxu0 0
        %3218 = vmatpush2.bf16.msra.mxu0 0
        %3219 = vmatprep.subr.bf16.mxu0 0
        %3220 = vmatpush2.bf16.msra.mxu0 0
        %3221 = vmatprep.subr.bf16.mxu0 0
        %3222 = vmatpush2.bf16.msra.mxu0 0
        %3223 = vmatprep.subr.bf16.mxu0 0
        %3224 = vmatpush2.bf16.msra.mxu0 0
        %3225 = vmatprep.subr.bf16.mxu0 0
        %3226 = vmatpush2.bf16.msra.mxu0 0
        %3227 = vmatprep.subr.bf16.mxu0 0
        %3228 = vmatpush2.bf16.msra.mxu0 0
        %3229 = vmatprep.mubr.bf16.mxu0 0
        %3230 = vmatmul.mubr.bf16.gmra.mxu0 %v3129
        %v3231 = vpop.f32.mrf.mxu0
        %v3232 = vadd.f32 0.0, %v3231
        %v3233 = vpop.f32.mrf.mxu0
        %v3234 = vpop.f32.mrf.mxu0
        %v3235 = vadd.f32 0.0, %v3234
        %v3236 = vpop.f32.mrf.mxu0
        %3237 = vmatprep.mubr.bf16.mxu0 0
        %3238 = vmatmul.mubr.bf16.gmra.mxu0 %v3130
        %v3239 = vpop.f32.mrf.mxu0
        %v3240 = vadd.f32 0.0, %v3239
        %v3241 = vpop.f32.mrf.mxu0
        %v3242 = vpop.f32.mrf.mxu0
        %v3243 = vadd.f32 0.0, %v3242
        %v3244 = vpop.f32.mrf.mxu0
        %3245 = vmatprep.mubr.bf16.mxu0 0
        %3246 = vmatmul.mubr.bf16.gmra.mxu0 %v3131
        %v3247 = vpop.f32.mrf.mxu0
        %v3248 = vadd.f32 0.0, %v3247
        %v3249 = vpop.f32.mrf.mxu0
        %v3250 = vpop.f32.mrf.mxu0
        %v3251 = vadd.f32 0.0, %v3250
        %v3252 = vpop.f32.mrf.mxu0
        %3253 = vmatprep.mubr.bf16.mxu0 0
        %3254 = vmatmul.mubr.bf16.gmra.mxu0 %v3132
        %v3255 = vpop.f32.mrf.mxu0
        %v3256 = vadd.f32 0.0, %v3255
        %v3257 = vpop.f32.mrf.mxu0
        %v3258 = vpop.f32.mrf.mxu0
        %v3259 = vadd.f32 0.0, %v3258
        %v3260 = vpop.f32.mrf.mxu0
        %3261 = vdwg.mxu0
        %v3262 = vadd.f32 %v1584, %v3232
        %v3263 = vadd.f32 %v1585, %v3235
        %v3264 = vadd.f32 %v1586, %v3240
        %v3265 = vadd.f32 %v1587, %v3243
        %v3266 = vadd.f32 %v1588, %v3248
        %v3267 = vadd.f32 %v1589, %v3251
        %v3268 = vadd.f32 %v1590, %v3256
        %v3269 = vadd.f32 %v1591, %v3259
        %v3270 = vld [vmem:[%s10] sm:$0x1]
        %v3272 = vlaneseq
        %v3273 = vshrl.u32 %v3272, 7
        %v3274 = vsub.s32 0, %v3273
        %v3275 = vrot.slane %v3270, %v3274
        %v3277 = vadd.f32 %v3262, %v3275
        %v3278 = vadd.f32 %v3263, %v3275
        %v3279 = vadd.f32 %v3264, %v3275
        %v3280 = vadd.f32 %v3265, %v3275
        %v3281 = vadd.f32 %v3266, %v3275
        %v3282 = vadd.f32 %v3267, %v3275
        %v3283 = vadd.f32 %v3268, %v3275
        %v3284 = vadd.f32 %v3269, %v3275
        %v3285 = vld [vmem:[%s11] sm:$0x1]
        %v3286 = vld [vmem:[%s12] sm:$0x1]
        %3287 = vadd.xlane.f32.xlu0 %v3277
        %v3288 = vpop.xlane.xlu0 %3287
        %3289 = vadd.xlane.f32.xlu0 %v3278
        %v3290 = vpop.xlane.xlu0 %3289
        %3291 = vadd.xlane.f32.xlu0 %v3279
        %v3292 = vpop.xlane.xlu0 %3291
        %3293 = vadd.xlane.f32.xlu0 %v3280
        %v3294 = vpop.xlane.xlu0 %3293
        %3295 = vadd.xlane.f32.xlu0 %v3281
        %v3296 = vpop.xlane.xlu0 %3295
        %3297 = vadd.xlane.f32.xlu0 %v3282
        %v3298 = vpop.xlane.xlu0 %3297
        %3299 = vadd.xlane.f32.xlu0 %v3283
        %v3300 = vpop.xlane.xlu0 %3299
        %3301 = vadd.xlane.f32.xlu0 %v3284
        %v3302 = vpop.xlane.xlu0 %3301
        %v3303 = vmul.f32 %v3288, %v1491
        %v3304 = vmul.f32 %v3290, %v1491
        %v3305 = vmul.f32 %v3292, %v1491
        %v3306 = vmul.f32 %v3294, %v1491
        %v3307 = vmul.f32 %v3296, %v1491
        %v3308 = vmul.f32 %v3298, %v1491
        %v3309 = vmul.f32 %v3300, %v1491
        %v3310 = vmul.f32 %v3302, %v1491
        %v3311 = vsub.f32 %v3277, %v3303
        %v3312 = vsub.f32 %v3278, %v3304
        %v3313 = vsub.f32 %v3279, %v3305
        %v3314 = vsub.f32 %v3280, %v3306
        %v3315 = vsub.f32 %v3281, %v3307
        %v3316 = vsub.f32 %v3282, %v3308
        %v3317 = vsub.f32 %v3283, %v3309
        %v3318 = vsub.f32 %v3284, %v3310
        %v3319 = vmul.f32 %v3311, %v3311
        %v3320 = vmul.f32 %v3312, %v3312
        %v3321 = vmul.f32 %v3313, %v3313
        %v3322 = vmul.f32 %v3314, %v3314
        %v3323 = vmul.f32 %v3315, %v3315
        %v3324 = vmul.f32 %v3316, %v3316
        %v3325 = vmul.f32 %v3317, %v3317
        %v3326 = vmul.f32 %v3318, %v3318
        %3327 = vadd.xlane.f32.xlu0 %v3319
        %v3328 = vpop.xlane.xlu0 %3327
        %3329 = vadd.xlane.f32.xlu0 %v3320
        %v3330 = vpop.xlane.xlu0 %3329
        %3331 = vadd.xlane.f32.xlu0 %v3321
        %v3332 = vpop.xlane.xlu0 %3331
        %3333 = vadd.xlane.f32.xlu0 %v3322
        %v3334 = vpop.xlane.xlu0 %3333
        %3335 = vadd.xlane.f32.xlu0 %v3323
        %v3336 = vpop.xlane.xlu0 %3335
        %3337 = vadd.xlane.f32.xlu0 %v3324
        %v3338 = vpop.xlane.xlu0 %3337
        %3339 = vadd.xlane.f32.xlu0 %v3325
        %v3340 = vpop.xlane.xlu0 %3339
        %3341 = vadd.xlane.f32.xlu0 %v3326
        %v3342 = vpop.xlane.xlu0 %3341
        %v3343 = vmul.f32 %v3328, %v1491
        %v3344 = vmul.f32 %v3330, %v1491
        %v3345 = vmul.f32 %v3332, %v1491
        %v3346 = vmul.f32 %v3334, %v1491
        %v3347 = vmul.f32 %v3336, %v1491
        %v3348 = vmul.f32 %v3338, %v1491
        %v3349 = vmul.f32 %v3340, %v1491
        %v3350 = vmul.f32 %v3342, %v1491
        %v3351 = vadd.f32 %v3343, 1e-05
        %v3352 = vadd.f32 %v3344, 1e-05
        %v3353 = vadd.f32 %v3345, 1e-05
        %v3354 = vadd.f32 %v3346, 1e-05
        %v3355 = vadd.f32 %v3347, 1e-05
        %v3356 = vadd.f32 %v3348, 1e-05
        %v3357 = vadd.f32 %v3349, 1e-05
        %v3358 = vadd.f32 %v3350, 1e-05
        %v3359 = vrsqrt.pop %v3351
        %v3360 = vrsqrt.pop %v3352
        %v3361 = vrsqrt.pop %v3353
        %v3362 = vrsqrt.pop %v3354
        %v3363 = vrsqrt.pop %v3355
        %v3364 = vrsqrt.pop %v3356
        %v3365 = vrsqrt.pop %v3357
        %v3366 = vrsqrt.pop %v3358
        %v3367 = vmul.f32 %v3311, %v3359
        %v3368 = vmul.f32 %v3312, %v3360
        %v3369 = vmul.f32 %v3313, %v3361
        %v3370 = vmul.f32 %v3314, %v3362
        %v3371 = vmul.f32 %v3315, %v3363
        %v3372 = vmul.f32 %v3316, %v3364
        %v3373 = vmul.f32 %v3317, %v3365
        %v3374 = vmul.f32 %v3318, %v3366
        %v3376 = vlaneseq
        %v3377 = vshrl.u32 %v3376, 7
        %v3378 = vsub.s32 0, %v3377
        %v3379 = vrot.slane %v3285, %v3378
        %v3381 = vmul.f32 %v3367, %v3379
        %v3382 = vmul.f32 %v3368, %v3379
        %v3383 = vmul.f32 %v3369, %v3379
        %v3384 = vmul.f32 %v3370, %v3379
        %v3385 = vmul.f32 %v3371, %v3379
        %v3386 = vmul.f32 %v3372, %v3379
        %v3387 = vmul.f32 %v3373, %v3379
        %v3388 = vmul.f32 %v3374, %v3379
        %v3390 = vlaneseq
        %v3391 = vshrl.u32 %v3390, 7
        %v3392 = vsub.s32 0, %v3391
        %v3393 = vrot.slane %v3286, %v3392
        %v3395 = vadd.f32 %v3381, %v3393
        %v3396 = vadd.f32 %v3382, %v3393
        %v3397 = vadd.f32 %v3383, %v3393
        %v3398 = vadd.f32 %v3384, %v3393
        %v3399 = vadd.f32 %v3385, %v3393
        %v3400 = vadd.f32 %v3386, %v3393
        %v3401 = vadd.f32 %v3387, %v3393
        %v3402 = vadd.f32 %v3388, %v3393
        %v3403 = vpack.c.bf16 %v3396, %v3395
        %v3404 = vpack.c.bf16 %v3398, %v3397
        %v3405 = vpack.c.bf16 %v3400, %v3399
        %v3406 = vpack.c.bf16 %v3402, %v3401
        %v3407 = vld [vmem:[%s13] sm:$0xff]
        %v3408 = vld [vmem:[%s13 + $0x8] sm:$0xff]
        %v3409 = vld [vmem:[%s13 + $0x10] sm:$0xff]
        %v3410 = vld [vmem:[%s13 + $0x18] sm:$0xff]
        %v3411 = vld [vmem:[%s13 + $0x20] sm:$0xff]
        %v3412 = vld [vmem:[%s13 + $0x28] sm:$0xff]
        %v3413 = vld [vmem:[%s13 + $0x30] sm:$0xff]
        %v3414 = vld [vmem:[%s13 + $0x38] sm:$0xff]
        %v3415 = vld [vmem:[%s13 + $0x40] sm:$0xff]
        %v3416 = vld [vmem:[%s13 + $0x48] sm:$0xff]
        %v3417 = vld [vmem:[%s13 + $0x50] sm:$0xff]
        %v3418 = vld [vmem:[%s13 + $0x58] sm:$0xff]
        %v3419 = vld [vmem:[%s13 + $0x60] sm:$0xff]
        %v3420 = vld [vmem:[%s13 + $0x68] sm:$0xff]
        %v3421 = vld [vmem:[%s13 + $0x70] sm:$0xff]
        %v3422 = vld [vmem:[%s13 + $0x78] sm:$0xff]
        %v3423 = vld [vmem:[%s13 + $0x80] sm:$0xff]
        %v3424 = vld [vmem:[%s13 + $0x88] sm:$0xff]
        %v3425 = vld [vmem:[%s13 + $0x90] sm:$0xff]
        %v3426 = vld [vmem:[%s13 + $0x98] sm:$0xff]
        %v3427 = vld [vmem:[%s13 + $0xa0] sm:$0xff]
        %v3428 = vld [vmem:[%s13 + $0xa8] sm:$0xff]
        %v3429 = vld [vmem:[%s13 + $0xb0] sm:$0xff]
        %v3430 = vld [vmem:[%s13 + $0xb8] sm:$0xff]
        %v3431 = vld [vmem:[%s13 + $0xc0] sm:$0xff]
        %v3432 = vld [vmem:[%s13 + $0xc8] sm:$0xff]
        %v3433 = vld [vmem:[%s13 + $0xd0] sm:$0xff]
        %v3434 = vld [vmem:[%s13 + $0xd8] sm:$0xff]
        %v3435 = vld [vmem:[%s13 + $0xe0] sm:$0xff]
        %v3436 = vld [vmem:[%s13 + $0xe8] sm:$0xff]
        %v3437 = vld [vmem:[%s13 + $0xf0] sm:$0xff]
        %v3438 = vld [vmem:[%s13 + $0xf8] sm:$0xff]
        %v3439 = vld [vmem:[%s14] sm:$0xf]
        %v3441 = vlaneseq
        %v3442 = vshrl.u32 %v3441, 7
        %v3443 = vsub.s32 0, %v3442
        %v3444 = vrot.slane %v3439, %v3443
        %v3445 = vlaneseq
        %v3446 = vshrl.u32 %v3445, 7
        %v3447 = vsub.s32 1, %v3446
        %v3448 = vrot.slane %v3439, %v3447
        %v3449 = vlaneseq
        %v3450 = vshrl.u32 %v3449, 7
        %v3451 = vsub.s32 2, %v3450
        %v3452 = vrot.slane %v3439, %v3451
        %v3453 = vlaneseq
        %v3454 = vshrl.u32 %v3453, 7
        %v3455 = vsub.s32 3, %v3454
        %v3456 = vrot.slane %v3439, %v3455
        %v3493 = vunpack.c.l.b16 %v3407
        %v3494 = vunpack.c.h.b16 %v3407
        %v3495 = vunpack.c.l.b16 %v3408
        %v3496 = vunpack.c.h.b16 %v3408
        %v3497 = vunpack.c.l.b16 %v3409
        %v3498 = vunpack.c.h.b16 %v3409
        %v3499 = vunpack.c.l.b16 %v3410
        %v3500 = vunpack.c.h.b16 %v3410
        %v3501 = vunpack.c.l.b16 %v3411
        %v3502 = vunpack.c.h.b16 %v3411
        %v3503 = vunpack.c.l.b16 %v3412
        %v3504 = vunpack.c.h.b16 %v3412
        %v3505 = vunpack.c.l.b16 %v3413
        %v3506 = vunpack.c.h.b16 %v3413
        %v3507 = vunpack.c.l.b16 %v3414
        %v3508 = vunpack.c.h.b16 %v3414
        %v3509 = vunpack.c.l.b16 %v3415
        %v3510 = vunpack.c.h.b16 %v3415
        %v3511 = vunpack.c.l.b16 %v3416
        %v3512 = vunpack.c.h.b16 %v3416
        %v3513 = vunpack.c.l.b16 %v3417
        %v3514 = vunpack.c.h.b16 %v3417
        %v3515 = vunpack.c.l.b16 %v3418
        %v3516 = vunpack.c.h.b16 %v3418
        %v3517 = vunpack.c.l.b16 %v3419
        %v3518 = vunpack.c.h.b16 %v3419
        %v3519 = vunpack.c.l.b16 %v3420
        %v3520 = vunpack.c.h.b16 %v3420
        %v3521 = vunpack.c.l.b16 %v3421
        %v3522 = vunpack.c.h.b16 %v3421
        %v3523 = vunpack.c.l.b16 %v3422
        %v3524 = vunpack.c.h.b16 %v3422
        %v3525 = vunpack.c.l.b16 %v3423
        %v3526 = vunpack.c.h.b16 %v3423
        %v3527 = vunpack.c.l.b16 %v3424
        %v3528 = vunpack.c.h.b16 %v3424
        %v3529 = vunpack.c.l.b16 %v3425
        %v3530 = vunpack.c.h.b16 %v3425
        %v3531 = vunpack.c.l.b16 %v3426
        %v3532 = vunpack.c.h.b16 %v3426
        %v3533 = vunpack.c.l.b16 %v3427
        %v3534 = vunpack.c.h.b16 %v3427
        %v3535 = vunpack.c.l.b16 %v3428
        %v3536 = vunpack.c.h.b16 %v3428
        %v3537 = vunpack.c.l.b16 %v3429
        %v3538 = vunpack.c.h.b16 %v3429
        %v3539 = vunpack.c.l.b16 %v3430
        %v3540 = vunpack.c.h.b16 %v3430
        %v3541 = vunpack.c.l.b16 %v3431
        %v3542 = vunpack.c.h.b16 %v3431
        %v3543 = vunpack.c.l.b16 %v3432
        %v3544 = vunpack.c.h.b16 %v3432
        %v3545 = vunpack.c.l.b16 %v3433
        %v3546 = vunpack.c.h.b16 %v3433
        %v3547 = vunpack.c.l.b16 %v3434
        %v3548 = vunpack.c.h.b16 %v3434
        %v3549 = vunpack.c.l.b16 %v3435
        %v3550 = vunpack.c.h.b16 %v3435
        %v3551 = vunpack.c.l.b16 %v3436
        %v3552 = vunpack.c.h.b16 %v3436
        %v3553 = vunpack.c.l.b16 %v3437
        %v3554 = vunpack.c.h.b16 %v3437
        %v3555 = vunpack.c.l.b16 %v3438
        %v3556 = vunpack.c.h.b16 %v3438
        %v3557 = vpack.c.b16 %v3497, %v3493
        %v3558 = vpack.c.b16 %v3498, %v3494
        %v3559 = vpack.c.b16 %v3499, %v3495
        %v3560 = vpack.c.b16 %v3500, %v3496
        %v3561 = vpack.c.b16 %v3505, %v3501
        %v3562 = vpack.c.b16 %v3506, %v3502
        %v3563 = vpack.c.b16 %v3507, %v3503
        %v3564 = vpack.c.b16 %v3508, %v3504
        %v3565 = vpack.c.b16 %v3513, %v3509
        %v3566 = vpack.c.b16 %v3514, %v3510
        %v3567 = vpack.c.b16 %v3515, %v3511
        %v3568 = vpack.c.b16 %v3516, %v3512
        %v3569 = vpack.c.b16 %v3521, %v3517
        %v3570 = vpack.c.b16 %v3522, %v3518
        %v3571 = vpack.c.b16 %v3523, %v3519
        %v3572 = vpack.c.b16 %v3524, %v3520
        %v3573 = vpack.c.b16 %v3529, %v3525
        %v3574 = vpack.c.b16 %v3530, %v3526
        %v3575 = vpack.c.b16 %v3531, %v3527
        %v3576 = vpack.c.b16 %v3532, %v3528
        %v3577 = vpack.c.b16 %v3537, %v3533
        %v3578 = vpack.c.b16 %v3538, %v3534
        %v3579 = vpack.c.b16 %v3539, %v3535
        %v3580 = vpack.c.b16 %v3540, %v3536
        %v3581 = vpack.c.b16 %v3545, %v3541
        %v3582 = vpack.c.b16 %v3546, %v3542
        %v3583 = vpack.c.b16 %v3547, %v3543
        %v3584 = vpack.c.b16 %v3548, %v3544
        %v3585 = vpack.c.b16 %v3553, %v3549
        %v3586 = vpack.c.b16 %v3554, %v3550
        %v3587 = vpack.c.b16 %v3555, %v3551
        %v3588 = vpack.c.b16 %v3556, %v3552
        %3621 = vmatprep.subr.bf16.mxu0 %v3586
        %3622 = vmatpush1.bf16.msra.mxu0 %v3585
        %3623 = vmatprep.subr.bf16.mxu0 %v3582
        %3624 = vmatpush1.bf16.msra.mxu0 %v3581
        %3625 = vmatprep.subr.bf16.mxu0 %v3578
        %3626 = vmatpush1.bf16.msra.mxu0 %v3577
        %3627 = vmatprep.subr.bf16.mxu0 %v3574
        %3628 = vmatpush1.bf16.msra.mxu0 %v3573
        %3629 = vmatprep.subr.bf16.mxu0 %v3570
        %3630 = vmatpush1.bf16.msra.mxu0 %v3569
        %3631 = vmatprep.subr.bf16.mxu0 %v3566
        %3632 = vmatpush1.bf16.msra.mxu0 %v3565
        %3633 = vmatprep.subr.bf16.mxu0 %v3562
        %3634 = vmatpush1.bf16.msra.mxu0 %v3561
        %3635 = vmatprep.subr.bf16.mxu0 %v3558
        %3636 = vmatpush1.bf16.msra.mxu0 %v3557
        %3637 = vmatprep.subr.bf16.mxu0 0
        %3638 = vmatpush2.bf16.msra.mxu0 0
        %3639 = vmatprep.subr.bf16.mxu0 0
        %3640 = vmatpush2.bf16.msra.mxu0 0
        %3641 = vmatprep.subr.bf16.mxu0 0
        %3642 = vmatpush2.bf16.msra.mxu0 0
        %3643 = vmatprep.subr.bf16.mxu0 0
        %3644 = vmatpush2.bf16.msra.mxu0 0
        %3645 = vmatprep.subr.bf16.mxu0 0
        %3646 = vmatpush2.bf16.msra.mxu0 0
        %3647 = vmatprep.subr.bf16.mxu0 0
        %3648 = vmatpush2.bf16.msra.mxu0 0
        %3649 = vmatprep.subr.bf16.mxu0 0
        %3650 = vmatpush2.bf16.msra.mxu0 0
        %3651 = vmatprep.subr.bf16.mxu0 0
        %3652 = vmatpush2.bf16.msra.mxu0 0
        %3653 = vmatprep.mubr.bf16.mxu0 0
        %3654 = vmatmul.mubr.bf16.gmra.mxu0 %v3403
        %v3655 = vpop.f32.mrf.mxu0
        %v3656 = vadd.f32 %v3444, %v3655
        %v3657 = vpop.f32.mrf.mxu0
        %v3658 = vadd.f32 %v3448, %v3657
        %v3659 = vpop.f32.mrf.mxu0
        %v3660 = vadd.f32 %v3444, %v3659
        %v3661 = vpop.f32.mrf.mxu0
        %v3662 = vadd.f32 %v3448, %v3661
        %3663 = vmatprep.mubr.bf16.mxu0 0
        %3664 = vmatmul.mubr.bf16.gmra.mxu0 %v3404
        %v3665 = vpop.f32.mrf.mxu0
        %v3666 = vadd.f32 %v3444, %v3665
        %v3667 = vpop.f32.mrf.mxu0
        %v3668 = vadd.f32 %v3448, %v3667
        %v3669 = vpop.f32.mrf.mxu0
        %v3670 = vadd.f32 %v3444, %v3669
        %v3671 = vpop.f32.mrf.mxu0
        %v3672 = vadd.f32 %v3448, %v3671
        %3673 = vmatprep.mubr.bf16.mxu0 0
        %3674 = vmatmul.mubr.bf16.gmra.mxu0 %v3405
        %v3675 = vpop.f32.mrf.mxu0
        %v3676 = vadd.f32 %v3444, %v3675
        %v3677 = vpop.f32.mrf.mxu0
        %v3678 = vadd.f32 %v3448, %v3677
        %v3679 = vpop.f32.mrf.mxu0
        %v3680 = vadd.f32 %v3444, %v3679
        %v3681 = vpop.f32.mrf.mxu0
        %v3682 = vadd.f32 %v3448, %v3681
        %3683 = vmatprep.mubr.bf16.mxu0 0
        %3684 = vmatmul.mubr.bf16.gmra.mxu0 %v3406
        %v3685 = vpop.f32.mrf.mxu0
        %v3686 = vadd.f32 %v3444, %v3685
        %v3687 = vpop.f32.mrf.mxu0
        %v3688 = vadd.f32 %v3448, %v3687
        %v3689 = vpop.f32.mrf.mxu0
        %v3690 = vadd.f32 %v3444, %v3689
        %v3691 = vpop.f32.mrf.mxu0
        %v3692 = vadd.f32 %v3448, %v3691
        %3693 = vdwg.mxu0
        %3694 = vmatprep.subr.bf16.mxu0 %v3588
        %3695 = vmatpush1.bf16.msra.mxu0 %v3587
        %3696 = vmatprep.subr.bf16.mxu0 %v3584
        %3697 = vmatpush1.bf16.msra.mxu0 %v3583
        %3698 = vmatprep.subr.bf16.mxu0 %v3580
        %3699 = vmatpush1.bf16.msra.mxu0 %v3579
        %3700 = vmatprep.subr.bf16.mxu0 %v3576
        %3701 = vmatpush1.bf16.msra.mxu0 %v3575
        %3702 = vmatprep.subr.bf16.mxu0 %v3572
        %3703 = vmatpush1.bf16.msra.mxu0 %v3571
        %3704 = vmatprep.subr.bf16.mxu0 %v3568
        %3705 = vmatpush1.bf16.msra.mxu0 %v3567
        %3706 = vmatprep.subr.bf16.mxu0 %v3564
        %3707 = vmatpush1.bf16.msra.mxu0 %v3563
        %3708 = vmatprep.subr.bf16.mxu0 %v3560
        %3709 = vmatpush1.bf16.msra.mxu0 %v3559
        %3710 = vmatprep.subr.bf16.mxu0 0
        %3711 = vmatpush2.bf16.msra.mxu0 0
        %3712 = vmatprep.subr.bf16.mxu0 0
        %3713 = vmatpush2.bf16.msra.mxu0 0
        %3714 = vmatprep.subr.bf16.mxu0 0
        %3715 = vmatpush2.bf16.msra.mxu0 0
        %3716 = vmatprep.subr.bf16.mxu0 0
        %3717 = vmatpush2.bf16.msra.mxu0 0
        %3718 = vmatprep.subr.bf16.mxu0 0
        %3719 = vmatpush2.bf16.msra.mxu0 0
        %3720 = vmatprep.subr.bf16.mxu0 0
        %3721 = vmatpush2.bf16.msra.mxu0 0
        %3722 = vmatprep.subr.bf16.mxu0 0
        %3723 = vmatpush2.bf16.msra.mxu0 0
        %3724 = vmatprep.subr.bf16.mxu0 0
        %3725 = vmatpush2.bf16.msra.mxu0 0
        %3726 = vmatprep.mubr.bf16.mxu0 0
        %3727 = vmatmul.mubr.bf16.gmra.mxu0 %v3403
        %v3728 = vpop.f32.mrf.mxu0
        %v3729 = vadd.f32 %v3452, %v3728
        %v3730 = vpop.f32.mrf.mxu0
        %v3731 = vadd.f32 %v3456, %v3730
        %v3732 = vpop.f32.mrf.mxu0
        %v3733 = vadd.f32 %v3452, %v3732
        %v3734 = vpop.f32.mrf.mxu0
        %v3735 = vadd.f32 %v3456, %v3734
        %3736 = vmatprep.mubr.bf16.mxu0 0
        %3737 = vmatmul.mubr.bf16.gmra.mxu0 %v3404
        %v3738 = vpop.f32.mrf.mxu0
        %v3739 = vadd.f32 %v3452, %v3738
        %v3740 = vpop.f32.mrf.mxu0
        %v3741 = vadd.f32 %v3456, %v3740
        %v3742 = vpop.f32.mrf.mxu0
        %v3743 = vadd.f32 %v3452, %v3742
        %v3744 = vpop.f32.mrf.mxu0
        %v3745 = vadd.f32 %v3456, %v3744
        %3746 = vmatprep.mubr.bf16.mxu0 0
        %3747 = vmatmul.mubr.bf16.gmra.mxu0 %v3405
        %v3748 = vpop.f32.mrf.mxu0
        %v3749 = vadd.f32 %v3452, %v3748
        %v3750 = vpop.f32.mrf.mxu0
        %v3751 = vadd.f32 %v3456, %v3750
        %v3752 = vpop.f32.mrf.mxu0
        %v3753 = vadd.f32 %v3452, %v3752
        %v3754 = vpop.f32.mrf.mxu0
        %v3755 = vadd.f32 %v3456, %v3754
        %3756 = vmatprep.mubr.bf16.mxu0 0
        %3757 = vmatmul.mubr.bf16.gmra.mxu0 %v3406
        %v3758 = vpop.f32.mrf.mxu0
        %v3759 = vadd.f32 %v3452, %v3758
        %v3760 = vpop.f32.mrf.mxu0
        %v3761 = vadd.f32 %v3456, %v3760
        %v3762 = vpop.f32.mrf.mxu0
        %v3763 = vadd.f32 %v3452, %v3762
        %v3764 = vpop.f32.mrf.mxu0
        %v3765 = vadd.f32 %v3456, %v3764
        %3766 = vdwg.mxu0
        %v3767 = vmul.f32 %v3656, %v3656
        %v3768 = vmul.f32 %v3658, %v3658
        %v3769 = vmul.f32 %v3729, %v3729
        %v3770 = vmul.f32 %v3731, %v3731
        %v3771 = vmul.f32 %v3660, %v3660
        %v3772 = vmul.f32 %v3662, %v3662
        %v3773 = vmul.f32 %v3733, %v3733
        %v3774 = vmul.f32 %v3735, %v3735
        %v3775 = vmul.f32 %v3666, %v3666
        %v3776 = vmul.f32 %v3668, %v3668
        %v3777 = vmul.f32 %v3739, %v3739
        %v3778 = vmul.f32 %v3741, %v3741
        %v3779 = vmul.f32 %v3670, %v3670
        %v3780 = vmul.f32 %v3672, %v3672
        %v3781 = vmul.f32 %v3743, %v3743
        %v3782 = vmul.f32 %v3745, %v3745
        %v3783 = vmul.f32 %v3676, %v3676
        %v3784 = vmul.f32 %v3678, %v3678
        %v3785 = vmul.f32 %v3749, %v3749
        %v3786 = vmul.f32 %v3751, %v3751
        %v3787 = vmul.f32 %v3680, %v3680
        %v3788 = vmul.f32 %v3682, %v3682
        %v3789 = vmul.f32 %v3753, %v3753
        %v3790 = vmul.f32 %v3755, %v3755
        %v3791 = vmul.f32 %v3686, %v3686
        %v3792 = vmul.f32 %v3688, %v3688
        %v3793 = vmul.f32 %v3759, %v3759
        %v3794 = vmul.f32 %v3761, %v3761
        %v3795 = vmul.f32 %v3690, %v3690
        %v3796 = vmul.f32 %v3692, %v3692
        %v3797 = vmul.f32 %v3763, %v3763
        %v3798 = vmul.f32 %v3765, %v3765
        %v3799 = vmul.f32 %v3656, %v3767
        %v3800 = vmul.f32 %v3658, %v3768
        %v3801 = vmul.f32 %v3729, %v3769
        %v3802 = vmul.f32 %v3731, %v3770
        %v3803 = vmul.f32 %v3660, %v3771
        %v3804 = vmul.f32 %v3662, %v3772
        %v3805 = vmul.f32 %v3733, %v3773
        %v3806 = vmul.f32 %v3735, %v3774
        %v3807 = vmul.f32 %v3666, %v3775
        %v3808 = vmul.f32 %v3668, %v3776
        %v3809 = vmul.f32 %v3739, %v3777
        %v3810 = vmul.f32 %v3741, %v3778
        %v3811 = vmul.f32 %v3670, %v3779
        %v3812 = vmul.f32 %v3672, %v3780
        %v3813 = vmul.f32 %v3743, %v3781
        %v3814 = vmul.f32 %v3745, %v3782
        %v3815 = vmul.f32 %v3676, %v3783
        %v3816 = vmul.f32 %v3678, %v3784
        %v3817 = vmul.f32 %v3749, %v3785
        %v3818 = vmul.f32 %v3751, %v3786
        %v3819 = vmul.f32 %v3680, %v3787
        %v3820 = vmul.f32 %v3682, %v3788
        %v3821 = vmul.f32 %v3753, %v3789
        %v3822 = vmul.f32 %v3755, %v3790
        %v3823 = vmul.f32 %v3686, %v3791
        %v3824 = vmul.f32 %v3688, %v3792
        %v3825 = vmul.f32 %v3759, %v3793
        %v3826 = vmul.f32 %v3761, %v3794
        %v3827 = vmul.f32 %v3690, %v3795
        %v3828 = vmul.f32 %v3692, %v3796
        %v3829 = vmul.f32 %v3763, %v3797
        %v3830 = vmul.f32 %v3765, %v3798
        %v3831 = vmul.f32 %v3799, 0.044715
        %v3832 = vmul.f32 %v3800, 0.044715
        %v3833 = vmul.f32 %v3801, 0.044715
        %v3834 = vmul.f32 %v3802, 0.044715
        %v3835 = vmul.f32 %v3803, 0.044715
        %v3836 = vmul.f32 %v3804, 0.044715
        %v3837 = vmul.f32 %v3805, 0.044715
        %v3838 = vmul.f32 %v3806, 0.044715
        %v3839 = vmul.f32 %v3807, 0.044715
        %v3840 = vmul.f32 %v3808, 0.044715
        %v3841 = vmul.f32 %v3809, 0.044715
        %v3842 = vmul.f32 %v3810, 0.044715
        %v3843 = vmul.f32 %v3811, 0.044715
        %v3844 = vmul.f32 %v3812, 0.044715
        %v3845 = vmul.f32 %v3813, 0.044715
        %v3846 = vmul.f32 %v3814, 0.044715
        %v3847 = vmul.f32 %v3815, 0.044715
        %v3848 = vmul.f32 %v3816, 0.044715
        %v3849 = vmul.f32 %v3817, 0.044715
        %v3850 = vmul.f32 %v3818, 0.044715
        %v3851 = vmul.f32 %v3819, 0.044715
        %v3852 = vmul.f32 %v3820, 0.044715
        %v3853 = vmul.f32 %v3821, 0.044715
        %v3854 = vmul.f32 %v3822, 0.044715
        %v3855 = vmul.f32 %v3823, 0.044715
        %v3856 = vmul.f32 %v3824, 0.044715
        %v3857 = vmul.f32 %v3825, 0.044715
        %v3858 = vmul.f32 %v3826, 0.044715
        %v3859 = vmul.f32 %v3827, 0.044715
        %v3860 = vmul.f32 %v3828, 0.044715
        %v3861 = vmul.f32 %v3829, 0.044715
        %v3862 = vmul.f32 %v3830, 0.044715
        %v3863 = vadd.f32 %v3656, %v3831
        %v3864 = vadd.f32 %v3658, %v3832
        %v3865 = vadd.f32 %v3729, %v3833
        %v3866 = vadd.f32 %v3731, %v3834
        %v3867 = vadd.f32 %v3660, %v3835
        %v3868 = vadd.f32 %v3662, %v3836
        %v3869 = vadd.f32 %v3733, %v3837
        %v3870 = vadd.f32 %v3735, %v3838
        %v3871 = vadd.f32 %v3666, %v3839
        %v3872 = vadd.f32 %v3668, %v3840
        %v3873 = vadd.f32 %v3739, %v3841
        %v3874 = vadd.f32 %v3741, %v3842
        %v3875 = vadd.f32 %v3670, %v3843
        %v3876 = vadd.f32 %v3672, %v3844
        %v3877 = vadd.f32 %v3743, %v3845
        %v3878 = vadd.f32 %v3745, %v3846
        %v3879 = vadd.f32 %v3676, %v3847
        %v3880 = vadd.f32 %v3678, %v3848
        %v3881 = vadd.f32 %v3749, %v3849
        %v3882 = vadd.f32 %v3751, %v3850
        %v3883 = vadd.f32 %v3680, %v3851
        %v3884 = vadd.f32 %v3682, %v3852
        %v3885 = vadd.f32 %v3753, %v3853
        %v3886 = vadd.f32 %v3755, %v3854
        %v3887 = vadd.f32 %v3686, %v3855
        %v3888 = vadd.f32 %v3688, %v3856
        %v3889 = vadd.f32 %v3759, %v3857
        %v3890 = vadd.f32 %v3761, %v3858
        %v3891 = vadd.f32 %v3690, %v3859
        %v3892 = vadd.f32 %v3692, %v3860
        %v3893 = vadd.f32 %v3763, %v3861
        %v3894 = vadd.f32 %v3765, %v3862
        %v3895 = vmul.f32 %v3863, 0.7978846
        %v3896 = vmul.f32 %v3864, 0.7978846
        %v3897 = vmul.f32 %v3865, 0.7978846
        %v3898 = vmul.f32 %v3866, 0.7978846
        %v3899 = vmul.f32 %v3867, 0.7978846
        %v3900 = vmul.f32 %v3868, 0.7978846
        %v3901 = vmul.f32 %v3869, 0.7978846
        %v3902 = vmul.f32 %v3870, 0.7978846
        %v3903 = vmul.f32 %v3871, 0.7978846
        %v3904 = vmul.f32 %v3872, 0.7978846
        %v3905 = vmul.f32 %v3873, 0.7978846
        %v3906 = vmul.f32 %v3874, 0.7978846
        %v3907 = vmul.f32 %v3875, 0.7978846
        %v3908 = vmul.f32 %v3876, 0.7978846
        %v3909 = vmul.f32 %v3877, 0.7978846
        %v3910 = vmul.f32 %v3878, 0.7978846
        %v3911 = vmul.f32 %v3879, 0.7978846
        %v3912 = vmul.f32 %v3880, 0.7978846
        %v3913 = vmul.f32 %v3881, 0.7978846
        %v3914 = vmul.f32 %v3882, 0.7978846
        %v3915 = vmul.f32 %v3883, 0.7978846
        %v3916 = vmul.f32 %v3884, 0.7978846
        %v3917 = vmul.f32 %v3885, 0.7978846
        %v3918 = vmul.f32 %v3886, 0.7978846
        %v3919 = vmul.f32 %v3887, 0.7978846
        %v3920 = vmul.f32 %v3888, 0.7978846
        %v3921 = vmul.f32 %v3889, 0.7978846
        %v3922 = vmul.f32 %v3890, 0.7978846
        %v3923 = vmul.f32 %v3891, 0.7978846
        %v3924 = vmul.f32 %v3892, 0.7978846
        %v3925 = vmul.f32 %v3893, 0.7978846
        %v3926 = vmul.f32 %v3894, 0.7978846
        %v3927 = vtanh.pop %v3895
        %v3928 = vtanh.pop %v3896
        %v3929 = vtanh.pop %v3897
        %v3930 = vtanh.pop %v3898
        %v3931 = vtanh.pop %v3899
        %v3932 = vtanh.pop %v3900
        %v3933 = vtanh.pop %v3901
        %v3934 = vtanh.pop %v3902
        %v3935 = vtanh.pop %v3903
        %v3936 = vtanh.pop %v3904
        %v3937 = vtanh.pop %v3905
        %v3938 = vtanh.pop %v3906
        %v3939 = vtanh.pop %v3907
        %v3940 = vtanh.pop %v3908
        %v3941 = vtanh.pop %v3909
        %v3942 = vtanh.pop %v3910
        %v3943 = vtanh.pop %v3911
        %v3944 = vtanh.pop %v3912
        %v3945 = vtanh.pop %v3913
        %v3946 = vtanh.pop %v3914
        %v3947 = vtanh.pop %v3915
        %v3948 = vtanh.pop %v3916
        %v3949 = vtanh.pop %v3917
        %v3950 = vtanh.pop %v3918
        %v3951 = vtanh.pop %v3919
        %v3952 = vtanh.pop %v3920
        %v3953 = vtanh.pop %v3921
        %v3954 = vtanh.pop %v3922
        %v3955 = vtanh.pop %v3923
        %v3956 = vtanh.pop %v3924
        %v3957 = vtanh.pop %v3925
        %v3958 = vtanh.pop %v3926
        %v3959 = vadd.f32 %v3927, 1.0
        %v3960 = vadd.f32 %v3928, 1.0
        %v3961 = vadd.f32 %v3929, 1.0
        %v3962 = vadd.f32 %v3930, 1.0
        %v3963 = vadd.f32 %v3931, 1.0
        %v3964 = vadd.f32 %v3932, 1.0
        %v3965 = vadd.f32 %v3933, 1.0
        %v3966 = vadd.f32 %v3934, 1.0
        %v3967 = vadd.f32 %v3935, 1.0
        %v3968 = vadd.f32 %v3936, 1.0
        %v3969 = vadd.f32 %v3937, 1.0
        %v3970 = vadd.f32 %v3938, 1.0
        %v3971 = vadd.f32 %v3939, 1.0
        %v3972 = vadd.f32 %v3940, 1.0
        %v3973 = vadd.f32 %v3941, 1.0
        %v3974 = vadd.f32 %v3942, 1.0
        %v3975 = vadd.f32 %v3943, 1.0
        %v3976 = vadd.f32 %v3944, 1.0
        %v3977 = vadd.f32 %v3945, 1.0
        %v3978 = vadd.f32 %v3946, 1.0
        %v3979 = vadd.f32 %v3947, 1.0
        %v3980 = vadd.f32 %v3948, 1.0
        %v3981 = vadd.f32 %v3949, 1.0
        %v3982 = vadd.f32 %v3950, 1.0
        %v3983 = vadd.f32 %v3951, 1.0
        %v3984 = vadd.f32 %v3952, 1.0
        %v3985 = vadd.f32 %v3953, 1.0
        %v3986 = vadd.f32 %v3954, 1.0
        %v3987 = vadd.f32 %v3955, 1.0
        %v3988 = vadd.f32 %v3956, 1.0
        %v3989 = vadd.f32 %v3957, 1.0
        %v3990 = vadd.f32 %v3958, 1.0
        %v3991 = vmul.f32 %v3959, 0.5
        %v3992 = vmul.f32 %v3960, 0.5
        %v3993 = vmul.f32 %v3961, 0.5
        %v3994 = vmul.f32 %v3962, 0.5
        %v3995 = vmul.f32 %v3963, 0.5
        %v3996 = vmul.f32 %v3964, 0.5
        %v3997 = vmul.f32 %v3965, 0.5
        %v3998 = vmul.f32 %v3966, 0.5
        %v3999 = vmul.f32 %v3967, 0.5
        %v4000 = vmul.f32 %v3968, 0.5
        %v4001 = vmul.f32 %v3969, 0.5
        %v4002 = vmul.f32 %v3970, 0.5
        %v4003 = vmul.f32 %v3971, 0.5
        %v4004 = vmul.f32 %v3972, 0.5
        %v4005 = vmul.f32 %v3973, 0.5
        %v4006 = vmul.f32 %v3974, 0.5
        %v4007 = vmul.f32 %v3975, 0.5
        %v4008 = vmul.f32 %v3976, 0.5
        %v4009 = vmul.f32 %v3977, 0.5
        %v4010 = vmul.f32 %v3978, 0.5
        %v4011 = vmul.f32 %v3979, 0.5
        %v4012 = vmul.f32 %v3980, 0.5
        %v4013 = vmul.f32 %v3981, 0.5
        %v4014 = vmul.f32 %v3982, 0.5
        %v4015 = vmul.f32 %v3983, 0.5
        %v4016 = vmul.f32 %v3984, 0.5
        %v4017 = vmul.f32 %v3985, 0.5
        %v4018 = vmul.f32 %v3986, 0.5
        %v4019 = vmul.f32 %v3987, 0.5
        %v4020 = vmul.f32 %v3988, 0.5
        %v4021 = vmul.f32 %v3989, 0.5
        %v4022 = vmul.f32 %v3990, 0.5
        %v4023 = vmul.f32 %v3656, %v3991
        %v4024 = vmul.f32 %v3658, %v3992
        %v4025 = vmul.f32 %v3729, %v3993
        %v4026 = vmul.f32 %v3731, %v3994
        %v4027 = vmul.f32 %v3660, %v3995
        %v4028 = vmul.f32 %v3662, %v3996
        %v4029 = vmul.f32 %v3733, %v3997
        %v4030 = vmul.f32 %v3735, %v3998
        %v4031 = vmul.f32 %v3666, %v3999
        %v4032 = vmul.f32 %v3668, %v4000
        %v4033 = vmul.f32 %v3739, %v4001
        %v4034 = vmul.f32 %v3741, %v4002
        %v4035 = vmul.f32 %v3670, %v4003
        %v4036 = vmul.f32 %v3672, %v4004
        %v4037 = vmul.f32 %v3743, %v4005
        %v4038 = vmul.f32 %v3745, %v4006
        %v4039 = vmul.f32 %v3676, %v4007
        %v4040 = vmul.f32 %v3678, %v4008
        %v4041 = vmul.f32 %v3749, %v4009
        %v4042 = vmul.f32 %v3751, %v4010
        %v4043 = vmul.f32 %v3680, %v4011
        %v4044 = vmul.f32 %v3682, %v4012
        %v4045 = vmul.f32 %v3753, %v4013
        %v4046 = vmul.f32 %v3755, %v4014
        %v4047 = vmul.f32 %v3686, %v4015
        %v4048 = vmul.f32 %v3688, %v4016
        %v4049 = vmul.f32 %v3759, %v4017
        %v4050 = vmul.f32 %v3761, %v4018
        %v4051 = vmul.f32 %v3690, %v4019
        %v4052 = vmul.f32 %v3692, %v4020
        %v4053 = vmul.f32 %v3763, %v4021
        %v4054 = vmul.f32 %v3765, %v4022
        %v4055 = vpack.c.bf16 %v4027, %v4023
        %v4056 = vpack.c.bf16 %v4028, %v4024
        %v4057 = vpack.c.bf16 %v4029, %v4025
        %v4058 = vpack.c.bf16 %v4030, %v4026
        %v4059 = vpack.c.bf16 %v4035, %v4031
        %v4060 = vpack.c.bf16 %v4036, %v4032
        %v4061 = vpack.c.bf16 %v4037, %v4033
        %v4062 = vpack.c.bf16 %v4038, %v4034
        %v4063 = vpack.c.bf16 %v4043, %v4039
        %v4064 = vpack.c.bf16 %v4044, %v4040
        %v4065 = vpack.c.bf16 %v4045, %v4041
        %v4066 = vpack.c.bf16 %v4046, %v4042
        %v4067 = vpack.c.bf16 %v4051, %v4047
        %v4068 = vpack.c.bf16 %v4052, %v4048
        %v4069 = vpack.c.bf16 %v4053, %v4049
        %v4070 = vpack.c.bf16 %v4054, %v4050
        %v4071 = vld [vmem:[%s15] sm:$0xf]
        %v4072 = vld [vmem:[%s15 + $0x4] sm:$0xf]
        %v4073 = vld [vmem:[%s15 + $0x8] sm:$0xf]
        %v4074 = vld [vmem:[%s15 + $0xc] sm:$0xf]
        %v4075 = vld [vmem:[%s15 + $0x10] sm:$0xf]
        %v4076 = vld [vmem:[%s15 + $0x14] sm:$0xf]
        %v4077 = vld [vmem:[%s15 + $0x18] sm:$0xf]
        %v4078 = vld [vmem:[%s15 + $0x1c] sm:$0xf]
        %v4079 = vld [vmem:[%s15 + $0x20] sm:$0xf]
        %v4080 = vld [vmem:[%s15 + $0x24] sm:$0xf]
        %v4081 = vld [vmem:[%s15 + $0x28] sm:$0xf]
        %v4082 = vld [vmem:[%s15 + $0x2c] sm:$0xf]
        %v4083 = vld [vmem:[%s15 + $0x30] sm:$0xf]
        %v4084 = vld [vmem:[%s15 + $0x34] sm:$0xf]
        %v4085 = vld [vmem:[%s15 + $0x38] sm:$0xf]
        %v4086 = vld [vmem:[%s15 + $0x3c] sm:$0xf]
        %v4087 = vld [vmem:[%s15 + $0x40] sm:$0xf]
        %v4088 = vld [vmem:[%s15 + $0x44] sm:$0xf]
        %v4089 = vld [vmem:[%s15 + $0x48] sm:$0xf]
        %v4090 = vld [vmem:[%s15 + $0x4c] sm:$0xf]
        %v4091 = vld [vmem:[%s15 + $0x50] sm:$0xf]
        %v4092 = vld [vmem:[%s15 + $0x54] sm:$0xf]
        %v4093 = vld [vmem:[%s15 + $0x58] sm:$0xf]
        %v4094 = vld [vmem:[%s15 + $0x5c] sm:$0xf]
        %v4095 = vld [vmem:[%s15 + $0x60] sm:$0xf]
        %v4096 = vld [vmem:[%s15 + $0x64] sm:$0xf]
        %v4097 = vld [vmem:[%s15 + $0x68] sm:$0xf]
        %v4098 = vld [vmem:[%s15 + $0x6c] sm:$0xf]
        %v4099 = vld [vmem:[%s15 + $0x70] sm:$0xf]
        %v4100 = vld [vmem:[%s15 + $0x74] sm:$0xf]
        %v4101 = vld [vmem:[%s15 + $0x78] sm:$0xf]
        %v4102 = vld [vmem:[%s15 + $0x7c] sm:$0xf]
        %v4103 = vld [vmem:[%s15 + $0x80] sm:$0xf]
        %v4104 = vld [vmem:[%s15 + $0x84] sm:$0xf]
        %v4105 = vld [vmem:[%s15 + $0x88] sm:$0xf]
        %v4106 = vld [vmem:[%s15 + $0x8c] sm:$0xf]
        %v4107 = vld [vmem:[%s15 + $0x90] sm:$0xf]
        %v4108 = vld [vmem:[%s15 + $0x94] sm:$0xf]
        %v4109 = vld [vmem:[%s15 + $0x98] sm:$0xf]
        %v4110 = vld [vmem:[%s15 + $0x9c] sm:$0xf]
        %v4111 = vld [vmem:[%s15 + $0xa0] sm:$0xf]
        %v4112 = vld [vmem:[%s15 + $0xa4] sm:$0xf]
        %v4113 = vld [vmem:[%s15 + $0xa8] sm:$0xf]
        %v4114 = vld [vmem:[%s15 + $0xac] sm:$0xf]
        %v4115 = vld [vmem:[%s15 + $0xb0] sm:$0xf]
        %v4116 = vld [vmem:[%s15 + $0xb4] sm:$0xf]
        %v4117 = vld [vmem:[%s15 + $0xb8] sm:$0xf]
        %v4118 = vld [vmem:[%s15 + $0xbc] sm:$0xf]
        %v4119 = vld [vmem:[%s15 + $0xc0] sm:$0xf]
        %v4120 = vld [vmem:[%s15 + $0xc4] sm:$0xf]
        %v4121 = vld [vmem:[%s15 + $0xc8] sm:$0xf]
        %v4122 = vld [vmem:[%s15 + $0xcc] sm:$0xf]
        %v4123 = vld [vmem:[%s15 + $0xd0] sm:$0xf]
        %v4124 = vld [vmem:[%s15 + $0xd4] sm:$0xf]
        %v4125 = vld [vmem:[%s15 + $0xd8] sm:$0xf]
        %v4126 = vld [vmem:[%s15 + $0xdc] sm:$0xf]
        %v4127 = vld [vmem:[%s15 + $0xe0] sm:$0xf]
        %v4128 = vld [vmem:[%s15 + $0xe4] sm:$0xf]
        %v4129 = vld [vmem:[%s15 + $0xe8] sm:$0xf]
        %v4130 = vld [vmem:[%s15 + $0xec] sm:$0xf]
        %v4131 = vld [vmem:[%s15 + $0xf0] sm:$0xf]
        %v4132 = vld [vmem:[%s15 + $0xf4] sm:$0xf]
        %v4133 = vld [vmem:[%s15 + $0xf8] sm:$0xf]
        %v4134 = vld [vmem:[%s15 + $0xfc] sm:$0xf]
        %v4199 = vunpack.c.l.b16 %v4071
        %v4200 = vunpack.c.l.b16 %v4072
        %v4201 = vunpack.c.l.b16 %v4073
        %v4202 = vunpack.c.l.b16 %v4074
        %v4203 = vunpack.c.l.b16 %v4075
        %v4204 = vunpack.c.l.b16 %v4076
        %v4205 = vunpack.c.l.b16 %v4077
        %v4206 = vunpack.c.l.b16 %v4078
        %v4207 = vunpack.c.l.b16 %v4079
        %v4208 = vunpack.c.l.b16 %v4080
        %v4209 = vunpack.c.l.b16 %v4081
        %v4210 = vunpack.c.l.b16 %v4082
        %v4211 = vunpack.c.l.b16 %v4083
        %v4212 = vunpack.c.l.b16 %v4084
        %v4213 = vunpack.c.l.b16 %v4085
        %v4214 = vunpack.c.l.b16 %v4086
        %v4215 = vunpack.c.l.b16 %v4087
        %v4216 = vunpack.c.l.b16 %v4088
        %v4217 = vunpack.c.l.b16 %v4089
        %v4218 = vunpack.c.l.b16 %v4090
        %v4219 = vunpack.c.l.b16 %v4091
        %v4220 = vunpack.c.l.b16 %v4092
        %v4221 = vunpack.c.l.b16 %v4093
        %v4222 = vunpack.c.l.b16 %v4094
        %v4223 = vunpack.c.l.b16 %v4095
        %v4224 = vunpack.c.l.b16 %v4096
        %v4225 = vunpack.c.l.b16 %v4097
        %v4226 = vunpack.c.l.b16 %v4098
        %v4227 = vunpack.c.l.b16 %v4099
        %v4228 = vunpack.c.l.b16 %v4100
        %v4229 = vunpack.c.l.b16 %v4101
        %v4230 = vunpack.c.l.b16 %v4102
        %v4231 = vunpack.c.l.b16 %v4103
        %v4232 = vunpack.c.l.b16 %v4104
        %v4233 = vunpack.c.l.b16 %v4105
        %v4234 = vunpack.c.l.b16 %v4106
        %v4235 = vunpack.c.l.b16 %v4107
        %v4236 = vunpack.c.l.b16 %v4108
        %v4237 = vunpack.c.l.b16 %v4109
        %v4238 = vunpack.c.l.b16 %v4110
        %v4239 = vunpack.c.l.b16 %v4111
        %v4240 = vunpack.c.l.b16 %v4112
        %v4241 = vunpack.c.l.b16 %v4113
        %v4242 = vunpack.c.l.b16 %v4114
        %v4243 = vunpack.c.l.b16 %v4115
        %v4244 = vunpack.c.l.b16 %v4116
        %v4245 = vunpack.c.l.b16 %v4117
        %v4246 = vunpack.c.l.b16 %v4118
        %v4247 = vunpack.c.l.b16 %v4119
        %v4248 = vunpack.c.l.b16 %v4120
        %v4249 = vunpack.c.l.b16 %v4121
        %v4250 = vunpack.c.l.b16 %v4122
        %v4251 = vunpack.c.l.b16 %v4123
        %v4252 = vunpack.c.l.b16 %v4124
        %v4253 = vunpack.c.l.b16 %v4125
        %v4254 = vunpack.c.l.b16 %v4126
        %v4255 = vunpack.c.l.b16 %v4127
        %v4256 = vunpack.c.l.b16 %v4128
        %v4257 = vunpack.c.l.b16 %v4129
        %v4258 = vunpack.c.l.b16 %v4130
        %v4259 = vunpack.c.l.b16 %v4131
        %v4260 = vunpack.c.l.b16 %v4132
        %v4261 = vunpack.c.l.b16 %v4133
        %v4262 = vunpack.c.l.b16 %v4134
        %v4263 = vpack.c.b16 %v4200, %v4199
        %v4264 = vpack.c.b16 %v4202, %v4201
        %v4265 = vpack.c.b16 %v4204, %v4203
        %v4266 = vpack.c.b16 %v4206, %v4205
        %v4267 = vpack.c.b16 %v4208, %v4207
        %v4268 = vpack.c.b16 %v4210, %v4209
        %v4269 = vpack.c.b16 %v4212, %v4211
        %v4270 = vpack.c.b16 %v4214, %v4213
        %v4271 = vpack.c.b16 %v4216, %v4215
        %v4272 = vpack.c.b16 %v4218, %v4217
        %v4273 = vpack.c.b16 %v4220, %v4219
        %v4274 = vpack.c.b16 %v4222, %v4221
        %v4275 = vpack.c.b16 %v4224, %v4223
        %v4276 = vpack.c.b16 %v4226, %v4225
        %v4277 = vpack.c.b16 %v4228, %v4227
        %v4278 = vpack.c.b16 %v4230, %v4229
        %v4279 = vpack.c.b16 %v4232, %v4231
        %v4280 = vpack.c.b16 %v4234, %v4233
        %v4281 = vpack.c.b16 %v4236, %v4235
        %v4282 = vpack.c.b16 %v4238, %v4237
        %v4283 = vpack.c.b16 %v4240, %v4239
        %v4284 = vpack.c.b16 %v4242, %v4241
        %v4285 = vpack.c.b16 %v4244, %v4243
        %v4286 = vpack.c.b16 %v4246, %v4245
        %v4287 = vpack.c.b16 %v4248, %v4247
        %v4288 = vpack.c.b16 %v4250, %v4249
        %v4289 = vpack.c.b16 %v4252, %v4251
        %v4290 = vpack.c.b16 %v4254, %v4253
        %v4291 = vpack.c.b16 %v4256, %v4255
        %v4292 = vpack.c.b16 %v4258, %v4257
        %v4293 = vpack.c.b16 %v4260, %v4259
        %v4294 = vpack.c.b16 %v4262, %v4261
        %4327 = vmatprep.subr.bf16.mxu0 0
        %4328 = vmatpush1.bf16.msra.mxu0 %v4270
        %4329 = vmatprep.subr.bf16.mxu0 0
        %4330 = vmatpush1.bf16.msra.mxu0 %v4269
        %4331 = vmatprep.subr.bf16.mxu0 0
        %4332 = vmatpush1.bf16.msra.mxu0 %v4268
        %4333 = vmatprep.subr.bf16.mxu0 0
        %4334 = vmatpush1.bf16.msra.mxu0 %v4267
        %4335 = vmatprep.subr.bf16.mxu0 0
        %4336 = vmatpush1.bf16.msra.mxu0 %v4266
        %4337 = vmatprep.subr.bf16.mxu0 0
        %4338 = vmatpush1.bf16.msra.mxu0 %v4265
        %4339 = vmatprep.subr.bf16.mxu0 0
        %4340 = vmatpush1.bf16.msra.mxu0 %v4264
        %4341 = vmatprep.subr.bf16.mxu0 0
        %4342 = vmatpush1.bf16.msra.mxu0 %v4263
        %4343 = vmatprep.subr.bf16.mxu0 0
        %4344 = vmatpush2.bf16.msra.mxu0 %v4278
        %4345 = vmatprep.subr.bf16.mxu0 0
        %4346 = vmatpush2.bf16.msra.mxu0 %v4277
        %4347 = vmatprep.subr.bf16.mxu0 0
        %4348 = vmatpush2.bf16.msra.mxu0 %v4276
        %4349 = vmatprep.subr.bf16.mxu0 0
        %4350 = vmatpush2.bf16.msra.mxu0 %v4275
        %4351 = vmatprep.subr.bf16.mxu0 0
        %4352 = vmatpush2.bf16.msra.mxu0 %v4274
        %4353 = vmatprep.subr.bf16.mxu0 0
        %4354 = vmatpush2.bf16.msra.mxu0 %v4273
        %4355 = vmatprep.subr.bf16.mxu0 0
        %4356 = vmatpush2.bf16.msra.mxu0 %v4272
        %4357 = vmatprep.subr.bf16.mxu0 0
        %4358 = vmatpush2.bf16.msra.mxu0 %v4271
        %4359 = vmatprep.mubr.bf16.mxu0 %v4056
        %4360 = vmatmul.mubr.bf16.gmra.mxu0 %v4055
        %v4361 = vpop.f32.mrf.mxu0
        %v4362 = vadd.f32 0.0, %v4361
        %v4363 = vpop.f32.mrf.mxu0
        %v4364 = vpop.f32.mrf.mxu0
        %v4365 = vadd.f32 0.0, %v4364
        %v4366 = vpop.f32.mrf.mxu0
        %4367 = vmatprep.mubr.bf16.mxu0 %v4060
        %4368 = vmatmul.mubr.bf16.gmra.mxu0 %v4059
        %v4369 = vpop.f32.mrf.mxu0
        %v4370 = vadd.f32 0.0, %v4369
        %v4371 = vpop.f32.mrf.mxu0
        %v4372 = vpop.f32.mrf.mxu0
        %v4373 = vadd.f32 0.0, %v4372
        %v4374 = vpop.f32.mrf.mxu0
        %4375 = vmatprep.mubr.bf16.mxu0 %v4064
        %4376 = vmatmul.mubr.bf16.gmra.mxu0 %v4063
        %v4377 = vpop.f32.mrf.mxu0
        %v4378 = vadd.f32 0.0, %v4377
        %v4379 = vpop.f32.mrf.mxu0
        %v4380 = vpop.f32.mrf.mxu0
        %v4381 = vadd.f32 0.0, %v4380
        %v4382 = vpop.f32.mrf.mxu0
        %4383 = vmatprep.mubr.bf16.mxu0 %v4068
        %4384 = vmatmul.mubr.bf16.gmra.mxu0 %v4067
        %v4385 = vpop.f32.mrf.mxu0
        %v4386 = vadd.f32 0.0, %v4385
        %v4387 = vpop.f32.mrf.mxu0
        %v4388 = vpop.f32.mrf.mxu0
        %v4389 = vadd.f32 0.0, %v4388
        %v4390 = vpop.f32.mrf.mxu0
        %4391 = vdwg.mxu0
        %4392 = vmatprep.subr.bf16.mxu0 0
        %4393 = vmatpush1.bf16.msra.mxu0 %v4286
        %4394 = vmatprep.subr.bf16.mxu0 0
        %4395 = vmatpush1.bf16.msra.mxu0 %v4285
        %4396 = vmatprep.subr.bf16.mxu0 0
        %4397 = vmatpush1.bf16.msra.mxu0 %v4284
        %4398 = vmatprep.subr.bf16.mxu0 0
        %4399 = vmatpush1.bf16.msra.mxu0 %v4283
        %4400 = vmatprep.subr.bf16.mxu0 0
        %4401 = vmatpush1.bf16.msra.mxu0 %v4282
        %4402 = vmatprep.subr.bf16.mxu0 0
        %4403 = vmatpush1.bf16.msra.mxu0 %v4281
        %4404 = vmatprep.subr.bf16.mxu0 0
        %4405 = vmatpush1.bf16.msra.mxu0 %v4280
        %4406 = vmatprep.subr.bf16.mxu0 0
        %4407 = vmatpush1.bf16.msra.mxu0 %v4279
        %4408 = vmatprep.subr.bf16.mxu0 0
        %4409 = vmatpush2.bf16.msra.mxu0 %v4294
        %4410 = vmatprep.subr.bf16.mxu0 0
        %4411 = vmatpush2.bf16.msra.mxu0 %v4293
        %4412 = vmatprep.subr.bf16.mxu0 0
        %4413 = vmatpush2.bf16.msra.mxu0 %v4292
        %4414 = vmatprep.subr.bf16.mxu0 0
        %4415 = vmatpush2.bf16.msra.mxu0 %v4291
        %4416 = vmatprep.subr.bf16.mxu0 0
        %4417 = vmatpush2.bf16.msra.mxu0 %v4290
        %4418 = vmatprep.subr.bf16.mxu0 0
        %4419 = vmatpush2.bf16.msra.mxu0 %v4289
        %4420 = vmatprep.subr.bf16.mxu0 0
        %4421 = vmatpush2.bf16.msra.mxu0 %v4288
        %4422 = vmatprep.subr.bf16.mxu0 0
        %4423 = vmatpush2.bf16.msra.mxu0 %v4287
        %4424 = vmatprep.mubr.bf16.mxu0 %v4058
        %4425 = vmatmul.mubr.bf16.gmra.mxu0 %v4057
        %v4426 = vpop.f32.mrf.mxu0
        %v4427 = vadd.f32 %v4362, %v4426
        %v4428 = vpop.f32.mrf.mxu0
        %v4429 = vpop.f32.mrf.mxu0
        %v4430 = vadd.f32 %v4365, %v4429
        %v4431 = vpop.f32.mrf.mxu0
        %4432 = vmatprep.mubr.bf16.mxu0 %v4062
        %4433 = vmatmul.mubr.bf16.gmra.mxu0 %v4061
        %v4434 = vpop.f32.mrf.mxu0
        %v4435 = vadd.f32 %v4370, %v4434
        %v4436 = vpop.f32.mrf.mxu0
        %v4437 = vpop.f32.mrf.mxu0
        %v4438 = vadd.f32 %v4373, %v4437
        %v4439 = vpop.f32.mrf.mxu0
        %4440 = vmatprep.mubr.bf16.mxu0 %v4066
        %4441 = vmatmul.mubr.bf16.gmra.mxu0 %v4065
        %v4442 = vpop.f32.mrf.mxu0
        %v4443 = vadd.f32 %v4378, %v4442
        %v4444 = vpop.f32.mrf.mxu0
        %v4445 = vpop.f32.mrf.mxu0
        %v4446 = vadd.f32 %v4381, %v4445
        %v4447 = vpop.f32.mrf.mxu0
        %4448 = vmatprep.mubr.bf16.mxu0 %v4070
        %4449 = vmatmul.mubr.bf16.gmra.mxu0 %v4069
        %v4450 = vpop.f32.mrf.mxu0
        %v4451 = vadd.f32 %v4386, %v4450
        %v4452 = vpop.f32.mrf.mxu0
        %v4453 = vpop.f32.mrf.mxu0
        %v4454 = vadd.f32 %v4389, %v4453
        %v4455 = vpop.f32.mrf.mxu0
        %4456 = vdwg.mxu0
        %v4457 = vadd.f32 %v3277, %v4427
        %v4458 = vadd.f32 %v3278, %v4430
        %v4459 = vadd.f32 %v3279, %v4435
        %v4460 = vadd.f32 %v3280, %v4438
        %v4461 = vadd.f32 %v3281, %v4443
        %v4462 = vadd.f32 %v3282, %v4446
        %v4463 = vadd.f32 %v3283, %v4451
        %v4464 = vadd.f32 %v3284, %v4454
        %v4465 = vld [vmem:[%s16] sm:$0x1]
        %v4467 = vlaneseq
        %v4468 = vshrl.u32 %v4467, 7
        %v4469 = vsub.s32 0, %v4468
        %v4470 = vrot.slane %v4465, %v4469
        %v4472 = vadd.f32 %v4457, %v4470
        %v4473 = vadd.f32 %v4458, %v4470
        %v4474 = vadd.f32 %v4459, %v4470
        %v4475 = vadd.f32 %v4460, %v4470
        %v4476 = vadd.f32 %v4461, %v4470
        %v4477 = vadd.f32 %v4462, %v4470
        %v4478 = vadd.f32 %v4463, %v4470
        %v4479 = vadd.f32 %v4464, %v4470
        %s4480 = scalar_lea.vmem %s5, 1
        %v4481 = vld [vmem:[%s4480] sm:$0x1]
        %s4482 = scalar_lea.vmem %s6, 1
        %v4483 = vld [vmem:[%s4482] sm:$0x1]
        %4484 = vadd.xlane.f32.xlu0 %v4472
        %v4485 = vpop.xlane.xlu0 %4484
        %4486 = vadd.xlane.f32.xlu0 %v4473
        %v4487 = vpop.xlane.xlu0 %4486
        %4488 = vadd.xlane.f32.xlu0 %v4474
        %v4489 = vpop.xlane.xlu0 %4488
        %4490 = vadd.xlane.f32.xlu0 %v4475
        %v4491 = vpop.xlane.xlu0 %4490
        %4492 = vadd.xlane.f32.xlu0 %v4476
        %v4493 = vpop.xlane.xlu0 %4492
        %4494 = vadd.xlane.f32.xlu0 %v4477
        %v4495 = vpop.xlane.xlu0 %4494
        %4496 = vadd.xlane.f32.xlu0 %v4478
        %v4497 = vpop.xlane.xlu0 %4496
        %4498 = vadd.xlane.f32.xlu0 %v4479
        %v4499 = vpop.xlane.xlu0 %4498
        %v4500 = vmul.f32 %v4485, %v1491
        %v4501 = vmul.f32 %v4487, %v1491
        %v4502 = vmul.f32 %v4489, %v1491
        %v4503 = vmul.f32 %v4491, %v1491
        %v4504 = vmul.f32 %v4493, %v1491
        %v4505 = vmul.f32 %v4495, %v1491
        %v4506 = vmul.f32 %v4497, %v1491
        %v4507 = vmul.f32 %v4499, %v1491
        %v4508 = vsub.f32 %v4472, %v4500
        %v4509 = vsub.f32 %v4473, %v4501
        %v4510 = vsub.f32 %v4474, %v4502
        %v4511 = vsub.f32 %v4475, %v4503
        %v4512 = vsub.f32 %v4476, %v4504
        %v4513 = vsub.f32 %v4477, %v4505
        %v4514 = vsub.f32 %v4478, %v4506
        %v4515 = vsub.f32 %v4479, %v4507
        %v4516 = vmul.f32 %v4508, %v4508
        %v4517 = vmul.f32 %v4509, %v4509
        %v4518 = vmul.f32 %v4510, %v4510
        %v4519 = vmul.f32 %v4511, %v4511
        %v4520 = vmul.f32 %v4512, %v4512
        %v4521 = vmul.f32 %v4513, %v4513
        %v4522 = vmul.f32 %v4514, %v4514
        %v4523 = vmul.f32 %v4515, %v4515
        %4524 = vadd.xlane.f32.xlu0 %v4516
        %v4525 = vpop.xlane.xlu0 %4524
        %4526 = vadd.xlane.f32.xlu0 %v4517
        %v4527 = vpop.xlane.xlu0 %4526
        %4528 = vadd.xlane.f32.xlu0 %v4518
        %v4529 = vpop.xlane.xlu0 %4528
        %4530 = vadd.xlane.f32.xlu0 %v4519
        %v4531 = vpop.xlane.xlu0 %4530
        %4532 = vadd.xlane.f32.xlu0 %v4520
        %v4533 = vpop.xlane.xlu0 %4532
        %4534 = vadd.xlane.f32.xlu0 %v4521
        %v4535 = vpop.xlane.xlu0 %4534
        %4536 = vadd.xlane.f32.xlu0 %v4522
        %v4537 = vpop.xlane.xlu0 %4536
        %4538 = vadd.xlane.f32.xlu0 %v4523
        %v4539 = vpop.xlane.xlu0 %4538
        %v4540 = vmul.f32 %v4525, %v1491
        %v4541 = vmul.f32 %v4527, %v1491
        %v4542 = vmul.f32 %v4529, %v1491
        %v4543 = vmul.f32 %v4531, %v1491
        %v4544 = vmul.f32 %v4533, %v1491
        %v4545 = vmul.f32 %v4535, %v1491
        %v4546 = vmul.f32 %v4537, %v1491
        %v4547 = vmul.f32 %v4539, %v1491
        %v4548 = vadd.f32 %v4540, 1e-05
        %v4549 = vadd.f32 %v4541, 1e-05
        %v4550 = vadd.f32 %v4542, 1e-05
        %v4551 = vadd.f32 %v4543, 1e-05
        %v4552 = vadd.f32 %v4544, 1e-05
        %v4553 = vadd.f32 %v4545, 1e-05
        %v4554 = vadd.f32 %v4546, 1e-05
        %v4555 = vadd.f32 %v4547, 1e-05
        %v4556 = vrsqrt.pop %v4548
        %v4557 = vrsqrt.pop %v4549
        %v4558 = vrsqrt.pop %v4550
        %v4559 = vrsqrt.pop %v4551
        %v4560 = vrsqrt.pop %v4552
        %v4561 = vrsqrt.pop %v4553
        %v4562 = vrsqrt.pop %v4554
        %v4563 = vrsqrt.pop %v4555
        %v4564 = vmul.f32 %v4508, %v4556
        %v4565 = vmul.f32 %v4509, %v4557
        %v4566 = vmul.f32 %v4510, %v4558
        %v4567 = vmul.f32 %v4511, %v4559
        %v4568 = vmul.f32 %v4512, %v4560
        %v4569 = vmul.f32 %v4513, %v4561
        %v4570 = vmul.f32 %v4514, %v4562
        %v4571 = vmul.f32 %v4515, %v4563
        %v4573 = vlaneseq
        %v4574 = vshrl.u32 %v4573, 7
        %v4575 = vsub.s32 0, %v4574
        %v4576 = vrot.slane %v4481, %v4575
        %v4578 = vmul.f32 %v4564, %v4576
        %v4579 = vmul.f32 %v4565, %v4576
        %v4580 = vmul.f32 %v4566, %v4576
        %v4581 = vmul.f32 %v4567, %v4576
        %v4582 = vmul.f32 %v4568, %v4576
        %v4583 = vmul.f32 %v4569, %v4576
        %v4584 = vmul.f32 %v4570, %v4576
        %v4585 = vmul.f32 %v4571, %v4576
        %v4587 = vlaneseq
        %v4588 = vshrl.u32 %v4587, 7
        %v4589 = vsub.s32 0, %v4588
        %v4590 = vrot.slane %v4483, %v4589
        %v4592 = vadd.f32 %v4578, %v4590
        %v4593 = vadd.f32 %v4579, %v4590
        %v4594 = vadd.f32 %v4580, %v4590
        %v4595 = vadd.f32 %v4581, %v4590
        %v4596 = vadd.f32 %v4582, %v4590
        %v4597 = vadd.f32 %v4583, %v4590
        %v4598 = vadd.f32 %v4584, %v4590
        %v4599 = vadd.f32 %v4585, %v4590
        %v4600 = vpack.c.bf16 %v4593, %v4592
        %v4601 = vpack.c.bf16 %v4595, %v4594
        %v4602 = vpack.c.bf16 %v4597, %v4596
        %v4603 = vpack.c.bf16 %v4599, %v4598
        %s4604 = scalar_lea.vmem %s7, 192
        %v4605 = vld [vmem:[%s4604] sm:$0xff]
        %v4606 = vld [vmem:[%s4604 + $0x8] sm:$0xf]
        %v4607 = vld [vmem:[%s4604 + $0xc] sm:$0xff]
        %v4608 = vld [vmem:[%s4604 + $0x14] sm:$0xf]
        %v4609 = vld [vmem:[%s4604 + $0x18] sm:$0xff]
        %v4610 = vld [vmem:[%s4604 + $0x20] sm:$0xf]
        %v4611 = vld [vmem:[%s4604 + $0x24] sm:$0xff]
        %v4612 = vld [vmem:[%s4604 + $0x2c] sm:$0xf]
        %v4613 = vld [vmem:[%s4604 + $0x30] sm:$0xff]
        %v4614 = vld [vmem:[%s4604 + $0x38] sm:$0xf]
        %v4615 = vld [vmem:[%s4604 + $0x3c] sm:$0xff]
        %v4616 = vld [vmem:[%s4604 + $0x44] sm:$0xf]
        %v4617 = vld [vmem:[%s4604 + $0x48] sm:$0xff]
        %v4618 = vld [vmem:[%s4604 + $0x50] sm:$0xf]
        %v4619 = vld [vmem:[%s4604 + $0x54] sm:$0xff]
        %v4620 = vld [vmem:[%s4604 + $0x5c] sm:$0xf]
        %v4621 = vld [vmem:[%s4604 + $0x60] sm:$0xff]
        %v4622 = vld [vmem:[%s4604 + $0x68] sm:$0xf]
        %v4623 = vld [vmem:[%s4604 + $0x6c] sm:$0xff]
        %v4624 = vld [vmem:[%s4604 + $0x74] sm:$0xf]
        %v4625 = vld [vmem:[%s4604 + $0x78] sm:$0xff]
        %v4626 = vld [vmem:[%s4604 + $0x80] sm:$0xf]
        %v4627 = vld [vmem:[%s4604 + $0x84] sm:$0xff]
        %v4628 = vld [vmem:[%s4604 + $0x8c] sm:$0xf]
        %v4629 = vld [vmem:[%s4604 + $0x90] sm:$0xff]
        %v4630 = vld [vmem:[%s4604 + $0x98] sm:$0xf]
        %v4631 = vld [vmem:[%s4604 + $0x9c] sm:$0xff]
        %v4632 = vld [vmem:[%s4604 + $0xa4] sm:$0xf]
        %v4633 = vld [vmem:[%s4604 + $0xa8] sm:$0xff]
        %v4634 = vld [vmem:[%s4604 + $0xb0] sm:$0xf]
        %v4635 = vld [vmem:[%s4604 + $0xb4] sm:$0xff]
        %v4636 = vld [vmem:[%s4604 + $0xbc] sm:$0xf]
        %s4637 = scalar_lea.vmem %s8, 3
        %v4638 = vld [vmem:[%s4637] sm:$0x7]
        %v4640 = vlaneseq
        %v4641 = vshrl.u32 %v4640, 7
        %v4642 = vsub.s32 0, %v4641
        %v4643 = vrot.slane %v4638, %v4642
        %v4644 = vlaneseq
        %v4645 = vshrl.u32 %v4644, 7
        %v4646 = vsub.s32 1, %v4645
        %v4647 = vrot.slane %v4638, %v4646
        %v4648 = vlaneseq
        %v4649 = vshrl.u32 %v4648, 7
        %v4650 = vsub.s32 2, %v4649
        %v4651 = vrot.slane %v4638, %v4650
        %v4687 = vunpack.c.l.b16 %v4605
        %v4688 = vunpack.c.h.b16 %v4605
        %v4689 = vunpack.c.l.b16 %v4606
        %v4690 = vunpack.c.l.b16 %v4607
        %v4691 = vunpack.c.h.b16 %v4607
        %v4692 = vunpack.c.l.b16 %v4608
        %v4693 = vunpack.c.l.b16 %v4609
        %v4694 = vunpack.c.h.b16 %v4609
        %v4695 = vunpack.c.l.b16 %v4610
        %v4696 = vunpack.c.l.b16 %v4611
        %v4697 = vunpack.c.h.b16 %v4611
        %v4698 = vunpack.c.l.b16 %v4612
        %v4699 = vunpack.c.l.b16 %v4613
        %v4700 = vunpack.c.h.b16 %v4613
        %v4701 = vunpack.c.l.b16 %v4614
        %v4702 = vunpack.c.l.b16 %v4615
        %v4703 = vunpack.c.h.b16 %v4615
        %v4704 = vunpack.c.l.b16 %v4616
        %v4705 = vunpack.c.l.b16 %v4617
        %v4706 = vunpack.c.h.b16 %v4617
        %v4707 = vunpack.c.l.b16 %v4618
        %v4708 = vunpack.c.l.b16 %v4619
        %v4709 = vunpack.c.h.b16 %v4619
        %v4710 = vunpack.c.l.b16 %v4620
        %v4711 = vunpack.c.l.b16 %v4621
        %v4712 = vunpack.c.h.b16 %v4621
        %v4713 = vunpack.c.l.b16 %v4622
        %v4714 = vunpack.c.l.b16 %v4623
        %v4715 = vunpack.c.h.b16 %v4623
        %v4716 = vunpack.c.l.b16 %v4624
        %v4717 = vunpack.c.l.b16 %v4625
        %v4718 = vunpack.c.h.b16 %v4625
        %v4719 = vunpack.c.l.b16 %v4626
        %v4720 = vunpack.c.l.b16 %v4627
        %v4721 = vunpack.c.h.b16 %v4627
        %v4722 = vunpack.c.l.b16 %v4628
        %v4723 = vunpack.c.l.b16 %v4629
        %v4724 = vunpack.c.h.b16 %v4629
        %v4725 = vunpack.c.l.b16 %v4630
        %v4726 = vunpack.c.l.b16 %v4631
        %v4727 = vunpack.c.h.b16 %v4631
        %v4728 = vunpack.c.l.b16 %v4632
        %v4729 = vunpack.c.l.b16 %v4633
        %v4730 = vunpack.c.h.b16 %v4633
        %v4731 = vunpack.c.l.b16 %v4634
        %v4732 = vunpack.c.l.b16 %v4635
        %v4733 = vunpack.c.h.b16 %v4635
        %v4734 = vunpack.c.l.b16 %v4636
        %v4735 = vpack.c.b16 %v4690, %v4687
        %v4736 = vpack.c.b16 %v4691, %v4688
        %v4737 = vpack.c.b16 %v4692, %v4689
        %v4738 = vpack.c.b16 %v4696, %v4693
        %v4739 = vpack.c.b16 %v4697, %v4694
        %v4740 = vpack.c.b16 %v4698, %v4695
        %v4741 = vpack.c.b16 %v4702, %v4699
        %v4742 = vpack.c.b16 %v4703, %v4700
        %v4743 = vpack.c.b16 %v4704, %v4701
        %v4744 = vpack.c.b16 %v4708, %v4705
        %v4745 = vpack.c.b16 %v4709, %v4706
        %v4746 = vpack.c.b16 %v4710, %v4707
        %v4747 = vpack.c.b16 %v4714, %v4711
        %v4748 = vpack.c.b16 %v4715, %v4712
        %v4749 = vpack.c.b16 %v4716, %v4713
        %v4750 = vpack.c.b16 %v4720, %v4717
        %v4751 = vpack.c.b16 %v4721, %v4718
        %v4752 = vpack.c.b16 %v4722, %v4719
        %v4753 = vpack.c.b16 %v4726, %v4723
        %v4754 = vpack.c.b16 %v4727, %v4724
        %v4755 = vpack.c.b16 %v4728, %v4725
        %v4756 = vpack.c.b16 %v4732, %v4729
        %v4757 = vpack.c.b16 %v4733, %v4730
        %v4758 = vpack.c.b16 %v4734, %v4731
        %4783 = vmatprep.subr.bf16.mxu0 %v4757
        %4784 = vmatpush1.bf16.msra.mxu0 %v4756
        %4785 = vmatprep.subr.bf16.mxu0 %v4754
        %4786 = vmatpush1.bf16.msra.mxu0 %v4753
        %4787 = vmatprep.subr.bf16.mxu0 %v4751
        %4788 = vmatpush1.bf16.msra.mxu0 %v4750
        %4789 = vmatprep.subr.bf16.mxu0 %v4748
        %4790 = vmatpush1.bf16.msra.mxu0 %v4747
        %4791 = vmatprep.subr.bf16.mxu0 %v4745
        %4792 = vmatpush1.bf16.msra.mxu0 %v4744
        %4793 = vmatprep.subr.bf16.mxu0 %v4742
        %4794 = vmatpush1.bf16.msra.mxu0 %v4741
        %4795 = vmatprep.subr.bf16.mxu0 %v4739
        %4796 = vmatpush1.bf16.msra.mxu0 %v4738
        %4797 = vmatprep.subr.bf16.mxu0 %v4736
        %4798 = vmatpush1.bf16.msra.mxu0 %v4735
        %4799 = vmatprep.subr.bf16.mxu0 0
        %4800 = vmatpush2.bf16.msra.mxu0 0
        %4801 = vmatprep.subr.bf16.mxu0 0
        %4802 = vmatpush2.bf16.msra.mxu0 0
        %4803 = vmatprep.subr.bf16.mxu0 0
        %4804 = vmatpush2.bf16.msra.mxu0 0
        %4805 = vmatprep.subr.bf16.mxu0 0
        %4806 = vmatpush2.bf16.msra.mxu0 0
        %4807 = vmatprep.subr.bf16.mxu0 0
        %4808 = vmatpush2.bf16.msra.mxu0 0
        %4809 = vmatprep.subr.bf16.mxu0 0
        %4810 = vmatpush2.bf16.msra.mxu0 0
        %4811 = vmatprep.subr.bf16.mxu0 0
        %4812 = vmatpush2.bf16.msra.mxu0 0
        %4813 = vmatprep.subr.bf16.mxu0 0
        %4814 = vmatpush2.bf16.msra.mxu0 0
        %4815 = vmatprep.mubr.bf16.mxu0 0
        %4816 = vmatmul.mubr.bf16.gmra.mxu0 %v4600
        %v4817 = vpop.f32.mrf.mxu0
        %v4818 = vadd.f32 %v4643, %v4817
        %v4819 = vpop.f32.mrf.mxu0
        %v4820 = vadd.f32 %v4647, %v4819
        %v4821 = vpop.f32.mrf.mxu0
        %v4822 = vadd.f32 %v4643, %v4821
        %v4823 = vpop.f32.mrf.mxu0
        %v4824 = vadd.f32 %v4647, %v4823
        %4825 = vmatprep.mubr.bf16.mxu0 0
        %4826 = vmatmul.mubr.bf16.gmra.mxu0 %v4601
        %v4827 = vpop.f32.mrf.mxu0
        %v4828 = vadd.f32 %v4643, %v4827
        %v4829 = vpop.f32.mrf.mxu0
        %v4830 = vadd.f32 %v4647, %v4829
        %v4831 = vpop.f32.mrf.mxu0
        %v4832 = vadd.f32 %v4643, %v4831
        %v4833 = vpop.f32.mrf.mxu0
        %v4834 = vadd.f32 %v4647, %v4833
        %4835 = vmatprep.mubr.bf16.mxu0 0
        %4836 = vmatmul.mubr.bf16.gmra.mxu0 %v4602
        %v4837 = vpop.f32.mrf.mxu0
        %v4838 = vadd.f32 %v4643, %v4837
        %v4839 = vpop.f32.mrf.mxu0
        %v4840 = vadd.f32 %v4647, %v4839
        %v4841 = vpop.f32.mrf.mxu0
        %v4842 = vadd.f32 %v4643, %v4841
        %v4843 = vpop.f32.mrf.mxu0
        %v4844 = vadd.f32 %v4647, %v4843
        %4845 = vmatprep.mubr.bf16.mxu0 0
        %4846 = vmatmul.mubr.bf16.gmra.mxu0 %v4603
        %v4847 = vpop.f32.mrf.mxu0
        %v4848 = vadd.f32 %v4643, %v4847
        %v4849 = vpop.f32.mrf.mxu0
        %v4850 = vadd.f32 %v4647, %v4849
        %v4851 = vpop.f32.mrf.mxu0
        %v4852 = vadd.f32 %v4643, %v4851
        %v4853 = vpop.f32.mrf.mxu0
        %v4854 = vadd.f32 %v4647, %v4853
        %4855 = vdwg.mxu0
        %4856 = vmatprep.subr.bf16.mxu0 0
        %4857 = vmatpush1.bf16.msra.mxu0 %v4758
        %4858 = vmatprep.subr.bf16.mxu0 0
        %4859 = vmatpush1.bf16.msra.mxu0 %v4755
        %4860 = vmatprep.subr.bf16.mxu0 0
        %4861 = vmatpush1.bf16.msra.mxu0 %v4752
        %4862 = vmatprep.subr.bf16.mxu0 0
        %4863 = vmatpush1.bf16.msra.mxu0 %v4749
        %4864 = vmatprep.subr.bf16.mxu0 0
        %4865 = vmatpush1.bf16.msra.mxu0 %v4746
        %4866 = vmatprep.subr.bf16.mxu0 0
        %4867 = vmatpush1.bf16.msra.mxu0 %v4743
        %4868 = vmatprep.subr.bf16.mxu0 0
        %4869 = vmatpush1.bf16.msra.mxu0 %v4740
        %4870 = vmatprep.subr.bf16.mxu0 0
        %4871 = vmatpush1.bf16.msra.mxu0 %v4737
        %4872 = vmatprep.subr.bf16.mxu0 0
        %4873 = vmatpush2.bf16.msra.mxu0 0
        %4874 = vmatprep.subr.bf16.mxu0 0
        %4875 = vmatpush2.bf16.msra.mxu0 0
        %4876 = vmatprep.subr.bf16.mxu0 0
        %4877 = vmatpush2.bf16.msra.mxu0 0
        %4878 = vmatprep.subr.bf16.mxu0 0
        %4879 = vmatpush2.bf16.msra.mxu0 0
        %4880 = vmatprep.subr.bf16.mxu0 0
        %4881 = vmatpush2.bf16.msra.mxu0 0
        %4882 = vmatprep.subr.bf16.mxu0 0
        %4883 = vmatpush2.bf16.msra.mxu0 0
        %4884 = vmatprep.subr.bf16.mxu0 0
        %4885 = vmatpush2.bf16.msra.mxu0 0
        %4886 = vmatprep.subr.bf16.mxu0 0
        %4887 = vmatpush2.bf16.msra.mxu0 0
        %4888 = vmatprep.mubr.bf16.mxu0 0
        %4889 = vmatmul.mubr.bf16.gmra.mxu0 %v4600
        %v4890 = vpop.f32.mrf.mxu0
        %v4891 = vadd.f32 %v4651, %v4890
        %v4892 = vpop.f32.mrf.mxu0
        %v4893 = vpop.f32.mrf.mxu0
        %v4894 = vadd.f32 %v4651, %v4893
        %v4895 = vpop.f32.mrf.mxu0
        %4896 = vmatprep.mubr.bf16.mxu0 0
        %4897 = vmatmul.mubr.bf16.gmra.mxu0 %v4601
        %v4898 = vpop.f32.mrf.mxu0
        %v4899 = vadd.f32 %v4651, %v4898
        %v4900 = vpop.f32.mrf.mxu0
        %v4901 = vpop.f32.mrf.mxu0
        %v4902 = vadd.f32 %v4651, %v4901
        %v4903 = vpop.f32.mrf.mxu0
        %4904 = vmatprep.mubr.bf16.mxu0 0
        %4905 = vmatmul.mubr.bf16.gmra.mxu0 %v4602
        %v4906 = vpop.f32.mrf.mxu0
        %v4907 = vadd.f32 %v4651, %v4906
        %v4908 = vpop.f32.mrf.mxu0
        %v4909 = vpop.f32.mrf.mxu0
        %v4910 = vadd.f32 %v4651, %v4909
        %v4911 = vpop.f32.mrf.mxu0
        %4912 = vmatprep.mubr.bf16.mxu0 0
        %4913 = vmatmul.mubr.bf16.gmra.mxu0 %v4603
        %v4914 = vpop.f32.mrf.mxu0
        %v4915 = vadd.f32 %v4651, %v4914
        %v4916 = vpop.f32.mrf.mxu0
        %v4917 = vpop.f32.mrf.mxu0
        %v4918 = vadd.f32 %v4651, %v4917
        %v4919 = vpop.f32.mrf.mxu0
        %4920 = vdwg.mxu0
        %v4921 = vpack.c.bf16 %v4824, %v4820
        %v4922 = vpack.c.bf16 %v4834, %v4830
        %v4923 = vpack.c.bf16 %v4844, %v4840
        %v4924 = vpack.c.bf16 %v4854, %v4850
        %v4925 = vpack.c.bf16 %v4894, %v4891
        %v4926 = vpack.c.bf16 %v4902, %v4899
        %v4927 = vpack.c.bf16 %v4910, %v4907
        %v4928 = vpack.c.bf16 %v4918, %v4915
        %v4929 = vsel %vm2084, %v4818, 0.0
        %v4930 = vsel %vm2084, %v4822, 0.0
        %v4931 = vsel %vm2084, %v4828, 0.0
        %v4932 = vsel %vm2084, %v4832, 0.0
        %v4933 = vsel %vm2084, %v4838, 0.0
        %v4934 = vsel %vm2084, %v4842, 0.0
        %v4935 = vsel %vm2084, %v4848, 0.0
        %v4936 = vsel %vm2084, %v4852, 0.0
        %v4937 = vpack.c.bf16 %v4930, %v4929
        %v4938 = vpack.c.bf16 %v4932, %v4931
        %v4939 = vpack.c.bf16 %v4934, %v4933
        %v4940 = vpack.c.bf16 %v4936, %v4935
        %4941 = vmatprep.subr.bf16.mxu0 0
        %4942 = vmatpush1.bf16.xpose.msra.mxu0 0
        %4943 = vmatprep.subr.bf16.mxu0 0
        %4944 = vmatpush1.bf16.xpose.msra.mxu0 0
        %4945 = vmatprep.subr.bf16.mxu0 0
        %4946 = vmatpush1.bf16.xpose.msra.mxu0 0
        %4947 = vmatprep.subr.bf16.mxu0 0
        %4948 = vmatpush1.bf16.xpose.msra.mxu0 0
        %4949 = vmatprep.subr.bf16.mxu0 0
        %4950 = vmatpush1.bf16.xpose.msra.mxu0 %v4924
        %4951 = vmatprep.subr.bf16.mxu0 0
        %4952 = vmatpush1.bf16.xpose.msra.mxu0 %v4923
        %4953 = vmatprep.subr.bf16.mxu0 0
        %4954 = vmatpush1.bf16.xpose.msra.mxu0 %v4922
        %4955 = vmatprep.subr.bf16.mxu0 0
        %4956 = vmatpush1.bf16.xpose.msra.mxu0 %v4921
        %4957 = vmatprep.subr.bf16.mxu0 0
        %4958 = vmatpush2.bf16.xpose.msra.mxu0 0
        %4959 = vmatprep.subr.bf16.mxu0 0
        %4960 = vmatpush2.bf16.xpose.msra.mxu0 0
        %4961 = vmatprep.subr.bf16.mxu0 0
        %4962 = vmatpush2.bf16.xpose.msra.mxu0 0
        %4963 = vmatprep.subr.bf16.mxu0 0
        %4964 = vmatpush2.bf16.xpose.msra.mxu0 0
        %4965 = vmatprep.subr.bf16.mxu0 0
        %4966 = vmatpush2.bf16.xpose.msra.mxu0 0
        %4967 = vmatprep.subr.bf16.mxu0 0
        %4968 = vmatpush2.bf16.xpose.msra.mxu0 0
        %4969 = vmatprep.subr.bf16.mxu0 0
        %4970 = vmatpush2.bf16.xpose.msra.mxu0 0
        %4971 = vmatprep.subr.bf16.mxu0 0
        %4972 = vmatpush2.bf16.xpose.msra.mxu0 0
        %4973 = vmatprep.mubr.bf16.mxu0 0
        %4974 = vmatmul.mubr.bf16.gmra.mxu0 %v4937
        %v4975 = vpop.f32.mrf.mxu0
        %v4976 = vadd.f32 %v1630, %v4975
        %v4977 = vpop.f32.mrf.mxu0
        %v4978 = vpop.f32.mrf.mxu0
        %v4979 = vadd.f32 %v1631, %v4978
        %v4980 = vpop.f32.mrf.mxu0
        %4981 = vmatprep.mubr.bf16.mxu0 0
        %4982 = vmatmul.mubr.bf16.gmra.mxu0 %v4938
        %v4983 = vpop.f32.mrf.mxu0
        %v4984 = vadd.f32 %v1632, %v4983
        %v4985 = vpop.f32.mrf.mxu0
        %v4986 = vpop.f32.mrf.mxu0
        %v4987 = vadd.f32 %v1633, %v4986
        %v4988 = vpop.f32.mrf.mxu0
        %4989 = vmatprep.mubr.bf16.mxu0 0
        %4990 = vmatmul.mubr.bf16.gmra.mxu0 %v4939
        %v4991 = vpop.f32.mrf.mxu0
        %v4992 = vadd.f32 %v1634, %v4991
        %v4993 = vpop.f32.mrf.mxu0
        %v4994 = vpop.f32.mrf.mxu0
        %v4995 = vadd.f32 %v1635, %v4994
        %v4996 = vpop.f32.mrf.mxu0
        %4997 = vmatprep.mubr.bf16.mxu0 0
        %4998 = vmatmul.mubr.bf16.gmra.mxu0 %v4940
        %v4999 = vpop.f32.mrf.mxu0
        %v5000 = vadd.f32 %v1636, %v4999
        %v5001 = vpop.f32.mrf.mxu0
        %v5002 = vpop.f32.mrf.mxu0
        %v5003 = vadd.f32 %v1637, %v5002
        %v5004 = vpop.f32.mrf.mxu0
        %5005 = vdwg.mxu0
        %v5006 = vsel %vm2162, %v4976, -inf
        %5007 = vmax.xlane.f32.xlu0 %v5006
        %v5008 = vpop.xlane.xlu0 %5007
        %v5009 = vsel %vm2162, %v4979, -inf
        %5010 = vmax.xlane.f32.xlu0 %v5009
        %v5011 = vpop.xlane.xlu0 %5010
        %v5012 = vsel %vm2162, %v4984, -inf
        %5013 = vmax.xlane.f32.xlu0 %v5012
        %v5014 = vpop.xlane.xlu0 %5013
        %v5015 = vsel %vm2162, %v4987, -inf
        %5016 = vmax.xlane.f32.xlu0 %v5015
        %v5017 = vpop.xlane.xlu0 %5016
        %v5018 = vsel %vm2162, %v4992, -inf
        %5019 = vmax.xlane.f32.xlu0 %v5018
        %v5020 = vpop.xlane.xlu0 %5019
        %v5021 = vsel %vm2162, %v4995, -inf
        %5022 = vmax.xlane.f32.xlu0 %v5021
        %v5023 = vpop.xlane.xlu0 %5022
        %v5024 = vsel %vm2162, %v5000, -inf
        %5025 = vmax.xlane.f32.xlu0 %v5024
        %v5026 = vpop.xlane.xlu0 %5025
        %v5027 = vsel %vm2162, %v5003, -inf
        %5028 = vmax.xlane.f32.xlu0 %v5027
        %v5029 = vpop.xlane.xlu0 %5028
        %v5030 = vsub.f32 %v4976, %v5008
        %v5031 = vsub.f32 %v4979, %v5011
        %v5032 = vsub.f32 %v4984, %v5014
        %v5033 = vsub.f32 %v4987, %v5017
        %v5034 = vsub.f32 %v4992, %v5020
        %v5035 = vsub.f32 %v4995, %v5023
        %v5036 = vsub.f32 %v5000, %v5026
        %v5037 = vsub.f32 %v5003, %v5029
        %v5038 = vmul.f32 %v5030, 1.442695
        %v5039 = vpow.pop %v5038
        %v5040 = vmul.f32 %v5031, 1.442695
        %v5041 = vpow.pop %v5040
        %v5042 = vmul.f32 %v5032, 1.442695
        %v5043 = vpow.pop %v5042
        %v5044 = vmul.f32 %v5033, 1.442695
        %v5045 = vpow.pop %v5044
        %v5046 = vmul.f32 %v5034, 1.442695
        %v5047 = vpow.pop %v5046
        %v5048 = vmul.f32 %v5035, 1.442695
        %v5049 = vpow.pop %v5048
        %v5050 = vmul.f32 %v5036, 1.442695
        %v5051 = vpow.pop %v5050
        %v5052 = vmul.f32 %v5037, 1.442695
        %v5053 = vpow.pop %v5052
        %v5054 = vsel %vm2162, %v5039, 0.0
        %5055 = vadd.xlane.f32.xlu0 %v5054
        %v5056 = vpop.xlane.xlu0 %5055
        %v5057 = vsel %vm2162, %v5041, 0.0
        %5058 = vadd.xlane.f32.xlu0 %v5057
        %v5059 = vpop.xlane.xlu0 %5058
        %v5060 = vsel %vm2162, %v5043, 0.0
        %5061 = vadd.xlane.f32.xlu0 %v5060
        %v5062 = vpop.xlane.xlu0 %5061
        %v5063 = vsel %vm2162, %v5045, 0.0
        %5064 = vadd.xlane.f32.xlu0 %v5063
        %v5065 = vpop.xlane.xlu0 %5064
        %v5066 = vsel %vm2162, %v5047, 0.0
        %5067 = vadd.xlane.f32.xlu0 %v5066
        %v5068 = vpop.xlane.xlu0 %5067
        %v5069 = vsel %vm2162, %v5049, 0.0
        %5070 = vadd.xlane.f32.xlu0 %v5069
        %v5071 = vpop.xlane.xlu0 %5070
        %v5072 = vsel %vm2162, %v5051, 0.0
        %5073 = vadd.xlane.f32.xlu0 %v5072
        %v5074 = vpop.xlane.xlu0 %5073
        %v5075 = vsel %vm2162, %v5053, 0.0
        %5076 = vadd.xlane.f32.xlu0 %v5075
        %v5077 = vpop.xlane.xlu0 %5076
        %v5078 = vrcp.pop %v5056
        %v5079 = vrcp.pop %v5059
        %v5080 = vrcp.pop %v5062
        %v5081 = vrcp.pop %v5065
        %v5082 = vrcp.pop %v5068
        %v5083 = vrcp.pop %v5071
        %v5084 = vrcp.pop %v5074
        %v5085 = vrcp.pop %v5077
        %v5086 = vmul.f32 %v5039, %v5078
        %v5087 = vmul.f32 %v5041, %v5079
        %v5088 = vmul.f32 %v5043, %v5080
        %v5089 = vmul.f32 %v5045, %v5081
        %v5090 = vmul.f32 %v5047, %v5082
        %v5091 = vmul.f32 %v5049, %v5083
        %v5092 = vmul.f32 %v5051, %v5084
        %v5093 = vmul.f32 %v5053, %v5085
        %v5094 = vpack.c.bf16 %v5087, %v5086
        %v5095 = vpack.c.bf16 %v5089, %v5088
        %v5096 = vpack.c.bf16 %v5091, %v5090
        %v5097 = vpack.c.bf16 %v5093, %v5092
        %v5099 = vsel %vm2162, %v5094, 0
        %v5102 = vsel %vm2162, %v5095, 0
        %v5105 = vsel %vm2162, %v5096, 0
        %v5108 = vsel %vm2162, %v5097, 0
        %5110 = vmatprep.subr.bf16.mxu0 0
        %5111 = vmatpush1.bf16.msra.mxu0 0
        %5112 = vmatprep.subr.bf16.mxu0 0
        %5113 = vmatpush1.bf16.msra.mxu0 0
        %5114 = vmatprep.subr.bf16.mxu0 0
        %5115 = vmatpush1.bf16.msra.mxu0 0
        %5116 = vmatprep.subr.bf16.mxu0 0
        %5117 = vmatpush1.bf16.msra.mxu0 0
        %5118 = vmatprep.subr.bf16.mxu0 0
        %5119 = vmatpush1.bf16.msra.mxu0 %v4928
        %5120 = vmatprep.subr.bf16.mxu0 0
        %5121 = vmatpush1.bf16.msra.mxu0 %v4927
        %5122 = vmatprep.subr.bf16.mxu0 0
        %5123 = vmatpush1.bf16.msra.mxu0 %v4926
        %5124 = vmatprep.subr.bf16.mxu0 0
        %5125 = vmatpush1.bf16.msra.mxu0 %v4925
        %5126 = vmatprep.subr.bf16.mxu0 0
        %5127 = vmatpush2.bf16.msra.mxu0 0
        %5128 = vmatprep.subr.bf16.mxu0 0
        %5129 = vmatpush2.bf16.msra.mxu0 0
        %5130 = vmatprep.subr.bf16.mxu0 0
        %5131 = vmatpush2.bf16.msra.mxu0 0
        %5132 = vmatprep.subr.bf16.mxu0 0
        %5133 = vmatpush2.bf16.msra.mxu0 0
        %5134 = vmatprep.subr.bf16.mxu0 0
        %5135 = vmatpush2.bf16.msra.mxu0 0
        %5136 = vmatprep.subr.bf16.mxu0 0
        %5137 = vmatpush2.bf16.msra.mxu0 0
        %5138 = vmatprep.subr.bf16.mxu0 0
        %5139 = vmatpush2.bf16.msra.mxu0 0
        %5140 = vmatprep.subr.bf16.mxu0 0
        %5141 = vmatpush2.bf16.msra.mxu0 0
        %5142 = vmatprep.mubr.bf16.mxu0 0
        %5143 = vmatmul.mubr.bf16.gmra.mxu0 %v5099
        %v5144 = vpop.f32.mrf.mxu0
        %v5145 = vadd.f32 0.0, %v5144
        %v5146 = vpop.f32.mrf.mxu0
        %v5147 = vpop.f32.mrf.mxu0
        %v5148 = vadd.f32 0.0, %v5147
        %v5149 = vpop.f32.mrf.mxu0
        %5150 = vmatprep.mubr.bf16.mxu0 0
        %5151 = vmatmul.mubr.bf16.gmra.mxu0 %v5102
        %v5152 = vpop.f32.mrf.mxu0
        %v5153 = vadd.f32 0.0, %v5152
        %v5154 = vpop.f32.mrf.mxu0
        %v5155 = vpop.f32.mrf.mxu0
        %v5156 = vadd.f32 0.0, %v5155
        %v5157 = vpop.f32.mrf.mxu0
        %5158 = vmatprep.mubr.bf16.mxu0 0
        %5159 = vmatmul.mubr.bf16.gmra.mxu0 %v5105
        %v5160 = vpop.f32.mrf.mxu0
        %v5161 = vadd.f32 0.0, %v5160
        %v5162 = vpop.f32.mrf.mxu0
        %v5163 = vpop.f32.mrf.mxu0
        %v5164 = vadd.f32 0.0, %v5163
        %v5165 = vpop.f32.mrf.mxu0
        %5166 = vmatprep.mubr.bf16.mxu0 0
        %5167 = vmatmul.mubr.bf16.gmra.mxu0 %v5108
        %v5168 = vpop.f32.mrf.mxu0
        %v5169 = vadd.f32 0.0, %v5168
        %v5170 = vpop.f32.mrf.mxu0
        %v5171 = vpop.f32.mrf.mxu0
        %v5172 = vadd.f32 0.0, %v5171
        %v5173 = vpop.f32.mrf.mxu0
        %5174 = vdwg.mxu0
        %v5175 = vsel %vm2084, %v5145, 0.0
        %v5176 = vsel %vm2084, %v5148, 0.0
        %v5177 = vsel %vm2084, %v5153, 0.0
        %v5178 = vsel %vm2084, %v5156, 0.0
        %v5179 = vsel %vm2084, %v5161, 0.0
        %v5180 = vsel %vm2084, %v5164, 0.0
        %v5181 = vsel %vm2084, %v5169, 0.0
        %v5182 = vsel %vm2084, %v5172, 0.0
        %v5183 = vsel %vm2340, %v4818, 0.0
        %v5184 = vsel %vm2340, %v4822, 0.0
        %v5185 = vsel %vm2340, %v4828, 0.0
        %v5186 = vsel %vm2340, %v4832, 0.0
        %v5187 = vsel %vm2340, %v4838, 0.0
        %v5188 = vsel %vm2340, %v4842, 0.0
        %v5189 = vsel %vm2340, %v4848, 0.0
        %v5190 = vsel %vm2340, %v4852, 0.0
        %v5191 = vpack.c.bf16 %v5184, %v5183
        %v5192 = vpack.c.bf16 %v5186, %v5185
        %v5193 = vpack.c.bf16 %v5188, %v5187
        %v5194 = vpack.c.bf16 %v5190, %v5189
        %5195 = vmatprep.subr.bf16.mxu0 0
        %5196 = vmatpush1.bf16.xpose.msra.mxu0 0
        %5197 = vmatprep.subr.bf16.mxu0 0
        %5198 = vmatpush1.bf16.xpose.msra.mxu0 0
        %5199 = vmatprep.subr.bf16.mxu0 0
        %5200 = vmatpush1.bf16.xpose.msra.mxu0 0
        %5201 = vmatprep.subr.bf16.mxu0 0
        %5202 = vmatpush1.bf16.xpose.msra.mxu0 0
        %5203 = vmatprep.subr.bf16.mxu0 0
        %5204 = vmatpush1.bf16.xpose.msra.mxu0 %v4924
        %5205 = vmatprep.subr.bf16.mxu0 0
        %5206 = vmatpush1.bf16.xpose.msra.mxu0 %v4923
        %5207 = vmatprep.subr.bf16.mxu0 0
        %5208 = vmatpush1.bf16.xpose.msra.mxu0 %v4922
        %5209 = vmatprep.subr.bf16.mxu0 0
        %5210 = vmatpush1.bf16.xpose.msra.mxu0 %v4921
        %5211 = vmatprep.subr.bf16.mxu0 0
        %5212 = vmatpush2.bf16.xpose.msra.mxu0 0
        %5213 = vmatprep.subr.bf16.mxu0 0
        %5214 = vmatpush2.bf16.xpose.msra.mxu0 0
        %5215 = vmatprep.subr.bf16.mxu0 0
        %5216 = vmatpush2.bf16.xpose.msra.mxu0 0
        %5217 = vmatprep.subr.bf16.mxu0 0
        %5218 = vmatpush2.bf16.xpose.msra.mxu0 0
        %5219 = vmatprep.subr.bf16.mxu0 0
        %5220 = vmatpush2.bf16.xpose.msra.mxu0 0
        %5221 = vmatprep.subr.bf16.mxu0 0
        %5222 = vmatpush2.bf16.xpose.msra.mxu0 0
        %5223 = vmatprep.subr.bf16.mxu0 0
        %5224 = vmatpush2.bf16.xpose.msra.mxu0 0
        %5225 = vmatprep.subr.bf16.mxu0 0
        %5226 = vmatpush2.bf16.xpose.msra.mxu0 0
        %5227 = vmatprep.mubr.bf16.mxu0 0
        %5228 = vmatmul.mubr.bf16.gmra.mxu0 %v5191
        %v5229 = vpop.f32.mrf.mxu0
        %v5230 = vadd.f32 %v1630, %v5229
        %v5231 = vpop.f32.mrf.mxu0
        %v5232 = vpop.f32.mrf.mxu0
        %v5233 = vadd.f32 %v1631, %v5232
        %v5234 = vpop.f32.mrf.mxu0
        %5235 = vmatprep.mubr.bf16.mxu0 0
        %5236 = vmatmul.mubr.bf16.gmra.mxu0 %v5192
        %v5237 = vpop.f32.mrf.mxu0
        %v5238 = vadd.f32 %v1632, %v5237
        %v5239 = vpop.f32.mrf.mxu0
        %v5240 = vpop.f32.mrf.mxu0
        %v5241 = vadd.f32 %v1633, %v5240
        %v5242 = vpop.f32.mrf.mxu0
        %5243 = vmatprep.mubr.bf16.mxu0 0
        %5244 = vmatmul.mubr.bf16.gmra.mxu0 %v5193
        %v5245 = vpop.f32.mrf.mxu0
        %v5246 = vadd.f32 %v1634, %v5245
        %v5247 = vpop.f32.mrf.mxu0
        %v5248 = vpop.f32.mrf.mxu0
        %v5249 = vadd.f32 %v1635, %v5248
        %v5250 = vpop.f32.mrf.mxu0
        %5251 = vmatprep.mubr.bf16.mxu0 0
        %5252 = vmatmul.mubr.bf16.gmra.mxu0 %v5194
        %v5253 = vpop.f32.mrf.mxu0
        %v5254 = vadd.f32 %v1636, %v5253
        %v5255 = vpop.f32.mrf.mxu0
        %v5256 = vpop.f32.mrf.mxu0
        %v5257 = vadd.f32 %v1637, %v5256
        %v5258 = vpop.f32.mrf.mxu0
        %5259 = vdwg.mxu0
        %v5260 = vsel %vm2162, %v5230, -inf
        %5261 = vmax.xlane.f32.xlu0 %v5260
        %v5262 = vpop.xlane.xlu0 %5261
        %v5263 = vsel %vm2162, %v5233, -inf
        %5264 = vmax.xlane.f32.xlu0 %v5263
        %v5265 = vpop.xlane.xlu0 %5264
        %v5266 = vsel %vm2162, %v5238, -inf
        %5267 = vmax.xlane.f32.xlu0 %v5266
        %v5268 = vpop.xlane.xlu0 %5267
        %v5269 = vsel %vm2162, %v5241, -inf
        %5270 = vmax.xlane.f32.xlu0 %v5269
        %v5271 = vpop.xlane.xlu0 %5270
        %v5272 = vsel %vm2162, %v5246, -inf
        %5273 = vmax.xlane.f32.xlu0 %v5272
        %v5274 = vpop.xlane.xlu0 %5273
        %v5275 = vsel %vm2162, %v5249, -inf
        %5276 = vmax.xlane.f32.xlu0 %v5275
        %v5277 = vpop.xlane.xlu0 %5276
        %v5278 = vsel %vm2162, %v5254, -inf
        %5279 = vmax.xlane.f32.xlu0 %v5278
        %v5280 = vpop.xlane.xlu0 %5279
        %v5281 = vsel %vm2162, %v5257, -inf
        %5282 = vmax.xlane.f32.xlu0 %v5281
        %v5283 = vpop.xlane.xlu0 %5282
        %v5284 = vsub.f32 %v5230, %v5262
        %v5285 = vsub.f32 %v5233, %v5265
        %v5286 = vsub.f32 %v5238, %v5268
        %v5287 = vsub.f32 %v5241, %v5271
        %v5288 = vsub.f32 %v5246, %v5274
        %v5289 = vsub.f32 %v5249, %v5277
        %v5290 = vsub.f32 %v5254, %v5280
        %v5291 = vsub.f32 %v5257, %v5283
        %v5292 = vmul.f32 %v5284, 1.442695
        %v5293 = vpow.pop %v5292
        %v5294 = vmul.f32 %v5285, 1.442695
        %v5295 = vpow.pop %v5294
        %v5296 = vmul.f32 %v5286, 1.442695
        %v5297 = vpow.pop %v5296
        %v5298 = vmul.f32 %v5287, 1.442695
        %v5299 = vpow.pop %v5298
        %v5300 = vmul.f32 %v5288, 1.442695
        %v5301 = vpow.pop %v5300
        %v5302 = vmul.f32 %v5289, 1.442695
        %v5303 = vpow.pop %v5302
        %v5304 = vmul.f32 %v5290, 1.442695
        %v5305 = vpow.pop %v5304
        %v5306 = vmul.f32 %v5291, 1.442695
        %v5307 = vpow.pop %v5306
        %v5308 = vsel %vm2162, %v5293, 0.0
        %5309 = vadd.xlane.f32.xlu0 %v5308
        %v5310 = vpop.xlane.xlu0 %5309
        %v5311 = vsel %vm2162, %v5295, 0.0
        %5312 = vadd.xlane.f32.xlu0 %v5311
        %v5313 = vpop.xlane.xlu0 %5312
        %v5314 = vsel %vm2162, %v5297, 0.0
        %5315 = vadd.xlane.f32.xlu0 %v5314
        %v5316 = vpop.xlane.xlu0 %5315
        %v5317 = vsel %vm2162, %v5299, 0.0
        %5318 = vadd.xlane.f32.xlu0 %v5317
        %v5319 = vpop.xlane.xlu0 %5318
        %v5320 = vsel %vm2162, %v5301, 0.0
        %5321 = vadd.xlane.f32.xlu0 %v5320
        %v5322 = vpop.xlane.xlu0 %5321
        %v5323 = vsel %vm2162, %v5303, 0.0
        %5324 = vadd.xlane.f32.xlu0 %v5323
        %v5325 = vpop.xlane.xlu0 %5324
        %v5326 = vsel %vm2162, %v5305, 0.0
        %5327 = vadd.xlane.f32.xlu0 %v5326
        %v5328 = vpop.xlane.xlu0 %5327
        %v5329 = vsel %vm2162, %v5307, 0.0
        %5330 = vadd.xlane.f32.xlu0 %v5329
        %v5331 = vpop.xlane.xlu0 %5330
        %v5332 = vrcp.pop %v5310
        %v5333 = vrcp.pop %v5313
        %v5334 = vrcp.pop %v5316
        %v5335 = vrcp.pop %v5319
        %v5336 = vrcp.pop %v5322
        %v5337 = vrcp.pop %v5325
        %v5338 = vrcp.pop %v5328
        %v5339 = vrcp.pop %v5331
        %v5340 = vmul.f32 %v5293, %v5332
        %v5341 = vmul.f32 %v5295, %v5333
        %v5342 = vmul.f32 %v5297, %v5334
        %v5343 = vmul.f32 %v5299, %v5335
        %v5344 = vmul.f32 %v5301, %v5336
        %v5345 = vmul.f32 %v5303, %v5337
        %v5346 = vmul.f32 %v5305, %v5338
        %v5347 = vmul.f32 %v5307, %v5339
        %v5348 = vpack.c.bf16 %v5341, %v5340
        %v5349 = vpack.c.bf16 %v5343, %v5342
        %v5350 = vpack.c.bf16 %v5345, %v5344
        %v5351 = vpack.c.bf16 %v5347, %v5346
        %v5353 = vsel %vm2162, %v5348, 0
        %v5356 = vsel %vm2162, %v5349, 0
        %v5359 = vsel %vm2162, %v5350, 0
        %v5362 = vsel %vm2162, %v5351, 0
        %5364 = vmatprep.subr.bf16.mxu0 0
        %5365 = vmatpush1.bf16.msra.mxu0 0
        %5366 = vmatprep.subr.bf16.mxu0 0
        %5367 = vmatpush1.bf16.msra.mxu0 0
        %5368 = vmatprep.subr.bf16.mxu0 0
        %5369 = vmatpush1.bf16.msra.mxu0 0
        %5370 = vmatprep.subr.bf16.mxu0 0
        %5371 = vmatpush1.bf16.msra.mxu0 0
        %5372 = vmatprep.subr.bf16.mxu0 0
        %5373 = vmatpush1.bf16.msra.mxu0 %v4928
        %5374 = vmatprep.subr.bf16.mxu0 0
        %5375 = vmatpush1.bf16.msra.mxu0 %v4927
        %5376 = vmatprep.subr.bf16.mxu0 0
        %5377 = vmatpush1.bf16.msra.mxu0 %v4926
        %5378 = vmatprep.subr.bf16.mxu0 0
        %5379 = vmatpush1.bf16.msra.mxu0 %v4925
        %5380 = vmatprep.subr.bf16.mxu0 0
        %5381 = vmatpush2.bf16.msra.mxu0 0
        %5382 = vmatprep.subr.bf16.mxu0 0
        %5383 = vmatpush2.bf16.msra.mxu0 0
        %5384 = vmatprep.subr.bf16.mxu0 0
        %5385 = vmatpush2.bf16.msra.mxu0 0
        %5386 = vmatprep.subr.bf16.mxu0 0
        %5387 = vmatpush2.bf16.msra.mxu0 0
        %5388 = vmatprep.subr.bf16.mxu0 0
        %5389 = vmatpush2.bf16.msra.mxu0 0
        %5390 = vmatprep.subr.bf16.mxu0 0
        %5391 = vmatpush2.bf16.msra.mxu0 0
        %5392 = vmatprep.subr.bf16.mxu0 0
        %5393 = vmatpush2.bf16.msra.mxu0 0
        %5394 = vmatprep.subr.bf16.mxu0 0
        %5395 = vmatpush2.bf16.msra.mxu0 0
        %5396 = vmatprep.mubr.bf16.mxu0 0
        %5397 = vmatmul.mubr.bf16.gmra.mxu0 %v5353
        %v5398 = vpop.f32.mrf.mxu0
        %v5399 = vadd.f32 0.0, %v5398
        %v5400 = vpop.f32.mrf.mxu0
        %v5401 = vpop.f32.mrf.mxu0
        %v5402 = vadd.f32 0.0, %v5401
        %v5403 = vpop.f32.mrf.mxu0
        %5404 = vmatprep.mubr.bf16.mxu0 0
        %5405 = vmatmul.mubr.bf16.gmra.mxu0 %v5356
        %v5406 = vpop.f32.mrf.mxu0
        %v5407 = vadd.f32 0.0, %v5406
        %v5408 = vpop.f32.mrf.mxu0
        %v5409 = vpop.f32.mrf.mxu0
        %v5410 = vadd.f32 0.0, %v5409
        %v5411 = vpop.f32.mrf.mxu0
        %5412 = vmatprep.mubr.bf16.mxu0 0
        %5413 = vmatmul.mubr.bf16.gmra.mxu0 %v5359
        %v5414 = vpop.f32.mrf.mxu0
        %v5415 = vadd.f32 0.0, %v5414
        %v5416 = vpop.f32.mrf.mxu0
        %v5417 = vpop.f32.mrf.mxu0
        %v5418 = vadd.f32 0.0, %v5417
        %v5419 = vpop.f32.mrf.mxu0
        %5420 = vmatprep.mubr.bf16.mxu0 0
        %5421 = vmatmul.mubr.bf16.gmra.mxu0 %v5362
        %v5422 = vpop.f32.mrf.mxu0
        %v5423 = vadd.f32 0.0, %v5422
        %v5424 = vpop.f32.mrf.mxu0
        %v5425 = vpop.f32.mrf.mxu0
        %v5426 = vadd.f32 0.0, %v5425
        %v5427 = vpop.f32.mrf.mxu0
        %5428 = vdwg.mxu0
        %v5429 = vsel %vm2340, %v5399, 0.0
        %v5430 = vsel %vm2340, %v5402, 0.0
        %v5431 = vsel %vm2340, %v5407, 0.0
        %v5432 = vsel %vm2340, %v5410, 0.0
        %v5433 = vsel %vm2340, %v5415, 0.0
        %v5434 = vsel %vm2340, %v5418, 0.0
        %v5435 = vsel %vm2340, %v5423, 0.0
        %v5436 = vsel %vm2340, %v5426, 0.0
        %v5437 = vadd.f32 %v5175, %v5429
        %v5438 = vadd.f32 %v5176, %v5430
        %v5439 = vadd.f32 %v5177, %v5431
        %v5440 = vadd.f32 %v5178, %v5432
        %v5441 = vadd.f32 %v5179, %v5433
        %v5442 = vadd.f32 %v5180, %v5434
        %v5443 = vadd.f32 %v5181, %v5435
        %v5444 = vadd.f32 %v5182, %v5436
        %v5445 = vsel %vm2603, %v4818, 0.0
        %v5446 = vsel %vm2603, %v4822, 0.0
        %v5447 = vsel %vm2603, %v4828, 0.0
        %v5448 = vsel %vm2603, %v4832, 0.0
        %v5449 = vsel %vm2603, %v4838, 0.0
        %v5450 = vsel %vm2603, %v4842, 0.0
        %v5451 = vsel %vm2603, %v4848, 0.0
        %v5452 = vsel %vm2603, %v4852, 0.0
        %v5453 = vpack.c.bf16 %v5446, %v5445
        %v5454 = vpack.c.bf16 %v5448, %v5447
        %v5455 = vpack.c.bf16 %v5450, %v5449
        %v5456 = vpack.c.bf16 %v5452, %v5451
        %5457 = vmatprep.subr.bf16.mxu0 0
        %5458 = vmatpush1.bf16.xpose.msra.mxu0 0
        %5459 = vmatprep.subr.bf16.mxu0 0
        %5460 = vmatpush1.bf16.xpose.msra.mxu0 0
        %5461 = vmatprep.subr.bf16.mxu0 0
        %5462 = vmatpush1.bf16.xpose.msra.mxu0 0
        %5463 = vmatprep.subr.bf16.mxu0 0
        %5464 = vmatpush1.bf16.xpose.msra.mxu0 0
        %5465 = vmatprep.subr.bf16.mxu0 0
        %5466 = vmatpush1.bf16.xpose.msra.mxu0 %v4924
        %5467 = vmatprep.subr.bf16.mxu0 0
        %5468 = vmatpush1.bf16.xpose.msra.mxu0 %v4923
        %5469 = vmatprep.subr.bf16.mxu0 0
        %5470 = vmatpush1.bf16.xpose.msra.mxu0 %v4922
        %5471 = vmatprep.subr.bf16.mxu0 0
        %5472 = vmatpush1.bf16.xpose.msra.mxu0 %v4921
        %5473 = vmatprep.subr.bf16.mxu0 0
        %5474 = vmatpush2.bf16.xpose.msra.mxu0 0
        %5475 = vmatprep.subr.bf16.mxu0 0
        %5476 = vmatpush2.bf16.xpose.msra.mxu0 0
        %5477 = vmatprep.subr.bf16.mxu0 0
        %5478 = vmatpush2.bf16.xpose.msra.mxu0 0
        %5479 = vmatprep.subr.bf16.mxu0 0
        %5480 = vmatpush2.bf16.xpose.msra.mxu0 0
        %5481 = vmatprep.subr.bf16.mxu0 0
        %5482 = vmatpush2.bf16.xpose.msra.mxu0 0
        %5483 = vmatprep.subr.bf16.mxu0 0
        %5484 = vmatpush2.bf16.xpose.msra.mxu0 0
        %5485 = vmatprep.subr.bf16.mxu0 0
        %5486 = vmatpush2.bf16.xpose.msra.mxu0 0
        %5487 = vmatprep.subr.bf16.mxu0 0
        %5488 = vmatpush2.bf16.xpose.msra.mxu0 0
        %5489 = vmatprep.mubr.bf16.mxu0 0
        %5490 = vmatmul.mubr.bf16.gmra.mxu0 %v5453
        %v5491 = vpop.f32.mrf.mxu0
        %v5492 = vadd.f32 %v1630, %v5491
        %v5493 = vpop.f32.mrf.mxu0
        %v5494 = vpop.f32.mrf.mxu0
        %v5495 = vadd.f32 %v1631, %v5494
        %v5496 = vpop.f32.mrf.mxu0
        %5497 = vmatprep.mubr.bf16.mxu0 0
        %5498 = vmatmul.mubr.bf16.gmra.mxu0 %v5454
        %v5499 = vpop.f32.mrf.mxu0
        %v5500 = vadd.f32 %v1632, %v5499
        %v5501 = vpop.f32.mrf.mxu0
        %v5502 = vpop.f32.mrf.mxu0
        %v5503 = vadd.f32 %v1633, %v5502
        %v5504 = vpop.f32.mrf.mxu0
        %5505 = vmatprep.mubr.bf16.mxu0 0
        %5506 = vmatmul.mubr.bf16.gmra.mxu0 %v5455
        %v5507 = vpop.f32.mrf.mxu0
        %v5508 = vadd.f32 %v1634, %v5507
        %v5509 = vpop.f32.mrf.mxu0
        %v5510 = vpop.f32.mrf.mxu0
        %v5511 = vadd.f32 %v1635, %v5510
        %v5512 = vpop.f32.mrf.mxu0
        %5513 = vmatprep.mubr.bf16.mxu0 0
        %5514 = vmatmul.mubr.bf16.gmra.mxu0 %v5456
        %v5515 = vpop.f32.mrf.mxu0
        %v5516 = vadd.f32 %v1636, %v5515
        %v5517 = vpop.f32.mrf.mxu0
        %v5518 = vpop.f32.mrf.mxu0
        %v5519 = vadd.f32 %v1637, %v5518
        %v5520 = vpop.f32.mrf.mxu0
        %5521 = vdwg.mxu0
        %v5522 = vsel %vm2162, %v5492, -inf
        %5523 = vmax.xlane.f32.xlu0 %v5522
        %v5524 = vpop.xlane.xlu0 %5523
        %v5525 = vsel %vm2162, %v5495, -inf
        %5526 = vmax.xlane.f32.xlu0 %v5525
        %v5527 = vpop.xlane.xlu0 %5526
        %v5528 = vsel %vm2162, %v5500, -inf
        %5529 = vmax.xlane.f32.xlu0 %v5528
        %v5530 = vpop.xlane.xlu0 %5529
        %v5531 = vsel %vm2162, %v5503, -inf
        %5532 = vmax.xlane.f32.xlu0 %v5531
        %v5533 = vpop.xlane.xlu0 %5532
        %v5534 = vsel %vm2162, %v5508, -inf
        %5535 = vmax.xlane.f32.xlu0 %v5534
        %v5536 = vpop.xlane.xlu0 %5535
        %v5537 = vsel %vm2162, %v5511, -inf
        %5538 = vmax.xlane.f32.xlu0 %v5537
        %v5539 = vpop.xlane.xlu0 %5538
        %v5540 = vsel %vm2162, %v5516, -inf
        %5541 = vmax.xlane.f32.xlu0 %v5540
        %v5542 = vpop.xlane.xlu0 %5541
        %v5543 = vsel %vm2162, %v5519, -inf
        %5544 = vmax.xlane.f32.xlu0 %v5543
        %v5545 = vpop.xlane.xlu0 %5544
        %v5546 = vsub.f32 %v5492, %v5524
        %v5547 = vsub.f32 %v5495, %v5527
        %v5548 = vsub.f32 %v5500, %v5530
        %v5549 = vsub.f32 %v5503, %v5533
        %v5550 = vsub.f32 %v5508, %v5536
        %v5551 = vsub.f32 %v5511, %v5539
        %v5552 = vsub.f32 %v5516, %v5542
        %v5553 = vsub.f32 %v5519, %v5545
        %v5554 = vmul.f32 %v5546, 1.442695
        %v5555 = vpow.pop %v5554
        %v5556 = vmul.f32 %v5547, 1.442695
        %v5557 = vpow.pop %v5556
        %v5558 = vmul.f32 %v5548, 1.442695
        %v5559 = vpow.pop %v5558
        %v5560 = vmul.f32 %v5549, 1.442695
        %v5561 = vpow.pop %v5560
        %v5562 = vmul.f32 %v5550, 1.442695
        %v5563 = vpow.pop %v5562
        %v5564 = vmul.f32 %v5551, 1.442695
        %v5565 = vpow.pop %v5564
        %v5566 = vmul.f32 %v5552, 1.442695
        %v5567 = vpow.pop %v5566
        %v5568 = vmul.f32 %v5553, 1.442695
        %v5569 = vpow.pop %v5568
        %v5570 = vsel %vm2162, %v5555, 0.0
        %5571 = vadd.xlane.f32.xlu0 %v5570
        %v5572 = vpop.xlane.xlu0 %5571
        %v5573 = vsel %vm2162, %v5557, 0.0
        %5574 = vadd.xlane.f32.xlu0 %v5573
        %v5575 = vpop.xlane.xlu0 %5574
        %v5576 = vsel %vm2162, %v5559, 0.0
        %5577 = vadd.xlane.f32.xlu0 %v5576
        %v5578 = vpop.xlane.xlu0 %5577
        %v5579 = vsel %vm2162, %v5561, 0.0
        %5580 = vadd.xlane.f32.xlu0 %v5579
        %v5581 = vpop.xlane.xlu0 %5580
        %v5582 = vsel %vm2162, %v5563, 0.0
        %5583 = vadd.xlane.f32.xlu0 %v5582
        %v5584 = vpop.xlane.xlu0 %5583
        %v5585 = vsel %vm2162, %v5565, 0.0
        %5586 = vadd.xlane.f32.xlu0 %v5585
        %v5587 = vpop.xlane.xlu0 %5586
        %v5588 = vsel %vm2162, %v5567, 0.0
        %5589 = vadd.xlane.f32.xlu0 %v5588
        %v5590 = vpop.xlane.xlu0 %5589
        %v5591 = vsel %vm2162, %v5569, 0.0
        %5592 = vadd.xlane.f32.xlu0 %v5591
        %v5593 = vpop.xlane.xlu0 %5592
        %v5594 = vrcp.pop %v5572
        %v5595 = vrcp.pop %v5575
        %v5596 = vrcp.pop %v5578
        %v5597 = vrcp.pop %v5581
        %v5598 = vrcp.pop %v5584
        %v5599 = vrcp.pop %v5587
        %v5600 = vrcp.pop %v5590
        %v5601 = vrcp.pop %v5593
        %v5602 = vmul.f32 %v5555, %v5594
        %v5603 = vmul.f32 %v5557, %v5595
        %v5604 = vmul.f32 %v5559, %v5596
        %v5605 = vmul.f32 %v5561, %v5597
        %v5606 = vmul.f32 %v5563, %v5598
        %v5607 = vmul.f32 %v5565, %v5599
        %v5608 = vmul.f32 %v5567, %v5600
        %v5609 = vmul.f32 %v5569, %v5601
        %v5610 = vpack.c.bf16 %v5603, %v5602
        %v5611 = vpack.c.bf16 %v5605, %v5604
        %v5612 = vpack.c.bf16 %v5607, %v5606
        %v5613 = vpack.c.bf16 %v5609, %v5608
        %v5615 = vsel %vm2162, %v5610, 0
        %v5618 = vsel %vm2162, %v5611, 0
        %v5621 = vsel %vm2162, %v5612, 0
        %v5624 = vsel %vm2162, %v5613, 0
        %5626 = vmatprep.subr.bf16.mxu0 0
        %5627 = vmatpush1.bf16.msra.mxu0 0
        %5628 = vmatprep.subr.bf16.mxu0 0
        %5629 = vmatpush1.bf16.msra.mxu0 0
        %5630 = vmatprep.subr.bf16.mxu0 0
        %5631 = vmatpush1.bf16.msra.mxu0 0
        %5632 = vmatprep.subr.bf16.mxu0 0
        %5633 = vmatpush1.bf16.msra.mxu0 0
        %5634 = vmatprep.subr.bf16.mxu0 0
        %5635 = vmatpush1.bf16.msra.mxu0 %v4928
        %5636 = vmatprep.subr.bf16.mxu0 0
        %5637 = vmatpush1.bf16.msra.mxu0 %v4927
        %5638 = vmatprep.subr.bf16.mxu0 0
        %5639 = vmatpush1.bf16.msra.mxu0 %v4926
        %5640 = vmatprep.subr.bf16.mxu0 0
        %5641 = vmatpush1.bf16.msra.mxu0 %v4925
        %5642 = vmatprep.subr.bf16.mxu0 0
        %5643 = vmatpush2.bf16.msra.mxu0 0
        %5644 = vmatprep.subr.bf16.mxu0 0
        %5645 = vmatpush2.bf16.msra.mxu0 0
        %5646 = vmatprep.subr.bf16.mxu0 0
        %5647 = vmatpush2.bf16.msra.mxu0 0
        %5648 = vmatprep.subr.bf16.mxu0 0
        %5649 = vmatpush2.bf16.msra.mxu0 0
        %5650 = vmatprep.subr.bf16.mxu0 0
        %5651 = vmatpush2.bf16.msra.mxu0 0
        %5652 = vmatprep.subr.bf16.mxu0 0
        %5653 = vmatpush2.bf16.msra.mxu0 0
        %5654 = vmatprep.subr.bf16.mxu0 0
        %5655 = vmatpush2.bf16.msra.mxu0 0
        %5656 = vmatprep.subr.bf16.mxu0 0
        %5657 = vmatpush2.bf16.msra.mxu0 0
        %5658 = vmatprep.mubr.bf16.mxu0 0
        %5659 = vmatmul.mubr.bf16.gmra.mxu0 %v5615
        %v5660 = vpop.f32.mrf.mxu0
        %v5661 = vadd.f32 0.0, %v5660
        %v5662 = vpop.f32.mrf.mxu0
        %v5663 = vpop.f32.mrf.mxu0
        %v5664 = vadd.f32 0.0, %v5663
        %v5665 = vpop.f32.mrf.mxu0
        %5666 = vmatprep.mubr.bf16.mxu0 0
        %5667 = vmatmul.mubr.bf16.gmra.mxu0 %v5618
        %v5668 = vpop.f32.mrf.mxu0
        %v5669 = vadd.f32 0.0, %v5668
        %v5670 = vpop.f32.mrf.mxu0
        %v5671 = vpop.f32.mrf.mxu0
        %v5672 = vadd.f32 0.0, %v5671
        %v5673 = vpop.f32.mrf.mxu0
        %5674 = vmatprep.mubr.bf16.mxu0 0
        %5675 = vmatmul.mubr.bf16.gmra.mxu0 %v5621
        %v5676 = vpop.f32.mrf.mxu0
        %v5677 = vadd.f32 0.0, %v5676
        %v5678 = vpop.f32.mrf.mxu0
        %v5679 = vpop.f32.mrf.mxu0
        %v5680 = vadd.f32 0.0, %v5679
        %v5681 = vpop.f32.mrf.mxu0
        %5682 = vmatprep.mubr.bf16.mxu0 0
        %5683 = vmatmul.mubr.bf16.gmra.mxu0 %v5624
        %v5684 = vpop.f32.mrf.mxu0
        %v5685 = vadd.f32 0.0, %v5684
        %v5686 = vpop.f32.mrf.mxu0
        %v5687 = vpop.f32.mrf.mxu0
        %v5688 = vadd.f32 0.0, %v5687
        %v5689 = vpop.f32.mrf.mxu0
        %5690 = vdwg.mxu0
        %v5691 = vsel %vm2603, %v5661, 0.0
        %v5692 = vsel %vm2603, %v5664, 0.0
        %v5693 = vsel %vm2603, %v5669, 0.0
        %v5694 = vsel %vm2603, %v5672, 0.0
        %v5695 = vsel %vm2603, %v5677, 0.0
        %v5696 = vsel %vm2603, %v5680, 0.0
        %v5697 = vsel %vm2603, %v5685, 0.0
        %v5698 = vsel %vm2603, %v5688, 0.0
        %v5699 = vadd.f32 %v5437, %v5691
        %v5700 = vadd.f32 %v5438, %v5692
        %v5701 = vadd.f32 %v5439, %v5693
        %v5702 = vadd.f32 %v5440, %v5694
        %v5703 = vadd.f32 %v5441, %v5695
        %v5704 = vadd.f32 %v5442, %v5696
        %v5705 = vadd.f32 %v5443, %v5697
        %v5706 = vadd.f32 %v5444, %v5698
        %v5707 = vsel %vm2866, %v4818, 0.0
        %v5708 = vsel %vm2866, %v4822, 0.0
        %v5709 = vsel %vm2866, %v4828, 0.0
        %v5710 = vsel %vm2866, %v4832, 0.0
        %v5711 = vsel %vm2866, %v4838, 0.0
        %v5712 = vsel %vm2866, %v4842, 0.0
        %v5713 = vsel %vm2866, %v4848, 0.0
        %v5714 = vsel %vm2866, %v4852, 0.0
        %v5715 = vpack.c.bf16 %v5708, %v5707
        %v5716 = vpack.c.bf16 %v5710, %v5709
        %v5717 = vpack.c.bf16 %v5712, %v5711
        %v5718 = vpack.c.bf16 %v5714, %v5713
        %5719 = vmatprep.subr.bf16.mxu0 0
        %5720 = vmatpush1.bf16.xpose.msra.mxu0 0
        %5721 = vmatprep.subr.bf16.mxu0 0
        %5722 = vmatpush1.bf16.xpose.msra.mxu0 0
        %5723 = vmatprep.subr.bf16.mxu0 0
        %5724 = vmatpush1.bf16.xpose.msra.mxu0 0
        %5725 = vmatprep.subr.bf16.mxu0 0
        %5726 = vmatpush1.bf16.xpose.msra.mxu0 0
        %5727 = vmatprep.subr.bf16.mxu0 0
        %5728 = vmatpush1.bf16.xpose.msra.mxu0 %v4924
        %5729 = vmatprep.subr.bf16.mxu0 0
        %5730 = vmatpush1.bf16.xpose.msra.mxu0 %v4923
        %5731 = vmatprep.subr.bf16.mxu0 0
        %5732 = vmatpush1.bf16.xpose.msra.mxu0 %v4922
        %5733 = vmatprep.subr.bf16.mxu0 0
        %5734 = vmatpush1.bf16.xpose.msra.mxu0 %v4921
        %5735 = vmatprep.subr.bf16.mxu0 0
        %5736 = vmatpush2.bf16.xpose.msra.mxu0 0
        %5737 = vmatprep.subr.bf16.mxu0 0
        %5738 = vmatpush2.bf16.xpose.msra.mxu0 0
        %5739 = vmatprep.subr.bf16.mxu0 0
        %5740 = vmatpush2.bf16.xpose.msra.mxu0 0
        %5741 = vmatprep.subr.bf16.mxu0 0
        %5742 = vmatpush2.bf16.xpose.msra.mxu0 0
        %5743 = vmatprep.subr.bf16.mxu0 0
        %5744 = vmatpush2.bf16.xpose.msra.mxu0 0
        %5745 = vmatprep.subr.bf16.mxu0 0
        %5746 = vmatpush2.bf16.xpose.msra.mxu0 0
        %5747 = vmatprep.subr.bf16.mxu0 0
        %5748 = vmatpush2.bf16.xpose.msra.mxu0 0
        %5749 = vmatprep.subr.bf16.mxu0 0
        %5750 = vmatpush2.bf16.xpose.msra.mxu0 0
        %5751 = vmatprep.mubr.bf16.mxu0 0
        %5752 = vmatmul.mubr.bf16.gmra.mxu0 %v5715
        %v5753 = vpop.f32.mrf.mxu0
        %v5754 = vadd.f32 %v1630, %v5753
        %v5755 = vpop.f32.mrf.mxu0
        %v5756 = vpop.f32.mrf.mxu0
        %v5757 = vadd.f32 %v1631, %v5756
        %v5758 = vpop.f32.mrf.mxu0
        %5759 = vmatprep.mubr.bf16.mxu0 0
        %5760 = vmatmul.mubr.bf16.gmra.mxu0 %v5716
        %v5761 = vpop.f32.mrf.mxu0
        %v5762 = vadd.f32 %v1632, %v5761
        %v5763 = vpop.f32.mrf.mxu0
        %v5764 = vpop.f32.mrf.mxu0
        %v5765 = vadd.f32 %v1633, %v5764
        %v5766 = vpop.f32.mrf.mxu0
        %5767 = vmatprep.mubr.bf16.mxu0 0
        %5768 = vmatmul.mubr.bf16.gmra.mxu0 %v5717
        %v5769 = vpop.f32.mrf.mxu0
        %v5770 = vadd.f32 %v1634, %v5769
        %v5771 = vpop.f32.mrf.mxu0
        %v5772 = vpop.f32.mrf.mxu0
        %v5773 = vadd.f32 %v1635, %v5772
        %v5774 = vpop.f32.mrf.mxu0
        %5775 = vmatprep.mubr.bf16.mxu0 0
        %5776 = vmatmul.mubr.bf16.gmra.mxu0 %v5718
        %v5777 = vpop.f32.mrf.mxu0
        %v5778 = vadd.f32 %v1636, %v5777
        %v5779 = vpop.f32.mrf.mxu0
        %v5780 = vpop.f32.mrf.mxu0
        %v5781 = vadd.f32 %v1637, %v5780
        %v5782 = vpop.f32.mrf.mxu0
        %5783 = vdwg.mxu0
        %v5784 = vsel %vm2162, %v5754, -inf
        %5785 = vmax.xlane.f32.xlu0 %v5784
        %v5786 = vpop.xlane.xlu0 %5785
        %v5787 = vsel %vm2162, %v5757, -inf
        %5788 = vmax.xlane.f32.xlu0 %v5787
        %v5789 = vpop.xlane.xlu0 %5788
        %v5790 = vsel %vm2162, %v5762, -inf
        %5791 = vmax.xlane.f32.xlu0 %v5790
        %v5792 = vpop.xlane.xlu0 %5791
        %v5793 = vsel %vm2162, %v5765, -inf
        %5794 = vmax.xlane.f32.xlu0 %v5793
        %v5795 = vpop.xlane.xlu0 %5794
        %v5796 = vsel %vm2162, %v5770, -inf
        %5797 = vmax.xlane.f32.xlu0 %v5796
        %v5798 = vpop.xlane.xlu0 %5797
        %v5799 = vsel %vm2162, %v5773, -inf
        %5800 = vmax.xlane.f32.xlu0 %v5799
        %v5801 = vpop.xlane.xlu0 %5800
        %v5802 = vsel %vm2162, %v5778, -inf
        %5803 = vmax.xlane.f32.xlu0 %v5802
        %v5804 = vpop.xlane.xlu0 %5803
        %v5805 = vsel %vm2162, %v5781, -inf
        %5806 = vmax.xlane.f32.xlu0 %v5805
        %v5807 = vpop.xlane.xlu0 %5806
        %v5808 = vsub.f32 %v5754, %v5786
        %v5809 = vsub.f32 %v5757, %v5789
        %v5810 = vsub.f32 %v5762, %v5792
        %v5811 = vsub.f32 %v5765, %v5795
        %v5812 = vsub.f32 %v5770, %v5798
        %v5813 = vsub.f32 %v5773, %v5801
        %v5814 = vsub.f32 %v5778, %v5804
        %v5815 = vsub.f32 %v5781, %v5807
        %v5816 = vmul.f32 %v5808, 1.442695
        %v5817 = vpow.pop %v5816
        %v5818 = vmul.f32 %v5809, 1.442695
        %v5819 = vpow.pop %v5818
        %v5820 = vmul.f32 %v5810, 1.442695
        %v5821 = vpow.pop %v5820
        %v5822 = vmul.f32 %v5811, 1.442695
        %v5823 = vpow.pop %v5822
        %v5824 = vmul.f32 %v5812, 1.442695
        %v5825 = vpow.pop %v5824
        %v5826 = vmul.f32 %v5813, 1.442695
        %v5827 = vpow.pop %v5826
        %v5828 = vmul.f32 %v5814, 1.442695
        %v5829 = vpow.pop %v5828
        %v5830 = vmul.f32 %v5815, 1.442695
        %v5831 = vpow.pop %v5830
        %v5832 = vsel %vm2162, %v5817, 0.0
        %5833 = vadd.xlane.f32.xlu0 %v5832
        %v5834 = vpop.xlane.xlu0 %5833
        %v5835 = vsel %vm2162, %v5819, 0.0
        %5836 = vadd.xlane.f32.xlu0 %v5835
        %v5837 = vpop.xlane.xlu0 %5836
        %v5838 = vsel %vm2162, %v5821, 0.0
        %5839 = vadd.xlane.f32.xlu0 %v5838
        %v5840 = vpop.xlane.xlu0 %5839
        %v5841 = vsel %vm2162, %v5823, 0.0
        %5842 = vadd.xlane.f32.xlu0 %v5841
        %v5843 = vpop.xlane.xlu0 %5842
        %v5844 = vsel %vm2162, %v5825, 0.0
        %5845 = vadd.xlane.f32.xlu0 %v5844
        %v5846 = vpop.xlane.xlu0 %5845
        %v5847 = vsel %vm2162, %v5827, 0.0
        %5848 = vadd.xlane.f32.xlu0 %v5847
        %v5849 = vpop.xlane.xlu0 %5848
        %v5850 = vsel %vm2162, %v5829, 0.0
        %5851 = vadd.xlane.f32.xlu0 %v5850
        %v5852 = vpop.xlane.xlu0 %5851
        %v5853 = vsel %vm2162, %v5831, 0.0
        %5854 = vadd.xlane.f32.xlu0 %v5853
        %v5855 = vpop.xlane.xlu0 %5854
        %v5856 = vrcp.pop %v5834
        %v5857 = vrcp.pop %v5837
        %v5858 = vrcp.pop %v5840
        %v5859 = vrcp.pop %v5843
        %v5860 = vrcp.pop %v5846
        %v5861 = vrcp.pop %v5849
        %v5862 = vrcp.pop %v5852
        %v5863 = vrcp.pop %v5855
        %v5864 = vmul.f32 %v5817, %v5856
        %v5865 = vmul.f32 %v5819, %v5857
        %v5866 = vmul.f32 %v5821, %v5858
        %v5867 = vmul.f32 %v5823, %v5859
        %v5868 = vmul.f32 %v5825, %v5860
        %v5869 = vmul.f32 %v5827, %v5861
        %v5870 = vmul.f32 %v5829, %v5862
        %v5871 = vmul.f32 %v5831, %v5863
        %v5872 = vpack.c.bf16 %v5865, %v5864
        %v5873 = vpack.c.bf16 %v5867, %v5866
        %v5874 = vpack.c.bf16 %v5869, %v5868
        %v5875 = vpack.c.bf16 %v5871, %v5870
        %v5877 = vsel %vm2162, %v5872, 0
        %v5880 = vsel %vm2162, %v5873, 0
        %v5883 = vsel %vm2162, %v5874, 0
        %v5886 = vsel %vm2162, %v5875, 0
        %5888 = vmatprep.subr.bf16.mxu0 0
        %5889 = vmatpush1.bf16.msra.mxu0 0
        %5890 = vmatprep.subr.bf16.mxu0 0
        %5891 = vmatpush1.bf16.msra.mxu0 0
        %5892 = vmatprep.subr.bf16.mxu0 0
        %5893 = vmatpush1.bf16.msra.mxu0 0
        %5894 = vmatprep.subr.bf16.mxu0 0
        %5895 = vmatpush1.bf16.msra.mxu0 0
        %5896 = vmatprep.subr.bf16.mxu0 0
        %5897 = vmatpush1.bf16.msra.mxu0 %v4928
        %5898 = vmatprep.subr.bf16.mxu0 0
        %5899 = vmatpush1.bf16.msra.mxu0 %v4927
        %5900 = vmatprep.subr.bf16.mxu0 0
        %5901 = vmatpush1.bf16.msra.mxu0 %v4926
        %5902 = vmatprep.subr.bf16.mxu0 0
        %5903 = vmatpush1.bf16.msra.mxu0 %v4925
        %5904 = vmatprep.subr.bf16.mxu0 0
        %5905 = vmatpush2.bf16.msra.mxu0 0
        %5906 = vmatprep.subr.bf16.mxu0 0
        %5907 = vmatpush2.bf16.msra.mxu0 0
        %5908 = vmatprep.subr.bf16.mxu0 0
        %5909 = vmatpush2.bf16.msra.mxu0 0
        %5910 = vmatprep.subr.bf16.mxu0 0
        %5911 = vmatpush2.bf16.msra.mxu0 0
        %5912 = vmatprep.subr.bf16.mxu0 0
        %5913 = vmatpush2.bf16.msra.mxu0 0
        %5914 = vmatprep.subr.bf16.mxu0 0
        %5915 = vmatpush2.bf16.msra.mxu0 0
        %5916 = vmatprep.subr.bf16.mxu0 0
        %5917 = vmatpush2.bf16.msra.mxu0 0
        %5918 = vmatprep.subr.bf16.mxu0 0
        %5919 = vmatpush2.bf16.msra.mxu0 0
        %5920 = vmatprep.mubr.bf16.mxu0 0
        %5921 = vmatmul.mubr.bf16.gmra.mxu0 %v5877
        %v5922 = vpop.f32.mrf.mxu0
        %v5923 = vadd.f32 0.0, %v5922
        %v5924 = vpop.f32.mrf.mxu0
        %v5925 = vpop.f32.mrf.mxu0
        %v5926 = vadd.f32 0.0, %v5925
        %v5927 = vpop.f32.mrf.mxu0
        %5928 = vmatprep.mubr.bf16.mxu0 0
        %5929 = vmatmul.mubr.bf16.gmra.mxu0 %v5880
        %v5930 = vpop.f32.mrf.mxu0
        %v5931 = vadd.f32 0.0, %v5930
        %v5932 = vpop.f32.mrf.mxu0
        %v5933 = vpop.f32.mrf.mxu0
        %v5934 = vadd.f32 0.0, %v5933
        %v5935 = vpop.f32.mrf.mxu0
        %5936 = vmatprep.mubr.bf16.mxu0 0
        %5937 = vmatmul.mubr.bf16.gmra.mxu0 %v5883
        %v5938 = vpop.f32.mrf.mxu0
        %v5939 = vadd.f32 0.0, %v5938
        %v5940 = vpop.f32.mrf.mxu0
        %v5941 = vpop.f32.mrf.mxu0
        %v5942 = vadd.f32 0.0, %v5941
        %v5943 = vpop.f32.mrf.mxu0
        %5944 = vmatprep.mubr.bf16.mxu0 0
        %5945 = vmatmul.mubr.bf16.gmra.mxu0 %v5886
        %v5946 = vpop.f32.mrf.mxu0
        %v5947 = vadd.f32 0.0, %v5946
        %v5948 = vpop.f32.mrf.mxu0
        %v5949 = vpop.f32.mrf.mxu0
        %v5950 = vadd.f32 0.0, %v5949
        %v5951 = vpop.f32.mrf.mxu0
        %5952 = vdwg.mxu0
        %v5953 = vsel %vm2866, %v5923, 0.0
        %v5954 = vsel %vm2866, %v5926, 0.0
        %v5955 = vsel %vm2866, %v5931, 0.0
        %v5956 = vsel %vm2866, %v5934, 0.0
        %v5957 = vsel %vm2866, %v5939, 0.0
        %v5958 = vsel %vm2866, %v5942, 0.0
        %v5959 = vsel %vm2866, %v5947, 0.0
        %v5960 = vsel %vm2866, %v5950, 0.0
        %v5961 = vadd.f32 %v5699, %v5953
        %v5962 = vadd.f32 %v5700, %v5954
        %v5963 = vadd.f32 %v5701, %v5955
        %v5964 = vadd.f32 %v5702, %v5956
        %v5965 = vadd.f32 %v5703, %v5957
        %v5966 = vadd.f32 %v5704, %v5958
        %v5967 = vadd.f32 %v5705, %v5959
        %v5968 = vadd.f32 %v5706, %v5960
        %v5969 = vpack.c.bf16 %v5962, %v5961
        %v5970 = vpack.c.bf16 %v5964, %v5963
        %v5971 = vpack.c.bf16 %v5966, %v5965
        %v5972 = vpack.c.bf16 %v5968, %v5967
        %s5973 = scalar_lea.vmem %s9, 64
        %v5974 = vld [vmem:[%s5973] sm:$0xf]
        %v5975 = vld [vmem:[%s5973 + $0x4] sm:$0xf]
        %v5976 = vld [vmem:[%s5973 + $0x8] sm:$0xf]
        %v5977 = vld [vmem:[%s5973 + $0xc] sm:$0xf]
        %v5978 = vld [vmem:[%s5973 + $0x10] sm:$0xf]
        %v5979 = vld [vmem:[%s5973 + $0x14] sm:$0xf]
        %v5980 = vld [vmem:[%s5973 + $0x18] sm:$0xf]
        %v5981 = vld [vmem:[%s5973 + $0x1c] sm:$0xf]
        %v5982 = vld [vmem:[%s5973 + $0x20] sm:$0xf]
        %v5983 = vld [vmem:[%s5973 + $0x24] sm:$0xf]
        %v5984 = vld [vmem:[%s5973 + $0x28] sm:$0xf]
        %v5985 = vld [vmem:[%s5973 + $0x2c] sm:$0xf]
        %v5986 = vld [vmem:[%s5973 + $0x30] sm:$0xf]
        %v5987 = vld [vmem:[%s5973 + $0x34] sm:$0xf]
        %v5988 = vld [vmem:[%s5973 + $0x38] sm:$0xf]
        %v5989 = vld [vmem:[%s5973 + $0x3c] sm:$0xf]
        %v6006 = vunpack.c.l.b16 %v5974
        %v6007 = vunpack.c.l.b16 %v5975
        %v6008 = vunpack.c.l.b16 %v5976
        %v6009 = vunpack.c.l.b16 %v5977
        %v6010 = vunpack.c.l.b16 %v5978
        %v6011 = vunpack.c.l.b16 %v5979
        %v6012 = vunpack.c.l.b16 %v5980
        %v6013 = vunpack.c.l.b16 %v5981
        %v6014 = vunpack.c.l.b16 %v5982
        %v6015 = vunpack.c.l.b16 %v5983
        %v6016 = vunpack.c.l.b16 %v5984
        %v6017 = vunpack.c.l.b16 %v5985
        %v6018 = vunpack.c.l.b16 %v5986
        %v6019 = vunpack.c.l.b16 %v5987
        %v6020 = vunpack.c.l.b16 %v5988
        %v6021 = vunpack.c.l.b16 %v5989
        %v6022 = vpack.c.b16 %v6007, %v6006
        %v6023 = vpack.c.b16 %v6009, %v6008
        %v6024 = vpack.c.b16 %v6011, %v6010
        %v6025 = vpack.c.b16 %v6013, %v6012
        %v6026 = vpack.c.b16 %v6015, %v6014
        %v6027 = vpack.c.b16 %v6017, %v6016
        %v6028 = vpack.c.b16 %v6019, %v6018
        %v6029 = vpack.c.b16 %v6021, %v6020
        %6038 = vmatprep.subr.bf16.mxu0 0
        %6039 = vmatpush1.bf16.msra.mxu0 %v6029
        %6040 = vmatprep.subr.bf16.mxu0 0
        %6041 = vmatpush1.bf16.msra.mxu0 %v6028
        %6042 = vmatprep.subr.bf16.mxu0 0
        %6043 = vmatpush1.bf16.msra.mxu0 %v6027
        %6044 = vmatprep.subr.bf16.mxu0 0
        %6045 = vmatpush1.bf16.msra.mxu0 %v6026
        %6046 = vmatprep.subr.bf16.mxu0 0
        %6047 = vmatpush1.bf16.msra.mxu0 %v6025
        %6048 = vmatprep.subr.bf16.mxu0 0
        %6049 = vmatpush1.bf16.msra.mxu0 %v6024
        %6050 = vmatprep.subr.bf16.mxu0 0
        %6051 = vmatpush1.bf16.msra.mxu0 %v6023
        %6052 = vmatprep.subr.bf16.mxu0 0
        %6053 = vmatpush1.bf16.msra.mxu0 %v6022
        %6054 = vmatprep.subr.bf16.mxu0 0
        %6055 = vmatpush2.bf16.msra.mxu0 0
        %6056 = vmatprep.subr.bf16.mxu0 0
        %6057 = vmatpush2.bf16.msra.mxu0 0
        %6058 = vmatprep.subr.bf16.mxu0 0
        %6059 = vmatpush2.bf16.msra.mxu0 0
        %6060 = vmatprep.subr.bf16.mxu0 0
        %6061 = vmatpush2.bf16.msra.mxu0 0
        %6062 = vmatprep.subr.bf16.mxu0 0
        %6063 = vmatpush2.bf16.msra.mxu0 0
        %6064 = vmatprep.subr.bf16.mxu0 0
        %6065 = vmatpush2.bf16.msra.mxu0 0
        %6066 = vmatprep.subr.bf16.mxu0 0
        %6067 = vmatpush2.bf16.msra.mxu0 0
        %6068 = vmatprep.subr.bf16.mxu0 0
        %6069 = vmatpush2.bf16.msra.mxu0 0
        %6070 = vmatprep.mubr.bf16.mxu0 0
        %6071 = vmatmul.mubr.bf16.gmra.mxu0 %v5969
        %v6072 = vpop.f32.mrf.mxu0
        %v6073 = vadd.f32 0.0, %v6072
        %v6074 = vpop.f32.mrf.mxu0
        %v6075 = vpop.f32.mrf.mxu0
        %v6076 = vadd.f32 0.0, %v6075
        %v6077 = vpop.f32.mrf.mxu0
        %6078 = vmatprep.mubr.bf16.mxu0 0
        %6079 = vmatmul.mubr.bf16.gmra.mxu0 %v5970
        %v6080 = vpop.f32.mrf.mxu0
        %v6081 = vadd.f32 0.0, %v6080
        %v6082 = vpop.f32.mrf.mxu0
        %v6083 = vpop.f32.mrf.mxu0
        %v6084 = vadd.f32 0.0, %v6083
        %v6085 = vpop.f32.mrf.mxu0
        %6086 = vmatprep.mubr.bf16.mxu0 0
        %6087 = vmatmul.mubr.bf16.gmra.mxu0 %v5971
        %v6088 = vpop.f32.mrf.mxu0
        %v6089 = vadd.f32 0.0, %v6088
        %v6090 = vpop.f32.mrf.mxu0
        %v6091 = vpop.f32.mrf.mxu0
        %v6092 = vadd.f32 0.0, %v6091
        %v6093 = vpop.f32.mrf.mxu0
        %6094 = vmatprep.mubr.bf16.mxu0 0
        %6095 = vmatmul.mubr.bf16.gmra.mxu0 %v5972
        %v6096 = vpop.f32.mrf.mxu0
        %v6097 = vadd.f32 0.0, %v6096
        %v6098 = vpop.f32.mrf.mxu0
        %v6099 = vpop.f32.mrf.mxu0
        %v6100 = vadd.f32 0.0, %v6099
        %v6101 = vpop.f32.mrf.mxu0
        %6102 = vdwg.mxu0
        %v6103 = vadd.f32 %v4472, %v6073
        %v6104 = vadd.f32 %v4473, %v6076
        %v6105 = vadd.f32 %v4474, %v6081
        %v6106 = vadd.f32 %v4475, %v6084
        %v6107 = vadd.f32 %v4476, %v6089
        %v6108 = vadd.f32 %v4477, %v6092
        %v6109 = vadd.f32 %v4478, %v6097
        %v6110 = vadd.f32 %v4479, %v6100
        %s6111 = scalar_lea.vmem %s10, 1
        %v6112 = vld [vmem:[%s6111] sm:$0x1]
        %v6114 = vlaneseq
        %v6115 = vshrl.u32 %v6114, 7
        %v6116 = vsub.s32 0, %v6115
        %v6117 = vrot.slane %v6112, %v6116
        %v6119 = vadd.f32 %v6103, %v6117
        %v6120 = vadd.f32 %v6104, %v6117
        %v6121 = vadd.f32 %v6105, %v6117
        %v6122 = vadd.f32 %v6106, %v6117
        %v6123 = vadd.f32 %v6107, %v6117
        %v6124 = vadd.f32 %v6108, %v6117
        %v6125 = vadd.f32 %v6109, %v6117
        %v6126 = vadd.f32 %v6110, %v6117
        %s6127 = scalar_lea.vmem %s11, 1
        %v6128 = vld [vmem:[%s6127] sm:$0x1]
        %s6129 = scalar_lea.vmem %s12, 1
        %v6130 = vld [vmem:[%s6129] sm:$0x1]
        %6131 = vadd.xlane.f32.xlu0 %v6119
        %v6132 = vpop.xlane.xlu0 %6131
        %6133 = vadd.xlane.f32.xlu0 %v6120
        %v6134 = vpop.xlane.xlu0 %6133
        %6135 = vadd.xlane.f32.xlu0 %v6121
        %v6136 = vpop.xlane.xlu0 %6135
        %6137 = vadd.xlane.f32.xlu0 %v6122
        %v6138 = vpop.xlane.xlu0 %6137
        %6139 = vadd.xlane.f32.xlu0 %v6123
        %v6140 = vpop.xlane.xlu0 %6139
        %6141 = vadd.xlane.f32.xlu0 %v6124
        %v6142 = vpop.xlane.xlu0 %6141
        %6143 = vadd.xlane.f32.xlu0 %v6125
        %v6144 = vpop.xlane.xlu0 %6143
        %6145 = vadd.xlane.f32.xlu0 %v6126
        %v6146 = vpop.xlane.xlu0 %6145
        %v6147 = vmul.f32 %v6132, %v1491
        %v6148 = vmul.f32 %v6134, %v1491
        %v6149 = vmul.f32 %v6136, %v1491
        %v6150 = vmul.f32 %v6138, %v1491
        %v6151 = vmul.f32 %v6140, %v1491
        %v6152 = vmul.f32 %v6142, %v1491
        %v6153 = vmul.f32 %v6144, %v1491
        %v6154 = vmul.f32 %v6146, %v1491
        %v6155 = vsub.f32 %v6119, %v6147
        %v6156 = vsub.f32 %v6120, %v6148
        %v6157 = vsub.f32 %v6121, %v6149
        %v6158 = vsub.f32 %v6122, %v6150
        %v6159 = vsub.f32 %v6123, %v6151
        %v6160 = vsub.f32 %v6124, %v6152
        %v6161 = vsub.f32 %v6125, %v6153
        %v6162 = vsub.f32 %v6126, %v6154
        %v6163 = vmul.f32 %v6155, %v6155
        %v6164 = vmul.f32 %v6156, %v6156
        %v6165 = vmul.f32 %v6157, %v6157
        %v6166 = vmul.f32 %v6158, %v6158
        %v6167 = vmul.f32 %v6159, %v6159
        %v6168 = vmul.f32 %v6160, %v6160
        %v6169 = vmul.f32 %v6161, %v6161
        %v6170 = vmul.f32 %v6162, %v6162
        %6171 = vadd.xlane.f32.xlu0 %v6163
        %v6172 = vpop.xlane.xlu0 %6171
        %6173 = vadd.xlane.f32.xlu0 %v6164
        %v6174 = vpop.xlane.xlu0 %6173
        %6175 = vadd.xlane.f32.xlu0 %v6165
        %v6176 = vpop.xlane.xlu0 %6175
        %6177 = vadd.xlane.f32.xlu0 %v6166
        %v6178 = vpop.xlane.xlu0 %6177
        %6179 = vadd.xlane.f32.xlu0 %v6167
        %v6180 = vpop.xlane.xlu0 %6179
        %6181 = vadd.xlane.f32.xlu0 %v6168
        %v6182 = vpop.xlane.xlu0 %6181
        %6183 = vadd.xlane.f32.xlu0 %v6169
        %v6184 = vpop.xlane.xlu0 %6183
        %6185 = vadd.xlane.f32.xlu0 %v6170
        %v6186 = vpop.xlane.xlu0 %6185
        %v6187 = vmul.f32 %v6172, %v1491
        %v6188 = vmul.f32 %v6174, %v1491
        %v6189 = vmul.f32 %v6176, %v1491
        %v6190 = vmul.f32 %v6178, %v1491
        %v6191 = vmul.f32 %v6180, %v1491
        %v6192 = vmul.f32 %v6182, %v1491
        %v6193 = vmul.f32 %v6184, %v1491
        %v6194 = vmul.f32 %v6186, %v1491
        %v6195 = vadd.f32 %v6187, 1e-05
        %v6196 = vadd.f32 %v6188, 1e-05
        %v6197 = vadd.f32 %v6189, 1e-05
        %v6198 = vadd.f32 %v6190, 1e-05
        %v6199 = vadd.f32 %v6191, 1e-05
        %v6200 = vadd.f32 %v6192, 1e-05
        %v6201 = vadd.f32 %v6193, 1e-05
        %v6202 = vadd.f32 %v6194, 1e-05
        %v6203 = vrsqrt.pop %v6195
        %v6204 = vrsqrt.pop %v6196
        %v6205 = vrsqrt.pop %v6197
        %v6206 = vrsqrt.pop %v6198
        %v6207 = vrsqrt.pop %v6199
        %v6208 = vrsqrt.pop %v6200
        %v6209 = vrsqrt.pop %v6201
        %v6210 = vrsqrt.pop %v6202
        %v6211 = vmul.f32 %v6155, %v6203
        %v6212 = vmul.f32 %v6156, %v6204
        %v6213 = vmul.f32 %v6157, %v6205
        %v6214 = vmul.f32 %v6158, %v6206
        %v6215 = vmul.f32 %v6159, %v6207
        %v6216 = vmul.f32 %v6160, %v6208
        %v6217 = vmul.f32 %v6161, %v6209
        %v6218 = vmul.f32 %v6162, %v6210
        %v6220 = vlaneseq
        %v6221 = vshrl.u32 %v6220, 7
        %v6222 = vsub.s32 0, %v6221
        %v6223 = vrot.slane %v6128, %v6222
        %v6225 = vmul.f32 %v6211, %v6223
        %v6226 = vmul.f32 %v6212, %v6223
        %v6227 = vmul.f32 %v6213, %v6223
        %v6228 = vmul.f32 %v6214, %v6223
        %v6229 = vmul.f32 %v6215, %v6223
        %v6230 = vmul.f32 %v6216, %v6223
        %v6231 = vmul.f32 %v6217, %v6223
        %v6232 = vmul.f32 %v6218, %v6223
        %v6234 = vlaneseq
        %v6235 = vshrl.u32 %v6234, 7
        %v6236 = vsub.s32 0, %v6235
        %v6237 = vrot.slane %v6130, %v6236
        %v6239 = vadd.f32 %v6225, %v6237
        %v6240 = vadd.f32 %v6226, %v6237
        %v6241 = vadd.f32 %v6227, %v6237
        %v6242 = vadd.f32 %v6228, %v6237
        %v6243 = vadd.f32 %v6229, %v6237
        %v6244 = vadd.f32 %v6230, %v6237
        %v6245 = vadd.f32 %v6231, %v6237
        %v6246 = vadd.f32 %v6232, %v6237
        %v6247 = vpack.c.bf16 %v6240, %v6239
        %v6248 = vpack.c.bf16 %v6242, %v6241
        %v6249 = vpack.c.bf16 %v6244, %v6243
        %v6250 = vpack.c.bf16 %v6246, %v6245
        %s6251 = scalar_lea.vmem %s13, 256
        %v6252 = vld [vmem:[%s6251] sm:$0xff]
        %v6253 = vld [vmem:[%s6251 + $0x8] sm:$0xff]
        %v6254 = vld [vmem:[%s6251 + $0x10] sm:$0xff]
        %v6255 = vld [vmem:[%s6251 + $0x18] sm:$0xff]
        %v6256 = vld [vmem:[%s6251 + $0x20] sm:$0xff]
        %v6257 = vld [vmem:[%s6251 + $0x28] sm:$0xff]
        %v6258 = vld [vmem:[%s6251 + $0x30] sm:$0xff]
        %v6259 = vld [vmem:[%s6251 + $0x38] sm:$0xff]
        %v6260 = vld [vmem:[%s6251 + $0x40] sm:$0xff]
        %v6261 = vld [vmem:[%s6251 + $0x48] sm:$0xff]
        %v6262 = vld [vmem:[%s6251 + $0x50] sm:$0xff]
        %v6263 = vld [vmem:[%s6251 + $0x58] sm:$0xff]
        %v6264 = vld [vmem:[%s6251 + $0x60] sm:$0xff]
        %v6265 = vld [vmem:[%s6251 + $0x68] sm:$0xff]
        %v6266 = vld [vmem:[%s6251 + $0x70] sm:$0xff]
        %v6267 = vld [vmem:[%s6251 + $0x78] sm:$0xff]
        %v6268 = vld [vmem:[%s6251 + $0x80] sm:$0xff]
        %v6269 = vld [vmem:[%s6251 + $0x88] sm:$0xff]
        %v6270 = vld [vmem:[%s6251 + $0x90] sm:$0xff]
        %v6271 = vld [vmem:[%s6251 + $0x98] sm:$0xff]
        %v6272 = vld [vmem:[%s6251 + $0xa0] sm:$0xff]
        %v6273 = vld [vmem:[%s6251 + $0xa8] sm:$0xff]
        %v6274 = vld [vmem:[%s6251 + $0xb0] sm:$0xff]
        %v6275 = vld [vmem:[%s6251 + $0xb8] sm:$0xff]
        %v6276 = vld [vmem:[%s6251 + $0xc0] sm:$0xff]
        %v6277 = vld [vmem:[%s6251 + $0xc8] sm:$0xff]
        %v6278 = vld [vmem:[%s6251 + $0xd0] sm:$0xff]
        %v6279 = vld [vmem:[%s6251 + $0xd8] sm:$0xff]
        %v6280 = vld [vmem:[%s6251 + $0xe0] sm:$0xff]
        %v6281 = vld [vmem:[%s6251 + $0xe8] sm:$0xff]
        %v6282 = vld [vmem:[%s6251 + $0xf0] sm:$0xff]
        %v6283 = vld [vmem:[%s6251 + $0xf8] sm:$0xff]
        %s6284 = scalar_lea.vmem %s14, 4
        %v6285 = vld [vmem:[%s6284] sm:$0xf]
        %v6287 = vlaneseq
        %v6288 = vshrl.u32 %v6287, 7
        %v6289 = vsub.s32 0, %v6288
        %v6290 = vrot.slane %v6285, %v6289
        %v6291 = vlaneseq
        %v6292 = vshrl.u32 %v6291, 7
        %v6293 = vsub.s32 1, %v6292
        %v6294 = vrot.slane %v6285, %v6293
        %v6295 = vlaneseq
        %v6296 = vshrl.u32 %v6295, 7
        %v6297 = vsub.s32 2, %v6296
        %v6298 = vrot.slane %v6285, %v6297
        %v6299 = vlaneseq
        %v6300 = vshrl.u32 %v6299, 7
        %v6301 = vsub.s32 3, %v6300
        %v6302 = vrot.slane %v6285, %v6301
        %v6339 = vunpack.c.l.b16 %v6252
        %v6340 = vunpack.c.h.b16 %v6252
        %v6341 = vunpack.c.l.b16 %v6253
        %v6342 = vunpack.c.h.b16 %v6253
        %v6343 = vunpack.c.l.b16 %v6254
        %v6344 = vunpack.c.h.b16 %v6254
        %v6345 = vunpack.c.l.b16 %v6255
        %v6346 = vunpack.c.h.b16 %v6255
        %v6347 = vunpack.c.l.b16 %v6256
        %v6348 = vunpack.c.h.b16 %v6256
        %v6349 = vunpack.c.l.b16 %v6257
        %v6350 = vunpack.c.h.b16 %v6257
        %v6351 = vunpack.c.l.b16 %v6258
        %v6352 = vunpack.c.h.b16 %v6258
        %v6353 = vunpack.c.l.b16 %v6259
        %v6354 = vunpack.c.h.b16 %v6259
        %v6355 = vunpack.c.l.b16 %v6260
        %v6356 = vunpack.c.h.b16 %v6260
        %v6357 = vunpack.c.l.b16 %v6261
        %v6358 = vunpack.c.h.b16 %v6261
        %v6359 = vunpack.c.l.b16 %v6262
        %v6360 = vunpack.c.h.b16 %v6262
        %v6361 = vunpack.c.l.b16 %v6263
        %v6362 = vunpack.c.h.b16 %v6263
        %v6363 = vunpack.c.l.b16 %v6264
        %v6364 = vunpack.c.h.b16 %v6264
        %v6365 = vunpack.c.l.b16 %v6265
        %v6366 = vunpack.c.h.b16 %v6265
        %v6367 = vunpack.c.l.b16 %v6266
        %v6368 = vunpack.c.h.b16 %v6266
        %v6369 = vunpack.c.l.b16 %v6267
        %v6370 = vunpack.c.h.b16 %v6267
        %v6371 = vunpack.c.l.b16 %v6268
        %v6372 = vunpack.c.h.b16 %v6268
        %v6373 = vunpack.c.l.b16 %v6269
        %v6374 = vunpack.c.h.b16 %v6269
        %v6375 = vunpack.c.l.b16 %v6270
        %v6376 = vunpack.c.h.b16 %v6270
        %v6377 = vunpack.c.l.b16 %v6271
        %v6378 = vunpack.c.h.b16 %v6271
        %v6379 = vunpack.c.l.b16 %v6272
        %v6380 = vunpack.c.h.b16 %v6272
        %v6381 = vunpack.c.l.b16 %v6273
        %v6382 = vunpack.c.h.b16 %v6273
        %v6383 = vunpack.c.l.b16 %v6274
        %v6384 = vunpack.c.h.b16 %v6274
        %v6385 = vunpack.c.l.b16 %v6275
        %v6386 = vunpack.c.h.b16 %v6275
        %v6387 = vunpack.c.l.b16 %v6276
        %v6388 = vunpack.c.h.b16 %v6276
        %v6389 = vunpack.c.l.b16 %v6277
        %v6390 = vunpack.c.h.b16 %v6277
        %v6391 = vunpack.c.l.b16 %v6278
        %v6392 = vunpack.c.h.b16 %v6278
        %v6393 = vunpack.c.l.b16 %v6279
        %v6394 = vunpack.c.h.b16 %v6279
        %v6395 = vunpack.c.l.b16 %v6280
        %v6396 = vunpack.c.h.b16 %v6280
        %v6397 = vunpack.c.l.b16 %v6281
        %v6398 = vunpack.c.h.b16 %v6281
        %v6399 = vunpack.c.l.b16 %v6282
        %v6400 = vunpack.c.h.b16 %v6282
        %v6401 = vunpack.c.l.b16 %v6283
        %v6402 = vunpack.c.h.b16 %v6283
        %v6403 = vpack.c.b16 %v6343, %v6339
        %v6404 = vpack.c.b16 %v6344, %v6340
        %v6405 = vpack.c.b16 %v6345, %v6341
        %v6406 = vpack.c.b16 %v6346, %v6342
        %v6407 = vpack.c.b16 %v6351, %v6347
        %v6408 = vpack.c.b16 %v6352, %v6348
        %v6409 = vpack.c.b16 %v6353, %v6349
        %v6410 = vpack.c.b16 %v6354, %v6350
        %v6411 = vpack.c.b16 %v6359, %v6355
        %v6412 = vpack.c.b16 %v6360, %v6356
        %v6413 = vpack.c.b16 %v6361, %v6357
        %v6414 = vpack.c.b16 %v6362, %v6358
        %v6415 = vpack.c.b16 %v6367, %v6363
        %v6416 = vpack.c.b16 %v6368, %v6364
        %v6417 = vpack.c.b16 %v6369, %v6365
        %v6418 = vpack.c.b16 %v6370, %v6366
        %v6419 = vpack.c.b16 %v6375, %v6371
        %v6420 = vpack.c.b16 %v6376, %v6372
        %v6421 = vpack.c.b16 %v6377, %v6373
        %v6422 = vpack.c.b16 %v6378, %v6374
        %v6423 = vpack.c.b16 %v6383, %v6379
        %v6424 = vpack.c.b16 %v6384, %v6380
        %v6425 = vpack.c.b16 %v6385, %v6381
        %v6426 = vpack.c.b16 %v6386, %v6382
        %v6427 = vpack.c.b16 %v6391, %v6387
        %v6428 = vpack.c.b16 %v6392, %v6388
        %v6429 = vpack.c.b16 %v6393, %v6389
        %v6430 = vpack.c.b16 %v6394, %v6390
        %v6431 = vpack.c.b16 %v6399, %v6395
        %v6432 = vpack.c.b16 %v6400, %v6396
        %v6433 = vpack.c.b16 %v6401, %v6397
        %v6434 = vpack.c.b16 %v6402, %v6398
        %6467 = vmatprep.subr.bf16.mxu0 %v6432
        %6468 = vmatpush1.bf16.msra.mxu0 %v6431
        %6469 = vmatprep.subr.bf16.mxu0 %v6428
        %6470 = vmatpush1.bf16.msra.mxu0 %v6427
        %6471 = vmatprep.subr.bf16.mxu0 %v6424
        %6472 = vmatpush1.bf16.msra.mxu0 %v6423
        %6473 = vmatprep.subr.bf16.mxu0 %v6420
        %6474 = vmatpush1.bf16.msra.mxu0 %v6419
        %6475 = vmatprep.subr.bf16.mxu0 %v6416
        %6476 = vmatpush1.bf16.msra.mxu0 %v6415
        %6477 = vmatprep.subr.bf16.mxu0 %v6412
        %6478 = vmatpush1.bf16.msra.mxu0 %v6411
        %6479 = vmatprep.subr.bf16.mxu0 %v6408
        %6480 = vmatpush1.bf16.msra.mxu0 %v6407
        %6481 = vmatprep.subr.bf16.mxu0 %v6404
        %6482 = vmatpush1.bf16.msra.mxu0 %v6403
        %6483 = vmatprep.subr.bf16.mxu0 0
        %6484 = vmatpush2.bf16.msra.mxu0 0
        %6485 = vmatprep.subr.bf16.mxu0 0
        %6486 = vmatpush2.bf16.msra.mxu0 0
        %6487 = vmatprep.subr.bf16.mxu0 0
        %6488 = vmatpush2.bf16.msra.mxu0 0
        %6489 = vmatprep.subr.bf16.mxu0 0
        %6490 = vmatpush2.bf16.msra.mxu0 0
        %6491 = vmatprep.subr.bf16.mxu0 0
        %6492 = vmatpush2.bf16.msra.mxu0 0
        %6493 = vmatprep.subr.bf16.mxu0 0
        %6494 = vmatpush2.bf16.msra.mxu0 0
        %6495 = vmatprep.subr.bf16.mxu0 0
        %6496 = vmatpush2.bf16.msra.mxu0 0
        %6497 = vmatprep.subr.bf16.mxu0 0
        %6498 = vmatpush2.bf16.msra.mxu0 0
        %6499 = vmatprep.mubr.bf16.mxu0 0
        %6500 = vmatmul.mubr.bf16.gmra.mxu0 %v6247
        %v6501 = vpop.f32.mrf.mxu0
        %v6502 = vadd.f32 %v6290, %v6501
        %v6503 = vpop.f32.mrf.mxu0
        %v6504 = vadd.f32 %v6294, %v6503
        %v6505 = vpop.f32.mrf.mxu0
        %v6506 = vadd.f32 %v6290, %v6505
        %v6507 = vpop.f32.mrf.mxu0
        %v6508 = vadd.f32 %v6294, %v6507
        %6509 = vmatprep.mubr.bf16.mxu0 0
        %6510 = vmatmul.mubr.bf16.gmra.mxu0 %v6248
        %v6511 = vpop.f32.mrf.mxu0
        %v6512 = vadd.f32 %v6290, %v6511
        %v6513 = vpop.f32.mrf.mxu0
        %v6514 = vadd.f32 %v6294, %v6513
        %v6515 = vpop.f32.mrf.mxu0
        %v6516 = vadd.f32 %v6290, %v6515
        %v6517 = vpop.f32.mrf.mxu0
        %v6518 = vadd.f32 %v6294, %v6517
        %6519 = vmatprep.mubr.bf16.mxu0 0
        %6520 = vmatmul.mubr.bf16.gmra.mxu0 %v6249
        %v6521 = vpop.f32.mrf.mxu0
        %v6522 = vadd.f32 %v6290, %v6521
        %v6523 = vpop.f32.mrf.mxu0
        %v6524 = vadd.f32 %v6294, %v6523
        %v6525 = vpop.f32.mrf.mxu0
        %v6526 = vadd.f32 %v6290, %v6525
        %v6527 = vpop.f32.mrf.mxu0
        %v6528 = vadd.f32 %v6294, %v6527
        %6529 = vmatprep.mubr.bf16.mxu0 0
        %6530 = vmatmul.mubr.bf16.gmra.mxu0 %v6250
        %v6531 = vpop.f32.mrf.mxu0
        %v6532 = vadd.f32 %v6290, %v6531
        %v6533 = vpop.f32.mrf.mxu0
        %v6534 = vadd.f32 %v6294, %v6533
        %v6535 = vpop.f32.mrf.mxu0
        %v6536 = vadd.f32 %v6290, %v6535
        %v6537 = vpop.f32.mrf.mxu0
        %v6538 = vadd.f32 %v6294, %v6537
        %6539 = vdwg.mxu0
        %6540 = vmatprep.subr.bf16.mxu0 %v6434
        %6541 = vmatpush1.bf16.msra.mxu0 %v6433
        %6542 = vmatprep.subr.bf16.mxu0 %v6430
        %6543 = vmatpush1.bf16.msra.mxu0 %v6429
        %6544 = vmatprep.subr.bf16.mxu0 %v6426
        %6545 = vmatpush1.bf16.msra.mxu0 %v6425
        %6546 = vmatprep.subr.bf16.mxu0 %v6422
        %6547 = vmatpush1.bf16.msra.mxu0 %v6421
        %6548 = vmatprep.subr.bf16.mxu0 %v6418
        %6549 = vmatpush1.bf16.msra.mxu0 %v6417
        %6550 = vmatprep.subr.bf16.mxu0 %v6414
        %6551 = vmatpush1.bf16.msra.mxu0 %v6413
        %6552 = vmatprep.subr.bf16.mxu0 %v6410
        %6553 = vmatpush1.bf16.msra.mxu0 %v6409
        %6554 = vmatprep.subr.bf16.mxu0 %v6406
        %6555 = vmatpush1.bf16.msra.mxu0 %v6405
        %6556 = vmatprep.subr.bf16.mxu0 0
        %6557 = vmatpush2.bf16.msra.mxu0 0
        %6558 = vmatprep.subr.bf16.mxu0 0
        %6559 = vmatpush2.bf16.msra.mxu0 0
        %6560 = vmatprep.subr.bf16.mxu0 0
        %6561 = vmatpush2.bf16.msra.mxu0 0
        %6562 = vmatprep.subr.bf16.mxu0 0
        %6563 = vmatpush2.bf16.msra.mxu0 0
        %6564 = vmatprep.subr.bf16.mxu0 0
        %6565 = vmatpush2.bf16.msra.mxu0 0
        %6566 = vmatprep.subr.bf16.mxu0 0
        %6567 = vmatpush2.bf16.msra.mxu0 0
        %6568 = vmatprep.subr.bf16.mxu0 0
        %6569 = vmatpush2.bf16.msra.mxu0 0
        %6570 = vmatprep.subr.bf16.mxu0 0
        %6571 = vmatpush2.bf16.msra.mxu0 0
        %6572 = vmatprep.mubr.bf16.mxu0 0
        %6573 = vmatmul.mubr.bf16.gmra.mxu0 %v6247
        %v6574 = vpop.f32.mrf.mxu0
        %v6575 = vadd.f32 %v6298, %v6574
        %v6576 = vpop.f32.mrf.mxu0
        %v6577 = vadd.f32 %v6302, %v6576
        %v6578 = vpop.f32.mrf.mxu0
        %v6579 = vadd.f32 %v6298, %v6578
        %v6580 = vpop.f32.mrf.mxu0
        %v6581 = vadd.f32 %v6302, %v6580
        %6582 = vmatprep.mubr.bf16.mxu0 0
        %6583 = vmatmul.mubr.bf16.gmra.mxu0 %v6248
        %v6584 = vpop.f32.mrf.mxu0
        %v6585 = vadd.f32 %v6298, %v6584
        %v6586 = vpop.f32.mrf.mxu0
        %v6587 = vadd.f32 %v6302, %v6586
        %v6588 = vpop.f32.mrf.mxu0
        %v6589 = vadd.f32 %v6298, %v6588
        %v6590 = vpop.f32.mrf.mxu0
        %v6591 = vadd.f32 %v6302, %v6590
        %6592 = vmatprep.mubr.bf16.mxu0 0
        %6593 = vmatmul.mubr.bf16.gmra.mxu0 %v6249
        %v6594 = vpop.f32.mrf.mxu0
        %v6595 = vadd.f32 %v6298, %v6594
        %v6596 = vpop.f32.mrf.mxu0
        %v6597 = vadd.f32 %v6302, %v6596
        %v6598 = vpop.f32.mrf.mxu0
        %v6599 = vadd.f32 %v6298, %v6598
        %v6600 = vpop.f32.mrf.mxu0
        %v6601 = vadd.f32 %v6302, %v6600
        %6602 = vmatprep.mubr.bf16.mxu0 0
        %6603 = vmatmul.mubr.bf16.gmra.mxu0 %v6250
        %v6604 = vpop.f32.mrf.mxu0
        %v6605 = vadd.f32 %v6298, %v6604
        %v6606 = vpop.f32.mrf.mxu0
        %v6607 = vadd.f32 %v6302, %v6606
        %v6608 = vpop.f32.mrf.mxu0
        %v6609 = vadd.f32 %v6298, %v6608
        %v6610 = vpop.f32.mrf.mxu0
        %v6611 = vadd.f32 %v6302, %v6610
        %6612 = vdwg.mxu0
        %v6613 = vmul.f32 %v6502, %v6502
        %v6614 = vmul.f32 %v6504, %v6504
        %v6615 = vmul.f32 %v6575, %v6575
        %v6616 = vmul.f32 %v6577, %v6577
        %v6617 = vmul.f32 %v6506, %v6506
        %v6618 = vmul.f32 %v6508, %v6508
        %v6619 = vmul.f32 %v6579, %v6579
        %v6620 = vmul.f32 %v6581, %v6581
        %v6621 = vmul.f32 %v6512, %v6512
        %v6622 = vmul.f32 %v6514, %v6514
        %v6623 = vmul.f32 %v6585, %v6585
        %v6624 = vmul.f32 %v6587, %v6587
        %v6625 = vmul.f32 %v6516, %v6516
        %v6626 = vmul.f32 %v6518, %v6518
        %v6627 = vmul.f32 %v6589, %v6589
        %v6628 = vmul.f32 %v6591, %v6591
        %v6629 = vmul.f32 %v6522, %v6522
        %v6630 = vmul.f32 %v6524, %v6524
        %v6631 = vmul.f32 %v6595, %v6595
        %v6632 = vmul.f32 %v6597, %v6597
        %v6633 = vmul.f32 %v6526, %v6526
        %v6634 = vmul.f32 %v6528, %v6528
        %v6635 = vmul.f32 %v6599, %v6599
        %v6636 = vmul.f32 %v6601, %v6601
        %v6637 = vmul.f32 %v6532, %v6532
        %v6638 = vmul.f32 %v6534, %v6534
        %v6639 = vmul.f32 %v6605, %v6605
        %v6640 = vmul.f32 %v6607, %v6607
        %v6641 = vmul.f32 %v6536, %v6536
        %v6642 = vmul.f32 %v6538, %v6538
        %v6643 = vmul.f32 %v6609, %v6609
        %v6644 = vmul.f32 %v6611, %v6611
        %v6645 = vmul.f32 %v6502, %v6613
        %v6646 = vmul.f32 %v6504, %v6614
        %v6647 = vmul.f32 %v6575, %v6615
        %v6648 = vmul.f32 %v6577, %v6616
        %v6649 = vmul.f32 %v6506, %v6617
        %v6650 = vmul.f32 %v6508, %v6618
        %v6651 = vmul.f32 %v6579, %v6619
        %v6652 = vmul.f32 %v6581, %v6620
        %v6653 = vmul.f32 %v6512, %v6621
        %v6654 = vmul.f32 %v6514, %v6622
        %v6655 = vmul.f32 %v6585, %v6623
        %v6656 = vmul.f32 %v6587, %v6624
        %v6657 = vmul.f32 %v6516, %v6625
        %v6658 = vmul.f32 %v6518, %v6626
        %v6659 = vmul.f32 %v6589, %v6627
        %v6660 = vmul.f32 %v6591, %v6628
        %v6661 = vmul.f32 %v6522, %v6629
        %v6662 = vmul.f32 %v6524, %v6630
        %v6663 = vmul.f32 %v6595, %v6631
        %v6664 = vmul.f32 %v6597, %v6632
        %v6665 = vmul.f32 %v6526, %v6633
        %v6666 = vmul.f32 %v6528, %v6634
        %v6667 = vmul.f32 %v6599, %v6635
        %v6668 = vmul.f32 %v6601, %v6636
        %v6669 = vmul.f32 %v6532, %v6637
        %v6670 = vmul.f32 %v6534, %v6638
        %v6671 = vmul.f32 %v6605, %v6639
        %v6672 = vmul.f32 %v6607, %v6640
        %v6673 = vmul.f32 %v6536, %v6641
        %v6674 = vmul.f32 %v6538, %v6642
        %v6675 = vmul.f32 %v6609, %v6643
        %v6676 = vmul.f32 %v6611, %v6644
        %v6677 = vmul.f32 %v6645, 0.044715
        %v6678 = vmul.f32 %v6646, 0.044715
        %v6679 = vmul.f32 %v6647, 0.044715
        %v6680 = vmul.f32 %v6648, 0.044715
        %v6681 = vmul.f32 %v6649, 0.044715
        %v6682 = vmul.f32 %v6650, 0.044715
        %v6683 = vmul.f32 %v6651, 0.044715
        %v6684 = vmul.f32 %v6652, 0.044715
        %v6685 = vmul.f32 %v6653, 0.044715
        %v6686 = vmul.f32 %v6654, 0.044715
        %v6687 = vmul.f32 %v6655, 0.044715
        %v6688 = vmul.f32 %v6656, 0.044715
        %v6689 = vmul.f32 %v6657, 0.044715
        %v6690 = vmul.f32 %v6658, 0.044715
        %v6691 = vmul.f32 %v6659, 0.044715
        %v6692 = vmul.f32 %v6660, 0.044715
        %v6693 = vmul.f32 %v6661, 0.044715
        %v6694 = vmul.f32 %v6662, 0.044715
        %v6695 = vmul.f32 %v6663, 0.044715
        %v6696 = vmul.f32 %v6664, 0.044715
        %v6697 = vmul.f32 %v6665, 0.044715
        %v6698 = vmul.f32 %v6666, 0.044715
        %v6699 = vmul.f32 %v6667, 0.044715
        %v6700 = vmul.f32 %v6668, 0.044715
        %v6701 = vmul.f32 %v6669, 0.044715
        %v6702 = vmul.f32 %v6670, 0.044715
        %v6703 = vmul.f32 %v6671, 0.044715
        %v6704 = vmul.f32 %v6672, 0.044715
        %v6705 = vmul.f32 %v6673, 0.044715
        %v6706 = vmul.f32 %v6674, 0.044715
        %v6707 = vmul.f32 %v6675, 0.044715
        %v6708 = vmul.f32 %v6676, 0.044715
        %v6709 = vadd.f32 %v6502, %v6677
        %v6710 = vadd.f32 %v6504, %v6678
        %v6711 = vadd.f32 %v6575, %v6679
        %v6712 = vadd.f32 %v6577, %v6680
        %v6713 = vadd.f32 %v6506, %v6681
        %v6714 = vadd.f32 %v6508, %v6682
        %v6715 = vadd.f32 %v6579, %v6683
        %v6716 = vadd.f32 %v6581, %v6684
        %v6717 = vadd.f32 %v6512, %v6685
        %v6718 = vadd.f32 %v6514, %v6686
        %v6719 = vadd.f32 %v6585, %v6687
        %v6720 = vadd.f32 %v6587, %v6688
        %v6721 = vadd.f32 %v6516, %v6689
        %v6722 = vadd.f32 %v6518, %v6690
        %v6723 = vadd.f32 %v6589, %v6691
        %v6724 = vadd.f32 %v6591, %v6692
        %v6725 = vadd.f32 %v6522, %v6693
        %v6726 = vadd.f32 %v6524, %v6694
        %v6727 = vadd.f32 %v6595, %v6695
        %v6728 = vadd.f32 %v6597, %v6696
        %v6729 = vadd.f32 %v6526, %v6697
        %v6730 = vadd.f32 %v6528, %v6698
        %v6731 = vadd.f32 %v6599, %v6699
        %v6732 = vadd.f32 %v6601, %v6700
        %v6733 = vadd.f32 %v6532, %v6701
        %v6734 = vadd.f32 %v6534, %v6702
        %v6735 = vadd.f32 %v6605, %v6703
        %v6736 = vadd.f32 %v6607, %v6704
        %v6737 = vadd.f32 %v6536, %v6705
        %v6738 = vadd.f32 %v6538, %v6706
        %v6739 = vadd.f32 %v6609, %v6707
        %v6740 = vadd.f32 %v6611, %v6708
        %v6741 = vmul.f32 %v6709, 0.7978846
        %v6742 = vmul.f32 %v6710, 0.7978846
        %v6743 = vmul.f32 %v6711, 0.7978846
        %v6744 = vmul.f32 %v6712, 0.7978846
        %v6745 = vmul.f32 %v6713, 0.7978846
        %v6746 = vmul.f32 %v6714, 0.7978846
        %v6747 = vmul.f32 %v6715, 0.7978846
        %v6748 = vmul.f32 %v6716, 0.7978846
        %v6749 = vmul.f32 %v6717, 0.7978846
        %v6750 = vmul.f32 %v6718, 0.7978846
        %v6751 = vmul.f32 %v6719, 0.7978846
        %v6752 = vmul.f32 %v6720, 0.7978846
        %v6753 = vmul.f32 %v6721, 0.7978846
        %v6754 = vmul.f32 %v6722, 0.7978846
        %v6755 = vmul.f32 %v6723, 0.7978846
        %v6756 = vmul.f32 %v6724, 0.7978846
        %v6757 = vmul.f32 %v6725, 0.7978846
        %v6758 = vmul.f32 %v6726, 0.7978846
        %v6759 = vmul.f32 %v6727, 0.7978846
        %v6760 = vmul.f32 %v6728, 0.7978846
        %v6761 = vmul.f32 %v6729, 0.7978846
        %v6762 = vmul.f32 %v6730, 0.7978846
        %v6763 = vmul.f32 %v6731, 0.7978846
        %v6764 = vmul.f32 %v6732, 0.7978846
        %v6765 = vmul.f32 %v6733, 0.7978846
        %v6766 = vmul.f32 %v6734, 0.7978846
        %v6767 = vmul.f32 %v6735, 0.7978846
        %v6768 = vmul.f32 %v6736, 0.7978846
        %v6769 = vmul.f32 %v6737, 0.7978846
        %v6770 = vmul.f32 %v6738, 0.7978846
        %v6771 = vmul.f32 %v6739, 0.7978846
        %v6772 = vmul.f32 %v6740, 0.7978846
        %v6773 = vtanh.pop %v6741
        %v6774 = vtanh.pop %v6742
        %v6775 = vtanh.pop %v6743
        %v6776 = vtanh.pop %v6744
        %v6777 = vtanh.pop %v6745
        %v6778 = vtanh.pop %v6746
        %v6779 = vtanh.pop %v6747
        %v6780 = vtanh.pop %v6748
        %v6781 = vtanh.pop %v6749
        %v6782 = vtanh.pop %v6750
        %v6783 = vtanh.pop %v6751
        %v6784 = vtanh.pop %v6752
        %v6785 = vtanh.pop %v6753
        %v6786 = vtanh.pop %v6754
        %v6787 = vtanh.pop %v6755
        %v6788 = vtanh.pop %v6756
        %v6789 = vtanh.pop %v6757
        %v6790 = vtanh.pop %v6758
        %v6791 = vtanh.pop %v6759
        %v6792 = vtanh.pop %v6760
        %v6793 = vtanh.pop %v6761
        %v6794 = vtanh.pop %v6762
        %v6795 = vtanh.pop %v6763
        %v6796 = vtanh.pop %v6764
        %v6797 = vtanh.pop %v6765
        %v6798 = vtanh.pop %v6766
        %v6799 = vtanh.pop %v6767
        %v6800 = vtanh.pop %v6768
        %v6801 = vtanh.pop %v6769
        %v6802 = vtanh.pop %v6770
        %v6803 = vtanh.pop %v6771
        %v6804 = vtanh.pop %v6772
        %v6805 = vadd.f32 %v6773, 1.0
        %v6806 = vadd.f32 %v6774, 1.0
        %v6807 = vadd.f32 %v6775, 1.0
        %v6808 = vadd.f32 %v6776, 1.0
        %v6809 = vadd.f32 %v6777, 1.0
        %v6810 = vadd.f32 %v6778, 1.0
        %v6811 = vadd.f32 %v6779, 1.0
        %v6812 = vadd.f32 %v6780, 1.0
        %v6813 = vadd.f32 %v6781, 1.0
        %v6814 = vadd.f32 %v6782, 1.0
        %v6815 = vadd.f32 %v6783, 1.0
        %v6816 = vadd.f32 %v6784, 1.0
        %v6817 = vadd.f32 %v6785, 1.0
        %v6818 = vadd.f32 %v6786, 1.0
        %v6819 = vadd.f32 %v6787, 1.0
        %v6820 = vadd.f32 %v6788, 1.0
        %v6821 = vadd.f32 %v6789, 1.0
        %v6822 = vadd.f32 %v6790, 1.0
        %v6823 = vadd.f32 %v6791, 1.0
        %v6824 = vadd.f32 %v6792, 1.0
        %v6825 = vadd.f32 %v6793, 1.0
        %v6826 = vadd.f32 %v6794, 1.0
        %v6827 = vadd.f32 %v6795, 1.0
        %v6828 = vadd.f32 %v6796, 1.0
        %v6829 = vadd.f32 %v6797, 1.0
        %v6830 = vadd.f32 %v6798, 1.0
        %v6831 = vadd.f32 %v6799, 1.0
        %v6832 = vadd.f32 %v6800, 1.0
        %v6833 = vadd.f32 %v6801, 1.0
        %v6834 = vadd.f32 %v6802, 1.0
        %v6835 = vadd.f32 %v6803, 1.0
        %v6836 = vadd.f32 %v6804, 1.0
        %v6837 = vmul.f32 %v6805, 0.5
        %v6838 = vmul.f32 %v6806, 0.5
        %v6839 = vmul.f32 %v6807, 0.5
        %v6840 = vmul.f32 %v6808, 0.5
        %v6841 = vmul.f32 %v6809, 0.5
        %v6842 = vmul.f32 %v6810, 0.5
        %v6843 = vmul.f32 %v6811, 0.5
        %v6844 = vmul.f32 %v6812, 0.5
        %v6845 = vmul.f32 %v6813, 0.5
        %v6846 = vmul.f32 %v6814, 0.5
        %v6847 = vmul.f32 %v6815, 0.5
        %v6848 = vmul.f32 %v6816, 0.5
        %v6849 = vmul.f32 %v6817, 0.5
        %v6850 = vmul.f32 %v6818, 0.5
        %v6851 = vmul.f32 %v6819, 0.5
        %v6852 = vmul.f32 %v6820, 0.5
        %v6853 = vmul.f32 %v6821, 0.5
        %v6854 = vmul.f32 %v6822, 0.5
        %v6855 = vmul.f32 %v6823, 0.5
        %v6856 = vmul.f32 %v6824, 0.5
        %v6857 = vmul.f32 %v6825, 0.5
        %v6858 = vmul.f32 %v6826, 0.5
        %v6859 = vmul.f32 %v6827, 0.5
        %v6860 = vmul.f32 %v6828, 0.5
        %v6861 = vmul.f32 %v6829, 0.5
        %v6862 = vmul.f32 %v6830, 0.5
        %v6863 = vmul.f32 %v6831, 0.5
        %v6864 = vmul.f32 %v6832, 0.5
        %v6865 = vmul.f32 %v6833, 0.5
        %v6866 = vmul.f32 %v6834, 0.5
        %v6867 = vmul.f32 %v6835, 0.5
        %v6868 = vmul.f32 %v6836, 0.5
        %v6869 = vmul.f32 %v6502, %v6837
        %v6870 = vmul.f32 %v6504, %v6838
        %v6871 = vmul.f32 %v6575, %v6839
        %v6872 = vmul.f32 %v6577, %v6840
        %v6873 = vmul.f32 %v6506, %v6841
        %v6874 = vmul.f32 %v6508, %v6842
        %v6875 = vmul.f32 %v6579, %v6843
        %v6876 = vmul.f32 %v6581, %v6844
        %v6877 = vmul.f32 %v6512, %v6845
        %v6878 = vmul.f32 %v6514, %v6846
        %v6879 = vmul.f32 %v6585, %v6847
        %v6880 = vmul.f32 %v6587, %v6848
        %v6881 = vmul.f32 %v6516, %v6849
        %v6882 = vmul.f32 %v6518, %v6850
        %v6883 = vmul.f32 %v6589, %v6851
        %v6884 = vmul.f32 %v6591, %v6852
        %v6885 = vmul.f32 %v6522, %v6853
        %v6886 = vmul.f32 %v6524, %v6854
        %v6887 = vmul.f32 %v6595, %v6855
        %v6888 = vmul.f32 %v6597, %v6856
        %v6889 = vmul.f32 %v6526, %v6857
        %v6890 = vmul.f32 %v6528, %v6858
        %v6891 = vmul.f32 %v6599, %v6859
        %v6892 = vmul.f32 %v6601, %v6860
        %v6893 = vmul.f32 %v6532, %v6861
        %v6894 = vmul.f32 %v6534, %v6862
        %v6895 = vmul.f32 %v6605, %v6863
        %v6896 = vmul.f32 %v6607, %v6864
        %v6897 = vmul.f32 %v6536, %v6865
        %v6898 = vmul.f32 %v6538, %v6866
        %v6899 = vmul.f32 %v6609, %v6867
        %v6900 = vmul.f32 %v6611, %v6868
        %v6901 = vpack.c.bf16 %v6873, %v6869
        %v6902 = vpack.c.bf16 %v6874, %v6870
        %v6903 = vpack.c.bf16 %v6875, %v6871
        %v6904 = vpack.c.bf16 %v6876, %v6872
        %v6905 = vpack.c.bf16 %v6881, %v6877
        %v6906 = vpack.c.bf16 %v6882, %v6878
        %v6907 = vpack.c.bf16 %v6883, %v6879
        %v6908 = vpack.c.bf16 %v6884, %v6880
        %v6909 = vpack.c.bf16 %v6889, %v6885
        %v6910 = vpack.c.bf16 %v6890, %v6886
        %v6911 = vpack.c.bf16 %v6891, %v6887
        %v6912 = vpack.c.bf16 %v6892, %v6888
        %v6913 = vpack.c.bf16 %v6897, %v6893
        %v6914 = vpack.c.bf16 %v6898, %v6894
        %v6915 = vpack.c.bf16 %v6899, %v6895
        %v6916 = vpack.c.bf16 %v6900, %v6896
        %s6917 = scalar_lea.vmem %s15, 256
        %v6918 = vld [vmem:[%s6917] sm:$0xf]
        %v6919 = vld [vmem:[%s6917 + $0x4] sm:$0xf]
        %v6920 = vld [vmem:[%s6917 + $0x8] sm:$0xf]
        %v6921 = vld [vmem:[%s6917 + $0xc] sm:$0xf]
        %v6922 = vld [vmem:[%s6917 + $0x10] sm:$0xf]
        %v6923 = vld [vmem:[%s6917 + $0x14] sm:$0xf]
        %v6924 = vld [vmem:[%s6917 + $0x18] sm:$0xf]
        %v6925 = vld [vmem:[%s6917 + $0x1c] sm:$0xf]
        %v6926 = vld [vmem:[%s6917 + $0x20] sm:$0xf]
        %v6927 = vld [vmem:[%s6917 + $0x24] sm:$0xf]
        %v6928 = vld [vmem:[%s6917 + $0x28] sm:$0xf]
        %v6929 = vld [vmem:[%s6917 + $0x2c] sm:$0xf]
        %v6930 = vld [vmem:[%s6917 + $0x30] sm:$0xf]
        %v6931 = vld [vmem:[%s6917 + $0x34] sm:$0xf]
        %v6932 = vld [vmem:[%s6917 + $0x38] sm:$0xf]
        %v6933 = vld [vmem:[%s6917 + $0x3c] sm:$0xf]
        %v6934 = vld [vmem:[%s6917 + $0x40] sm:$0xf]
        %v6935 = vld [vmem:[%s6917 + $0x44] sm:$0xf]
        %v6936 = vld [vmem:[%s6917 + $0x48] sm:$0xf]
        %v6937 = vld [vmem:[%s6917 + $0x4c] sm:$0xf]
        %v6938 = vld [vmem:[%s6917 + $0x50] sm:$0xf]
        %v6939 = vld [vmem:[%s6917 + $0x54] sm:$0xf]
        %v6940 = vld [vmem:[%s6917 + $0x58] sm:$0xf]
        %v6941 = vld [vmem:[%s6917 + $0x5c] sm:$0xf]
        %v6942 = vld [vmem:[%s6917 + $0x60] sm:$0xf]
        %v6943 = vld [vmem:[%s6917 + $0x64] sm:$0xf]
        %v6944 = vld [vmem:[%s6917 + $0x68] sm:$0xf]
        %v6945 = vld [vmem:[%s6917 + $0x6c] sm:$0xf]
        %v6946 = vld [vmem:[%s6917 + $0x70] sm:$0xf]
        %v6947 = vld [vmem:[%s6917 + $0x74] sm:$0xf]
        %v6948 = vld [vmem:[%s6917 + $0x78] sm:$0xf]
        %v6949 = vld [vmem:[%s6917 + $0x7c] sm:$0xf]
        %v6950 = vld [vmem:[%s6917 + $0x80] sm:$0xf]
        %v6951 = vld [vmem:[%s6917 + $0x84] sm:$0xf]
        %v6952 = vld [vmem:[%s6917 + $0x88] sm:$0xf]
        %v6953 = vld [vmem:[%s6917 + $0x8c] sm:$0xf]
        %v6954 = vld [vmem:[%s6917 + $0x90] sm:$0xf]
        %v6955 = vld [vmem:[%s6917 + $0x94] sm:$0xf]
        %v6956 = vld [vmem:[%s6917 + $0x98] sm:$0xf]
        %v6957 = vld [vmem:[%s6917 + $0x9c] sm:$0xf]
        %v6958 = vld [vmem:[%s6917 + $0xa0] sm:$0xf]
        %v6959 = vld [vmem:[%s6917 + $0xa4] sm:$0xf]
        %v6960 = vld [vmem:[%s6917 + $0xa8] sm:$0xf]
        %v6961 = vld [vmem:[%s6917 + $0xac] sm:$0xf]
        %v6962 = vld [vmem:[%s6917 + $0xb0] sm:$0xf]
        %v6963 = vld [vmem:[%s6917 + $0xb4] sm:$0xf]
        %v6964 = vld [vmem:[%s6917 + $0xb8] sm:$0xf]
        %v6965 = vld [vmem:[%s6917 + $0xbc] sm:$0xf]
        %v6966 = vld [vmem:[%s6917 + $0xc0] sm:$0xf]
        %v6967 = vld [vmem:[%s6917 + $0xc4] sm:$0xf]
        %v6968 = vld [vmem:[%s6917 + $0xc8] sm:$0xf]
        %v6969 = vld [vmem:[%s6917 + $0xcc] sm:$0xf]
        %v6970 = vld [vmem:[%s6917 + $0xd0] sm:$0xf]
        %v6971 = vld [vmem:[%s6917 + $0xd4] sm:$0xf]
        %v6972 = vld [vmem:[%s6917 + $0xd8] sm:$0xf]
        %v6973 = vld [vmem:[%s6917 + $0xdc] sm:$0xf]
        %v6974 = vld [vmem:[%s6917 + $0xe0] sm:$0xf]
        %v6975 = vld [vmem:[%s6917 + $0xe4] sm:$0xf]
        %v6976 = vld [vmem:[%s6917 + $0xe8] sm:$0xf]
        %v6977 = vld [vmem:[%s6917 + $0xec] sm:$0xf]
        %v6978 = vld [vmem:[%s6917 + $0xf0] sm:$0xf]
        %v6979 = vld [vmem:[%s6917 + $0xf4] sm:$0xf]
        %v6980 = vld [vmem:[%s6917 + $0xf8] sm:$0xf]
        %v6981 = vld [vmem:[%s6917 + $0xfc] sm:$0xf]
        %v7046 = vunpack.c.l.b16 %v6918
        %v7047 = vunpack.c.l.b16 %v6919
        %v7048 = vunpack.c.l.b16 %v6920
        %v7049 = vunpack.c.l.b16 %v6921
        %v7050 = vunpack.c.l.b16 %v6922
        %v7051 = vunpack.c.l.b16 %v6923
        %v7052 = vunpack.c.l.b16 %v6924
        %v7053 = vunpack.c.l.b16 %v6925
        %v7054 = vunpack.c.l.b16 %v6926
        %v7055 = vunpack.c.l.b16 %v6927
        %v7056 = vunpack.c.l.b16 %v6928
        %v7057 = vunpack.c.l.b16 %v6929
        %v7058 = vunpack.c.l.b16 %v6930
        %v7059 = vunpack.c.l.b16 %v6931
        %v7060 = vunpack.c.l.b16 %v6932
        %v7061 = vunpack.c.l.b16 %v6933
        %v7062 = vunpack.c.l.b16 %v6934
        %v7063 = vunpack.c.l.b16 %v6935
        %v7064 = vunpack.c.l.b16 %v6936
        %v7065 = vunpack.c.l.b16 %v6937
        %v7066 = vunpack.c.l.b16 %v6938
        %v7067 = vunpack.c.l.b16 %v6939
        %v7068 = vunpack.c.l.b16 %v6940
        %v7069 = vunpack.c.l.b16 %v6941
        %v7070 = vunpack.c.l.b16 %v6942
        %v7071 = vunpack.c.l.b16 %v6943
        %v7072 = vunpack.c.l.b16 %v6944
        %v7073 = vunpack.c.l.b16 %v6945
        %v7074 = vunpack.c.l.b16 %v6946
        %v7075 = vunpack.c.l.b16 %v6947
        %v7076 = vunpack.c.l.b16 %v6948
        %v7077 = vunpack.c.l.b16 %v6949
        %v7078 = vunpack.c.l.b16 %v6950
        %v7079 = vunpack.c.l.b16 %v6951
        %v7080 = vunpack.c.l.b16 %v6952
        %v7081 = vunpack.c.l.b16 %v6953
        %v7082 = vunpack.c.l.b16 %v6954
        %v7083 = vunpack.c.l.b16 %v6955
        %v7084 = vunpack.c.l.b16 %v6956
        %v7085 = vunpack.c.l.b16 %v6957
        %v7086 = vunpack.c.l.b16 %v6958
        %v7087 = vunpack.c.l.b16 %v6959
        %v7088 = vunpack.c.l.b16 %v6960
        %v7089 = vunpack.c.l.b16 %v6961
        %v7090 = vunpack.c.l.b16 %v6962
        %v7091 = vunpack.c.l.b16 %v6963
        %v7092 = vunpack.c.l.b16 %v6964
        %v7093 = vunpack.c.l.b16 %v6965
        %v7094 = vunpack.c.l.b16 %v6966
        %v7095 = vunpack.c.l.b16 %v6967
        %v7096 = vunpack.c.l.b16 %v6968
        %v7097 = vunpack.c.l.b16 %v6969
        %v7098 = vunpack.c.l.b16 %v6970
        %v7099 = vunpack.c.l.b16 %v6971
        %v7100 = vunpack.c.l.b16 %v6972
        %v7101 = vunpack.c.l.b16 %v6973
        %v7102 = vunpack.c.l.b16 %v6974
        %v7103 = vunpack.c.l.b16 %v6975
        %v7104 = vunpack.c.l.b16 %v6976
        %v7105 = vunpack.c.l.b16 %v6977
        %v7106 = vunpack.c.l.b16 %v6978
        %v7107 = vunpack.c.l.b16 %v6979
        %v7108 = vunpack.c.l.b16 %v6980
        %v7109 = vunpack.c.l.b16 %v6981
        %v7110 = vpack.c.b16 %v7047, %v7046
        %v7111 = vpack.c.b16 %v7049, %v7048
        %v7112 = vpack.c.b16 %v7051, %v7050
        %v7113 = vpack.c.b16 %v7053, %v7052
        %v7114 = vpack.c.b16 %v7055, %v7054
        %v7115 = vpack.c.b16 %v7057, %v7056
        %v7116 = vpack.c.b16 %v7059, %v7058
        %v7117 = vpack.c.b16 %v7061, %v7060
        %v7118 = vpack.c.b16 %v7063, %v7062
        %v7119 = vpack.c.b16 %v7065, %v7064
        %v7120 = vpack.c.b16 %v7067, %v7066
        %v7121 = vpack.c.b16 %v7069, %v7068
        %v7122 = vpack.c.b16 %v7071, %v7070
        %v7123 = vpack.c.b16 %v7073, %v7072
        %v7124 = vpack.c.b16 %v7075, %v7074
        %v7125 = vpack.c.b16 %v7077, %v7076
        %v7126 = vpack.c.b16 %v7079, %v7078
        %v7127 = vpack.c.b16 %v7081, %v7080
        %v7128 = vpack.c.b16 %v7083, %v7082
        %v7129 = vpack.c.b16 %v7085, %v7084
        %v7130 = vpack.c.b16 %v7087, %v7086
        %v7131 = vpack.c.b16 %v7089, %v7088
        %v7132 = vpack.c.b16 %v7091, %v7090
        %v7133 = vpack.c.b16 %v7093, %v7092
        %v7134 = vpack.c.b16 %v7095, %v7094
        %v7135 = vpack.c.b16 %v7097, %v7096
        %v7136 = vpack.c.b16 %v7099, %v7098
        %v7137 = vpack.c.b16 %v7101, %v7100
        %v7138 = vpack.c.b16 %v7103, %v7102
        %v7139 = vpack.c.b16 %v7105, %v7104
        %v7140 = vpack.c.b16 %v7107, %v7106
        %v7141 = vpack.c.b16 %v7109, %v7108
        %7174 = vmatprep.subr.bf16.mxu0 0
        %7175 = vmatpush1.bf16.msra.mxu0 %v7117
        %7176 = vmatprep.subr.bf16.mxu0 0
        %7177 = vmatpush1.bf16.msra.mxu0 %v7116
        %7178 = vmatprep.subr.bf16.mxu0 0
        %7179 = vmatpush1.bf16.msra.mxu0 %v7115
        %7180 = vmatprep.subr.bf16.mxu0 0
        %7181 = vmatpush1.bf16.msra.mxu0 %v7114
        %7182 = vmatprep.subr.bf16.mxu0 0
        %7183 = vmatpush1.bf16.msra.mxu0 %v7113
        %7184 = vmatprep.subr.bf16.mxu0 0
        %7185 = vmatpush1.bf16.msra.mxu0 %v7112
        %7186 = vmatprep.subr.bf16.mxu0 0
        %7187 = vmatpush1.bf16.msra.mxu0 %v7111
        %7188 = vmatprep.subr.bf16.mxu0 0
        %7189 = vmatpush1.bf16.msra.mxu0 %v7110
        %7190 = vmatprep.subr.bf16.mxu0 0
        %7191 = vmatpush2.bf16.msra.mxu0 %v7125
        %7192 = vmatprep.subr.bf16.mxu0 0
        %7193 = vmatpush2.bf16.msra.mxu0 %v7124
        %7194 = vmatprep.subr.bf16.mxu0 0
        %7195 = vmatpush2.bf16.msra.mxu0 %v7123
        %7196 = vmatprep.subr.bf16.mxu0 0
        %7197 = vmatpush2.bf16.msra.mxu0 %v7122
        %7198 = vmatprep.subr.bf16.mxu0 0
        %7199 = vmatpush2.bf16.msra.mxu0 %v7121
        %7200 = vmatprep.subr.bf16.mxu0 0
        %7201 = vmatpush2.bf16.msra.mxu0 %v7120
        %7202 = vmatprep.subr.bf16.mxu0 0
        %7203 = vmatpush2.bf16.msra.mxu0 %v7119
        %7204 = vmatprep.subr.bf16.mxu0 0
        %7205 = vmatpush2.bf16.msra.mxu0 %v7118
        %7206 = vmatprep.mubr.bf16.mxu0 %v6902
        %7207 = vmatmul.mubr.bf16.gmra.mxu0 %v6901
        %v7208 = vpop.f32.mrf.mxu0
        %v7209 = vadd.f32 0.0, %v7208
        %v7210 = vpop.f32.mrf.mxu0
        %v7211 = vpop.f32.mrf.mxu0
        %v7212 = vadd.f32 0.0, %v7211
        %v7213 = vpop.f32.mrf.mxu0
        %7214 = vmatprep.mubr.bf16.mxu0 %v6906
        %7215 = vmatmul.mubr.bf16.gmra.mxu0 %v6905
        %v7216 = vpop.f32.mrf.mxu0
        %v7217 = vadd.f32 0.0, %v7216
        %v7218 = vpop.f32.mrf.mxu0
        %v7219 = vpop.f32.mrf.mxu0
        %v7220 = vadd.f32 0.0, %v7219
        %v7221 = vpop.f32.mrf.mxu0
        %7222 = vmatprep.mubr.bf16.mxu0 %v6910
        %7223 = vmatmul.mubr.bf16.gmra.mxu0 %v6909
        %v7224 = vpop.f32.mrf.mxu0
        %v7225 = vadd.f32 0.0, %v7224
        %v7226 = vpop.f32.mrf.mxu0
        %v7227 = vpop.f32.mrf.mxu0
        %v7228 = vadd.f32 0.0, %v7227
        %v7229 = vpop.f32.mrf.mxu0
        %7230 = vmatprep.mubr.bf16.mxu0 %v6914
        %7231 = vmatmul.mubr.bf16.gmra.mxu0 %v6913
        %v7232 = vpop.f32.mrf.mxu0
        %v7233 = vadd.f32 0.0, %v7232
        %v7234 = vpop.f32.mrf.mxu0
        %v7235 = vpop.f32.mrf.mxu0
        %v7236 = vadd.f32 0.0, %v7235
        %v7237 = vpop.f32.mrf.mxu0
        %7238 = vdwg.mxu0
        %7239 = vmatprep.subr.bf16.mxu0 0
        %7240 = vmatpush1.bf16.msra.mxu0 %v7133
        %7241 = vmatprep.subr.bf16.mxu0 0
        %7242 = vmatpush1.bf16.msra.mxu0 %v7132
        %7243 = vmatprep.subr.bf16.mxu0 0
        %7244 = vmatpush1.bf16.msra.mxu0 %v7131
        %7245 = vmatprep.subr.bf16.mxu0 0
        %7246 = vmatpush1.bf16.msra.mxu0 %v7130
        %7247 = vmatprep.subr.bf16.mxu0 0
        %7248 = vmatpush1.bf16.msra.mxu0 %v7129
        %7249 = vmatprep.subr.bf16.mxu0 0
        %7250 = vmatpush1.bf16.msra.mxu0 %v7128
        %7251 = vmatprep.subr.bf16.mxu0 0
        %7252 = vmatpush1.bf16.msra.mxu0 %v7127
        %7253 = vmatprep.subr.bf16.mxu0 0
        %7254 = vmatpush1.bf16.msra.mxu0 %v7126
        %7255 = vmatprep.subr.bf16.mxu0 0
        %7256 = vmatpush2.bf16.msra.mxu0 %v7141
        %7257 = vmatprep.subr.bf16.mxu0 0
        %7258 = vmatpush2.bf16.msra.mxu0 %v7140
        %7259 = vmatprep.subr.bf16.mxu0 0
        %7260 = vmatpush2.bf16.msra.mxu0 %v7139
        %7261 = vmatprep.subr.bf16.mxu0 0
        %7262 = vmatpush2.bf16.msra.mxu0 %v7138
        %7263 = vmatprep.subr.bf16.mxu0 0
        %7264 = vmatpush2.bf16.msra.mxu0 %v7137
        %7265 = vmatprep.subr.bf16.mxu0 0
        %7266 = vmatpush2.bf16.msra.mxu0 %v7136
        %7267 = vmatprep.subr.bf16.mxu0 0
        %7268 = vmatpush2.bf16.msra.mxu0 %v7135
        %7269 = vmatprep.subr.bf16.mxu0 0
        %7270 = vmatpush2.bf16.msra.mxu0 %v7134
        %7271 = vmatprep.mubr.bf16.mxu0 %v6904
        %7272 = vmatmul.mubr.bf16.gmra.mxu0 %v6903
        %v7273 = vpop.f32.mrf.mxu0
        %v7274 = vadd.f32 %v7209, %v7273
        %v7275 = vpop.f32.mrf.mxu0
        %v7276 = vpop.f32.mrf.mxu0
        %v7277 = vadd.f32 %v7212, %v7276
        %v7278 = vpop.f32.mrf.mxu0
        %7279 = vmatprep.mubr.bf16.mxu0 %v6908
        %7280 = vmatmul.mubr.bf16.gmra.mxu0 %v6907
        %v7281 = vpop.f32.mrf.mxu0
        %v7282 = vadd.f32 %v7217, %v7281
        %v7283 = vpop.f32.mrf.mxu0
        %v7284 = vpop.f32.mrf.mxu0
        %v7285 = vadd.f32 %v7220, %v7284
        %v7286 = vpop.f32.mrf.mxu0
        %7287 = vmatprep.mubr.bf16.mxu0 %v6912
        %7288 = vmatmul.mubr.bf16.gmra.mxu0 %v6911
        %v7289 = vpop.f32.mrf.mxu0
        %v7290 = vadd.f32 %v7225, %v7289
        %v7291 = vpop.f32.mrf.mxu0
        %v7292 = vpop.f32.mrf.mxu0
        %v7293 = vadd.f32 %v7228, %v7292
        %v7294 = vpop.f32.mrf.mxu0
        %7295 = vmatprep.mubr.bf16.mxu0 %v6916
        %7296 = vmatmul.mubr.bf16.gmra.mxu0 %v6915
        %v7297 = vpop.f32.mrf.mxu0
        %v7298 = vadd.f32 %v7233, %v7297
        %v7299 = vpop.f32.mrf.mxu0
        %v7300 = vpop.f32.mrf.mxu0
        %v7301 = vadd.f32 %v7236, %v7300
        %v7302 = vpop.f32.mrf.mxu0
        %7303 = vdwg.mxu0
        %v7304 = vadd.f32 %v6119, %v7274
        %v7305 = vadd.f32 %v6120, %v7277
        %v7306 = vadd.f32 %v6121, %v7282
        %v7307 = vadd.f32 %v6122, %v7285
        %v7308 = vadd.f32 %v6123, %v7290
        %v7309 = vadd.f32 %v6124, %v7293
        %v7310 = vadd.f32 %v6125, %v7298
        %v7311 = vadd.f32 %v6126, %v7301
        %s7312 = scalar_lea.vmem %s16, 1
        %v7313 = vld [vmem:[%s7312] sm:$0x1]
        %v7315 = vlaneseq
        %v7316 = vshrl.u32 %v7315, 7
        %v7317 = vsub.s32 0, %v7316
        %v7318 = vrot.slane %v7313, %v7317
        %v7320 = vadd.f32 %v7304, %v7318
        %v7321 = vadd.f32 %v7305, %v7318
        %v7322 = vadd.f32 %v7306, %v7318
        %v7323 = vadd.f32 %v7307, %v7318
        %v7324 = vadd.f32 %v7308, %v7318
        %v7325 = vadd.f32 %v7309, %v7318
        %v7326 = vadd.f32 %v7310, %v7318
        %v7327 = vadd.f32 %v7311, %v7318
        %v7328 = vmul.u32 %v1593, 8
        %vm7329 = vcmp.eq.s32.totalorder %v1602, %v7328
        %v7330 = vsel %vm7329, 1, 0
        %v7331 = vcvt.s32.f32 %v7330
        %v7332 = vpack.c.bf16 %v7331, %v7331
        %v7333 = vpack.c.bf16 %v7321, %v7320
        %v7334 = vpack.c.bf16 %v7323, %v7322
        %v7335 = vpack.c.bf16 %v7325, %v7324
        %v7336 = vpack.c.bf16 %v7327, %v7326
        %v7338 = vsel %vm2162, %v7332, 0
        %7340 = vmatprep.subr.bf16.mxu0 0
        %7341 = vmatpush1.bf16.msra.mxu0 0
        %7342 = vmatprep.subr.bf16.mxu0 0
        %7343 = vmatpush1.bf16.msra.mxu0 0
        %7344 = vmatprep.subr.bf16.mxu0 0
        %7345 = vmatpush1.bf16.msra.mxu0 0
        %7346 = vmatprep.subr.bf16.mxu0 0
        %7347 = vmatpush1.bf16.msra.mxu0 0
        %7348 = vmatprep.subr.bf16.mxu0 0
        %7349 = vmatpush1.bf16.msra.mxu0 %v7336
        %7350 = vmatprep.subr.bf16.mxu0 0
        %7351 = vmatpush1.bf16.msra.mxu0 %v7335
        %7352 = vmatprep.subr.bf16.mxu0 0
        %7353 = vmatpush1.bf16.msra.mxu0 %v7334
        %7354 = vmatprep.subr.bf16.mxu0 0
        %7355 = vmatpush1.bf16.msra.mxu0 %v7333
        %7356 = vmatprep.subr.bf16.mxu0 0
        %7357 = vmatpush2.bf16.msra.mxu0 0
        %7358 = vmatprep.subr.bf16.mxu0 0
        %7359 = vmatpush2.bf16.msra.mxu0 0
        %7360 = vmatprep.subr.bf16.mxu0 0
        %7361 = vmatpush2.bf16.msra.mxu0 0
        %7362 = vmatprep.subr.bf16.mxu0 0
        %7363 = vmatpush2.bf16.msra.mxu0 0
        %7364 = vmatprep.subr.bf16.mxu0 0
        %7365 = vmatpush2.bf16.msra.mxu0 0
        %7366 = vmatprep.subr.bf16.mxu0 0
        %7367 = vmatpush2.bf16.msra.mxu0 0
        %7368 = vmatprep.subr.bf16.mxu0 0
        %7369 = vmatpush2.bf16.msra.mxu0 0
        %7370 = vmatprep.subr.bf16.mxu0 0
        %7371 = vmatpush2.bf16.msra.mxu0 0
        %7372 = vmatprep.mubr.bf16.mxu0 0
        %7373 = vmatmul.mubr.bf16.gmra.mxu0 %v7338
        %v7374 = vpop.f32.mrf.mxu0
        %v7375 = vadd.f32 0.0, %v7374
        %v7376 = vpop.f32.mrf.mxu0
        %v7377 = vpop.f32.mrf.mxu0
        %v7378 = vpop.f32.mrf.mxu0
        %7379 = vdwg.mxu0
        %v7380 = vld [vmem:[%s17] sm:$0x1]
        %v7381 = vld [vmem:[%s18] sm:$0x1]
        %7382 = vadd.xlane.f32.xlu0 %v7375
        %v7383 = vpop.xlane.xlu0 %7382
        %v7384 = vmul.f32 %v7383, %v1491
        %v7385 = vsub.f32 %v7375, %v7384
        %v7386 = vmul.f32 %v7385, %v7385
        %7387 = vadd.xlane.f32.xlu0 %v7386
        %v7388 = vpop.xlane.xlu0 %7387
        %v7389 = vmul.f32 %v7388, %v1491
        %v7390 = vadd.f32 %v7389, 1e-05
        %v7391 = vrsqrt.pop %v7390
        %v7392 = vmul.f32 %v7385, %v7391
        %v7394 = vlaneseq
        %v7395 = vshrl.u32 %v7394, 7
        %v7396 = vsub.s32 0, %v7395
        %v7397 = vrot.slane %v7380, %v7396
        %v7399 = vmul.f32 %v7392, %v7397
        %v7401 = vlaneseq
        %v7402 = vshrl.u32 %v7401, 7
        %v7403 = vsub.s32 0, %v7402
        %v7404 = vrot.slane %v7381, %v7403
        %v7406 = vadd.f32 %v7399, %v7404
        %v7407 = vpack.c.bf16 %v7406, %v7406
        %v7408 = vld [vmem:[%s19] sm:$0xff]
        %v7409 = vld [vmem:[%s19 + $0x8] sm:$0xff]
        %v7410 = vld [vmem:[%s19 + $0x10] sm:$0xff]
        %v7411 = vld [vmem:[%s19 + $0x18] sm:$0xff]
        %v7412 = vld [vmem:[%s19 + $0x20] sm:$0xff]
        %v7413 = vld [vmem:[%s19 + $0x28] sm:$0xff]
        %v7414 = vld [vmem:[%s19 + $0x30] sm:$0xff]
        %v7415 = vld [vmem:[%s19 + $0x38] sm:$0xff]
        %v7416 = vld [vmem:[%s19 + $0x40] sm:$0xff]
        %v7417 = vld [vmem:[%s19 + $0x48] sm:$0xff]
        %v7418 = vld [vmem:[%s19 + $0x50] sm:$0xff]
        %v7419 = vld [vmem:[%s19 + $0x58] sm:$0xff]
        %v7420 = vld [vmem:[%s19 + $0x60] sm:$0xff]
        %v7421 = vld [vmem:[%s19 + $0x68] sm:$0xff]
        %v7422 = vld [vmem:[%s19 + $0x70] sm:$0xff]
        %v7423 = vld [vmem:[%s19 + $0x78] sm:$0xff]
        %v7424 = vld [vmem:[%s19 + $0x80] sm:$0xff]
        %v7425 = vld [vmem:[%s19 + $0x88] sm:$0xff]
        %v7426 = vld [vmem:[%s19 + $0x90] sm:$0xff]
        %v7427 = vld [vmem:[%s19 + $0x98] sm:$0xff]
        %v7428 = vld [vmem:[%s19 + $0xa0] sm:$0xff]
        %v7429 = vld [vmem:[%s19 + $0xa8] sm:$0xff]
        %v7430 = vld [vmem:[%s19 + $0xb0] sm:$0xff]
        %v7431 = vld [vmem:[%s19 + $0xb8] sm:$0xff]
        %v7432 = vld [vmem:[%s19 + $0xc0] sm:$0xff]
        %v7433 = vld [vmem:[%s19 + $0xc8] sm:$0xff]
        %v7434 = vld [vmem:[%s19 + $0xd0] sm:$0xff]
        %v7435 = vld [vmem:[%s19 + $0xd8] sm:$0xff]
        %v7436 = vld [vmem:[%s19 + $0xe0] sm:$0xff]
        %v7437 = vld [vmem:[%s19 + $0xe8] sm:$0xff]
        %v7438 = vld [vmem:[%s19 + $0xf0] sm:$0xff]
        %v7439 = vld [vmem:[%s19 + $0xf8] sm:$0xff]
        %v7440 = vld [vmem:[%s19 + $0x100] sm:$0xff]
        %v7441 = vld [vmem:[%s19 + $0x108] sm:$0xff]
        %v7442 = vld [vmem:[%s19 + $0x110] sm:$0xff]
        %v7443 = vld [vmem:[%s19 + $0x118] sm:$0xff]
        %v7444 = vld [vmem:[%s19 + $0x120] sm:$0xff]
        %v7445 = vld [vmem:[%s19 + $0x128] sm:$0xff]
        %v7446 = vld [vmem:[%s19 + $0x130] sm:$0xff]
        %v7447 = vld [vmem:[%s19 + $0x138] sm:$0xff]
        %v7448 = vld [vmem:[%s19 + $0x140] sm:$0xff]
        %v7449 = vld [vmem:[%s19 + $0x148] sm:$0xff]
        %v7450 = vld [vmem:[%s19 + $0x150] sm:$0xff]
        %v7451 = vld [vmem:[%s19 + $0x158] sm:$0xff]
        %v7452 = vld [vmem:[%s19 + $0x160] sm:$0xff]
        %v7453 = vld [vmem:[%s19 + $0x168] sm:$0xff]
        %v7454 = vld [vmem:[%s19 + $0x170] sm:$0xff]
        %v7455 = vld [vmem:[%s19 + $0x178] sm:$0xff]
        %v7456 = vld [vmem:[%s19 + $0x180] sm:$0xff]
        %v7457 = vld [vmem:[%s19 + $0x188] sm:$0xff]
        %v7458 = vld [vmem:[%s19 + $0x190] sm:$0xff]
        %v7459 = vld [vmem:[%s19 + $0x198] sm:$0xff]
        %v7460 = vld [vmem:[%s19 + $0x1a0] sm:$0xff]
        %v7461 = vld [vmem:[%s19 + $0x1a8] sm:$0xff]
        %v7462 = vld [vmem:[%s19 + $0x1b0] sm:$0xff]
        %v7463 = vld [vmem:[%s19 + $0x1b8] sm:$0xff]
        %v7464 = vld [vmem:[%s19 + $0x1c0] sm:$0xff]
        %v7465 = vld [vmem:[%s19 + $0x1c8] sm:$0xff]
        %v7466 = vld [vmem:[%s19 + $0x1d0] sm:$0xff]
        %v7467 = vld [vmem:[%s19 + $0x1d8] sm:$0xff]
        %v7468 = vld [vmem:[%s19 + $0x1e0] sm:$0xff]
        %v7469 = vld [vmem:[%s19 + $0x1e8] sm:$0xff]
        %v7470 = vld [vmem:[%s19 + $0x1f0] sm:$0xff]
        %v7471 = vld [vmem:[%s19 + $0x1f8] sm:$0xff]
        %v7536 = vunpack.c.l.b16 %v7408
        %v7537 = vunpack.c.h.b16 %v7408
        %v7538 = vunpack.c.l.b16 %v7409
        %v7539 = vunpack.c.h.b16 %v7409
        %v7540 = vunpack.c.l.b16 %v7410
        %v7541 = vunpack.c.h.b16 %v7410
        %v7542 = vunpack.c.l.b16 %v7411
        %v7543 = vunpack.c.h.b16 %v7411
        %v7544 = vunpack.c.l.b16 %v7412
        %v7545 = vunpack.c.h.b16 %v7412
        %v7546 = vunpack.c.l.b16 %v7413
        %v7547 = vunpack.c.h.b16 %v7413
        %v7548 = vunpack.c.l.b16 %v7414
        %v7549 = vunpack.c.h.b16 %v7414
        %v7550 = vunpack.c.l.b16 %v7415
        %v7551 = vunpack.c.h.b16 %v7415
        %v7552 = vunpack.c.l.b16 %v7416
        %v7553 = vunpack.c.h.b16 %v7416
        %v7554 = vunpack.c.l.b16 %v7417
        %v7555 = vunpack.c.h.b16 %v7417
        %v7556 = vunpack.c.l.b16 %v7418
        %v7557 = vunpack.c.h.b16 %v7418
        %v7558 = vunpack.c.l.b16 %v7419
        %v7559 = vunpack.c.h.b16 %v7419
        %v7560 = vunpack.c.l.b16 %v7420
        %v7561 = vunpack.c.h.b16 %v7420
        %v7562 = vunpack.c.l.b16 %v7421
        %v7563 = vunpack.c.h.b16 %v7421
        %v7564 = vunpack.c.l.b16 %v7422
        %v7565 = vunpack.c.h.b16 %v7422
        %v7566 = vunpack.c.l.b16 %v7423
        %v7567 = vunpack.c.h.b16 %v7423
        %v7568 = vunpack.c.l.b16 %v7424
        %v7569 = vunpack.c.h.b16 %v7424
        %v7570 = vunpack.c.l.b16 %v7425
        %v7571 = vunpack.c.h.b16 %v7425
        %v7572 = vunpack.c.l.b16 %v7426
        %v7573 = vunpack.c.h.b16 %v7426
        %v7574 = vunpack.c.l.b16 %v7427
        %v7575 = vunpack.c.h.b16 %v7427
        %v7576 = vunpack.c.l.b16 %v7428
        %v7577 = vunpack.c.h.b16 %v7428
        %v7578 = vunpack.c.l.b16 %v7429
        %v7579 = vunpack.c.h.b16 %v7429
        %v7580 = vunpack.c.l.b16 %v7430
        %v7581 = vunpack.c.h.b16 %v7430
        %v7582 = vunpack.c.l.b16 %v7431
        %v7583 = vunpack.c.h.b16 %v7431
        %v7584 = vunpack.c.l.b16 %v7432
        %v7585 = vunpack.c.h.b16 %v7432
        %v7586 = vunpack.c.l.b16 %v7433
        %v7587 = vunpack.c.h.b16 %v7433
        %v7588 = vunpack.c.l.b16 %v7434
        %v7589 = vunpack.c.h.b16 %v7434
        %v7590 = vunpack.c.l.b16 %v7435
        %v7591 = vunpack.c.h.b16 %v7435
        %v7592 = vunpack.c.l.b16 %v7436
        %v7593 = vunpack.c.h.b16 %v7436
        %v7594 = vunpack.c.l.b16 %v7437
        %v7595 = vunpack.c.h.b16 %v7437
        %v7596 = vunpack.c.l.b16 %v7438
        %v7597 = vunpack.c.h.b16 %v7438
        %v7598 = vunpack.c.l.b16 %v7439
        %v7599 = vunpack.c.h.b16 %v7439
        %v7600 = vunpack.c.l.b16 %v7440
        %v7601 = vunpack.c.h.b16 %v7440
        %v7602 = vunpack.c.l.b16 %v7441
        %v7603 = vunpack.c.h.b16 %v7441
        %v7604 = vunpack.c.l.b16 %v7442
        %v7605 = vunpack.c.h.b16 %v7442
        %v7606 = vunpack.c.l.b16 %v7443
        %v7607 = vunpack.c.h.b16 %v7443
        %v7608 = vunpack.c.l.b16 %v7444
        %v7609 = vunpack.c.h.b16 %v7444
        %v7610 = vunpack.c.l.b16 %v7445
        %v7611 = vunpack.c.h.b16 %v7445
        %v7612 = vunpack.c.l.b16 %v7446
        %v7613 = vunpack.c.h.b16 %v7446
        %v7614 = vunpack.c.l.b16 %v7447
        %v7615 = vunpack.c.h.b16 %v7447
        %v7616 = vunpack.c.l.b16 %v7448
        %v7617 = vunpack.c.h.b16 %v7448
        %v7618 = vunpack.c.l.b16 %v7449
        %v7619 = vunpack.c.h.b16 %v7449
        %v7620 = vunpack.c.l.b16 %v7450
        %v7621 = vunpack.c.h.b16 %v7450
        %v7622 = vunpack.c.l.b16 %v7451
        %v7623 = vunpack.c.h.b16 %v7451
        %v7624 = vunpack.c.l.b16 %v7452
        %v7625 = vunpack.c.h.b16 %v7452
        %v7626 = vunpack.c.l.b16 %v7453
        %v7627 = vunpack.c.h.b16 %v7453
        %v7628 = vunpack.c.l.b16 %v7454
        %v7629 = vunpack.c.h.b16 %v7454
        %v7630 = vunpack.c.l.b16 %v7455
        %v7631 = vunpack.c.h.b16 %v7455
        %v7632 = vunpack.c.l.b16 %v7456
        %v7633 = vunpack.c.h.b16 %v7456
        %v7634 = vunpack.c.l.b16 %v7457
        %v7635 = vunpack.c.h.b16 %v7457
        %v7636 = vunpack.c.l.b16 %v7458
        %v7637 = vunpack.c.h.b16 %v7458
        %v7638 = vunpack.c.l.b16 %v7459
        %v7639 = vunpack.c.h.b16 %v7459
        %v7640 = vunpack.c.l.b16 %v7460
        %v7641 = vunpack.c.h.b16 %v7460
        %v7642 = vunpack.c.l.b16 %v7461
        %v7643 = vunpack.c.h.b16 %v7461
        %v7644 = vunpack.c.l.b16 %v7462
        %v7645 = vunpack.c.h.b16 %v7462
        %v7646 = vunpack.c.l.b16 %v7463
        %v7647 = vunpack.c.h.b16 %v7463
        %v7648 = vunpack.c.l.b16 %v7464
        %v7649 = vunpack.c.h.b16 %v7464
        %v7650 = vunpack.c.l.b16 %v7465
        %v7651 = vunpack.c.h.b16 %v7465
        %v7652 = vunpack.c.l.b16 %v7466
        %v7653 = vunpack.c.h.b16 %v7466
        %v7654 = vunpack.c.l.b16 %v7467
        %v7655 = vunpack.c.h.b16 %v7467
        %v7656 = vunpack.c.l.b16 %v7468
        %v7657 = vunpack.c.h.b16 %v7468
        %v7658 = vunpack.c.l.b16 %v7469
        %v7659 = vunpack.c.h.b16 %v7469
        %v7660 = vunpack.c.l.b16 %v7470
        %v7661 = vunpack.c.h.b16 %v7470
        %v7662 = vunpack.c.l.b16 %v7471
        %v7663 = vunpack.c.h.b16 %v7471
        %v7664 = vpack.c.b16 %v7544, %v7536
        %v7665 = vpack.c.b16 %v7545, %v7537
        %v7666 = vpack.c.b16 %v7546, %v7538
        %v7667 = vpack.c.b16 %v7547, %v7539
        %v7668 = vpack.c.b16 %v7548, %v7540
        %v7669 = vpack.c.b16 %v7549, %v7541
        %v7670 = vpack.c.b16 %v7550, %v7542
        %v7671 = vpack.c.b16 %v7551, %v7543
        %v7672 = vpack.c.b16 %v7560, %v7552
        %v7673 = vpack.c.b16 %v7561, %v7553
        %v7674 = vpack.c.b16 %v7562, %v7554
        %v7675 = vpack.c.b16 %v7563, %v7555
        %v7676 = vpack.c.b16 %v7564, %v7556
        %v7677 = vpack.c.b16 %v7565, %v7557
        %v7678 = vpack.c.b16 %v7566, %v7558
        %v7679 = vpack.c.b16 %v7567, %v7559
        %v7680 = vpack.c.b16 %v7576, %v7568
        %v7681 = vpack.c.b16 %v7577, %v7569
        %v7682 = vpack.c.b16 %v7578, %v7570
        %v7683 = vpack.c.b16 %v7579, %v7571
        %v7684 = vpack.c.b16 %v7580, %v7572
        %v7685 = vpack.c.b16 %v7581, %v7573
        %v7686 = vpack.c.b16 %v7582, %v7574
        %v7687 = vpack.c.b16 %v7583, %v7575
        %v7688 = vpack.c.b16 %v7592, %v7584
        %v7689 = vpack.c.b16 %v7593, %v7585
        %v7690 = vpack.c.b16 %v7594, %v7586
        %v7691 = vpack.c.b16 %v7595, %v7587
        %v7692 = vpack.c.b16 %v7596, %v7588
        %v7693 = vpack.c.b16 %v7597, %v7589
        %v7694 = vpack.c.b16 %v7598, %v7590
        %v7695 = vpack.c.b16 %v7599, %v7591
        %v7696 = vpack.c.b16 %v7608, %v7600
        %v7697 = vpack.c.b16 %v7609, %v7601
        %v7698 = vpack.c.b16 %v7610, %v7602
        %v7699 = vpack.c.b16 %v7611, %v7603
        %v7700 = vpack.c.b16 %v7612, %v7604
        %v7701 = vpack.c.b16 %v7613, %v7605
        %v7702 = vpack.c.b16 %v7614, %v7606
        %v7703 = vpack.c.b16 %v7615, %v7607
        %v7704 = vpack.c.b16 %v7624, %v7616
        %v7705 = vpack.c.b16 %v7625, %v7617
        %v7706 = vpack.c.b16 %v7626, %v7618
        %v7707 = vpack.c.b16 %v7627, %v7619
        %v7708 = vpack.c.b16 %v7628, %v7620
        %v7709 = vpack.c.b16 %v7629, %v7621
        %v7710 = vpack.c.b16 %v7630, %v7622
        %v7711 = vpack.c.b16 %v7631, %v7623
        %v7712 = vpack.c.b16 %v7640, %v7632
        %v7713 = vpack.c.b16 %v7641, %v7633
        %v7714 = vpack.c.b16 %v7642, %v7634
        %v7715 = vpack.c.b16 %v7643, %v7635
        %v7716 = vpack.c.b16 %v7644, %v7636
        %v7717 = vpack.c.b16 %v7645, %v7637
        %v7718 = vpack.c.b16 %v7646, %v7638
        %v7719 = vpack.c.b16 %v7647, %v7639
        %v7720 = vpack.c.b16 %v7656, %v7648
        %v7721 = vpack.c.b16 %v7657, %v7649
        %v7722 = vpack.c.b16 %v7658, %v7650
        %v7723 = vpack.c.b16 %v7659, %v7651
        %v7724 = vpack.c.b16 %v7660, %v7652
        %v7725 = vpack.c.b16 %v7661, %v7653
        %v7726 = vpack.c.b16 %v7662, %v7654
        %v7727 = vpack.c.b16 %v7663, %v7655
        %7792 = vmatprep.subr.bf16.mxu0 %v7721
        %7793 = vmatpush1.bf16.msra.mxu0 %v7720
        %7794 = vmatprep.subr.bf16.mxu0 %v7713
        %7795 = vmatpush1.bf16.msra.mxu0 %v7712
        %7796 = vmatprep.subr.bf16.mxu0 %v7705
        %7797 = vmatpush1.bf16.msra.mxu0 %v7704
        %7798 = vmatprep.subr.bf16.mxu0 %v7697
        %7799 = vmatpush1.bf16.msra.mxu0 %v7696
        %7800 = vmatprep.subr.bf16.mxu0 %v7689
        %7801 = vmatpush1.bf16.msra.mxu0 %v7688
        %7802 = vmatprep.subr.bf16.mxu0 %v7681
        %7803 = vmatpush1.bf16.msra.mxu0 %v7680
        %7804 = vmatprep.subr.bf16.mxu0 %v7673
        %7805 = vmatpush1.bf16.msra.mxu0 %v7672
        %7806 = vmatprep.subr.bf16.mxu0 %v7665
        %7807 = vmatpush1.bf16.msra.mxu0 %v7664
        %7808 = vmatprep.subr.bf16.mxu0 0
        %7809 = vmatpush2.bf16.msra.mxu0 0
        %7810 = vmatprep.subr.bf16.mxu0 0
        %7811 = vmatpush2.bf16.msra.mxu0 0
        %7812 = vmatprep.subr.bf16.mxu0 0
        %7813 = vmatpush2.bf16.msra.mxu0 0
        %7814 = vmatprep.subr.bf16.mxu0 0
        %7815 = vmatpush2.bf16.msra.mxu0 0
        %7816 = vmatprep.subr.bf16.mxu0 0
        %7817 = vmatpush2.bf16.msra.mxu0 0
        %7818 = vmatprep.subr.bf16.mxu0 0
        %7819 = vmatpush2.bf16.msra.mxu0 0
        %7820 = vmatprep.subr.bf16.mxu0 0
        %7821 = vmatpush2.bf16.msra.mxu0 0
        %7822 = vmatprep.subr.bf16.mxu0 0
        %7823 = vmatpush2.bf16.msra.mxu0 0
        %7824 = vmatprep.mubr.bf16.mxu0 0
        %7825 = vmatmul.mubr.bf16.gmra.mxu0 %v7407
        %v7826 = vpop.f32.mrf.mxu0
        %v7827 = vadd.f32 0.0, %v7826
        %v7828 = vpop.f32.mrf.mxu0
        %v7829 = vadd.f32 0.0, %v7828
        %v7830 = vpop.f32.mrf.mxu0
        %v7831 = vpop.f32.mrf.mxu0
        %7832 = vdwg.mxu0
        %7833 = vmatprep.subr.bf16.mxu0 %v7723
        %7834 = vmatpush1.bf16.msra.mxu0 %v7722
        %7835 = vmatprep.subr.bf16.mxu0 %v7715
        %7836 = vmatpush1.bf16.msra.mxu0 %v7714
        %7837 = vmatprep.subr.bf16.mxu0 %v7707
        %7838 = vmatpush1.bf16.msra.mxu0 %v7706
        %7839 = vmatprep.subr.bf16.mxu0 %v7699
        %7840 = vmatpush1.bf16.msra.mxu0 %v7698
        %7841 = vmatprep.subr.bf16.mxu0 %v7691
        %7842 = vmatpush1.bf16.msra.mxu0 %v7690
        %7843 = vmatprep.subr.bf16.mxu0 %v7683
        %7844 = vmatpush1.bf16.msra.mxu0 %v7682
        %7845 = vmatprep.subr.bf16.mxu0 %v7675
        %7846 = vmatpush1.bf16.msra.mxu0 %v7674
        %7847 = vmatprep.subr.bf16.mxu0 %v7667
        %7848 = vmatpush1.bf16.msra.mxu0 %v7666
        %7849 = vmatprep.subr.bf16.mxu0 0
        %7850 = vmatpush2.bf16.msra.mxu0 0
        %7851 = vmatprep.subr.bf16.mxu0 0
        %7852 = vmatpush2.bf16.msra.mxu0 0
        %7853 = vmatprep.subr.bf16.mxu0 0
        %7854 = vmatpush2.bf16.msra.mxu0 0
        %7855 = vmatprep.subr.bf16.mxu0 0
        %7856 = vmatpush2.bf16.msra.mxu0 0
        %7857 = vmatprep.subr.bf16.mxu0 0
        %7858 = vmatpush2.bf16.msra.mxu0 0
        %7859 = vmatprep.subr.bf16.mxu0 0
        %7860 = vmatpush2.bf16.msra.mxu0 0
        %7861 = vmatprep.subr.bf16.mxu0 0
        %7862 = vmatpush2.bf16.msra.mxu0 0
        %7863 = vmatprep.subr.bf16.mxu0 0
        %7864 = vmatpush2.bf16.msra.mxu0 0
        %7865 = vmatprep.mubr.bf16.mxu0 0
        %7866 = vmatmul.mubr.bf16.gmra.mxu0 %v7407
        %v7867 = vpop.f32.mrf.mxu0
        %v7868 = vadd.f32 0.0, %v7867
        %v7869 = vpop.f32.mrf.mxu0
        %v7870 = vadd.f32 0.0, %v7869
        %v7871 = vpop.f32.mrf.mxu0
        %v7872 = vpop.f32.mrf.mxu0
        %7873 = vdwg.mxu0
        %7874 = vmatprep.subr.bf16.mxu0 %v7725
        %7875 = vmatpush1.bf16.msra.mxu0 %v7724
        %7876 = vmatprep.subr.bf16.mxu0 %v7717
        %7877 = vmatpush1.bf16.msra.mxu0 %v7716
        %7878 = vmatprep.subr.bf16.mxu0 %v7709
        %7879 = vmatpush1.bf16.msra.mxu0 %v7708
        %7880 = vmatprep.subr.bf16.mxu0 %v7701
        %7881 = vmatpush1.bf16.msra.mxu0 %v7700
        %7882 = vmatprep.subr.bf16.mxu0 %v7693
        %7883 = vmatpush1.bf16.msra.mxu0 %v7692
        %7884 = vmatprep.subr.bf16.mxu0 %v7685
        %7885 = vmatpush1.bf16.msra.mxu0 %v7684
        %7886 = vmatprep.subr.bf16.mxu0 %v7677
        %7887 = vmatpush1.bf16.msra.mxu0 %v7676
        %7888 = vmatprep.subr.bf16.mxu0 %v7669
        %7889 = vmatpush1.bf16.msra.mxu0 %v7668
        %7890 = vmatprep.subr.bf16.mxu0 0
        %7891 = vmatpush2.bf16.msra.mxu0 0
        %7892 = vmatprep.subr.bf16.mxu0 0
        %7893 = vmatpush2.bf16.msra.mxu0 0
        %7894 = vmatprep.subr.bf16.mxu0 0
        %7895 = vmatpush2.bf16.msra.mxu0 0
        %7896 = vmatprep.subr.bf16.mxu0 0
        %7897 = vmatpush2.bf16.msra.mxu0 0
        %7898 = vmatprep.subr.bf16.mxu0 0
        %7899 = vmatpush2.bf16.msra.mxu0 0
        %7900 = vmatprep.subr.bf16.mxu0 0
        %7901 = vmatpush2.bf16.msra.mxu0 0
        %7902 = vmatprep.subr.bf16.mxu0 0
        %7903 = vmatpush2.bf16.msra.mxu0 0
        %7904 = vmatprep.subr.bf16.mxu0 0
        %7905 = vmatpush2.bf16.msra.mxu0 0
        %7906 = vmatprep.mubr.bf16.mxu0 0
        %7907 = vmatmul.mubr.bf16.gmra.mxu0 %v7407
        %v7908 = vpop.f32.mrf.mxu0
        %v7909 = vadd.f32 0.0, %v7908
        %v7910 = vpop.f32.mrf.mxu0
        %v7911 = vadd.f32 0.0, %v7910
        %v7912 = vpop.f32.mrf.mxu0
        %v7913 = vpop.f32.mrf.mxu0
        %7914 = vdwg.mxu0
        %7915 = vmatprep.subr.bf16.mxu0 %v7727
        %7916 = vmatpush1.bf16.msra.mxu0 %v7726
        %7917 = vmatprep.subr.bf16.mxu0 %v7719
        %7918 = vmatpush1.bf16.msra.mxu0 %v7718
        %7919 = vmatprep.subr.bf16.mxu0 %v7711
        %7920 = vmatpush1.bf16.msra.mxu0 %v7710
        %7921 = vmatprep.subr.bf16.mxu0 %v7703
        %7922 = vmatpush1.bf16.msra.mxu0 %v7702
        %7923 = vmatprep.subr.bf16.mxu0 %v7695
        %7924 = vmatpush1.bf16.msra.mxu0 %v7694
        %7925 = vmatprep.subr.bf16.mxu0 %v7687
        %7926 = vmatpush1.bf16.msra.mxu0 %v7686
        %7927 = vmatprep.subr.bf16.mxu0 %v7679
        %7928 = vmatpush1.bf16.msra.mxu0 %v7678
        %7929 = vmatprep.subr.bf16.mxu0 %v7671
        %7930 = vmatpush1.bf16.msra.mxu0 %v7670
        %7931 = vmatprep.subr.bf16.mxu0 0
        %7932 = vmatpush2.bf16.msra.mxu0 0
        %7933 = vmatprep.subr.bf16.mxu0 0
        %7934 = vmatpush2.bf16.msra.mxu0 0
        %7935 = vmatprep.subr.bf16.mxu0 0
        %7936 = vmatpush2.bf16.msra.mxu0 0
        %7937 = vmatprep.subr.bf16.mxu0 0
        %7938 = vmatpush2.bf16.msra.mxu0 0
        %7939 = vmatprep.subr.bf16.mxu0 0
        %7940 = vmatpush2.bf16.msra.mxu0 0
        %7941 = vmatprep.subr.bf16.mxu0 0
        %7942 = vmatpush2.bf16.msra.mxu0 0
        %7943 = vmatprep.subr.bf16.mxu0 0
        %7944 = vmatpush2.bf16.msra.mxu0 0
        %7945 = vmatprep.subr.bf16.mxu0 0
        %7946 = vmatpush2.bf16.msra.mxu0 0
        %7947 = vmatprep.mubr.bf16.mxu0 0
        %7948 = vmatmul.mubr.bf16.gmra.mxu0 %v7407
        %v7949 = vpop.f32.mrf.mxu0
        %v7950 = vadd.f32 0.0, %v7949
        %v7951 = vpop.f32.mrf.mxu0
        %v7952 = vadd.f32 0.0, %v7951
        %v7953 = vpop.f32.mrf.mxu0
        %v7954 = vpop.f32.mrf.mxu0
        %7955 = vdwg.mxu0
        %v7956 = vpack.c.bf16 %v7827, %v7827
        %v7957 = vpack.c.bf16 %v7829, %v7829
        %v7958 = vpack.c.bf16 %v7868, %v7868
        %v7959 = vpack.c.bf16 %v7870, %v7870
        %v7960 = vpack.c.bf16 %v7909, %v7909
        %v7961 = vpack.c.bf16 %v7911, %v7911
        %v7962 = vpack.c.bf16 %v7950, %v7950
        %v7963 = vpack.c.bf16 %v7952, %v7952
        %v7964 = vld [vmem:[%s20] sm:$0xff]
        %v7965 = vld [vmem:[%s20 + $0x8] sm:$0xff]
        %v7966 = vld [vmem:[%s20 + $0x10] sm:$0xff]
        %v7967 = vld [vmem:[%s20 + $0x18] sm:$0xff]
        %v7968 = vld [vmem:[%s20 + $0x20] sm:$0xff]
        %v7969 = vld [vmem:[%s20 + $0x28] sm:$0xff]
        %v7970 = vld [vmem:[%s20 + $0x30] sm:$0xff]
        %v7971 = vld [vmem:[%s20 + $0x38] sm:$0xff]
        %v7972 = vld [vmem:[%s20 + $0x40] sm:$0xff]
        %v7973 = vld [vmem:[%s20 + $0x48] sm:$0xff]
        %v7974 = vld [vmem:[%s20 + $0x50] sm:$0xff]
        %v7975 = vld [vmem:[%s20 + $0x58] sm:$0xff]
        %v7976 = vld [vmem:[%s20 + $0x60] sm:$0xff]
        %v7977 = vld [vmem:[%s20 + $0x68] sm:$0xff]
        %v7978 = vld [vmem:[%s20 + $0x70] sm:$0xff]
        %v7979 = vld [vmem:[%s20 + $0x78] sm:$0xff]
        %v7980 = vld [vmem:[%s20 + $0x80] sm:$0xff]
        %v7981 = vld [vmem:[%s20 + $0x88] sm:$0xff]
        %v7982 = vld [vmem:[%s20 + $0x90] sm:$0xff]
        %v7983 = vld [vmem:[%s20 + $0x98] sm:$0xff]
        %v7984 = vld [vmem:[%s20 + $0xa0] sm:$0xff]
        %v7985 = vld [vmem:[%s20 + $0xa8] sm:$0xff]
        %v7986 = vld [vmem:[%s20 + $0xb0] sm:$0xff]
        %v7987 = vld [vmem:[%s20 + $0xb8] sm:$0xff]
        %v7988 = vld [vmem:[%s20 + $0xc0] sm:$0xff]
        %v7989 = vld [vmem:[%s20 + $0xc8] sm:$0xff]
        %v7990 = vld [vmem:[%s20 + $0xd0] sm:$0xff]
        %v7991 = vld [vmem:[%s20 + $0xd8] sm:$0xff]
        %v7992 = vld [vmem:[%s20 + $0xe0] sm:$0xff]
        %v7993 = vld [vmem:[%s20 + $0xe8] sm:$0xff]
        %v7994 = vld [vmem:[%s20 + $0xf0] sm:$0xff]
        %v7995 = vld [vmem:[%s20 + $0xf8] sm:$0xff]
        %v7996 = vld [vmem:[%s20 + $0x100] sm:$0xff]
        %v7997 = vld [vmem:[%s20 + $0x108] sm:$0xff]
        %v7998 = vld [vmem:[%s20 + $0x110] sm:$0xff]
        %v7999 = vld [vmem:[%s20 + $0x118] sm:$0xff]
        %v8000 = vld [vmem:[%s20 + $0x120] sm:$0xff]
        %v8001 = vld [vmem:[%s20 + $0x128] sm:$0xff]
        %v8002 = vld [vmem:[%s20 + $0x130] sm:$0xff]
        %v8003 = vld [vmem:[%s20 + $0x138] sm:$0xff]
        %v8004 = vld [vmem:[%s20 + $0x140] sm:$0xff]
        %v8005 = vld [vmem:[%s20 + $0x148] sm:$0xff]
        %v8006 = vld [vmem:[%s20 + $0x150] sm:$0xff]
        %v8007 = vld [vmem:[%s20 + $0x158] sm:$0xff]
        %v8008 = vld [vmem:[%s20 + $0x160] sm:$0xff]
        %v8009 = vld [vmem:[%s20 + $0x168] sm:$0xff]
        %v8010 = vld [vmem:[%s20 + $0x170] sm:$0xff]
        %v8011 = vld [vmem:[%s20 + $0x178] sm:$0xff]
        %v8012 = vld [vmem:[%s20 + $0x180] sm:$0xff]
        %v8013 = vld [vmem:[%s20 + $0x188] sm:$0xff]
        %v8014 = vld [vmem:[%s20 + $0x190] sm:$0xff]
        %v8015 = vld [vmem:[%s20 + $0x198] sm:$0xff]
        %v8016 = vld [vmem:[%s20 + $0x1a0] sm:$0xff]
        %v8017 = vld [vmem:[%s20 + $0x1a8] sm:$0xff]
        %v8018 = vld [vmem:[%s20 + $0x1b0] sm:$0xff]
        %v8019 = vld [vmem:[%s20 + $0x1b8] sm:$0xff]
        %v8020 = vld [vmem:[%s20 + $0x1c0] sm:$0xff]
        %v8021 = vld [vmem:[%s20 + $0x1c8] sm:$0xff]
        %v8022 = vld [vmem:[%s20 + $0x1d0] sm:$0xff]
        %v8023 = vld [vmem:[%s20 + $0x1d8] sm:$0xff]
        %v8024 = vld [vmem:[%s20 + $0x1e0] sm:$0xff]
        %v8025 = vld [vmem:[%s20 + $0x1e8] sm:$0xff]
        %v8026 = vld [vmem:[%s20 + $0x1f0] sm:$0xff]
        %v8027 = vld [vmem:[%s20 + $0x1f8] sm:$0xff]
        %v8028 = vld [vmem:[%s20 + $0x200] sm:$0xff]
        %v8029 = vld [vmem:[%s20 + $0x208] sm:$0xff]
        %v8030 = vld [vmem:[%s20 + $0x210] sm:$0xff]
        %v8031 = vld [vmem:[%s20 + $0x218] sm:$0xff]
        %v8032 = vld [vmem:[%s20 + $0x220] sm:$0xff]
        %v8033 = vld [vmem:[%s20 + $0x228] sm:$0xff]
        %v8034 = vld [vmem:[%s20 + $0x230] sm:$0xff]
        %v8035 = vld [vmem:[%s20 + $0x238] sm:$0xff]
        %v8036 = vld [vmem:[%s20 + $0x240] sm:$0xff]
        %v8037 = vld [vmem:[%s20 + $0x248] sm:$0xff]
        %v8038 = vld [vmem:[%s20 + $0x250] sm:$0xff]
        %v8039 = vld [vmem:[%s20 + $0x258] sm:$0xff]
        %v8040 = vld [vmem:[%s20 + $0x260] sm:$0xff]
        %v8041 = vld [vmem:[%s20 + $0x268] sm:$0xff]
        %v8042 = vld [vmem:[%s20 + $0x270] sm:$0xff]
        %v8043 = vld [vmem:[%s20 + $0x278] sm:$0xff]
        %v8044 = vld [vmem:[%s20 + $0x280] sm:$0xff]
        %v8045 = vld [vmem:[%s20 + $0x288] sm:$0xff]
        %v8046 = vld [vmem:[%s20 + $0x290] sm:$0xff]
        %v8047 = vld [vmem:[%s20 + $0x298] sm:$0xff]
        %v8048 = vld [vmem:[%s20 + $0x2a0] sm:$0xff]
        %v8049 = vld [vmem:[%s20 + $0x2a8] sm:$0xff]
        %v8050 = vld [vmem:[%s20 + $0x2b0] sm:$0xff]
        %v8051 = vld [vmem:[%s20 + $0x2b8] sm:$0xff]
        %v8052 = vld [vmem:[%s20 + $0x2c0] sm:$0xff]
        %v8053 = vld [vmem:[%s20 + $0x2c8] sm:$0xff]
        %v8054 = vld [vmem:[%s20 + $0x2d0] sm:$0xff]
        %v8055 = vld [vmem:[%s20 + $0x2d8] sm:$0xff]
        %v8056 = vld [vmem:[%s20 + $0x2e0] sm:$0xff]
        %v8057 = vld [vmem:[%s20 + $0x2e8] sm:$0xff]
        %v8058 = vld [vmem:[%s20 + $0x2f0] sm:$0xff]
        %v8059 = vld [vmem:[%s20 + $0x2f8] sm:$0xff]
        %v8060 = vld [vmem:[%s20 + $0x300] sm:$0xff]
        %v8061 = vld [vmem:[%s20 + $0x308] sm:$0xff]
        %v8062 = vld [vmem:[%s20 + $0x310] sm:$0xff]
        %v8063 = vld [vmem:[%s20 + $0x318] sm:$0xff]
        %v8064 = vld [vmem:[%s20 + $0x320] sm:$0xff]
        %v8065 = vld [vmem:[%s20 + $0x328] sm:$0xff]
        %v8066 = vld [vmem:[%s20 + $0x330] sm:$0xff]
        %v8067 = vld [vmem:[%s20 + $0x338] sm:$0xff]
        %v8068 = vld [vmem:[%s20 + $0x340] sm:$0xff]
        %v8069 = vld [vmem:[%s20 + $0x348] sm:$0xff]
        %v8070 = vld [vmem:[%s20 + $0x350] sm:$0xff]
        %v8071 = vld [vmem:[%s20 + $0x358] sm:$0xff]
        %v8072 = vld [vmem:[%s20 + $0x360] sm:$0xff]
        %v8073 = vld [vmem:[%s20 + $0x368] sm:$0xff]
        %v8074 = vld [vmem:[%s20 + $0x370] sm:$0xff]
        %v8075 = vld [vmem:[%s20 + $0x378] sm:$0xff]
        %v8076 = vld [vmem:[%s20 + $0x380] sm:$0xff]
        %v8077 = vld [vmem:[%s20 + $0x388] sm:$0xff]
        %v8078 = vld [vmem:[%s20 + $0x390] sm:$0xff]
        %v8079 = vld [vmem:[%s20 + $0x398] sm:$0xff]
        %v8080 = vld [vmem:[%s20 + $0x3a0] sm:$0xff]
        %v8081 = vld [vmem:[%s20 + $0x3a8] sm:$0xff]
        %v8082 = vld [vmem:[%s20 + $0x3b0] sm:$0xff]
        %v8083 = vld [vmem:[%s20 + $0x3b8] sm:$0xff]
        %v8084 = vld [vmem:[%s20 + $0x3c0] sm:$0xff]
        %v8085 = vld [vmem:[%s20 + $0x3c8] sm:$0xff]
        %v8086 = vld [vmem:[%s20 + $0x3d0] sm:$0xff]
        %v8087 = vld [vmem:[%s20 + $0x3d8] sm:$0xff]
        %v8088 = vld [vmem:[%s20 + $0x3e0] sm:$0xff]
        %v8089 = vld [vmem:[%s20 + $0x3e8] sm:$0xff]
        %v8090 = vld [vmem:[%s20 + $0x3f0] sm:$0xff]
        %v8091 = vld [vmem:[%s20 + $0x3f8] sm:$0xff]
        %v8092 = vld [vmem:[%s20 + $0x400] sm:$0xff]
        %v8093 = vld [vmem:[%s20 + $0x408] sm:$0xff]
        %v8094 = vld [vmem:[%s20 + $0x410] sm:$0xff]
        %v8095 = vld [vmem:[%s20 + $0x418] sm:$0xff]
        %v8096 = vld [vmem:[%s20 + $0x420] sm:$0xff]
        %v8097 = vld [vmem:[%s20 + $0x428] sm:$0xff]
        %v8098 = vld [vmem:[%s20 + $0x430] sm:$0xff]
        %v8099 = vld [vmem:[%s20 + $0x438] sm:$0xff]
        %v8100 = vld [vmem:[%s20 + $0x440] sm:$0xff]
        %v8101 = vld [vmem:[%s20 + $0x448] sm:$0xff]
        %v8102 = vld [vmem:[%s20 + $0x450] sm:$0xff]
        %v8103 = vld [vmem:[%s20 + $0x458] sm:$0xff]
        %v8104 = vld [vmem:[%s20 + $0x460] sm:$0xff]
        %v8105 = vld [vmem:[%s20 + $0x468] sm:$0xff]
        %v8106 = vld [vmem:[%s20 + $0x470] sm:$0xff]
        %v8107 = vld [vmem:[%s20 + $0x478] sm:$0xff]
        %v8108 = vld [vmem:[%s20 + $0x480] sm:$0xff]
        %v8109 = vld [vmem:[%s20 + $0x488] sm:$0xff]
        %v8110 = vld [vmem:[%s20 + $0x490] sm:$0xff]
        %v8111 = vld [vmem:[%s20 + $0x498] sm:$0xff]
        %v8112 = vld [vmem:[%s20 + $0x4a0] sm:$0xff]
        %v8113 = vld [vmem:[%s20 + $0x4a8] sm:$0xff]
        %v8114 = vld [vmem:[%s20 + $0x4b0] sm:$0xff]
        %v8115 = vld [vmem:[%s20 + $0x4b8] sm:$0xff]
        %v8116 = vld [vmem:[%s20 + $0x4c0] sm:$0xff]
        %v8117 = vld [vmem:[%s20 + $0x4c8] sm:$0xff]
        %v8118 = vld [vmem:[%s20 + $0x4d0] sm:$0xff]
        %v8119 = vld [vmem:[%s20 + $0x4d8] sm:$0xff]
        %v8120 = vld [vmem:[%s20 + $0x4e0] sm:$0xff]
        %v8121 = vld [vmem:[%s20 + $0x4e8] sm:$0xff]
        %v8122 = vld [vmem:[%s20 + $0x4f0] sm:$0xff]
        %v8123 = vld [vmem:[%s20 + $0x4f8] sm:$0xff]
        %v8124 = vld [vmem:[%s20 + $0x500] sm:$0xff]
        %v8125 = vld [vmem:[%s20 + $0x508] sm:$0xff]
        %v8126 = vld [vmem:[%s20 + $0x510] sm:$0xff]
        %v8127 = vld [vmem:[%s20 + $0x518] sm:$0xff]
        %v8128 = vld [vmem:[%s20 + $0x520] sm:$0xff]
        %v8129 = vld [vmem:[%s20 + $0x528] sm:$0xff]
        %v8130 = vld [vmem:[%s20 + $0x530] sm:$0xff]
        %v8131 = vld [vmem:[%s20 + $0x538] sm:$0xff]
        %v8132 = vld [vmem:[%s20 + $0x540] sm:$0xff]
        %v8133 = vld [vmem:[%s20 + $0x548] sm:$0xff]
        %v8134 = vld [vmem:[%s20 + $0x550] sm:$0xff]
        %v8135 = vld [vmem:[%s20 + $0x558] sm:$0xff]
        %v8136 = vld [vmem:[%s20 + $0x560] sm:$0xff]
        %v8137 = vld [vmem:[%s20 + $0x568] sm:$0xff]
        %v8138 = vld [vmem:[%s20 + $0x570] sm:$0xff]
        %v8139 = vld [vmem:[%s20 + $0x578] sm:$0xff]
        %v8140 = vld [vmem:[%s20 + $0x580] sm:$0xff]
        %v8141 = vld [vmem:[%s20 + $0x588] sm:$0xff]
        %v8142 = vld [vmem:[%s20 + $0x590] sm:$0xff]
        %v8143 = vld [vmem:[%s20 + $0x598] sm:$0xff]
        %v8144 = vld [vmem:[%s20 + $0x5a0] sm:$0xff]
        %v8145 = vld [vmem:[%s20 + $0x5a8] sm:$0xff]
        %v8146 = vld [vmem:[%s20 + $0x5b0] sm:$0xff]
        %v8147 = vld [vmem:[%s20 + $0x5b8] sm:$0xff]
        %v8148 = vld [vmem:[%s20 + $0x5c0] sm:$0xff]
        %v8149 = vld [vmem:[%s20 + $0x5c8] sm:$0xff]
        %v8150 = vld [vmem:[%s20 + $0x5d0] sm:$0xff]
        %v8151 = vld [vmem:[%s20 + $0x5d8] sm:$0xff]
        %v8152 = vld [vmem:[%s20 + $0x5e0] sm:$0xff]
        %v8153 = vld [vmem:[%s20 + $0x5e8] sm:$0xff]
        %v8154 = vld [vmem:[%s20 + $0x5f0] sm:$0xff]
        %v8155 = vld [vmem:[%s20 + $0x5f8] sm:$0xff]
        %v8156 = vld [vmem:[%s20 + $0x600] sm:$0xff]
        %v8157 = vld [vmem:[%s20 + $0x608] sm:$0xff]
        %v8158 = vld [vmem:[%s20 + $0x610] sm:$0xff]
        %v8159 = vld [vmem:[%s20 + $0x618] sm:$0xff]
        %v8160 = vld [vmem:[%s20 + $0x620] sm:$0xff]
        %v8161 = vld [vmem:[%s20 + $0x628] sm:$0xff]
        %v8162 = vld [vmem:[%s20 + $0x630] sm:$0xff]
        %v8163 = vld [vmem:[%s20 + $0x638] sm:$0xff]
        %v8164 = vld [vmem:[%s20 + $0x640] sm:$0xff]
        %v8165 = vld [vmem:[%s20 + $0x648] sm:$0xff]
        %v8166 = vld [vmem:[%s20 + $0x650] sm:$0xff]
        %v8167 = vld [vmem:[%s20 + $0x658] sm:$0xff]
        %v8168 = vld [vmem:[%s20 + $0x660] sm:$0xff]
        %v8169 = vld [vmem:[%s20 + $0x668] sm:$0xff]
        %v8170 = vld [vmem:[%s20 + $0x670] sm:$0xff]
        %v8171 = vld [vmem:[%s20 + $0x678] sm:$0xff]
        %v8172 = vld [vmem:[%s20 + $0x680] sm:$0xff]
        %v8173 = vld [vmem:[%s20 + $0x688] sm:$0xff]
        %v8174 = vld [vmem:[%s20 + $0x690] sm:$0xff]
        %v8175 = vld [vmem:[%s20 + $0x698] sm:$0xff]
        %v8176 = vld [vmem:[%s20 + $0x6a0] sm:$0xff]
        %v8177 = vld [vmem:[%s20 + $0x6a8] sm:$0xff]
        %v8178 = vld [vmem:[%s20 + $0x6b0] sm:$0xff]
        %v8179 = vld [vmem:[%s20 + $0x6b8] sm:$0xff]
        %v8180 = vld [vmem:[%s20 + $0x6c0] sm:$0xff]
        %v8181 = vld [vmem:[%s20 + $0x6c8] sm:$0xff]
        %v8182 = vld [vmem:[%s20 + $0x6d0] sm:$0xff]
        %v8183 = vld [vmem:[%s20 + $0x6d8] sm:$0xff]
        %v8184 = vld [vmem:[%s20 + $0x6e0] sm:$0xff]
        %v8185 = vld [vmem:[%s20 + $0x6e8] sm:$0xff]
        %v8186 = vld [vmem:[%s20 + $0x6f0] sm:$0xff]
        %v8187 = vld [vmem:[%s20 + $0x6f8] sm:$0xff]
        %v8188 = vld [vmem:[%s20 + $0x700] sm:$0xff]
        %v8189 = vld [vmem:[%s20 + $0x708] sm:$0xff]
        %v8190 = vld [vmem:[%s20 + $0x710] sm:$0xff]
        %v8191 = vld [vmem:[%s20 + $0x718] sm:$0xff]
        %v8192 = vld [vmem:[%s20 + $0x720] sm:$0xff]
        %v8193 = vld [vmem:[%s20 + $0x728] sm:$0xff]
        %v8194 = vld [vmem:[%s20 + $0x730] sm:$0xff]
        %v8195 = vld [vmem:[%s20 + $0x738] sm:$0xff]
        %v8196 = vld [vmem:[%s20 + $0x740] sm:$0xff]
        %v8197 = vld [vmem:[%s20 + $0x748] sm:$0xff]
        %v8198 = vld [vmem:[%s20 + $0x750] sm:$0xff]
        %v8199 = vld [vmem:[%s20 + $0x758] sm:$0xff]
        %v8200 = vld [vmem:[%s20 + $0x760] sm:$0xff]
        %v8201 = vld [vmem:[%s20 + $0x768] sm:$0xff]
        %v8202 = vld [vmem:[%s20 + $0x770] sm:$0xff]
        %v8203 = vld [vmem:[%s20 + $0x778] sm:$0xff]
        %v8204 = vld [vmem:[%s20 + $0x780] sm:$0xff]
        %v8205 = vld [vmem:[%s20 + $0x788] sm:$0xff]
        %v8206 = vld [vmem:[%s20 + $0x790] sm:$0xff]
        %v8207 = vld [vmem:[%s20 + $0x798] sm:$0xff]
        %v8208 = vld [vmem:[%s20 + $0x7a0] sm:$0xff]
        %v8209 = vld [vmem:[%s20 + $0x7a8] sm:$0xff]
        %v8210 = vld [vmem:[%s20 + $0x7b0] sm:$0xff]
        %v8211 = vld [vmem:[%s20 + $0x7b8] sm:$0xff]
        %v8212 = vld [vmem:[%s20 + $0x7c0] sm:$0xff]
        %v8213 = vld [vmem:[%s20 + $0x7c8] sm:$0xff]
        %v8214 = vld [vmem:[%s20 + $0x7d0] sm:$0xff]
        %v8215 = vld [vmem:[%s20 + $0x7d8] sm:$0xff]
        %v8216 = vld [vmem:[%s20 + $0x7e0] sm:$0xff]
        %v8217 = vld [vmem:[%s20 + $0x7e8] sm:$0xff]
        %v8218 = vld [vmem:[%s20 + $0x7f0] sm:$0xff]
        %v8219 = vld [vmem:[%s20 + $0x7f8] sm:$0xff]
        %v8220 = vld [vmem:[%s21] sm:$0xf]
        %v8222 = vlaneseq
        %v8223 = vshrl.u32 %v8222, 7
        %v8224 = vsub.s32 0, %v8223
        %v8225 = vrot.slane %v8220, %v8224
        %v8226 = vlaneseq
        %v8227 = vshrl.u32 %v8226, 7
        %v8228 = vsub.s32 1, %v8227
        %v8229 = vrot.slane %v8220, %v8228
        %v8230 = vlaneseq
        %v8231 = vshrl.u32 %v8230, 7
        %v8232 = vsub.s32 2, %v8231
        %v8233 = vrot.slane %v8220, %v8232
        %v8234 = vlaneseq
        %v8235 = vshrl.u32 %v8234, 7
        %v8236 = vsub.s32 3, %v8235
        %v8237 = vrot.slane %v8220, %v8236
        %v8498 = vunpack.c.l.b16 %v7964
        %v8499 = vunpack.c.h.b16 %v7964
        %v8500 = vunpack.c.l.b16 %v7965
        %v8501 = vunpack.c.h.b16 %v7965
        %v8502 = vunpack.c.l.b16 %v7966
        %v8503 = vunpack.c.h.b16 %v7966
        %v8504 = vunpack.c.l.b16 %v7967
        %v8505 = vunpack.c.h.b16 %v7967
        %v8506 = vunpack.c.l.b16 %v7968
        %v8507 = vunpack.c.h.b16 %v7968
        %v8508 = vunpack.c.l.b16 %v7969
        %v8509 = vunpack.c.h.b16 %v7969
        %v8510 = vunpack.c.l.b16 %v7970
        %v8511 = vunpack.c.h.b16 %v7970
        %v8512 = vunpack.c.l.b16 %v7971
        %v8513 = vunpack.c.h.b16 %v7971
        %v8514 = vunpack.c.l.b16 %v7972
        %v8515 = vunpack.c.h.b16 %v7972
        %v8516 = vunpack.c.l.b16 %v7973
        %v8517 = vunpack.c.h.b16 %v7973
        %v8518 = vunpack.c.l.b16 %v7974
        %v8519 = vunpack.c.h.b16 %v7974
        %v8520 = vunpack.c.l.b16 %v7975
        %v8521 = vunpack.c.h.b16 %v7975
        %v8522 = vunpack.c.l.b16 %v7976
        %v8523 = vunpack.c.h.b16 %v7976
        %v8524 = vunpack.c.l.b16 %v7977
        %v8525 = vunpack.c.h.b16 %v7977
        %v8526 = vunpack.c.l.b16 %v7978
        %v8527 = vunpack.c.h.b16 %v7978
        %v8528 = vunpack.c.l.b16 %v7979
        %v8529 = vunpack.c.h.b16 %v7979
        %v8530 = vunpack.c.l.b16 %v7980
        %v8531 = vunpack.c.h.b16 %v7980
        %v8532 = vunpack.c.l.b16 %v7981
        %v8533 = vunpack.c.h.b16 %v7981
        %v8534 = vunpack.c.l.b16 %v7982
        %v8535 = vunpack.c.h.b16 %v7982
        %v8536 = vunpack.c.l.b16 %v7983
        %v8537 = vunpack.c.h.b16 %v7983
        %v8538 = vunpack.c.l.b16 %v7984
        %v8539 = vunpack.c.h.b16 %v7984
        %v8540 = vunpack.c.l.b16 %v7985
        %v8541 = vunpack.c.h.b16 %v7985
        %v8542 = vunpack.c.l.b16 %v7986
        %v8543 = vunpack.c.h.b16 %v7986
        %v8544 = vunpack.c.l.b16 %v7987
        %v8545 = vunpack.c.h.b16 %v7987
        %v8546 = vunpack.c.l.b16 %v7988
        %v8547 = vunpack.c.h.b16 %v7988
        %v8548 = vunpack.c.l.b16 %v7989
        %v8549 = vunpack.c.h.b16 %v7989
        %v8550 = vunpack.c.l.b16 %v7990
        %v8551 = vunpack.c.h.b16 %v7990
        %v8552 = vunpack.c.l.b16 %v7991
        %v8553 = vunpack.c.h.b16 %v7991
        %v8554 = vunpack.c.l.b16 %v7992
        %v8555 = vunpack.c.h.b16 %v7992
        %v8556 = vunpack.c.l.b16 %v7993
        %v8557 = vunpack.c.h.b16 %v7993
        %v8558 = vunpack.c.l.b16 %v7994
        %v8559 = vunpack.c.h.b16 %v7994
        %v8560 = vunpack.c.l.b16 %v7995
        %v8561 = vunpack.c.h.b16 %v7995
        %v8562 = vunpack.c.l.b16 %v7996
        %v8563 = vunpack.c.h.b16 %v7996
        %v8564 = vunpack.c.l.b16 %v7997
        %v8565 = vunpack.c.h.b16 %v7997
        %v8566 = vunpack.c.l.b16 %v7998
        %v8567 = vunpack.c.h.b16 %v7998
        %v8568 = vunpack.c.l.b16 %v7999
        %v8569 = vunpack.c.h.b16 %v7999
        %v8570 = vunpack.c.l.b16 %v8000
        %v8571 = vunpack.c.h.b16 %v8000
        %v8572 = vunpack.c.l.b16 %v8001
        %v8573 = vunpack.c.h.b16 %v8001
        %v8574 = vunpack.c.l.b16 %v8002
        %v8575 = vunpack.c.h.b16 %v8002
        %v8576 = vunpack.c.l.b16 %v8003
        %v8577 = vunpack.c.h.b16 %v8003
        %v8578 = vunpack.c.l.b16 %v8004
        %v8579 = vunpack.c.h.b16 %v8004
        %v8580 = vunpack.c.l.b16 %v8005
        %v8581 = vunpack.c.h.b16 %v8005
        %v8582 = vunpack.c.l.b16 %v8006
        %v8583 = vunpack.c.h.b16 %v8006
        %v8584 = vunpack.c.l.b16 %v8007
        %v8585 = vunpack.c.h.b16 %v8007
        %v8586 = vunpack.c.l.b16 %v8008
        %v8587 = vunpack.c.h.b16 %v8008
        %v8588 = vunpack.c.l.b16 %v8009
        %v8589 = vunpack.c.h.b16 %v8009
        %v8590 = vunpack.c.l.b16 %v8010
        %v8591 = vunpack.c.h.b16 %v8010
        %v8592 = vunpack.c.l.b16 %v8011
        %v8593 = vunpack.c.h.b16 %v8011
        %v8594 = vunpack.c.l.b16 %v8012
        %v8595 = vunpack.c.h.b16 %v8012
        %v8596 = vunpack.c.l.b16 %v8013
        %v8597 = vunpack.c.h.b16 %v8013
        %v8598 = vunpack.c.l.b16 %v8014
        %v8599 = vunpack.c.h.b16 %v8014
        %v8600 = vunpack.c.l.b16 %v8015
        %v8601 = vunpack.c.h.b16 %v8015
        %v8602 = vunpack.c.l.b16 %v8016
        %v8603 = vunpack.c.h.b16 %v8016
        %v8604 = vunpack.c.l.b16 %v8017
        %v8605 = vunpack.c.h.b16 %v8017
        %v8606 = vunpack.c.l.b16 %v8018
        %v8607 = vunpack.c.h.b16 %v8018
        %v8608 = vunpack.c.l.b16 %v8019
        %v8609 = vunpack.c.h.b16 %v8019
        %v8610 = vunpack.c.l.b16 %v8020
        %v8611 = vunpack.c.h.b16 %v8020
        %v8612 = vunpack.c.l.b16 %v8021
        %v8613 = vunpack.c.h.b16 %v8021
        %v8614 = vunpack.c.l.b16 %v8022
        %v8615 = vunpack.c.h.b16 %v8022
        %v8616 = vunpack.c.l.b16 %v8023
        %v8617 = vunpack.c.h.b16 %v8023
        %v8618 = vunpack.c.l.b16 %v8024
        %v8619 = vunpack.c.h.b16 %v8024
        %v8620 = vunpack.c.l.b16 %v8025
        %v8621 = vunpack.c.h.b16 %v8025
        %v8622 = vunpack.c.l.b16 %v8026
        %v8623 = vunpack.c.h.b16 %v8026
        %v8624 = vunpack.c.l.b16 %v8027
        %v8625 = vunpack.c.h.b16 %v8027
        %v8626 = vunpack.c.l.b16 %v8028
        %v8627 = vunpack.c.h.b16 %v8028
        %v8628 = vunpack.c.l.b16 %v8029
        %v8629 = vunpack.c.h.b16 %v8029
        %v8630 = vunpack.c.l.b16 %v8030
        %v8631 = vunpack.c.h.b16 %v8030
        %v8632 = vunpack.c.l.b16 %v8031
        %v8633 = vunpack.c.h.b16 %v8031
        %v8634 = vunpack.c.l.b16 %v8032
        %v8635 = vunpack.c.h.b16 %v8032
        %v8636 = vunpack.c.l.b16 %v8033
        %v8637 = vunpack.c.h.b16 %v8033
        %v8638 = vunpack.c.l.b16 %v8034
        %v8639 = vunpack.c.h.b16 %v8034
        %v8640 = vunpack.c.l.b16 %v8035
        %v8641 = vunpack.c.h.b16 %v8035
        %v8642 = vunpack.c.l.b16 %v8036
        %v8643 = vunpack.c.h.b16 %v8036
        %v8644 = vunpack.c.l.b16 %v8037
        %v8645 = vunpack.c.h.b16 %v8037
        %v8646 = vunpack.c.l.b16 %v8038
        %v8647 = vunpack.c.h.b16 %v8038
        %v8648 = vunpack.c.l.b16 %v8039
        %v8649 = vunpack.c.h.b16 %v8039
        %v8650 = vunpack.c.l.b16 %v8040
        %v8651 = vunpack.c.h.b16 %v8040
        %v8652 = vunpack.c.l.b16 %v8041
        %v8653 = vunpack.c.h.b16 %v8041
        %v8654 = vunpack.c.l.b16 %v8042
        %v8655 = vunpack.c.h.b16 %v8042
        %v8656 = vunpack.c.l.b16 %v8043
        %v8657 = vunpack.c.h.b16 %v8043
        %v8658 = vunpack.c.l.b16 %v8044
        %v8659 = vunpack.c.h.b16 %v8044
        %v8660 = vunpack.c.l.b16 %v8045
        %v8661 = vunpack.c.h.b16 %v8045
        %v8662 = vunpack.c.l.b16 %v8046
        %v8663 = vunpack.c.h.b16 %v8046
        %v8664 = vunpack.c.l.b16 %v8047
        %v8665 = vunpack.c.h.b16 %v8047
        %v8666 = vunpack.c.l.b16 %v8048
        %v8667 = vunpack.c.h.b16 %v8048
        %v8668 = vunpack.c.l.b16 %v8049
        %v8669 = vunpack.c.h.b16 %v8049
        %v8670 = vunpack.c.l.b16 %v8050
        %v8671 = vunpack.c.h.b16 %v8050
        %v8672 = vunpack.c.l.b16 %v8051
        %v8673 = vunpack.c.h.b16 %v8051
        %v8674 = vunpack.c.l.b16 %v8052
        %v8675 = vunpack.c.h.b16 %v8052
        %v8676 = vunpack.c.l.b16 %v8053
        %v8677 = vunpack.c.h.b16 %v8053
        %v8678 = vunpack.c.l.b16 %v8054
        %v8679 = vunpack.c.h.b16 %v8054
        %v8680 = vunpack.c.l.b16 %v8055
        %v8681 = vunpack.c.h.b16 %v8055
        %v8682 = vunpack.c.l.b16 %v8056
        %v8683 = vunpack.c.h.b16 %v8056
        %v8684 = vunpack.c.l.b16 %v8057
        %v8685 = vunpack.c.h.b16 %v8057
        %v8686 = vunpack.c.l.b16 %v8058
        %v8687 = vunpack.c.h.b16 %v8058
        %v8688 = vunpack.c.l.b16 %v8059
        %v8689 = vunpack.c.h.b16 %v8059
        %v8690 = vunpack.c.l.b16 %v8060
        %v8691 = vunpack.c.h.b16 %v8060
        %v8692 = vunpack.c.l.b16 %v8061
        %v8693 = vunpack.c.h.b16 %v8061
        %v8694 = vunpack.c.l.b16 %v8062
        %v8695 = vunpack.c.h.b16 %v8062
        %v8696 = vunpack.c.l.b16 %v8063
        %v8697 = vunpack.c.h.b16 %v8063
        %v8698 = vunpack.c.l.b16 %v8064
        %v8699 = vunpack.c.h.b16 %v8064
        %v8700 = vunpack.c.l.b16 %v8065
        %v8701 = vunpack.c.h.b16 %v8065
        %v8702 = vunpack.c.l.b16 %v8066
        %v8703 = vunpack.c.h.b16 %v8066
        %v8704 = vunpack.c.l.b16 %v8067
        %v8705 = vunpack.c.h.b16 %v8067
        %v8706 = vunpack.c.l.b16 %v8068
        %v8707 = vunpack.c.h.b16 %v8068
        %v8708 = vunpack.c.l.b16 %v8069
        %v8709 = vunpack.c.h.b16 %v8069
        %v8710 = vunpack.c.l.b16 %v8070
        %v8711 = vunpack.c.h.b16 %v8070
        %v8712 = vunpack.c.l.b16 %v8071
        %v8713 = vunpack.c.h.b16 %v8071
        %v8714 = vunpack.c.l.b16 %v8072
        %v8715 = vunpack.c.h.b16 %v8072
        %v8716 = vunpack.c.l.b16 %v8073
        %v8717 = vunpack.c.h.b16 %v8073
        %v8718 = vunpack.c.l.b16 %v8074
        %v8719 = vunpack.c.h.b16 %v8074
        %v8720 = vunpack.c.l.b16 %v8075
        %v8721 = vunpack.c.h.b16 %v8075
        %v8722 = vunpack.c.l.b16 %v8076
        %v8723 = vunpack.c.h.b16 %v8076
        %v8724 = vunpack.c.l.b16 %v8077
        %v8725 = vunpack.c.h.b16 %v8077
        %v8726 = vunpack.c.l.b16 %v8078
        %v8727 = vunpack.c.h.b16 %v8078
        %v8728 = vunpack.c.l.b16 %v8079
        %v8729 = vunpack.c.h.b16 %v8079
        %v8730 = vunpack.c.l.b16 %v8080
        %v8731 = vunpack.c.h.b16 %v8080
        %v8732 = vunpack.c.l.b16 %v8081
        %v8733 = vunpack.c.h.b16 %v8081
        %v8734 = vunpack.c.l.b16 %v8082
        %v8735 = vunpack.c.h.b16 %v8082
        %v8736 = vunpack.c.l.b16 %v8083
        %v8737 = vunpack.c.h.b16 %v8083
        %v8738 = vunpack.c.l.b16 %v8084
        %v8739 = vunpack.c.h.b16 %v8084
        %v8740 = vunpack.c.l.b16 %v8085
        %v8741 = vunpack.c.h.b16 %v8085
        %v8742 = vunpack.c.l.b16 %v8086
        %v8743 = vunpack.c.h.b16 %v8086
        %v8744 = vunpack.c.l.b16 %v8087
        %v8745 = vunpack.c.h.b16 %v8087
        %v8746 = vunpack.c.l.b16 %v8088
        %v8747 = vunpack.c.h.b16 %v8088
        %v8748 = vunpack.c.l.b16 %v8089
        %v8749 = vunpack.c.h.b16 %v8089
        %v8750 = vunpack.c.l.b16 %v8090
        %v8751 = vunpack.c.h.b16 %v8090
        %v8752 = vunpack.c.l.b16 %v8091
        %v8753 = vunpack.c.h.b16 %v8091
        %v8754 = vunpack.c.l.b16 %v8092
        %v8755 = vunpack.c.h.b16 %v8092
        %v8756 = vunpack.c.l.b16 %v8093
        %v8757 = vunpack.c.h.b16 %v8093
        %v8758 = vunpack.c.l.b16 %v8094
        %v8759 = vunpack.c.h.b16 %v8094
        %v8760 = vunpack.c.l.b16 %v8095
        %v8761 = vunpack.c.h.b16 %v8095
        %v8762 = vunpack.c.l.b16 %v8096
        %v8763 = vunpack.c.h.b16 %v8096
        %v8764 = vunpack.c.l.b16 %v8097
        %v8765 = vunpack.c.h.b16 %v8097
        %v8766 = vunpack.c.l.b16 %v8098
        %v8767 = vunpack.c.h.b16 %v8098
        %v8768 = vunpack.c.l.b16 %v8099
        %v8769 = vunpack.c.h.b16 %v8099
        %v8770 = vunpack.c.l.b16 %v8100
        %v8771 = vunpack.c.h.b16 %v8100
        %v8772 = vunpack.c.l.b16 %v8101
        %v8773 = vunpack.c.h.b16 %v8101
        %v8774 = vunpack.c.l.b16 %v8102
        %v8775 = vunpack.c.h.b16 %v8102
        %v8776 = vunpack.c.l.b16 %v8103
        %v8777 = vunpack.c.h.b16 %v8103
        %v8778 = vunpack.c.l.b16 %v8104
        %v8779 = vunpack.c.h.b16 %v8104
        %v8780 = vunpack.c.l.b16 %v8105
        %v8781 = vunpack.c.h.b16 %v8105
        %v8782 = vunpack.c.l.b16 %v8106
        %v8783 = vunpack.c.h.b16 %v8106
        %v8784 = vunpack.c.l.b16 %v8107
        %v8785 = vunpack.c.h.b16 %v8107
        %v8786 = vunpack.c.l.b16 %v8108
        %v8787 = vunpack.c.h.b16 %v8108
        %v8788 = vunpack.c.l.b16 %v8109
        %v8789 = vunpack.c.h.b16 %v8109
        %v8790 = vunpack.c.l.b16 %v8110
        %v8791 = vunpack.c.h.b16 %v8110
        %v8792 = vunpack.c.l.b16 %v8111
        %v8793 = vunpack.c.h.b16 %v8111
        %v8794 = vunpack.c.l.b16 %v8112
        %v8795 = vunpack.c.h.b16 %v8112
        %v8796 = vunpack.c.l.b16 %v8113
        %v8797 = vunpack.c.h.b16 %v8113
        %v8798 = vunpack.c.l.b16 %v8114
        %v8799 = vunpack.c.h.b16 %v8114
        %v8800 = vunpack.c.l.b16 %v8115
        %v8801 = vunpack.c.h.b16 %v8115
        %v8802 = vunpack.c.l.b16 %v8116
        %v8803 = vunpack.c.h.b16 %v8116
        %v8804 = vunpack.c.l.b16 %v8117
        %v8805 = vunpack.c.h.b16 %v8117
        %v8806 = vunpack.c.l.b16 %v8118
        %v8807 = vunpack.c.h.b16 %v8118
        %v8808 = vunpack.c.l.b16 %v8119
        %v8809 = vunpack.c.h.b16 %v8119
        %v8810 = vunpack.c.l.b16 %v8120
        %v8811 = vunpack.c.h.b16 %v8120
        %v8812 = vunpack.c.l.b16 %v8121
        %v8813 = vunpack.c.h.b16 %v8121
        %v8814 = vunpack.c.l.b16 %v8122
        %v8815 = vunpack.c.h.b16 %v8122
        %v8816 = vunpack.c.l.b16 %v8123
        %v8817 = vunpack.c.h.b16 %v8123
        %v8818 = vunpack.c.l.b16 %v8124
        %v8819 = vunpack.c.h.b16 %v8124
        %v8820 = vunpack.c.l.b16 %v8125
        %v8821 = vunpack.c.h.b16 %v8125
        %v8822 = vunpack.c.l.b16 %v8126
        %v8823 = vunpack.c.h.b16 %v8126
        %v8824 = vunpack.c.l.b16 %v8127
        %v8825 = vunpack.c.h.b16 %v8127
        %v8826 = vunpack.c.l.b16 %v8128
        %v8827 = vunpack.c.h.b16 %v8128
        %v8828 = vunpack.c.l.b16 %v8129
        %v8829 = vunpack.c.h.b16 %v8129
        %v8830 = vunpack.c.l.b16 %v8130
        %v8831 = vunpack.c.h.b16 %v8130
        %v8832 = vunpack.c.l.b16 %v8131
        %v8833 = vunpack.c.h.b16 %v8131
        %v8834 = vunpack.c.l.b16 %v8132
        %v8835 = vunpack.c.h.b16 %v8132
        %v8836 = vunpack.c.l.b16 %v8133
        %v8837 = vunpack.c.h.b16 %v8133
        %v8838 = vunpack.c.l.b16 %v8134
        %v8839 = vunpack.c.h.b16 %v8134
        %v8840 = vunpack.c.l.b16 %v8135
        %v8841 = vunpack.c.h.b16 %v8135
        %v8842 = vunpack.c.l.b16 %v8136
        %v8843 = vunpack.c.h.b16 %v8136
        %v8844 = vunpack.c.l.b16 %v8137
        %v8845 = vunpack.c.h.b16 %v8137
        %v8846 = vunpack.c.l.b16 %v8138
        %v8847 = vunpack.c.h.b16 %v8138
        %v8848 = vunpack.c.l.b16 %v8139
        %v8849 = vunpack.c.h.b16 %v8139
        %v8850 = vunpack.c.l.b16 %v8140
        %v8851 = vunpack.c.h.b16 %v8140
        %v8852 = vunpack.c.l.b16 %v8141
        %v8853 = vunpack.c.h.b16 %v8141
        %v8854 = vunpack.c.l.b16 %v8142
        %v8855 = vunpack.c.h.b16 %v8142
        %v8856 = vunpack.c.l.b16 %v8143
        %v8857 = vunpack.c.h.b16 %v8143
        %v8858 = vunpack.c.l.b16 %v8144
        %v8859 = vunpack.c.h.b16 %v8144
        %v8860 = vunpack.c.l.b16 %v8145
        %v8861 = vunpack.c.h.b16 %v8145
        %v8862 = vunpack.c.l.b16 %v8146
        %v8863 = vunpack.c.h.b16 %v8146
        %v8864 = vunpack.c.l.b16 %v8147
        %v8865 = vunpack.c.h.b16 %v8147
        %v8866 = vunpack.c.l.b16 %v8148
        %v8867 = vunpack.c.h.b16 %v8148
        %v8868 = vunpack.c.l.b16 %v8149
        %v8869 = vunpack.c.h.b16 %v8149
        %v8870 = vunpack.c.l.b16 %v8150
        %v8871 = vunpack.c.h.b16 %v8150
        %v8872 = vunpack.c.l.b16 %v8151
        %v8873 = vunpack.c.h.b16 %v8151
        %v8874 = vunpack.c.l.b16 %v8152
        %v8875 = vunpack.c.h.b16 %v8152
        %v8876 = vunpack.c.l.b16 %v8153
        %v8877 = vunpack.c.h.b16 %v8153
        %v8878 = vunpack.c.l.b16 %v8154
        %v8879 = vunpack.c.h.b16 %v8154
        %v8880 = vunpack.c.l.b16 %v8155
        %v8881 = vunpack.c.h.b16 %v8155
        %v8882 = vunpack.c.l.b16 %v8156
        %v8883 = vunpack.c.h.b16 %v8156
        %v8884 = vunpack.c.l.b16 %v8157
        %v8885 = vunpack.c.h.b16 %v8157
        %v8886 = vunpack.c.l.b16 %v8158
        %v8887 = vunpack.c.h.b16 %v8158
        %v8888 = vunpack.c.l.b16 %v8159
        %v8889 = vunpack.c.h.b16 %v8159
        %v8890 = vunpack.c.l.b16 %v8160
        %v8891 = vunpack.c.h.b16 %v8160
        %v8892 = vunpack.c.l.b16 %v8161
        %v8893 = vunpack.c.h.b16 %v8161
        %v8894 = vunpack.c.l.b16 %v8162
        %v8895 = vunpack.c.h.b16 %v8162
        %v8896 = vunpack.c.l.b16 %v8163
        %v8897 = vunpack.c.h.b16 %v8163
        %v8898 = vunpack.c.l.b16 %v8164
        %v8899 = vunpack.c.h.b16 %v8164
        %v8900 = vunpack.c.l.b16 %v8165
        %v8901 = vunpack.c.h.b16 %v8165
        %v8902 = vunpack.c.l.b16 %v8166
        %v8903 = vunpack.c.h.b16 %v8166
        %v8904 = vunpack.c.l.b16 %v8167
        %v8905 = vunpack.c.h.b16 %v8167
        %v8906 = vunpack.c.l.b16 %v8168
        %v8907 = vunpack.c.h.b16 %v8168
        %v8908 = vunpack.c.l.b16 %v8169
        %v8909 = vunpack.c.h.b16 %v8169
        %v8910 = vunpack.c.l.b16 %v8170
        %v8911 = vunpack.c.h.b16 %v8170
        %v8912 = vunpack.c.l.b16 %v8171
        %v8913 = vunpack.c.h.b16 %v8171
        %v8914 = vunpack.c.l.b16 %v8172
        %v8915 = vunpack.c.h.b16 %v8172
        %v8916 = vunpack.c.l.b16 %v8173
        %v8917 = vunpack.c.h.b16 %v8173
        %v8918 = vunpack.c.l.b16 %v8174
        %v8919 = vunpack.c.h.b16 %v8174
        %v8920 = vunpack.c.l.b16 %v8175
        %v8921 = vunpack.c.h.b16 %v8175
        %v8922 = vunpack.c.l.b16 %v8176
        %v8923 = vunpack.c.h.b16 %v8176
        %v8924 = vunpack.c.l.b16 %v8177
        %v8925 = vunpack.c.h.b16 %v8177
        %v8926 = vunpack.c.l.b16 %v8178
        %v8927 = vunpack.c.h.b16 %v8178
        %v8928 = vunpack.c.l.b16 %v8179
        %v8929 = vunpack.c.h.b16 %v8179
        %v8930 = vunpack.c.l.b16 %v8180
        %v8931 = vunpack.c.h.b16 %v8180
        %v8932 = vunpack.c.l.b16 %v8181
        %v8933 = vunpack.c.h.b16 %v8181
        %v8934 = vunpack.c.l.b16 %v8182
        %v8935 = vunpack.c.h.b16 %v8182
        %v8936 = vunpack.c.l.b16 %v8183
        %v8937 = vunpack.c.h.b16 %v8183
        %v8938 = vunpack.c.l.b16 %v8184
        %v8939 = vunpack.c.h.b16 %v8184
        %v8940 = vunpack.c.l.b16 %v8185
        %v8941 = vunpack.c.h.b16 %v8185
        %v8942 = vunpack.c.l.b16 %v8186
        %v8943 = vunpack.c.h.b16 %v8186
        %v8944 = vunpack.c.l.b16 %v8187
        %v8945 = vunpack.c.h.b16 %v8187
        %v8946 = vunpack.c.l.b16 %v8188
        %v8947 = vunpack.c.h.b16 %v8188
        %v8948 = vunpack.c.l.b16 %v8189
        %v8949 = vunpack.c.h.b16 %v8189
        %v8950 = vunpack.c.l.b16 %v8190
        %v8951 = vunpack.c.h.b16 %v8190
        %v8952 = vunpack.c.l.b16 %v8191
        %v8953 = vunpack.c.h.b16 %v8191
        %v8954 = vunpack.c.l.b16 %v8192
        %v8955 = vunpack.c.h.b16 %v8192
        %v8956 = vunpack.c.l.b16 %v8193
        %v8957 = vunpack.c.h.b16 %v8193
        %v8958 = vunpack.c.l.b16 %v8194
        %v8959 = vunpack.c.h.b16 %v8194
        %v8960 = vunpack.c.l.b16 %v8195
        %v8961 = vunpack.c.h.b16 %v8195
        %v8962 = vunpack.c.l.b16 %v8196
        %v8963 = vunpack.c.h.b16 %v8196
        %v8964 = vunpack.c.l.b16 %v8197
        %v8965 = vunpack.c.h.b16 %v8197
        %v8966 = vunpack.c.l.b16 %v8198
        %v8967 = vunpack.c.h.b16 %v8198
        %v8968 = vunpack.c.l.b16 %v8199
        %v8969 = vunpack.c.h.b16 %v8199
        %v8970 = vunpack.c.l.b16 %v8200
        %v8971 = vunpack.c.h.b16 %v8200
        %v8972 = vunpack.c.l.b16 %v8201
        %v8973 = vunpack.c.h.b16 %v8201
        %v8974 = vunpack.c.l.b16 %v8202
        %v8975 = vunpack.c.h.b16 %v8202
        %v8976 = vunpack.c.l.b16 %v8203
        %v8977 = vunpack.c.h.b16 %v8203
        %v8978 = vunpack.c.l.b16 %v8204
        %v8979 = vunpack.c.h.b16 %v8204
        %v8980 = vunpack.c.l.b16 %v8205
        %v8981 = vunpack.c.h.b16 %v8205
        %v8982 = vunpack.c.l.b16 %v8206
        %v8983 = vunpack.c.h.b16 %v8206
        %v8984 = vunpack.c.l.b16 %v8207
        %v8985 = vunpack.c.h.b16 %v8207
        %v8986 = vunpack.c.l.b16 %v8208
        %v8987 = vunpack.c.h.b16 %v8208
        %v8988 = vunpack.c.l.b16 %v8209
        %v8989 = vunpack.c.h.b16 %v8209
        %v8990 = vunpack.c.l.b16 %v8210
        %v8991 = vunpack.c.h.b16 %v8210
        %v8992 = vunpack.c.l.b16 %v8211
        %v8993 = vunpack.c.h.b16 %v8211
        %v8994 = vunpack.c.l.b16 %v8212
        %v8995 = vunpack.c.h.b16 %v8212
        %v8996 = vunpack.c.l.b16 %v8213
        %v8997 = vunpack.c.h.b16 %v8213
        %v8998 = vunpack.c.l.b16 %v8214
        %v8999 = vunpack.c.h.b16 %v8214
        %v9000 = vunpack.c.l.b16 %v8215
        %v9001 = vunpack.c.h.b16 %v8215
        %v9002 = vunpack.c.l.b16 %v8216
        %v9003 = vunpack.c.h.b16 %v8216
        %v9004 = vunpack.c.l.b16 %v8217
        %v9005 = vunpack.c.h.b16 %v8217
        %v9006 = vunpack.c.l.b16 %v8218
        %v9007 = vunpack.c.h.b16 %v8218
        %v9008 = vunpack.c.l.b16 %v8219
        %v9009 = vunpack.c.h.b16 %v8219
        %v9010 = vpack.c.b16 %v8502, %v8498
        %v9011 = vpack.c.b16 %v8503, %v8499
        %v9012 = vpack.c.b16 %v8504, %v8500
        %v9013 = vpack.c.b16 %v8505, %v8501
        %v9014 = vpack.c.b16 %v8510, %v8506
        %v9015 = vpack.c.b16 %v8511, %v8507
        %v9016 = vpack.c.b16 %v8512, %v8508
        %v9017 = vpack.c.b16 %v8513, %v8509
        %v9018 = vpack.c.b16 %v8518, %v8514
        %v9019 = vpack.c.b16 %v8519, %v8515
        %v9020 = vpack.c.b16 %v8520, %v8516
        %v9021 = vpack.c.b16 %v8521, %v8517
        %v9022 = vpack.c.b16 %v8526, %v8522
        %v9023 = vpack.c.b16 %v8527, %v8523
        %v9024 = vpack.c.b16 %v8528, %v8524
        %v9025 = vpack.c.b16 %v8529, %v8525
        %v9026 = vpack.c.b16 %v8534, %v8530
        %v9027 = vpack.c.b16 %v8535, %v8531
        %v9028 = vpack.c.b16 %v8536, %v8532
        %v9029 = vpack.c.b16 %v8537, %v8533
        %v9030 = vpack.c.b16 %v8542, %v8538
        %v9031 = vpack.c.b16 %v8543, %v8539
        %v9032 = vpack.c.b16 %v8544, %v8540
        %v9033 = vpack.c.b16 %v8545, %v8541
        %v9034 = vpack.c.b16 %v8550, %v8546
        %v9035 = vpack.c.b16 %v8551, %v8547
        %v9036 = vpack.c.b16 %v8552, %v8548
        %v9037 = vpack.c.b16 %v8553, %v8549
        %v9038 = vpack.c.b16 %v8558, %v8554
        %v9039 = vpack.c.b16 %v8559, %v8555
        %v9040 = vpack.c.b16 %v8560, %v8556
        %v9041 = vpack.c.b16 %v8561, %v8557
        %v9042 = vpack.c.b16 %v8566, %v8562
        %v9043 = vpack.c.b16 %v8567, %v8563
        %v9044 = vpack.c.b16 %v8568, %v8564
        %v9045 = vpack.c.b16 %v8569, %v8565
        %v9046 = vpack.c.b16 %v8574, %v8570
        %v9047 = vpack.c.b16 %v8575, %v8571
        %v9048 = vpack.c.b16 %v8576, %v8572
        %v9049 = vpack.c.b16 %v8577, %v8573
        %v9050 = vpack.c.b16 %v8582, %v8578
        %v9051 = vpack.c.b16 %v8583, %v8579
        %v9052 = vpack.c.b16 %v8584, %v8580
        %v9053 = vpack.c.b16 %v8585, %v8581
        %v9054 = vpack.c.b16 %v8590, %v8586
        %v9055 = vpack.c.b16 %v8591, %v8587
        %v9056 = vpack.c.b16 %v8592, %v8588
        %v9057 = vpack.c.b16 %v8593, %v8589
        %v9058 = vpack.c.b16 %v8598, %v8594
        %v9059 = vpack.c.b16 %v8599, %v8595
        %v9060 = vpack.c.b16 %v8600, %v8596
        %v9061 = vpack.c.b16 %v8601, %v8597
        %v9062 = vpack.c.b16 %v8606, %v8602
        %v9063 = vpack.c.b16 %v8607, %v8603
        %v9064 = vpack.c.b16 %v8608, %v8604
        %v9065 = vpack.c.b16 %v8609, %v8605
        %v9066 = vpack.c.b16 %v8614, %v8610
        %v9067 = vpack.c.b16 %v8615, %v8611
        %v9068 = vpack.c.b16 %v8616, %v8612
        %v9069 = vpack.c.b16 %v8617, %v8613
        %v9070 = vpack.c.b16 %v8622, %v8618
        %v9071 = vpack.c.b16 %v8623, %v8619
        %v9072 = vpack.c.b16 %v8624, %v8620
        %v9073 = vpack.c.b16 %v8625, %v8621
        %v9074 = vpack.c.b16 %v8630, %v8626
        %v9075 = vpack.c.b16 %v8631, %v8627
        %v9076 = vpack.c.b16 %v8632, %v8628
        %v9077 = vpack.c.b16 %v8633, %v8629
        %v9078 = vpack.c.b16 %v8638, %v8634
        %v9079 = vpack.c.b16 %v8639, %v8635
        %v9080 = vpack.c.b16 %v8640, %v8636
        %v9081 = vpack.c.b16 %v8641, %v8637
        %v9082 = vpack.c.b16 %v8646, %v8642
        %v9083 = vpack.c.b16 %v8647, %v8643
        %v9084 = vpack.c.b16 %v8648, %v8644
        %v9085 = vpack.c.b16 %v8649, %v8645
        %v9086 = vpack.c.b16 %v8654, %v8650
        %v9087 = vpack.c.b16 %v8655, %v8651
        %v9088 = vpack.c.b16 %v8656, %v8652
        %v9089 = vpack.c.b16 %v8657, %v8653
        %v9090 = vpack.c.b16 %v8662, %v8658
        %v9091 = vpack.c.b16 %v8663, %v8659
        %v9092 = vpack.c.b16 %v8664, %v8660
        %v9093 = vpack.c.b16 %v8665, %v8661
        %v9094 = vpack.c.b16 %v8670, %v8666
        %v9095 = vpack.c.b16 %v8671, %v8667
        %v9096 = vpack.c.b16 %v8672, %v8668
        %v9097 = vpack.c.b16 %v8673, %v8669
        %v9098 = vpack.c.b16 %v8678, %v8674
        %v9099 = vpack.c.b16 %v8679, %v8675
        %v9100 = vpack.c.b16 %v8680, %v8676
        %v9101 = vpack.c.b16 %v8681, %v8677
        %v9102 = vpack.c.b16 %v8686, %v8682
        %v9103 = vpack.c.b16 %v8687, %v8683
        %v9104 = vpack.c.b16 %v8688, %v8684
        %v9105 = vpack.c.b16 %v8689, %v8685
        %v9106 = vpack.c.b16 %v8694, %v8690
        %v9107 = vpack.c.b16 %v8695, %v8691
        %v9108 = vpack.c.b16 %v8696, %v8692
        %v9109 = vpack.c.b16 %v8697, %v8693
        %v9110 = vpack.c.b16 %v8702, %v8698
        %v9111 = vpack.c.b16 %v8703, %v8699
        %v9112 = vpack.c.b16 %v8704, %v8700
        %v9113 = vpack.c.b16 %v8705, %v8701
        %v9114 = vpack.c.b16 %v8710, %v8706
        %v9115 = vpack.c.b16 %v8711, %v8707
        %v9116 = vpack.c.b16 %v8712, %v8708
        %v9117 = vpack.c.b16 %v8713, %v8709
        %v9118 = vpack.c.b16 %v8718, %v8714
        %v9119 = vpack.c.b16 %v8719, %v8715
        %v9120 = vpack.c.b16 %v8720, %v8716
        %v9121 = vpack.c.b16 %v8721, %v8717
        %v9122 = vpack.c.b16 %v8726, %v8722
        %v9123 = vpack.c.b16 %v8727, %v8723
        %v9124 = vpack.c.b16 %v8728, %v8724
        %v9125 = vpack.c.b16 %v8729, %v8725
        %v9126 = vpack.c.b16 %v8734, %v8730
        %v9127 = vpack.c.b16 %v8735, %v8731
        %v9128 = vpack.c.b16 %v8736, %v8732
        %v9129 = vpack.c.b16 %v8737, %v8733
        %v9130 = vpack.c.b16 %v8742, %v8738
        %v9131 = vpack.c.b16 %v8743, %v8739
        %v9132 = vpack.c.b16 %v8744, %v8740
        %v9133 = vpack.c.b16 %v8745, %v8741
        %v9134 = vpack.c.b16 %v8750, %v8746
        %v9135 = vpack.c.b16 %v8751, %v8747
        %v9136 = vpack.c.b16 %v8752, %v8748
        %v9137 = vpack.c.b16 %v8753, %v8749
        %v9138 = vpack.c.b16 %v8758, %v8754
        %v9139 = vpack.c.b16 %v8759, %v8755
        %v9140 = vpack.c.b16 %v8760, %v8756
        %v9141 = vpack.c.b16 %v8761, %v8757
        %v9142 = vpack.c.b16 %v8766, %v8762
        %v9143 = vpack.c.b16 %v8767, %v8763
        %v9144 = vpack.c.b16 %v8768, %v8764
        %v9145 = vpack.c.b16 %v8769, %v8765
        %v9146 = vpack.c.b16 %v8774, %v8770
        %v9147 = vpack.c.b16 %v8775, %v8771
        %v9148 = vpack.c.b16 %v8776, %v8772
        %v9149 = vpack.c.b16 %v8777, %v8773
        %v9150 = vpack.c.b16 %v8782, %v8778
        %v9151 = vpack.c.b16 %v8783, %v8779
        %v9152 = vpack.c.b16 %v8784, %v8780
        %v9153 = vpack.c.b16 %v8785, %v8781
        %v9154 = vpack.c.b16 %v8790, %v8786
        %v9155 = vpack.c.b16 %v8791, %v8787
        %v9156 = vpack.c.b16 %v8792, %v8788
        %v9157 = vpack.c.b16 %v8793, %v8789
        %v9158 = vpack.c.b16 %v8798, %v8794
        %v9159 = vpack.c.b16 %v8799, %v8795
        %v9160 = vpack.c.b16 %v8800, %v8796
        %v9161 = vpack.c.b16 %v8801, %v8797
        %v9162 = vpack.c.b16 %v8806, %v8802
        %v9163 = vpack.c.b16 %v8807, %v8803
        %v9164 = vpack.c.b16 %v8808, %v8804
        %v9165 = vpack.c.b16 %v8809, %v8805
        %v9166 = vpack.c.b16 %v8814, %v8810
        %v9167 = vpack.c.b16 %v8815, %v8811
        %v9168 = vpack.c.b16 %v8816, %v8812
        %v9169 = vpack.c.b16 %v8817, %v8813
        %v9170 = vpack.c.b16 %v8822, %v8818
        %v9171 = vpack.c.b16 %v8823, %v8819
        %v9172 = vpack.c.b16 %v8824, %v8820
        %v9173 = vpack.c.b16 %v8825, %v8821
        %v9174 = vpack.c.b16 %v8830, %v8826
        %v9175 = vpack.c.b16 %v8831, %v8827
        %v9176 = vpack.c.b16 %v8832, %v8828
        %v9177 = vpack.c.b16 %v8833, %v8829
        %v9178 = vpack.c.b16 %v8838, %v8834
        %v9179 = vpack.c.b16 %v8839, %v8835
        %v9180 = vpack.c.b16 %v8840, %v8836
        %v9181 = vpack.c.b16 %v8841, %v8837
        %v9182 = vpack.c.b16 %v8846, %v8842
        %v9183 = vpack.c.b16 %v8847, %v8843
        %v9184 = vpack.c.b16 %v8848, %v8844
        %v9185 = vpack.c.b16 %v8849, %v8845
        %v9186 = vpack.c.b16 %v8854, %v8850
        %v9187 = vpack.c.b16 %v8855, %v8851
        %v9188 = vpack.c.b16 %v8856, %v8852
        %v9189 = vpack.c.b16 %v8857, %v8853
        %v9190 = vpack.c.b16 %v8862, %v8858
        %v9191 = vpack.c.b16 %v8863, %v8859
        %v9192 = vpack.c.b16 %v8864, %v8860
        %v9193 = vpack.c.b16 %v8865, %v8861
        %v9194 = vpack.c.b16 %v8870, %v8866
        %v9195 = vpack.c.b16 %v8871, %v8867
        %v9196 = vpack.c.b16 %v8872, %v8868
        %v9197 = vpack.c.b16 %v8873, %v8869
        %v9198 = vpack.c.b16 %v8878, %v8874
        %v9199 = vpack.c.b16 %v8879, %v8875
        %v9200 = vpack.c.b16 %v8880, %v8876
        %v9201 = vpack.c.b16 %v8881, %v8877
        %v9202 = vpack.c.b16 %v8886, %v8882
        %v9203 = vpack.c.b16 %v8887, %v8883
        %v9204 = vpack.c.b16 %v8888, %v8884
        %v9205 = vpack.c.b16 %v8889, %v8885
        %v9206 = vpack.c.b16 %v8894, %v8890
        %v9207 = vpack.c.b16 %v8895, %v8891
        %v9208 = vpack.c.b16 %v8896, %v8892
        %v9209 = vpack.c.b16 %v8897, %v8893
        %v9210 = vpack.c.b16 %v8902, %v8898
        %v9211 = vpack.c.b16 %v8903, %v8899
        %v9212 = vpack.c.b16 %v8904, %v8900
        %v9213 = vpack.c.b16 %v8905, %v8901
        %v9214 = vpack.c.b16 %v8910, %v8906
        %v9215 = vpack.c.b16 %v8911, %v8907
        %v9216 = vpack.c.b16 %v8912, %v8908
        %v9217 = vpack.c.b16 %v8913, %v8909
        %v9218 = vpack.c.b16 %v8918, %v8914
        %v9219 = vpack.c.b16 %v8919, %v8915
        %v9220 = vpack.c.b16 %v8920, %v8916
        %v9221 = vpack.c.b16 %v8921, %v8917
        %v9222 = vpack.c.b16 %v8926, %v8922
        %v9223 = vpack.c.b16 %v8927, %v8923
        %v9224 = vpack.c.b16 %v8928, %v8924
        %v9225 = vpack.c.b16 %v8929, %v8925
        %v9226 = vpack.c.b16 %v8934, %v8930
        %v9227 = vpack.c.b16 %v8935, %v8931
        %v9228 = vpack.c.b16 %v8936, %v8932
        %v9229 = vpack.c.b16 %v8937, %v8933
        %v9230 = vpack.c.b16 %v8942, %v8938
        %v9231 = vpack.c.b16 %v8943, %v8939
        %v9232 = vpack.c.b16 %v8944, %v8940
        %v9233 = vpack.c.b16 %v8945, %v8941
        %v9234 = vpack.c.b16 %v8950, %v8946
        %v9235 = vpack.c.b16 %v8951, %v8947
        %v9236 = vpack.c.b16 %v8952, %v8948
        %v9237 = vpack.c.b16 %v8953, %v8949
        %v9238 = vpack.c.b16 %v8958, %v8954
        %v9239 = vpack.c.b16 %v8959, %v8955
        %v9240 = vpack.c.b16 %v8960, %v8956
        %v9241 = vpack.c.b16 %v8961, %v8957
        %v9242 = vpack.c.b16 %v8966, %v8962
        %v9243 = vpack.c.b16 %v8967, %v8963
        %v9244 = vpack.c.b16 %v8968, %v8964
        %v9245 = vpack.c.b16 %v8969, %v8965
        %v9246 = vpack.c.b16 %v8974, %v8970
        %v9247 = vpack.c.b16 %v8975, %v8971
        %v9248 = vpack.c.b16 %v8976, %v8972
        %v9249 = vpack.c.b16 %v8977, %v8973
        %v9250 = vpack.c.b16 %v8982, %v8978
        %v9251 = vpack.c.b16 %v8983, %v8979
        %v9252 = vpack.c.b16 %v8984, %v8980
        %v9253 = vpack.c.b16 %v8985, %v8981
        %v9254 = vpack.c.b16 %v8990, %v8986
        %v9255 = vpack.c.b16 %v8991, %v8987
        %v9256 = vpack.c.b16 %v8992, %v8988
        %v9257 = vpack.c.b16 %v8993, %v8989
        %v9258 = vpack.c.b16 %v8998, %v8994
        %v9259 = vpack.c.b16 %v8999, %v8995
        %v9260 = vpack.c.b16 %v9000, %v8996
        %v9261 = vpack.c.b16 %v9001, %v8997
        %v9262 = vpack.c.b16 %v9006, %v9002
        %v9263 = vpack.c.b16 %v9007, %v9003
        %v9264 = vpack.c.b16 %v9008, %v9004
        %v9265 = vpack.c.b16 %v9009, %v9005
        %9522 = vmatprep.subr.bf16.mxu0 %v9039
        %9523 = vmatpush1.bf16.msra.mxu0 %v9038
        %9524 = vmatprep.subr.bf16.mxu0 %v9035
        %9525 = vmatpush1.bf16.msra.mxu0 %v9034
        %9526 = vmatprep.subr.bf16.mxu0 %v9031
        %9527 = vmatpush1.bf16.msra.mxu0 %v9030
        %9528 = vmatprep.subr.bf16.mxu0 %v9027
        %9529 = vmatpush1.bf16.msra.mxu0 %v9026
        %9530 = vmatprep.subr.bf16.mxu0 %v9023
        %9531 = vmatpush1.bf16.msra.mxu0 %v9022
        %9532 = vmatprep.subr.bf16.mxu0 %v9019
        %9533 = vmatpush1.bf16.msra.mxu0 %v9018
        %9534 = vmatprep.subr.bf16.mxu0 %v9015
        %9535 = vmatpush1.bf16.msra.mxu0 %v9014
        %9536 = vmatprep.subr.bf16.mxu0 %v9011
        %9537 = vmatpush1.bf16.msra.mxu0 %v9010
        %9538 = vmatprep.subr.bf16.mxu0 %v9071
        %9539 = vmatpush2.bf16.msra.mxu0 %v9070
        %9540 = vmatprep.subr.bf16.mxu0 %v9067
        %9541 = vmatpush2.bf16.msra.mxu0 %v9066
        %9542 = vmatprep.subr.bf16.mxu0 %v9063
        %9543 = vmatpush2.bf16.msra.mxu0 %v9062
        %9544 = vmatprep.subr.bf16.mxu0 %v9059
        %9545 = vmatpush2.bf16.msra.mxu0 %v9058
        %9546 = vmatprep.subr.bf16.mxu0 %v9055
        %9547 = vmatpush2.bf16.msra.mxu0 %v9054
        %9548 = vmatprep.subr.bf16.mxu0 %v9051
        %9549 = vmatpush2.bf16.msra.mxu0 %v9050
        %9550 = vmatprep.subr.bf16.mxu0 %v9047
        %9551 = vmatpush2.bf16.msra.mxu0 %v9046
        %9552 = vmatprep.subr.bf16.mxu0 %v9043
        %9553 = vmatpush2.bf16.msra.mxu0 %v9042
        %9554 = vmatprep.mubr.bf16.mxu0 %v7957
        %9555 = vmatmul.mubr.bf16.gmra.mxu0 %v7956
        %v9556 = vpop.f32.mrf.mxu0
        %v9557 = vadd.f32 %v8225, %v9556
        %v9558 = vpop.f32.mrf.mxu0
        %v9559 = vadd.f32 %v8229, %v9558
        %v9560 = vpop.f32.mrf.mxu0
        %v9561 = vpop.f32.mrf.mxu0
        %9562 = vdwg.mxu0
        %9563 = vmatprep.subr.bf16.mxu0 %v9103
        %9564 = vmatpush1.bf16.msra.mxu0 %v9102
        %9565 = vmatprep.subr.bf16.mxu0 %v9099
        %9566 = vmatpush1.bf16.msra.mxu0 %v9098
        %9567 = vmatprep.subr.bf16.mxu0 %v9095
        %9568 = vmatpush1.bf16.msra.mxu0 %v9094
        %9569 = vmatprep.subr.bf16.mxu0 %v9091
        %9570 = vmatpush1.bf16.msra.mxu0 %v9090
        %9571 = vmatprep.subr.bf16.mxu0 %v9087
        %9572 = vmatpush1.bf16.msra.mxu0 %v9086
        %9573 = vmatprep.subr.bf16.mxu0 %v9083
        %9574 = vmatpush1.bf16.msra.mxu0 %v9082
        %9575 = vmatprep.subr.bf16.mxu0 %v9079
        %9576 = vmatpush1.bf16.msra.mxu0 %v9078
        %9577 = vmatprep.subr.bf16.mxu0 %v9075
        %9578 = vmatpush1.bf16.msra.mxu0 %v9074
        %9579 = vmatprep.subr.bf16.mxu0 %v9135
        %9580 = vmatpush2.bf16.msra.mxu0 %v9134
        %9581 = vmatprep.subr.bf16.mxu0 %v9131
        %9582 = vmatpush2.bf16.msra.mxu0 %v9130
        %9583 = vmatprep.subr.bf16.mxu0 %v9127
        %9584 = vmatpush2.bf16.msra.mxu0 %v9126
        %9585 = vmatprep.subr.bf16.mxu0 %v9123
        %9586 = vmatpush2.bf16.msra.mxu0 %v9122
        %9587 = vmatprep.subr.bf16.mxu0 %v9119
        %9588 = vmatpush2.bf16.msra.mxu0 %v9118
        %9589 = vmatprep.subr.bf16.mxu0 %v9115
        %9590 = vmatpush2.bf16.msra.mxu0 %v9114
        %9591 = vmatprep.subr.bf16.mxu0 %v9111
        %9592 = vmatpush2.bf16.msra.mxu0 %v9110
        %9593 = vmatprep.subr.bf16.mxu0 %v9107
        %9594 = vmatpush2.bf16.msra.mxu0 %v9106
        %9595 = vmatprep.mubr.bf16.mxu0 %v7959
        %9596 = vmatmul.mubr.bf16.gmra.mxu0 %v7958
        %v9597 = vpop.f32.mrf.mxu0
        %v9598 = vadd.f32 %v9557, %v9597
        %v9599 = vpop.f32.mrf.mxu0
        %v9600 = vadd.f32 %v9559, %v9599
        %v9601 = vpop.f32.mrf.mxu0
        %v9602 = vpop.f32.mrf.mxu0
        %9603 = vdwg.mxu0
        %9604 = vmatprep.subr.bf16.mxu0 %v9167
        %9605 = vmatpush1.bf16.msra.mxu0 %v9166
        %9606 = vmatprep.subr.bf16.mxu0 %v9163
        %9607 = vmatpush1.bf16.msra.mxu0 %v9162
        %9608 = vmatprep.subr.bf16.mxu0 %v9159
        %9609 = vmatpush1.bf16.msra.mxu0 %v9158
        %9610 = vmatprep.subr.bf16.mxu0 %v9155
        %9611 = vmatpush1.bf16.msra.mxu0 %v9154
        %9612 = vmatprep.subr.bf16.mxu0 %v9151
        %9613 = vmatpush1.bf16.msra.mxu0 %v9150
        %9614 = vmatprep.subr.bf16.mxu0 %v9147
        %9615 = vmatpush1.bf16.msra.mxu0 %v9146
        %9616 = vmatprep.subr.bf16.mxu0 %v9143
        %9617 = vmatpush1.bf16.msra.mxu0 %v9142
        %9618 = vmatprep.subr.bf16.mxu0 %v9139
        %9619 = vmatpush1.bf16.msra.mxu0 %v9138
        %9620 = vmatprep.subr.bf16.mxu0 %v9199
        %9621 = vmatpush2.bf16.msra.mxu0 %v9198
        %9622 = vmatprep.subr.bf16.mxu0 %v9195
        %9623 = vmatpush2.bf16.msra.mxu0 %v9194
        %9624 = vmatprep.subr.bf16.mxu0 %v9191
        %9625 = vmatpush2.bf16.msra.mxu0 %v9190
        %9626 = vmatprep.subr.bf16.mxu0 %v9187
        %9627 = vmatpush2.bf16.msra.mxu0 %v9186
        %9628 = vmatprep.subr.bf16.mxu0 %v9183
        %9629 = vmatpush2.bf16.msra.mxu0 %v9182
        %9630 = vmatprep.subr.bf16.mxu0 %v9179
        %9631 = vmatpush2.bf16.msra.mxu0 %v9178
        %9632 = vmatprep.subr.bf16.mxu0 %v9175
        %9633 = vmatpush2.bf16.msra.mxu0 %v9174
        %9634 = vmatprep.subr.bf16.mxu0 %v9171
        %9635 = vmatpush2.bf16.msra.mxu0 %v9170
        %9636 = vmatprep.mubr.bf16.mxu0 %v7961
        %9637 = vmatmul.mubr.bf16.gmra.mxu0 %v7960
        %v9638 = vpop.f32.mrf.mxu0
        %v9639 = vadd.f32 %v9598, %v9638
        %v9640 = vpop.f32.mrf.mxu0
        %v9641 = vadd.f32 %v9600, %v9640
        %v9642 = vpop.f32.mrf.mxu0
        %v9643 = vpop.f32.mrf.mxu0
        %9644 = vdwg.mxu0
        %9645 = vmatprep.subr.bf16.mxu0 %v9231
        %9646 = vmatpush1.bf16.msra.mxu0 %v9230
        %9647 = vmatprep.subr.bf16.mxu0 %v9227
        %9648 = vmatpush1.bf16.msra.mxu0 %v9226
        %9649 = vmatprep.subr.bf16.mxu0 %v9223
        %9650 = vmatpush1.bf16.msra.mxu0 %v9222
        %9651 = vmatprep.subr.bf16.mxu0 %v9219
        %9652 = vmatpush1.bf16.msra.mxu0 %v9218
        %9653 = vmatprep.subr.bf16.mxu0 %v9215
        %9654 = vmatpush1.bf16.msra.mxu0 %v9214
        %9655 = vmatprep.subr.bf16.mxu0 %v9211
        %9656 = vmatpush1.bf16.msra.mxu0 %v9210
        %9657 = vmatprep.subr.bf16.mxu0 %v9207
        %9658 = vmatpush1.bf16.msra.mxu0 %v9206
        %9659 = vmatprep.subr.bf16.mxu0 %v9203
        %9660 = vmatpush1.bf16.msra.mxu0 %v9202
        %9661 = vmatprep.subr.bf16.mxu0 %v9263
        %9662 = vmatpush2.bf16.msra.mxu0 %v9262
        %9663 = vmatprep.subr.bf16.mxu0 %v9259
        %9664 = vmatpush2.bf16.msra.mxu0 %v9258
        %9665 = vmatprep.subr.bf16.mxu0 %v9255
        %9666 = vmatpush2.bf16.msra.mxu0 %v9254
        %9667 = vmatprep.subr.bf16.mxu0 %v9251
        %9668 = vmatpush2.bf16.msra.mxu0 %v9250
        %9669 = vmatprep.subr.bf16.mxu0 %v9247
        %9670 = vmatpush2.bf16.msra.mxu0 %v9246
        %9671 = vmatprep.subr.bf16.mxu0 %v9243
        %9672 = vmatpush2.bf16.msra.mxu0 %v9242
        %9673 = vmatprep.subr.bf16.mxu0 %v9239
        %9674 = vmatpush2.bf16.msra.mxu0 %v9238
        %9675 = vmatprep.subr.bf16.mxu0 %v9235
        %9676 = vmatpush2.bf16.msra.mxu0 %v9234
        %9677 = vmatprep.mubr.bf16.mxu0 %v7963
        %9678 = vmatmul.mubr.bf16.gmra.mxu0 %v7962
        %v9679 = vpop.f32.mrf.mxu0
        %v9680 = vadd.f32 %v9639, %v9679
        %v9681 = vpop.f32.mrf.mxu0
        %v9682 = vadd.f32 %v9641, %v9681
        %v9683 = vpop.f32.mrf.mxu0
        %v9684 = vpop.f32.mrf.mxu0
        %9685 = vdwg.mxu0
        %9686 = vmatprep.subr.bf16.mxu0 %v9041
        %9687 = vmatpush1.bf16.msra.mxu0 %v9040
        %9688 = vmatprep.subr.bf16.mxu0 %v9037
        %9689 = vmatpush1.bf16.msra.mxu0 %v9036
        %9690 = vmatprep.subr.bf16.mxu0 %v9033
        %9691 = vmatpush1.bf16.msra.mxu0 %v9032
        %9692 = vmatprep.subr.bf16.mxu0 %v9029
        %9693 = vmatpush1.bf16.msra.mxu0 %v9028
        %9694 = vmatprep.subr.bf16.mxu0 %v9025
        %9695 = vmatpush1.bf16.msra.mxu0 %v9024
        %9696 = vmatprep.subr.bf16.mxu0 %v9021
        %9697 = vmatpush1.bf16.msra.mxu0 %v9020
        %9698 = vmatprep.subr.bf16.mxu0 %v9017
        %9699 = vmatpush1.bf16.msra.mxu0 %v9016
        %9700 = vmatprep.subr.bf16.mxu0 %v9013
        %9701 = vmatpush1.bf16.msra.mxu0 %v9012
        %9702 = vmatprep.subr.bf16.mxu0 %v9073
        %9703 = vmatpush2.bf16.msra.mxu0 %v9072
        %9704 = vmatprep.subr.bf16.mxu0 %v9069
        %9705 = vmatpush2.bf16.msra.mxu0 %v9068
        %9706 = vmatprep.subr.bf16.mxu0 %v9065
        %9707 = vmatpush2.bf16.msra.mxu0 %v9064
        %9708 = vmatprep.subr.bf16.mxu0 %v9061
        %9709 = vmatpush2.bf16.msra.mxu0 %v9060
        %9710 = vmatprep.subr.bf16.mxu0 %v9057
        %9711 = vmatpush2.bf16.msra.mxu0 %v9056
        %9712 = vmatprep.subr.bf16.mxu0 %v9053
        %9713 = vmatpush2.bf16.msra.mxu0 %v9052
        %9714 = vmatprep.subr.bf16.mxu0 %v9049
        %9715 = vmatpush2.bf16.msra.mxu0 %v9048
        %9716 = vmatprep.subr.bf16.mxu0 %v9045
        %9717 = vmatpush2.bf16.msra.mxu0 %v9044
        %9718 = vmatprep.mubr.bf16.mxu0 %v7957
        %9719 = vmatmul.mubr.bf16.gmra.mxu0 %v7956
        %v9720 = vpop.f32.mrf.mxu0
        %v9721 = vadd.f32 %v8233, %v9720
        %v9722 = vpop.f32.mrf.mxu0
        %v9723 = vadd.f32 %v8237, %v9722
        %v9724 = vpop.f32.mrf.mxu0
        %v9725 = vpop.f32.mrf.mxu0
        %9726 = vdwg.mxu0
        %9727 = vmatprep.subr.bf16.mxu0 %v9105
        %9728 = vmatpush1.bf16.msra.mxu0 %v9104
        %9729 = vmatprep.subr.bf16.mxu0 %v9101
        %9730 = vmatpush1.bf16.msra.mxu0 %v9100
        %9731 = vmatprep.subr.bf16.mxu0 %v9097
        %9732 = vmatpush1.bf16.msra.mxu0 %v9096
        %9733 = vmatprep.subr.bf16.mxu0 %v9093
        %9734 = vmatpush1.bf16.msra.mxu0 %v9092
        %9735 = vmatprep.subr.bf16.mxu0 %v9089
        %9736 = vmatpush1.bf16.msra.mxu0 %v9088
        %9737 = vmatprep.subr.bf16.mxu0 %v9085
        %9738 = vmatpush1.bf16.msra.mxu0 %v9084
        %9739 = vmatprep.subr.bf16.mxu0 %v9081
        %9740 = vmatpush1.bf16.msra.mxu0 %v9080
        %9741 = vmatprep.subr.bf16.mxu0 %v9077
        %9742 = vmatpush1.bf16.msra.mxu0 %v9076
        %9743 = vmatprep.subr.bf16.mxu0 %v9137
        %9744 = vmatpush2.bf16.msra.mxu0 %v9136
        %9745 = vmatprep.subr.bf16.mxu0 %v9133
        %9746 = vmatpush2.bf16.msra.mxu0 %v9132
        %9747 = vmatprep.subr.bf16.mxu0 %v9129
        %9748 = vmatpush2.bf16.msra.mxu0 %v9128
        %9749 = vmatprep.subr.bf16.mxu0 %v9125
        %9750 = vmatpush2.bf16.msra.mxu0 %v9124
        %9751 = vmatprep.subr.bf16.mxu0 %v9121
        %9752 = vmatpush2.bf16.msra.mxu0 %v9120
        %9753 = vmatprep.subr.bf16.mxu0 %v9117
        %9754 = vmatpush2.bf16.msra.mxu0 %v9116
        %9755 = vmatprep.subr.bf16.mxu0 %v9113
        %9756 = vmatpush2.bf16.msra.mxu0 %v9112
        %9757 = vmatprep.subr.bf16.mxu0 %v9109
        %9758 = vmatpush2.bf16.msra.mxu0 %v9108
        %9759 = vmatprep.mubr.bf16.mxu0 %v7959
        %9760 = vmatmul.mubr.bf16.gmra.mxu0 %v7958
        %v9761 = vpop.f32.mrf.mxu0
        %v9762 = vadd.f32 %v9721, %v9761
        %v9763 = vpop.f32.mrf.mxu0
        %v9764 = vadd.f32 %v9723, %v9763
        %v9765 = vpop.f32.mrf.mxu0
        %v9766 = vpop.f32.mrf.mxu0
        %9767 = vdwg.mxu0
        %9768 = vmatprep.subr.bf16.mxu0 %v9169
        %9769 = vmatpush1.bf16.msra.mxu0 %v9168
        %9770 = vmatprep.subr.bf16.mxu0 %v9165
        %9771 = vmatpush1.bf16.msra.mxu0 %v9164
        %9772 = vmatprep.subr.bf16.mxu0 %v9161
        %9773 = vmatpush1.bf16.msra.mxu0 %v9160
        %9774 = vmatprep.subr.bf16.mxu0 %v9157
        %9775 = vmatpush1.bf16.msra.mxu0 %v9156
        %9776 = vmatprep.subr.bf16.mxu0 %v9153
        %9777 = vmatpush1.bf16.msra.mxu0 %v9152
        %9778 = vmatprep.subr.bf16.mxu0 %v9149
        %9779 = vmatpush1.bf16.msra.mxu0 %v9148
        %9780 = vmatprep.subr.bf16.mxu0 %v9145
        %9781 = vmatpush1.bf16.msra.mxu0 %v9144
        %9782 = vmatprep.subr.bf16.mxu0 %v9141
        %9783 = vmatpush1.bf16.msra.mxu0 %v9140
        %9784 = vmatprep.subr.bf16.mxu0 %v9201
        %9785 = vmatpush2.bf16.msra.mxu0 %v9200
        %9786 = vmatprep.subr.bf16.mxu0 %v9197
        %9787 = vmatpush2.bf16.msra.mxu0 %v9196
        %9788 = vmatprep.subr.bf16.mxu0 %v9193
        %9789 = vmatpush2.bf16.msra.mxu0 %v9192
        %9790 = vmatprep.subr.bf16.mxu0 %v9189
        %9791 = vmatpush2.bf16.msra.mxu0 %v9188
        %9792 = vmatprep.subr.bf16.mxu0 %v9185
        %9793 = vmatpush2.bf16.msra.mxu0 %v9184
        %9794 = vmatprep.subr.bf16.mxu0 %v9181
        %9795 = vmatpush2.bf16.msra.mxu0 %v9180
        %9796 = vmatprep.subr.bf16.mxu0 %v9177
        %9797 = vmatpush2.bf16.msra.mxu0 %v9176
        %9798 = vmatprep.subr.bf16.mxu0 %v9173
        %9799 = vmatpush2.bf16.msra.mxu0 %v9172
        %9800 = vmatprep.mubr.bf16.mxu0 %v7961
        %9801 = vmatmul.mubr.bf16.gmra.mxu0 %v7960
        %v9802 = vpop.f32.mrf.mxu0
        %v9803 = vadd.f32 %v9762, %v9802
        %v9804 = vpop.f32.mrf.mxu0
        %v9805 = vadd.f32 %v9764, %v9804
        %v9806 = vpop.f32.mrf.mxu0
        %v9807 = vpop.f32.mrf.mxu0
        %9808 = vdwg.mxu0
        %9809 = vmatprep.subr.bf16.mxu0 %v9233
        %9810 = vmatpush1.bf16.msra.mxu0 %v9232
        %9811 = vmatprep.subr.bf16.mxu0 %v9229
        %9812 = vmatpush1.bf16.msra.mxu0 %v9228
        %9813 = vmatprep.subr.bf16.mxu0 %v9225
        %9814 = vmatpush1.bf16.msra.mxu0 %v9224
        %9815 = vmatprep.subr.bf16.mxu0 %v9221
        %9816 = vmatpush1.bf16.msra.mxu0 %v9220
        %9817 = vmatprep.subr.bf16.mxu0 %v9217
        %9818 = vmatpush1.bf16.msra.mxu0 %v9216
        %9819 = vmatprep.subr.bf16.mxu0 %v9213
        %9820 = vmatpush1.bf16.msra.mxu0 %v9212
        %9821 = vmatprep.subr.bf16.mxu0 %v9209
        %9822 = vmatpush1.bf16.msra.mxu0 %v9208
        %9823 = vmatprep.subr.bf16.mxu0 %v9205
        %9824 = vmatpush1.bf16.msra.mxu0 %v9204
        %9825 = vmatprep.subr.bf16.mxu0 %v9265
        %9826 = vmatpush2.bf16.msra.mxu0 %v9264
        %9827 = vmatprep.subr.bf16.mxu0 %v9261
        %9828 = vmatpush2.bf16.msra.mxu0 %v9260
        %9829 = vmatprep.subr.bf16.mxu0 %v9257
        %9830 = vmatpush2.bf16.msra.mxu0 %v9256
        %9831 = vmatprep.subr.bf16.mxu0 %v9253
        %9832 = vmatpush2.bf16.msra.mxu0 %v9252
        %9833 = vmatprep.subr.bf16.mxu0 %v9249
        %9834 = vmatpush2.bf16.msra.mxu0 %v9248
        %9835 = vmatprep.subr.bf16.mxu0 %v9245
        %9836 = vmatpush2.bf16.msra.mxu0 %v9244
        %9837 = vmatprep.subr.bf16.mxu0 %v9241
        %9838 = vmatpush2.bf16.msra.mxu0 %v9240
        %9839 = vmatprep.subr.bf16.mxu0 %v9237
        %9840 = vmatpush2.bf16.msra.mxu0 %v9236
        %9841 = vmatprep.mubr.bf16.mxu0 %v7963
        %9842 = vmatmul.mubr.bf16.gmra.mxu0 %v7962
        %v9843 = vpop.f32.mrf.mxu0
        %v9844 = vadd.f32 %v9803, %v9843
        %v9845 = vpop.f32.mrf.mxu0
        %v9846 = vadd.f32 %v9805, %v9845
        %v9847 = vpop.f32.mrf.mxu0
        %v9848 = vpop.f32.mrf.mxu0
        %9849 = vdwg.mxu0
        %v9850 = vmax.f32 %v9680, 0.0
        %v9851 = vmax.f32 %v9682, 0.0
        %v9852 = vmax.f32 %v9844, 0.0
        %v9853 = vmax.f32 %v9846, 0.0
        %v9854 = vpack.c.bf16 %v9850, %v9850
        %v9855 = vpack.c.bf16 %v9851, %v9851
        %v9856 = vpack.c.bf16 %v9852, %v9852
        %v9857 = vpack.c.bf16 %v9853, %v9853
        %v9858 = vld [vmem:[%s22] sm:$0xf]
        %v9859 = vld [vmem:[%s22 + $0x4] sm:$0xf]
        %v9860 = vld [vmem:[%s22 + $0x8] sm:$0xf]
        %v9861 = vld [vmem:[%s22 + $0xc] sm:$0xf]
        %v9862 = vld [vmem:[%s22 + $0x10] sm:$0xf]
        %v9863 = vld [vmem:[%s22 + $0x14] sm:$0xf]
        %v9864 = vld [vmem:[%s22 + $0x18] sm:$0xf]
        %v9865 = vld [vmem:[%s22 + $0x1c] sm:$0xf]
        %v9866 = vld [vmem:[%s22 + $0x20] sm:$0xf]
        %v9867 = vld [vmem:[%s22 + $0x24] sm:$0xf]
        %v9868 = vld [vmem:[%s22 + $0x28] sm:$0xf]
        %v9869 = vld [vmem:[%s22 + $0x2c] sm:$0xf]
        %v9870 = vld [vmem:[%s22 + $0x30] sm:$0xf]
        %v9871 = vld [vmem:[%s22 + $0x34] sm:$0xf]
        %v9872 = vld [vmem:[%s22 + $0x38] sm:$0xf]
        %v9873 = vld [vmem:[%s22 + $0x3c] sm:$0xf]
        %v9874 = vld [vmem:[%s22 + $0x40] sm:$0xf]
        %v9875 = vld [vmem:[%s22 + $0x44] sm:$0xf]
        %v9876 = vld [vmem:[%s22 + $0x48] sm:$0xf]
        %v9877 = vld [vmem:[%s22 + $0x4c] sm:$0xf]
        %v9878 = vld [vmem:[%s22 + $0x50] sm:$0xf]
        %v9879 = vld [vmem:[%s22 + $0x54] sm:$0xf]
        %v9880 = vld [vmem:[%s22 + $0x58] sm:$0xf]
        %v9881 = vld [vmem:[%s22 + $0x5c] sm:$0xf]
        %v9882 = vld [vmem:[%s22 + $0x60] sm:$0xf]
        %v9883 = vld [vmem:[%s22 + $0x64] sm:$0xf]
        %v9884 = vld [vmem:[%s22 + $0x68] sm:$0xf]
        %v9885 = vld [vmem:[%s22 + $0x6c] sm:$0xf]
        %v9886 = vld [vmem:[%s22 + $0x70] sm:$0xf]
        %v9887 = vld [vmem:[%s22 + $0x74] sm:$0xf]
        %v9888 = vld [vmem:[%s22 + $0x78] sm:$0xf]
        %v9889 = vld [vmem:[%s22 + $0x7c] sm:$0xf]
        %v9890 = vld [vmem:[%s22 + $0x80] sm:$0xf]
        %v9891 = vld [vmem:[%s22 + $0x84] sm:$0xf]
        %v9892 = vld [vmem:[%s22 + $0x88] sm:$0xf]
        %v9893 = vld [vmem:[%s22 + $0x8c] sm:$0xf]
        %v9894 = vld [vmem:[%s22 + $0x90] sm:$0xf]
        %v9895 = vld [vmem:[%s22 + $0x94] sm:$0xf]
        %v9896 = vld [vmem:[%s22 + $0x98] sm:$0xf]
        %v9897 = vld [vmem:[%s22 + $0x9c] sm:$0xf]
        %v9898 = vld [vmem:[%s22 + $0xa0] sm:$0xf]
        %v9899 = vld [vmem:[%s22 + $0xa4] sm:$0xf]
        %v9900 = vld [vmem:[%s22 + $0xa8] sm:$0xf]
        %v9901 = vld [vmem:[%s22 + $0xac] sm:$0xf]
        %v9902 = vld [vmem:[%s22 + $0xb0] sm:$0xf]
        %v9903 = vld [vmem:[%s22 + $0xb4] sm:$0xf]
        %v9904 = vld [vmem:[%s22 + $0xb8] sm:$0xf]
        %v9905 = vld [vmem:[%s22 + $0xbc] sm:$0xf]
        %v9906 = vld [vmem:[%s22 + $0xc0] sm:$0xf]
        %v9907 = vld [vmem:[%s22 + $0xc4] sm:$0xf]
        %v9908 = vld [vmem:[%s22 + $0xc8] sm:$0xf]
        %v9909 = vld [vmem:[%s22 + $0xcc] sm:$0xf]
        %v9910 = vld [vmem:[%s22 + $0xd0] sm:$0xf]
        %v9911 = vld [vmem:[%s22 + $0xd4] sm:$0xf]
        %v9912 = vld [vmem:[%s22 + $0xd8] sm:$0xf]
        %v9913 = vld [vmem:[%s22 + $0xdc] sm:$0xf]
        %v9914 = vld [vmem:[%s22 + $0xe0] sm:$0xf]
        %v9915 = vld [vmem:[%s22 + $0xe4] sm:$0xf]
        %v9916 = vld [vmem:[%s22 + $0xe8] sm:$0xf]
        %v9917 = vld [vmem:[%s22 + $0xec] sm:$0xf]
        %v9918 = vld [vmem:[%s22 + $0xf0] sm:$0xf]
        %v9919 = vld [vmem:[%s22 + $0xf4] sm:$0xf]
        %v9920 = vld [vmem:[%s22 + $0xf8] sm:$0xf]
        %v9921 = vld [vmem:[%s22 + $0xfc] sm:$0xf]
        %v9922 = vld [vmem:[%s23] sm:$0x1]
        %v9924 = vlaneseq
        %v9925 = vshrl.u32 %v9924, 7
        %v9926 = vsub.s32 0, %v9925
        %v9927 = vrot.slane %v9922, %v9926
        %v9993 = vunpack.c.l.b16 %v9858
        %v9994 = vunpack.c.l.b16 %v9859
        %v9995 = vunpack.c.l.b16 %v9860
        %v9996 = vunpack.c.l.b16 %v9861
        %v9997 = vunpack.c.l.b16 %v9862
        %v9998 = vunpack.c.l.b16 %v9863
        %v9999 = vunpack.c.l.b16 %v9864
        %v10000 = vunpack.c.l.b16 %v9865
        %v10001 = vunpack.c.l.b16 %v9866
        %v10002 = vunpack.c.l.b16 %v9867
        %v10003 = vunpack.c.l.b16 %v9868
        %v10004 = vunpack.c.l.b16 %v9869
        %v10005 = vunpack.c.l.b16 %v9870
        %v10006 = vunpack.c.l.b16 %v9871
        %v10007 = vunpack.c.l.b16 %v9872
        %v10008 = vunpack.c.l.b16 %v9873
        %v10009 = vunpack.c.l.b16 %v9874
        %v10010 = vunpack.c.l.b16 %v9875
        %v10011 = vunpack.c.l.b16 %v9876
        %v10012 = vunpack.c.l.b16 %v9877
        %v10013 = vunpack.c.l.b16 %v9878
        %v10014 = vunpack.c.l.b16 %v9879
        %v10015 = vunpack.c.l.b16 %v9880
        %v10016 = vunpack.c.l.b16 %v9881
        %v10017 = vunpack.c.l.b16 %v9882
        %v10018 = vunpack.c.l.b16 %v9883
        %v10019 = vunpack.c.l.b16 %v9884
        %v10020 = vunpack.c.l.b16 %v9885
        %v10021 = vunpack.c.l.b16 %v9886
        %v10022 = vunpack.c.l.b16 %v9887
        %v10023 = vunpack.c.l.b16 %v9888
        %v10024 = vunpack.c.l.b16 %v9889
        %v10025 = vunpack.c.l.b16 %v9890
        %v10026 = vunpack.c.l.b16 %v9891
        %v10027 = vunpack.c.l.b16 %v9892
        %v10028 = vunpack.c.l.b16 %v9893
        %v10029 = vunpack.c.l.b16 %v9894
        %v10030 = vunpack.c.l.b16 %v9895
        %v10031 = vunpack.c.l.b16 %v9896
        %v10032 = vunpack.c.l.b16 %v9897
        %v10033 = vunpack.c.l.b16 %v9898
        %v10034 = vunpack.c.l.b16 %v9899
        %v10035 = vunpack.c.l.b16 %v9900
        %v10036 = vunpack.c.l.b16 %v9901
        %v10037 = vunpack.c.l.b16 %v9902
        %v10038 = vunpack.c.l.b16 %v9903
        %v10039 = vunpack.c.l.b16 %v9904
        %v10040 = vunpack.c.l.b16 %v9905
        %v10041 = vunpack.c.l.b16 %v9906
        %v10042 = vunpack.c.l.b16 %v9907
        %v10043 = vunpack.c.l.b16 %v9908
        %v10044 = vunpack.c.l.b16 %v9909
        %v10045 = vunpack.c.l.b16 %v9910
        %v10046 = vunpack.c.l.b16 %v9911
        %v10047 = vunpack.c.l.b16 %v9912
        %v10048 = vunpack.c.l.b16 %v9913
        %v10049 = vunpack.c.l.b16 %v9914
        %v10050 = vunpack.c.l.b16 %v9915
        %v10051 = vunpack.c.l.b16 %v9916
        %v10052 = vunpack.c.l.b16 %v9917
        %v10053 = vunpack.c.l.b16 %v9918
        %v10054 = vunpack.c.l.b16 %v9919
        %v10055 = vunpack.c.l.b16 %v9920
        %v10056 = vunpack.c.l.b16 %v9921
        %v10057 = vpack.c.b16 %v9994, %v9993
        %v10058 = vpack.c.b16 %v9996, %v9995
        %v10059 = vpack.c.b16 %v9998, %v9997
        %v10060 = vpack.c.b16 %v10000, %v9999
        %v10061 = vpack.c.b16 %v10002, %v10001
        %v10062 = vpack.c.b16 %v10004, %v10003
        %v10063 = vpack.c.b16 %v10006, %v10005
        %v10064 = vpack.c.b16 %v10008, %v10007
        %v10065 = vpack.c.b16 %v10010, %v10009
        %v10066 = vpack.c.b16 %v10012, %v10011
        %v10067 = vpack.c.b16 %v10014, %v10013
        %v10068 = vpack.c.b16 %v10016, %v10015
        %v10069 = vpack.c.b16 %v10018, %v10017
        %v10070 = vpack.c.b16 %v10020, %v10019
        %v10071 = vpack.c.b16 %v10022, %v10021
        %v10072 = vpack.c.b16 %v10024, %v10023
        %v10073 = vpack.c.b16 %v10026, %v10025
        %v10074 = vpack.c.b16 %v10028, %v10027
        %v10075 = vpack.c.b16 %v10030, %v10029
        %v10076 = vpack.c.b16 %v10032, %v10031
        %v10077 = vpack.c.b16 %v10034, %v10033
        %v10078 = vpack.c.b16 %v10036, %v10035
        %v10079 = vpack.c.b16 %v10038, %v10037
        %v10080 = vpack.c.b16 %v10040, %v10039
        %v10081 = vpack.c.b16 %v10042, %v10041
        %v10082 = vpack.c.b16 %v10044, %v10043
        %v10083 = vpack.c.b16 %v10046, %v10045
        %v10084 = vpack.c.b16 %v10048, %v10047
        %v10085 = vpack.c.b16 %v10050, %v10049
        %v10086 = vpack.c.b16 %v10052, %v10051
        %v10087 = vpack.c.b16 %v10054, %v10053
        %v10088 = vpack.c.b16 %v10056, %v10055
        %10121 = vmatprep.subr.bf16.mxu0 0
        %10122 = vmatpush1.bf16.msra.mxu0 %v10064
        %10123 = vmatprep.subr.bf16.mxu0 0
        %10124 = vmatpush1.bf16.msra.mxu0 %v10063
        %10125 = vmatprep.subr.bf16.mxu0 0
        %10126 = vmatpush1.bf16.msra.mxu0 %v10062
        %10127 = vmatprep.subr.bf16.mxu0 0
        %10128 = vmatpush1.bf16.msra.mxu0 %v10061
        %10129 = vmatprep.subr.bf16.mxu0 0
        %10130 = vmatpush1.bf16.msra.mxu0 %v10060
        %10131 = vmatprep.subr.bf16.mxu0 0
        %10132 = vmatpush1.bf16.msra.mxu0 %v10059
        %10133 = vmatprep.subr.bf16.mxu0 0
        %10134 = vmatpush1.bf16.msra.mxu0 %v10058
        %10135 = vmatprep.subr.bf16.mxu0 0
        %10136 = vmatpush1.bf16.msra.mxu0 %v10057
        %10137 = vmatprep.subr.bf16.mxu0 0
        %10138 = vmatpush2.bf16.msra.mxu0 %v10072
        %10139 = vmatprep.subr.bf16.mxu0 0
        %10140 = vmatpush2.bf16.msra.mxu0 %v10071
        %10141 = vmatprep.subr.bf16.mxu0 0
        %10142 = vmatpush2.bf16.msra.mxu0 %v10070
        %10143 = vmatprep.subr.bf16.mxu0 0
        %10144 = vmatpush2.bf16.msra.mxu0 %v10069
        %10145 = vmatprep.subr.bf16.mxu0 0
        %10146 = vmatpush2.bf16.msra.mxu0 %v10068
        %10147 = vmatprep.subr.bf16.mxu0 0
        %10148 = vmatpush2.bf16.msra.mxu0 %v10067
        %10149 = vmatprep.subr.bf16.mxu0 0
        %10150 = vmatpush2.bf16.msra.mxu0 %v10066
        %10151 = vmatprep.subr.bf16.mxu0 0
        %10152 = vmatpush2.bf16.msra.mxu0 %v10065
        %10153 = vmatprep.mubr.bf16.mxu0 %v9855
        %10154 = vmatmul.mubr.bf16.gmra.mxu0 %v9854
        %v10155 = vpop.f32.mrf.mxu0
        %v10156 = vadd.f32 %v9927, %v10155
        %v10157 = vpop.f32.mrf.mxu0
        %v10158 = vpop.f32.mrf.mxu0
        %v10159 = vpop.f32.mrf.mxu0
        %10160 = vdwg.mxu0
        %10161 = vmatprep.subr.bf16.mxu0 0
        %10162 = vmatpush1.bf16.msra.mxu0 %v10080
        %10163 = vmatprep.subr.bf16.mxu0 0
        %10164 = vmatpush1.bf16.msra.mxu0 %v10079
        %10165 = vmatprep.subr.bf16.mxu0 0
        %10166 = vmatpush1.bf16.msra.mxu0 %v10078
        %10167 = vmatprep.subr.bf16.mxu0 0
        %10168 = vmatpush1.bf16.msra.mxu0 %v10077
        %10169 = vmatprep.subr.bf16.mxu0 0
        %10170 = vmatpush1.bf16.msra.mxu0 %v10076
        %10171 = vmatprep.subr.bf16.mxu0 0
        %10172 = vmatpush1.bf16.msra.mxu0 %v10075
        %10173 = vmatprep.subr.bf16.mxu0 0
        %10174 = vmatpush1.bf16.msra.mxu0 %v10074
        %10175 = vmatprep.subr.bf16.mxu0 0
        %10176 = vmatpush1.bf16.msra.mxu0 %v10073
        %10177 = vmatprep.subr.bf16.mxu0 0
        %10178 = vmatpush2.bf16.msra.mxu0 %v10088
        %10179 = vmatprep.subr.bf16.mxu0 0
        %10180 = vmatpush2.bf16.msra.mxu0 %v10087
        %10181 = vmatprep.subr.bf16.mxu0 0
        %10182 = vmatpush2.bf16.msra.mxu0 %v10086
        %10183 = vmatprep.subr.bf16.mxu0 0
        %10184 = vmatpush2.bf16.msra.mxu0 %v10085
        %10185 = vmatprep.subr.bf16.mxu0 0
        %10186 = vmatpush2.bf16.msra.mxu0 %v10084
        %10187 = vmatprep.subr.bf16.mxu0 0
        %10188 = vmatpush2.bf16.msra.mxu0 %v10083
        %10189 = vmatprep.subr.bf16.mxu0 0
        %10190 = vmatpush2.bf16.msra.mxu0 %v10082
        %10191 = vmatprep.subr.bf16.mxu0 0
        %10192 = vmatpush2.bf16.msra.mxu0 %v10081
        %10193 = vmatprep.mubr.bf16.mxu0 %v9857
        %10194 = vmatmul.mubr.bf16.gmra.mxu0 %v9856
        %v10195 = vpop.f32.mrf.mxu0
        %v10196 = vadd.f32 %v10156, %v10195
        %v10197 = vpop.f32.mrf.mxu0
        %v10198 = vpop.f32.mrf.mxu0
        %v10199 = vpop.f32.mrf.mxu0
        %10200 = vdwg.mxu0
        %10201 = vst [vmem:[%s733] sm:$0xff] %v10196
        %s10202 = sand.u32 %s555, 1
        %s10203 = scalar_lea.sflag [#allocation3], %s10202
        %s10204 = sand.u32 %s555, 1
        %s10205 = smul.addr %s10204, 8
        %s10206 = scalar_lea.vmem [#allocation2], %s10205
        // Predicated region
        $region117: #{image_classifier_forward.1} parent=115 // pred_check
          %p10207 = pneg %p565
        $region118: #{image_classifier_forward.1} parent=115 // pred_check_branch
          %10209 = sbr.rel (%p10207) target = $region120
        $region119: #{image_classifier_forward.1} parent=115 // pred_region
          %s10211 = ssub.s32 128, 128
          %10212 = vsyncadd %s10203, %s10211
          %s10213 = smul.addr %s38, 128
          %s10214 = scalar_lea.hbm %s24, %s10213
          %s10216 = sshll.u32 %s10206, 4
          %s10217 = int_to_ptr.vmem [resolvable:$true] %s10216
          %10219 = dma.vmem_to_hbm [thread:$0]  %s10217, 128, %s10214, %s10203
        $region120: #{image_classifier_forward.1} parent=115 // pred_fallthru
          _
      $region116: #{image_classifier_forward.1} parent=5 // pred_fallthru
        _
      %p10220 = scmp.le.s32.totalorder 2, %s33
      // Predicated region
      $region121: #{image_classifier_forward.1} parent=5 // pred_check
        %p10221 = pneg %p10220
      $region122: #{image_classifier_forward.1} parent=5 // pred_check_branch
        %10223 = sbr.rel (%p10221) target = $region124
      $region123: #{image_classifier_forward.1} parent=5 // pred_region
        %s10224 = ssub.s32 %s33, 2
        // Predicated region
        $region125: #{image_classifier_forward.1} parent=123 // pred_check
          %p10225 = pneg %p571
        $region126: #{image_classifier_forward.1} parent=123 // pred_check_branch
          %10227 = sbr.rel (%p10225) target = $region128
        $region127: #{image_classifier_forward.1} parent=123 // pred_region
          %s10228 = sand.u32 %s556, 1
          %s10229 = scalar_lea.sflag [#allocation3], %s10228
          %s10230 = sand.u32 %s556, 1
          %s10231 = smul.addr %s10230, 8
          %s10232 = scalar_lea.vmem [#allocation2], %s10231
          %10233 = dma.done %s10229, 128
        $region128: #{image_classifier_forward.1} parent=123 // pred_fallthru
          _
      $region124: #{image_classifier_forward.1} parent=5 // pred_fallthru
        _
    $region6: #{image_classifier_forward.1} parent=1 // loop_footer
      %s37 = sadd.s32 1, %s33
    $region7: #{image_classifier_forward.1} parent=1 // loop_footer_branch
      %32 = sbr.rel target = $region3
    $region8: #{image_classifier_forward.1} parent=1 // loop_exit
      _
    %10234 = vsyncpa [#allocation3], 1
    %s10235 = scalar_lea.sflag [#allocation3], 1
    %10236 = vsyncpa %s10235, 1

</llo_original>
